<compile_context>
chip_gen: v6e
topology: v6e:2x2x1
jax: 0.10.0
libtpu: 0.0.40
codegen_flags: <defaults>
</compile_context>

<pallas_src>
import functools

import jax
import jax.numpy as jnp
from jax.experimental import pallas as pl
from jax.experimental.pallas import tpu as pltpu


# ----------------------------------------------------------------------------
# Pallas kernels: fused  act((A @ W) + shift)
# ----------------------------------------------------------------------------
def _apply_activation(y, activation):
    if activation == "relu":
        return jnp.maximum(y, 0.0)
    if activation == "sigmoid":
        return jax.nn.sigmoid(y)
    return y


def _mm_single_kernel(a_ref, w_ref, shift_ref, o_ref, *, activation):
    # K fits in one tile: no accumulator scratch, no init/finish branches.
    y = jnp.dot(a_ref[...], w_ref[...], preferred_element_type=jnp.float32)
    y = _apply_activation(y + shift_ref[...], activation)
    o_ref[...] = y.astype(o_ref.dtype)


def _mm_acc_kernel(a_ref, w_ref, shift_ref, o_ref, acc_ref, *, activation):
    @pl.when(pl.program_id(2) == 0)
    def _init():
        acc_ref[...] = jnp.zeros_like(acc_ref)

    acc_ref[...] += jnp.dot(a_ref[...], w_ref[...],
                            preferred_element_type=jnp.float32)

    @pl.when(pl.program_id(2) == pl.num_programs(2) - 1)
    def _finish():
        y = _apply_activation(acc_ref[...] + shift_ref[...], activation)
        o_ref[...] = y.astype(o_ref.dtype)


# ----------------------------------------------------------------------------
# Tiling helpers
# ----------------------------------------------------------------------------
def _round_up(x, m):
    return (x + m - 1) // m * m


def _pick_divisor_tile(dim, candidates):
    for c in candidates:
        if c <= dim and dim % c == 0:
            return c
    return dim  # full dimension (always legal)


def _pick_tm(m, tk, tn, out_bytes, with_acc):
    # Largest row tile that keeps double-buffered A/W/out (+acc) under ~12 MiB,
    # safe against the smallest default scoped-VMEM limit across v5e/v6e/v7x.
    budget = 12 * 1024 * 1024
    tm = 8
    for cand in (2048, 1024, 512, 256, 128, 64, 32, 16, 8):
        vmem = (2 * cand * tk * 2            # A tiles (bf16, double-buffered)
                + 2 * tk * tn * 2            # W tiles (bf16, double-buffered)
                + 2 * cand * tn * out_bytes  # output tiles (double-buffered)
                + 2 * tn * 4                 # shift tiles
                + (cand * tn * 4 if with_acc else 0))
        if vmem <= budget:
            tm = cand
            break
    return min(tm, _round_up(m, 8))


def fused_matmul(a, w, shift, activation, out_dtype=jnp.bfloat16):
    """act((a @ w) + shift) with bf16 operands and f32 accumulation.

    a: (M, K), w: (K, N), shift: (N,).  N is padded to a multiple of 128 and M to the
    row tile; the padding is sliced off before returning.
    """
    m, k = a.shape
    k2, n = w.shape
    assert k == k2
    a = a.astype(jnp.bfloat16)
    w = w.astype(jnp.bfloat16)
    shift = shift.astype(jnp.float32).reshape(1, n)

    # Lane-dense output (review item 4).
    n_pad = _round_up(n, 128)
    if n_pad != n:
        w = jnp.pad(w, ((0, 0), (0, n_pad - n)))
        shift = jnp.pad(shift, ((0, 0), (0, n_pad - n)))

    tn = _pick_divisor_tile(n_pad, (512, 256, 128))
    tk = _pick_divisor_tile(k, (512, 256, 128))
    nk = k // tk
    out_bytes = jnp.dtype(out_dtype).itemsize
    tm = _pick_tm(m, tk, tn, out_bytes, with_acc=(nk > 1))
    m_pad = _round_up(m, tm)
    if m_pad != m:
        a = jnp.pad(a, ((0, m_pad - m), (0, 0)))

    if nk == 1:
        kernel = functools.partial(_mm_single_kernel, activation=activation)
        out = pl.pallas_call(
            kernel,
            out_shape=jax.ShapeDtypeStruct((m_pad, n_pad), out_dtype),
            grid_spec=pltpu.PrefetchScalarGridSpec(
                num_scalar_prefetch=0,
                grid=(m_pad // tm, n_pad // tn),
                in_specs=[
                    pl.BlockSpec((tm, k), lambda i, j: (i, 0)),
                    pl.BlockSpec((k, tn), lambda i, j: (0, j)),
                    pl.BlockSpec((1, tn), lambda i, j: (0, j)),
                ],
                out_specs=pl.BlockSpec((tm, tn), lambda i, j: (i, j)),
            ),
            compiler_params=pltpu.CompilerParams(
                dimension_semantics=("parallel", "parallel")),
        )(a, w, shift)
    else:
        kernel = functools.partial(_mm_acc_kernel, activation=activation)
        out = pl.pallas_call(
            kernel,
            out_shape=jax.ShapeDtypeStruct((m_pad, n_pad), out_dtype),
            grid_spec=pltpu.PrefetchScalarGridSpec(
                num_scalar_prefetch=0,
                grid=(m_pad // tm, n_pad // tn, nk),
                in_specs=[
                    pl.BlockSpec((tm, tk), lambda i, j, kk: (i, kk)),
                    pl.BlockSpec((tk, tn), lambda i, j, kk: (kk, j)),
                    pl.BlockSpec((1, tn), lambda i, j, kk: (0, j)),
                ],
                out_specs=pl.BlockSpec((tm, tn), lambda i, j, kk: (i, j)),
                scratch_shapes=[pltpu.VMEM((tm, tn), jnp.float32)],
            ),
            compiler_params=pltpu.CompilerParams(
                dimension_semantics=("parallel", "parallel", "arbitrary")),
        )(a, w, shift)

    if m_pad != m or n_pad != n:
        out = out[:m, :n]
    return out


# ----------------------------------------------------------------------------
# ConvTranspose2d(4, stride=2, pad=1) via sub-pixel decomposition (no zero-upsample)
# ----------------------------------------------------------------------------
# For output row oy and input row iy: oy = 2*iy - 1 + ky (ky in 0..3).
# A 2x2 window of x starting at row s (x coords) produces output rows 2s+1 and 2s+2:
#   out sub-pixel 0 (row 2s+1): tap dy=0 -> ky=2, tap dy=1 -> ky=0
#   out sub-pixel 1 (row 2s+2): tap dy=0 -> ky=3, tap dy=1 -> ky=1
_TAPS = ((2, 0), (3, 1))  # _TAPS[out_subpixel][window_offset] -> conv-transpose kernel index


def conv_transpose_4s2p1(x, wt, scale, shift, activation="relu"):
    """x: (N, H, W, Cin) NHWC bf16; wt: PyTorch ConvTranspose2d weight (Cin, Cout, 4, 4).

    Returns (N, 2H, 2W, Cout) bf16.  BN scale is folded into the weights; `shift`
    (bias+BN offset) and the activation are applied in the Pallas epilogue.
    """
    n, h, w, cin = x.shape
    cout = wt.shape[1]

    # 2x2-tap patches over the (1,1)-padded input: K = 4*cin (no zero stuffing).
    xp = jnp.pad(x, ((0, 0), (1, 1), (1, 1), (0, 0)))
    taps = [xp[:, dy:dy + h + 1, dx:dx + w + 1, :]
            for dy in range(2) for dx in range(2)]
    patches = jnp.concatenate(taps, axis=-1).reshape(n * (h + 1) * (w + 1), 4 * cin)

    # Weight (4*cin, 4*cout): rows ordered (dy, dx, ci), cols ordered (oy, ox, co).
    kblocks = []
    for dy in range(2):
        for dx in range(2):
            nblocks = []
            for oy in range(2):
                for ox in range(2):
                    nblocks.append(wt[:, :, _TAPS[oy][dy], _TAPS[ox][dx]])
            kblocks.append(jnp.concatenate(nblocks, axis=1))
    wmat = jnp.concatenate(kblocks, axis=0)

    # Fold BN scale into the weight columns; keep only shift + act in the kernel.
    wmat = wmat * jnp.tile(scale, 4)[None, :]
    shift4 = jnp.tile(shift, 4)

    y = fused_matmul(patches, wmat, shift4, activation, out_dtype=jnp.bfloat16)

    # Interleave the 4 sub-pixel phases and crop the one-pixel border.
    y = y.reshape(n, h + 1, w + 1, 2, 2, cout)
    y = y.transpose(0, 1, 3, 2, 4, 5).reshape(n, 2 * h + 2, 2 * w + 2, cout)
    return y[:, 1:2 * h + 1, 1:2 * w + 1, :]


def conv_transpose_3s1p1(x, wt, shift, activation="sigmoid", out_dtype=jnp.float32):
    """ConvTranspose2d(cin, cout, 3, stride=1, padding=1): a 3x3 conv with flipped kernel."""
    n, h, w, cin = x.shape
    cout = wt.shape[1]
    xp = jnp.pad(x, ((0, 0), (1, 1), (1, 1), (0, 0)))
    taps = [xp[:, dy:dy + h, dx:dx + w, :] for dy in range(3) for dx in range(3)]
    patches = jnp.concatenate(taps, axis=-1).reshape(n * h * w, 9 * cin)
    wmat = jnp.transpose(wt[:, :, ::-1, ::-1], (2, 3, 0, 1)).reshape(9 * cin, cout)
    y = fused_matmul(patches, wmat, shift, activation, out_dtype=out_dtype)
    return y.reshape(n, h, w, cout)


# ----------------------------------------------------------------------------
# Parameters (deterministic synthetic init; BN folded in inference mode) and forward
# ----------------------------------------------------------------------------
FULL_CHANNELS = (1024, 512, 256, 128, 64, 32, 16, 8)  # the PyTorch DecoderMUG2d widths
_BN_EPS = 1e-5


def init_params(key, channels=FULL_CHANNELS, output_nc=1, encode_dim=1024):
    keys = iter(jax.random.split(key, 64))
    p = {}
    c0 = channels[0]
    p["w_lin"] = (jax.random.normal(next(keys), (encode_dim, c0 * 4 * 4), jnp.float32)
                  / jnp.sqrt(float(encode_dim)))
    p["b_lin"] = 0.01 * jax.random.normal(next(keys), (c0 * 4 * 4,), jnp.float32)

    convs = []
    for cin, cout in zip(channels[:-1], channels[1:]):
        wt = (jax.random.normal(next(keys), (cin, cout, 4, 4), jnp.float32)
              / jnp.sqrt(float(cin * 16)))
        b = 0.01 * jax.random.normal(next(keys), (cout,), jnp.float32)
        gamma = 0.5 + jax.random.uniform(next(keys), (cout,), jnp.float32)
        beta = 0.1 * jax.random.normal(next(keys), (cout,), jnp.float32)
        rmean = 0.1 * jax.random.normal(next(keys), (cout,), jnp.float32)
        rvar = 0.5 + jax.random.uniform(next(keys), (cout,), jnp.float32)
        s = gamma / jnp.sqrt(rvar + _BN_EPS)
        convs.append({"wt": wt, "scale": s, "shift": (b - rmean) * s + beta})
    p["convs"] = convs

    wt = (jax.random.normal(next(keys), (channels[-1], output_nc, 3, 3), jnp.float32)
          / jnp.sqrt(float(channels[-1] * 9)))
    b = 0.01 * jax.random.normal(next(keys), (output_nc,), jnp.float32)
    p["final"] = {"wt": wt, "shift": b}
    return p


@jax.jit
def decoder_forward(params, x):
    """x: (batch, encode_dim) -> (batch, output_nc, S, S) in NCHW, like PyTorch."""
    n = x.shape[0]
    # project: Linear + ReLU (fused Pallas matmul, bf16 weight streaming).
    h = fused_matmul(x, params["w_lin"], params["b_lin"], "relu",
                     out_dtype=jnp.bfloat16)
    c0 = params["convs"][0]["wt"].shape[0]
    # x.view(-1, C0, 4, 4) (NCHW) -> NHWC
    h = h.reshape(n, c0, 4, 4).transpose(0, 2, 3, 1)
    # [ConvTranspose2d(4, s=2, p=1) + BN(folded) + ReLU] stack (sub-pixel decomposition).
    for layer in params["convs"]:
        h = conv_transpose_4s2p1(h, layer["wt"], layer["scale"], layer["shift"],
                                 activation="relu")
    # ConvTranspose2d(C_last, output_nc, 3, s=1, p=1) + Sigmoid.
    fl = params["final"]
    h = conv_transpose_3s1p1(h, fl["wt"], fl["shift"], activation="sigmoid",
                             out_dtype=jnp.float32)
    return h.transpose(0, 3, 1, 2)  # NHWC -> NCHW


if __name__ == "__main__":
    key = jax.random.PRNGKey(0)
    pkey, xkey = jax.random.split(key)

    # Small instantiation of the same architecture (Linear+ReLU; stride-2 convT+BN+ReLU
    # stack; 3x3 convT+Sigmoid) so the smoke test / interpret check finishes quickly.
    # Full-size config: channels=FULL_CHANNELS, encode_dim=1024 -> (B, 1, 512, 512).
    channels = (64, 32, 16, 8)
    encode_dim = 128
    params = init_params(pkey, channels=channels, output_nc=1, encode_dim=encode_dim)
    x = jax.random.normal(xkey, (2, encode_dim), jnp.float32)  # batch=2

    out = jax.block_until_ready(decoder_forward(params, x))

    side = 4 * (2 ** (len(channels) - 1))  # 4 -> 8 -> 16 -> 32
    assert out.shape == (2, 1, side, side), out.shape
    assert bool(jnp.all(jnp.isfinite(out)))
    assert bool(jnp.all((out >= 0.0) & (out <= 1.0)))  # sigmoid range
    print("KERNEL_OK")
</pallas_src>

<mosaic_0001>
module attributes {stable_mosaic.version = 11 : i64} {
  func.func @_mm_single_kernel(%arg0: i32, %arg1: i32, %arg2: memref<8x128xbf16, #tpu.memory_space<vmem>>, %arg3: memref<128x512xbf16, #tpu.memory_space<vmem>>, %arg4: memref<1x512xf32, #tpu.memory_space<vmem>>, %arg5: memref<8x512xbf16, #tpu.memory_space<vmem>>) attributes {dimension_semantics = [#tpu.dimension_semantics<parallel>, #tpu.dimension_semantics<parallel>], iteration_bounds = array<i64: 1, 2>, scalar_prefetch = 0 : i64, scratch_operands = 0 : i64, tpu.core_type = #tpu.core_type<tc>, window_params = [{transform_indices = @transform_0, window_bounds = array<i64: 8, 128>}, {transform_indices = @transform_1, window_bounds = array<i64: 128, 512>}, {transform_indices = @transform_2, window_bounds = array<i64: 1, 512>}, {transform_indices = @transform_3, window_bounds = array<i64: 8, 512>}]} {
    %c0 = arith.constant 0 : index
    %c0_0 = arith.constant 0 : index
    %0 = vector.load %arg2[%c0, %c0_0] : memref<8x128xbf16, #tpu.memory_space<vmem>>, vector<8x128xbf16>
    %c0_1 = arith.constant 0 : index
    %c0_2 = arith.constant 0 : index
    %1 = vector.load %arg3[%c0_1, %c0_2] : memref<128x512xbf16, #tpu.memory_space<vmem>>, vector<128x512xbf16>
    %cst = arith.constant dense<0.000000e+00> : vector<8x512xf32>
    %2 = tpu.matmul %0, %1, %cst {dimension_numbers = #tpu.dot_dimension_numbers<[1], [0], [0], [1], [0, 0, 1, 1], [], []>} : vector<8x128xbf16>, vector<128x512xbf16>, vector<8x512xf32> -> vector<8x512xf32>
    %c0_3 = arith.constant 0 : index
    %c0_4 = arith.constant 0 : index
    %3 = vector.load %arg4[%c0_3, %c0_4] : memref<1x512xf32, #tpu.memory_space<vmem>>, vector<1x512xf32>
    %4 = vector.broadcast %3 : vector<1x512xf32> to vector<8x512xf32>
    %5 = arith.addf %2, %4 : vector<8x512xf32>
    %cst_5 = arith.constant 0.000000e+00 : f32
    %6 = vector.broadcast %cst_5 : f32 to vector<8x512xf32>
    %7 = arith.maximumf %5, %6 : vector<8x512xf32>
    %8 = arith.truncf %7 : vector<8x512xf32> to vector<8x512xbf16>
    %c0_6 = arith.constant 0 : index
    %c0_7 = arith.constant 0 : index
    %9 = vector.load %arg5[%c0_6, %c0_7] : memref<8x512xbf16, #tpu.memory_space<vmem>>, vector<8x512xbf16>
    tpu.vector_store %arg5[%c0_6, %c0_7], %8 {strides = array<i32>} : memref<8x512xbf16, #tpu.memory_space<vmem>>, vector<8x512xbf16>,
    return
  }
  func.func @transform_0(%arg0: i32, %arg1: i32) -> (i32, i32) {
    %c0_i32 = arith.constant 0 : i32
    %c0_i32_0 = arith.constant 0 : i32
    return %arg0, %c0_i32 : i32, i32
  }
  func.func @transform_1(%arg0: i32, %arg1: i32) -> (i32, i32) {
    %c0_i32 = arith.constant 0 : i32
    %c0_i32_0 = arith.constant 0 : i32
    return %c0_i32, %arg1 : i32, i32
  }
  func.func @transform_2(%arg0: i32, %arg1: i32) -> (i32, i32) {
    %c0_i32 = arith.constant 0 : i32
    %c0_i32_0 = arith.constant 0 : i32
    return %c0_i32, %arg1 : i32, i32
  }
  func.func @transform_3(%arg0: i32, %arg1: i32) -> (i32, i32) {
    %c0_i32 = arith.constant 0 : i32
    return %arg0, %arg1 : i32, i32
  }
}

module attributes {stable_mosaic.version = 11 : i64} {
  func.func @_mm_single_kernel(%arg0: i32, %arg1: i32, %arg2: memref<56x256xbf16, #tpu.memory_space<vmem>>, %arg3: memref<256x128xbf16, #tpu.memory_space<vmem>>, %arg4: memref<1x128xf32, #tpu.memory_space<vmem>>, %arg5: memref<56x128xbf16, #tpu.memory_space<vmem>>) attributes {dimension_semantics = [#tpu.dimension_semantics<parallel>, #tpu.dimension_semantics<parallel>], iteration_bounds = array<i64: 1, 1>, scalar_prefetch = 0 : i64, scratch_operands = 0 : i64, tpu.core_type = #tpu.core_type<tc>, window_params = [{transform_indices = @transform_0, window_bounds = array<i64: 56, 256>}, {transform_indices = @transform_1, window_bounds = array<i64: 256, 128>}, {transform_indices = @transform_2, window_bounds = array<i64: 1, 128>}, {transform_indices = @transform_3, window_bounds = array<i64: 56, 128>}]} {
    %c0 = arith.constant 0 : index
    %c0_0 = arith.constant 0 : index
    %0 = vector.load %arg2[%c0, %c0_0] : memref<56x256xbf16, #tpu.memory_space<vmem>>, vector<56x256xbf16>
    %c0_1 = arith.constant 0 : index
    %c0_2 = arith.constant 0 : index
    %1 = vector.load %arg3[%c0_1, %c0_2] : memref<256x128xbf16, #tpu.memory_space<vmem>>, vector<256x128xbf16>
    %cst = arith.constant dense<0.000000e+00> : vector<56x128xf32>
    %2 = tpu.matmul %0, %1, %cst {dimension_numbers = #tpu.dot_dimension_numbers<[1], [0], [0], [1], [0, 0, 1, 1], [], []>} : vector<56x256xbf16>, vector<256x128xbf16>, vector<56x128xf32> -> vector<56x128xf32>
    %c0_3 = arith.constant 0 : index
    %c0_4 = arith.constant 0 : index
    %3 = vector.load %arg4[%c0_3, %c0_4] : memref<1x128xf32, #tpu.memory_space<vmem>>, vector<1x128xf32>
    %4 = vector.broadcast %3 : vector<1x128xf32> to vector<56x128xf32>
    %5 = arith.addf %2, %4 : vector<56x128xf32>
    %cst_5 = arith.constant 0.000000e+00 : f32
    %6 = vector.broadcast %cst_5 : f32 to vector<56x128xf32>
    %7 = arith.maximumf %5, %6 : vector<56x128xf32>
    %8 = arith.truncf %7 : vector<56x128xf32> to vector<56x128xbf16>
    %c0_6 = arith.constant 0 : index
    %c0_7 = arith.constant 0 : index
    %9 = vector.load %arg5[%c0_6, %c0_7] : memref<56x128xbf16, #tpu.memory_space<vmem>>, vector<56x128xbf16>
    tpu.vector_store %arg5[%c0_6, %c0_7], %8 {strides = array<i32>} : memref<56x128xbf16, #tpu.memory_space<vmem>>, vector<56x128xbf16>,
    return
  }
  func.func @transform_0(%arg0: i32, %arg1: i32) -> (i32, i32) {
    %c0_i32 = arith.constant 0 : i32
    %c0_i32_0 = arith.constant 0 : i32
    return %arg0, %c0_i32 : i32, i32
  }
  func.func @transform_1(%arg0: i32, %arg1: i32) -> (i32, i32) {
    %c0_i32 = arith.constant 0 : i32
    %c0_i32_0 = arith.constant 0 : i32
    return %c0_i32, %arg1 : i32, i32
  }
  func.func @transform_2(%arg0: i32, %arg1: i32) -> (i32, i32) {
    %c0_i32 = arith.constant 0 : i32
    %c0_i32_0 = arith.constant 0 : i32
    return %c0_i32, %arg1 : i32, i32
  }
  func.func @transform_3(%arg0: i32, %arg1: i32) -> (i32, i32) {
    %c0_i32 = arith.constant 0 : i32
    return %arg0, %arg1 : i32, i32
  }
}

module attributes {stable_mosaic.version = 11 : i64} {
  func.func @_mm_single_kernel(%arg0: i32, %arg1: i32, %arg2: memref<168x128xbf16, #tpu.memory_space<vmem>>, %arg3: memref<128x128xbf16, #tpu.memory_space<vmem>>, %arg4: memref<1x128xf32, #tpu.memory_space<vmem>>, %arg5: memref<168x128xbf16, #tpu.memory_space<vmem>>) attributes {dimension_semantics = [#tpu.dimension_semantics<parallel>, #tpu.dimension_semantics<parallel>], iteration_bounds = array<i64: 1, 1>, scalar_prefetch = 0 : i64, scratch_operands = 0 : i64, tpu.core_type = #tpu.core_type<tc>, window_params = [{transform_indices = @transform_0, window_bounds = array<i64: 168, 128>}, {transform_indices = @transform_1, window_bounds = array<i64: 128, 128>}, {transform_indices = @transform_2, window_bounds = array<i64: 1, 128>}, {transform_indices = @transform_3, window_bounds = array<i64: 168, 128>}]} {
    %c0 = arith.constant 0 : index
    %c0_0 = arith.constant 0 : index
    %0 = vector.load %arg2[%c0, %c0_0] : memref<168x128xbf16, #tpu.memory_space<vmem>>, vector<168x128xbf16>
    %c0_1 = arith.constant 0 : index
    %c0_2 = arith.constant 0 : index
    %1 = vector.load %arg3[%c0_1, %c0_2] : memref<128x128xbf16, #tpu.memory_space<vmem>>, vector<128x128xbf16>
    %cst = arith.constant dense<0.000000e+00> : vector<168x128xf32>
    %2 = tpu.matmul %0, %1, %cst {dimension_numbers = #tpu.dot_dimension_numbers<[1], [0], [0], [1], [0, 0, 1, 1], [], []>} : vector<168x128xbf16>, vector<128x128xbf16>, vector<168x128xf32> -> vector<168x128xf32>
    %c0_3 = arith.constant 0 : index
    %c0_4 = arith.constant 0 : index
    %3 = vector.load %arg4[%c0_3, %c0_4] : memref<1x128xf32, #tpu.memory_space<vmem>>, vector<1x128xf32>
    %4 = vector.broadcast %3 : vector<1x128xf32> to vector<168x128xf32>
    %5 = arith.addf %2, %4 : vector<168x128xf32>
    %cst_5 = arith.constant 0.000000e+00 : f32
    %6 = vector.broadcast %cst_5 : f32 to vector<168x128xf32>
    %7 = arith.maximumf %5, %6 : vector<168x128xf32>
    %8 = arith.truncf %7 : vector<168x128xf32> to vector<168x128xbf16>
    %c0_6 = arith.constant 0 : index
    %c0_7 = arith.constant 0 : index
    %9 = vector.load %arg5[%c0_6, %c0_7] : memref<168x128xbf16, #tpu.memory_space<vmem>>, vector<168x128xbf16>
    tpu.vector_store %arg5[%c0_6, %c0_7], %8 {strides = array<i32>} : memref<168x128xbf16, #tpu.memory_space<vmem>>, vector<168x128xbf16>,
    return
  }
  func.func @transform_0(%arg0: i32, %arg1: i32) -> (i32, i32) {
    %c0_i32 = arith.constant 0 : i32
    %c0_i32_0 = arith.constant 0 : i32
    return %arg0, %c0_i32 : i32, i32
  }
  func.func @transform_1(%arg0: i32, %arg1: i32) -> (i32, i32) {
    %c0_i32 = arith.constant 0 : i32
    %c0_i32_0 = arith.constant 0 : i32
    return %c0_i32, %arg1 : i32, i32
  }
  func.func @transform_2(%arg0: i32, %arg1: i32) -> (i32, i32) {
    %c0_i32 = arith.constant 0 : i32
    %c0_i32_0 = arith.constant 0 : i32
    return %c0_i32, %arg1 : i32, i32
  }
  func.func @transform_3(%arg0: i32, %arg1: i32) -> (i32, i32) {
    %c0_i32 = arith.constant 0 : i32
    return %arg0, %arg1 : i32, i32
  }
}

module attributes {stable_mosaic.version = 11 : i64} {
  func.func @_mm_single_kernel(%arg0: i32, %arg1: i32, %arg2: memref<584x64xbf16, #tpu.memory_space<vmem>>, %arg3: memref<64x128xbf16, #tpu.memory_space<vmem>>, %arg4: memref<1x128xf32, #tpu.memory_space<vmem>>, %arg5: memref<584x128xbf16, #tpu.memory_space<vmem>>) attributes {dimension_semantics = [#tpu.dimension_semantics<parallel>, #tpu.dimension_semantics<parallel>], iteration_bounds = array<i64: 1, 1>, scalar_prefetch = 0 : i64, scratch_operands = 0 : i64, tpu.core_type = #tpu.core_type<tc>, window_params = [{transform_indices = @transform_0, window_bounds = array<i64: 584, 64>}, {transform_indices = @transform_1, window_bounds = array<i64: 64, 128>}, {transform_indices = @transform_2, window_bounds = array<i64: 1, 128>}, {transform_indices = @transform_3, window_bounds = array<i64: 584, 128>}]} {
    %c0 = arith.constant 0 : index
    %c0_0 = arith.constant 0 : index
    %0 = vector.load %arg2[%c0, %c0_0] : memref<584x64xbf16, #tpu.memory_space<vmem>>, vector<584x64xbf16>
    %c0_1 = arith.constant 0 : index
    %c0_2 = arith.constant 0 : index
    %1 = vector.load %arg3[%c0_1, %c0_2] : memref<64x128xbf16, #tpu.memory_space<vmem>>, vector<64x128xbf16>
    %cst = arith.constant dense<0.000000e+00> : vector<584x128xf32>
    %2 = tpu.matmul %0, %1, %cst {dimension_numbers = #tpu.dot_dimension_numbers<[1], [0], [0], [1], [0, 0, 1, 1], [], []>} : vector<584x64xbf16>, vector<64x128xbf16>, vector<584x128xf32> -> vector<584x128xf32>
    %c0_3 = arith.constant 0 : index
    %c0_4 = arith.constant 0 : index
    %3 = vector.load %arg4[%c0_3, %c0_4] : memref<1x128xf32, #tpu.memory_space<vmem>>, vector<1x128xf32>
    %4 = vector.broadcast %3 : vector<1x128xf32> to vector<584x128xf32>
    %5 = arith.addf %2, %4 : vector<584x128xf32>
    %cst_5 = arith.constant 0.000000e+00 : f32
    %6 = vector.broadcast %cst_5 : f32 to vector<584x128xf32>
    %7 = arith.maximumf %5, %6 : vector<584x128xf32>
    %8 = arith.truncf %7 : vector<584x128xf32> to vector<584x128xbf16>
    %c0_6 = arith.constant 0 : index
    %c0_7 = arith.constant 0 : index
    %9 = vector.load %arg5[%c0_6, %c0_7] : memref<584x128xbf16, #tpu.memory_space<vmem>>, vector<584x128xbf16>
    tpu.vector_store %arg5[%c0_6, %c0_7], %8 {strides = array<i32>} : memref<584x128xbf16, #tpu.memory_space<vmem>>, vector<584x128xbf16>,
    return
  }
  func.func @transform_0(%arg0: i32, %arg1: i32) -> (i32, i32) {
    %c0_i32 = arith.constant 0 : i32
    %c0_i32_0 = arith.constant 0 : i32
    return %arg0, %c0_i32 : i32, i32
  }
  func.func @transform_1(%arg0: i32, %arg1: i32) -> (i32, i32) {
    %c0_i32 = arith.constant 0 : i32
    %c0_i32_0 = arith.constant 0 : i32
    return %c0_i32, %arg1 : i32, i32
  }
  func.func @transform_2(%arg0: i32, %arg1: i32) -> (i32, i32) {
    %c0_i32 = arith.constant 0 : i32
    %c0_i32_0 = arith.constant 0 : i32
    return %c0_i32, %arg1 : i32, i32
  }
  func.func @transform_3(%arg0: i32, %arg1: i32) -> (i32, i32) {
    %c0_i32 = arith.constant 0 : i32
    return %arg0, %arg1 : i32, i32
  }
}

module attributes {stable_mosaic.version = 11 : i64} {
  func.func @_mm_single_kernel(%arg0: i32, %arg1: i32, %arg2: memref<2048x72xbf16, #tpu.memory_space<vmem>>, %arg3: memref<72x128xbf16, #tpu.memory_space<vmem>>, %arg4: memref<1x128xf32, #tpu.memory_space<vmem>>, %arg5: memref<2048x128xf32, #tpu.memory_space<vmem>>) attributes {dimension_semantics = [#tpu.dimension_semantics<parallel>, #tpu.dimension_semantics<parallel>], iteration_bounds = array<i64: 1, 1>, scalar_prefetch = 0 : i64, scratch_operands = 0 : i64, tpu.core_type = #tpu.core_type<tc>, window_params = [{transform_indices = @transform_0, window_bounds = array<i64: 2048, 72>}, {transform_indices = @transform_1, window_bounds = array<i64: 72, 128>}, {transform_indices = @transform_2, window_bounds = array<i64: 1, 128>}, {transform_indices = @transform_3, window_bounds = array<i64: 2048, 128>}]} {
    %c0 = arith.constant 0 : index
    %c0_0 = arith.constant 0 : index
    %0 = vector.load %arg2[%c0, %c0_0] : memref<2048x72xbf16, #tpu.memory_space<vmem>>, vector<2048x72xbf16>
    %c0_1 = arith.constant 0 : index
    %c0_2 = arith.constant 0 : index
    %1 = vector.load %arg3[%c0_1, %c0_2] : memref<72x128xbf16, #tpu.memory_space<vmem>>, vector<72x128xbf16>
    %cst = arith.constant dense<0.000000e+00> : vector<2048x128xf32>
    %2 = tpu.matmul %0, %1, %cst {dimension_numbers = #tpu.dot_dimension_numbers<[1], [0], [0], [1], [0, 0, 1, 1], [], []>} : vector<2048x72xbf16>, vector<72x128xbf16>, vector<2048x128xf32> -> vector<2048x128xf32>
    %c0_3 = arith.constant 0 : index
    %c0_4 = arith.constant 0 : index
    %3 = vector.load %arg4[%c0_3, %c0_4] : memref<1x128xf32, #tpu.memory_space<vmem>>, vector<1x128xf32>
    %4 = vector.broadcast %3 : vector<1x128xf32> to vector<2048x128xf32>
    %5 = arith.addf %2, %4 : vector<2048x128xf32>
    %6 = arith.negf %5 : vector<2048x128xf32>
    %7 = math.exp %6 : vector<2048x128xf32>
    %cst_5 = arith.constant 1.000000e+00 : f32
    %8 = vector.broadcast %cst_5 : f32 to vector<2048x128xf32>
    %9 = arith.addf %8, %7 : vector<2048x128xf32>
    %10 = arith.divf %8, %9 : vector<2048x128xf32>
    %c0_6 = arith.constant 0 : index
    %c0_7 = arith.constant 0 : index
    %11 = vector.load %arg5[%c0_6, %c0_7] : memref<2048x128xf32, #tpu.memory_space<vmem>>, vector<2048x128xf32>
    tpu.vector_store %arg5[%c0_6, %c0_7], %10 {strides = array<i32>} : memref<2048x128xf32, #tpu.memory_space<vmem>>, vector<2048x128xf32>,
    return
  }
  func.func @transform_0(%arg0: i32, %arg1: i32) -> (i32, i32) {
    %c0_i32 = arith.constant 0 : i32
    %c0_i32_0 = arith.constant 0 : i32
    return %arg0, %c0_i32 : i32, i32
  }
  func.func @transform_1(%arg0: i32, %arg1: i32) -> (i32, i32) {
    %c0_i32 = arith.constant 0 : i32
    %c0_i32_0 = arith.constant 0 : i32
    return %c0_i32, %arg1 : i32, i32
  }
  func.func @transform_2(%arg0: i32, %arg1: i32) -> (i32, i32) {
    %c0_i32 = arith.constant 0 : i32
    %c0_i32_0 = arith.constant 0 : i32
    return %c0_i32, %arg1 : i32, i32
  }
  func.func @transform_3(%arg0: i32, %arg1: i32) -> (i32, i32) {
    %c0_i32 = arith.constant 0 : i32
    return %arg0, %arg1 : i32, i32
  }
}

</mosaic_0001>

<llo_original>
// kernel: mul.13
$region0: #{mul.13}
  %s0 = inlined_call_operand.vmem [shape: f32[4,32], index: 0, kind: input, shape index: {}]
  %s1 = inlined_call_operand.vmem [shape: f32[128], index: 1, kind: output, shape index: {}]
  $region1: #{mul.13} parent=0
    #allocation0 [shape = 'u8[4096]{0}', space=vmem, size = 0x1000, scoped, tag = 'scoped mem for output reshape']
    #allocation1 [shape = 'u8[4096]{0}', space=vmem, size = 0x1000, scoped, tag = 'scoped mem for input reshape']
    %s3 = sshll.u32 1, 4
    %s4 = ssub.s32 %s3, 1
    %v5 = vld [vmem:[%s0] sm:%s4]
    %6 = vst [vmem:[#allocation1] sm:%s4] %v5
    %v7 = vld [vmem:[#allocation1] sm:$0x1]
    %vm8 = vcmask 261120
    %9 = vst.msk [vmem:[#allocation0] sm:$0x1] %vm8, %v7
    %s10 = scalar_lea.vmem [#allocation1], 3
    %v11 = vld [vmem:[%s10] sm:$0x1]
    %12 = vrot.lane.b32.xlu0 %v11, 96
    %v13 = vpop.permute.xlu0 %12
    %vm14 = vcmask 1048320
    %15 = vst.msk [vmem:[#allocation0] sm:$0x1] %vm14, %v13
    %s16 = scalar_lea.vmem [#allocation1], 2
    %v17 = vld [vmem:[%s16] sm:$0x1]
    %18 = vrot.lane.b32.xlu0 %v17, 64
    %v19 = vpop.permute.xlu0 %18
    %vm20 = vcmask 785920
    %21 = vst.msk [vmem:[#allocation0] sm:$0x1] %vm20, %v19
    %s22 = scalar_lea.vmem [#allocation1], 1
    %v23 = vld [vmem:[%s22] sm:$0x1]
    %24 = vrot.lane.b32.xlu0 %v23, 32
    %v25 = vpop.permute.xlu0 %24
    %vm26 = vcmask 523520
    %27 = vst.msk [vmem:[#allocation0] sm:$0x1] %vm26, %v25
    %s29 = sshll.u32 1, 1
    %s30 = ssub.s32 %s29, 1
    %v32 = vld [vmem:[#allocation0] sm:%s30]
    %s33 = sshll.u32 1, 1
    %s34 = ssub.s32 %s33, 1
    %35 = vst [vmem:[%s1] sm:%s34] %v32

// kernel: tile.33
$region0: #{tile.33}
  #allocation0 [shape = 's32[1]{0}', space=sflag, size = 0x4, scoped, tag = 'scoped memory for tile.33']
  %s0 = inlined_call_operand.vmem [shape: f32[32], index: 0, kind: input, shape index: {}]
  %s1 = inlined_call_operand.vmem [shape: f32[4,32], index: 1, kind: output, shape index: {}]
  // Predicated region
  $region2: #{tile.33} parent=0 // pred_check
    _
  $region3: #{tile.33} parent=0 // pred_check_branch
    %3 = sbr.rel (0) target = $region5
  $region4: #{tile.33} parent=0 // pred_region
    _
  $region5: #{tile.33} parent=0 // pred_fallthru
    _
  %v4 = vld [vmem:[%s0] ss:$0 sm:$0xff]
  %5 = vst [vmem:[%s1] sm:$0xf] %v4

// kernel: decoder_forward.5
$region0: #{decoder_forward.5}
  #allocation0 [shape = 'u32[]', space=smem, size = 0x4, offset = 0x4, fixed_abs, tag = 'smem constant byte address 0x4 - core index']
  #allocation1 [shape = 'u32[144,128]{1,0:T(1,128)}', space=vmem, size = 0x12000, scoped, tag = 'internal scratch']
  %s0 = inlined_call_operand.vmem [shape: bf16[8,128], index: 0, kind: input, shape index: {}]
  %s1 = inlined_call_operand.vmem [shape: bf16[128,1024], index: 1, kind: input, shape index: {}]
  %s2 = inlined_call_operand.vmem [shape: f32[1,1024], index: 2, kind: input, shape index: {}]
  %s3 = inlined_call_operand.vmem [shape: bf16[8,1024], index: 3, kind: output, shape index: {}]
  %s4 = sld [smem:[#allocation0]]
  $region68: #{decoder_forward.5} parent=0
    _
  %s6 = ssub.s32 1, %s4
  %s7 = scalar_select 0, %s6, %s4
  $region1: #{decoder_forward.5} parent=0
    #allocation2 [shape = 'u8[262144]{0}', space=vmem, size = 0x40000, scoped, tag = 'input window, operand 1']
    loop: start=0, step=1, limit=4
    $region2: #{decoder_forward.5} parent=1 // loop_pre_header
      _
    $region3: #{decoder_forward.5} parent=1 // loop_header
      %s9 = sphi 0, %s13
      %p10 = scmp.ge.s32.totalorder %s9, 4
      %s16 = sphi 0, %s28
      %s17 = sphi 0, %s24
      %s18 = sphi 0, %s16
      %s19 = sphi 0, %s17
      %s20 = sphi 0, %s18
      %s21 = sphi 0, %s19
      %s31 = sphi 0, %s33
      %s34 = sphi 0, %s31
      %s35 = sphi 0, %s34
      %s51 = sphi 0, %s35
      %s57 = sphi 0, %s59
      %s60 = sphi 0, %s57
      %s61 = sphi 0, %s60
      %s77 = sphi 0, %s61
      %s83 = sphi 0, %s85
      %s86 = sphi 0, %s83
      %s87 = sphi 0, %s86
      %s103 = sphi 0, %s87
      %s111 = sphi 0, %s113
      %s114 = sphi 0, %s111
      %s115 = sphi 0, %s114
      %s131 = sphi 0, %s115
    $region4: #{decoder_forward.5} parent=1 // loop_header_branch
      %12 = sbr.rel (%p10) target = $region8
    $region5: #{decoder_forward.5} parent=1 // loop_body
      %s14 = ssub.s32 %s9, 1
      %s15 = ssub.s32 %s9, 2
      %s22 = sadd.s32 1, %s17
      %p23 = scmp.ge.s32.totalorder %s22, 2
      %s24 = scalar_select %p23, 0, %s22
      %s25 = sadd.s32 1, %s16
      %s26 = scalar_select %p23, %s25, %s16
      %p27 = scmp.ge.s32.totalorder %s26, 1
      %s28 = scalar_select %p27, 0, %s26
      %s29 = ssub.s32 %s16, %s28
      %p30 = scmp.eq.s32.totalorder %s29, 0
      %s32 = sadd.s32 %s31, 1
      %s33 = scalar_select %p30, %s31, %s32
      %p36 = pneg %p30
      %p37 = scmp.eq.s32.totalorder %s9, 1
      %p38 = por %p36, %p37
      %p39 = scmp.ne.s32.totalorder %s31, %s34
      %p40 = scmp.eq.s32.totalorder %s9, 0
      %p41 = por %p39, %p40
      %p42 = scmp.ne.s32.totalorder %s31, %s34
      %p43 = scmp.eq.s32.totalorder %s14, 1
      %p44 = por %p42, %p43
      %p45 = scmp.ne.s32.totalorder %s34, %s35
      %p46 = scmp.eq.s32.totalorder %s14, 0
      %p47 = por %p45, %p46
      %p48 = scmp.ne.s32.totalorder %s34, %s35
      %p49 = scmp.eq.s32.totalorder %s15, 1
      %p50 = por %p48, %p49
      %p52 = scmp.ne.s32.totalorder %s35, %s51
      %p53 = scmp.eq.s32.totalorder %s15, 0
      %p54 = por %p52, %p53
      %s55 = ssub.s32 %s17, %s24
      %p56 = scmp.eq.s32.totalorder %s55, 0
      %s58 = sadd.s32 %s57, 1
      %s59 = scalar_select %p56, %s57, %s58
      %p62 = pneg %p56
      %p63 = scmp.eq.s32.totalorder %s9, 1
      %p64 = por %p62, %p63
      %p65 = scmp.ne.s32.totalorder %s57, %s60
      %p66 = scmp.eq.s32.totalorder %s9, 0
      %p67 = por %p65, %p66
      %p68 = scmp.ne.s32.totalorder %s57, %s60
      %p69 = scmp.eq.s32.totalorder %s14, 1
      %p70 = por %p68, %p69
      %p71 = scmp.ne.s32.totalorder %s60, %s61
      %p72 = scmp.eq.s32.totalorder %s14, 0
      %p73 = por %p71, %p72
      %p74 = scmp.ne.s32.totalorder %s60, %s61
      %p75 = scmp.eq.s32.totalorder %s15, 1
      %p76 = por %p74, %p75
      %p78 = scmp.ne.s32.totalorder %s61, %s77
      %p79 = scmp.eq.s32.totalorder %s15, 0
      %p80 = por %p78, %p79
      %s81 = ssub.s32 %s17, %s24
      %p82 = scmp.eq.s32.totalorder %s81, 0
      %s84 = sadd.s32 %s83, 1
      %s85 = scalar_select %p82, %s83, %s84
      %p88 = pneg %p82
      %p89 = scmp.eq.s32.totalorder %s9, 1
      %p90 = por %p88, %p89
      %p91 = scmp.ne.s32.totalorder %s83, %s86
      %p92 = scmp.eq.s32.totalorder %s9, 0
      %p93 = por %p91, %p92
      %p94 = scmp.ne.s32.totalorder %s83, %s86
      %p95 = scmp.eq.s32.totalorder %s14, 1
      %p96 = por %p94, %p95
      %p97 = scmp.ne.s32.totalorder %s86, %s87
      %p98 = scmp.eq.s32.totalorder %s14, 0
      %p99 = por %p97, %p98
      %p100 = scmp.ne.s32.totalorder %s86, %s87
      %p101 = scmp.eq.s32.totalorder %s15, 1
      %p102 = por %p100, %p101
      %p104 = scmp.ne.s32.totalorder %s87, %s103
      %p105 = scmp.eq.s32.totalorder %s15, 0
      %p106 = por %p104, %p105
      %s107 = ssub.s32 %s16, %s28
      %s108 = ssub.s32 %s17, %s24
      %s109 = sor.u32 %s107, %s108
      %p110 = scmp.eq.s32.totalorder %s109, 0
      %s112 = sadd.s32 %s111, 1
      %s113 = scalar_select %p110, %s111, %s112
      %p116 = pneg %p110
      %p117 = scmp.eq.s32.totalorder %s9, 1
      %p118 = por %p116, %p117
      %p119 = scmp.ne.s32.totalorder %s111, %s114
      %p120 = scmp.eq.s32.totalorder %s9, 0
      %p121 = por %p119, %p120
      %p122 = scmp.ne.s32.totalorder %s111, %s114
      %p123 = scmp.eq.s32.totalorder %s14, 1
      %p124 = por %p122, %p123
      %p125 = scmp.ne.s32.totalorder %s114, %s115
      %p126 = scmp.eq.s32.totalorder %s14, 0
      %p127 = por %p125, %p126
      %p128 = scmp.ne.s32.totalorder %s114, %s115
      %p129 = scmp.eq.s32.totalorder %s15, 1
      %p130 = por %p128, %p129
      %p132 = scmp.ne.s32.totalorder %s115, %s131
      %p133 = scmp.eq.s32.totalorder %s15, 0
      %p134 = por %p132, %p133
      %p135 = scmp.le.s32.totalorder 1, %s9
      %p136 = scmp.lt.s32.totalorder %s9, 3
      %p137 = pnand %p135, %p136
      %p138 = pneg %p137
      // Predicated region
      $region9: #{decoder_forward.5} parent=5 // pred_check
        _
      $region10: #{decoder_forward.5} parent=5 // pred_check_branch
        %140 = sbr.rel (%p137) target = $region12
      $region11: #{decoder_forward.5} parent=5 // pred_region
        %s141 = ssub.s32 %s9, 1
        // Predicated region
        $region13: #{decoder_forward.5} parent=11 // pred_check
          %p142 = pneg %p47
        $region14: #{decoder_forward.5} parent=11 // pred_check_branch
          %144 = sbr.rel (%p142) target = $region16
        $region15: #{decoder_forward.5} parent=11 // pred_region
          %p145 = scmp.lt.s32.totalorder %s18, 0
          %s146 = scalar_select %p145, %s18, 0
          %s147 = smul.addr %s146, 4
          %s148 = scalar_lea.vmem %s0, %s147
        $region16: #{decoder_forward.5} parent=11 // pred_fallthru
          _
      $region12: #{decoder_forward.5} parent=5 // pred_fallthru
        _
      %p149 = scmp.lt.s32.totalorder %s9, 2
      // Predicated region
      $region17: #{decoder_forward.5} parent=5 // pred_check
        %p150 = pneg %p149
      $region18: #{decoder_forward.5} parent=5 // pred_check_branch
        %152 = sbr.rel (%p150) target = $region20
      $region19: #{decoder_forward.5} parent=5 // pred_region
        // Predicated region
        $region21: #{decoder_forward.5} parent=19 // pred_check
          %p153 = pneg %p67
        $region22: #{decoder_forward.5} parent=19 // pred_check_branch
          %155 = sbr.rel (%p153) target = $region24
        $region23: #{decoder_forward.5} parent=19 // pred_region
          %s156 = sand.u32 %s57, 1
          %s157 = sand.u32 %s57, 1
          %s158 = smul.addr %s157, 256
          %s159 = scalar_lea.vmem [#allocation2], %s158
          %s160 = smul.u32 4, %s17
          %s161 = smul.addr %s160, 4
          %s162 = scalar_lea.vmem %s1, %s161
          // Predicated region
          $region25: #{decoder_forward.5} parent=23 // pred_check
            _
          $region26: #{decoder_forward.5} parent=23 // pred_check_branch
            %164 = sbr.rel (0) target = $region28
          $region27: #{decoder_forward.5} parent=23 // pred_region
            // Predicated region
            $region29: #{decoder_forward.5} parent=27 // pred_check
              _
            $region30: #{decoder_forward.5} parent=27 // pred_check_branch
              %166 = sbr.rel (0) target = $region32
            $region31: #{decoder_forward.5} parent=27 // pred_region
              loop: start=0, step=1, limit=1
              $region33: #{decoder_forward.5} parent=31 // loop_pre_header
                _
              $region34: #{decoder_forward.5} parent=31 // loop_header
                %s168 = sphi 0, %s172
                %p169 = scmp.ge.s32.totalorder %s168, 1
                %s173 = sphi %s162, %s162
                %s174 = sphi %s159, %s159
              $region35: #{decoder_forward.5} parent=31 // loop_header_branch
                %171 = sbr.rel (%p169) target = $region39
              $region36: #{decoder_forward.5} parent=31 // loop_body
                %v175 = vld [vmem:[%s173] sm:$0xff]
                %176 = vst [vmem:[%s174] sm:$0xff] %v175
                %v177 = vld [vmem:[%s173 + $0x8] sm:$0xff]
                %178 = vst [vmem:[%s174 + $0x8] sm:$0xff] %v177
                %v179 = vld [vmem:[%s173 + $0x20] sm:$0xff]
                %180 = vst [vmem:[%s174 + $0x10] sm:$0xff] %v179
                %v181 = vld [vmem:[%s173 + $0x28] sm:$0xff]
                %182 = vst [vmem:[%s174 + $0x18] sm:$0xff] %v181
                %v183 = vld [vmem:[%s173 + $0x40] sm:$0xff]
                %184 = vst [vmem:[%s174 + $0x20] sm:$0xff] %v183
                %v185 = vld [vmem:[%s173 + $0x48] sm:$0xff]
                %186 = vst [vmem:[%s174 + $0x28] sm:$0xff] %v185
                %v187 = vld [vmem:[%s173 + $0x60] sm:$0xff]
                %188 = vst [vmem:[%s174 + $0x30] sm:$0xff] %v187
                %v189 = vld [vmem:[%s173 + $0x68] sm:$0xff]
                %190 = vst [vmem:[%s174 + $0x38] sm:$0xff] %v189
                %v191 = vld [vmem:[%s173 + $0x80] sm:$0xff]
                %192 = vst [vmem:[%s174 + $0x40] sm:$0xff] %v191
                %v193 = vld [vmem:[%s173 + $0x88] sm:$0xff]
                %194 = vst [vmem:[%s174 + $0x48] sm:$0xff] %v193
                %v195 = vld [vmem:[%s173 + $0xa0] sm:$0xff]
                %196 = vst [vmem:[%s174 + $0x50] sm:$0xff] %v195
                %v197 = vld [vmem:[%s173 + $0xa8] sm:$0xff]
                %198 = vst [vmem:[%s174 + $0x58] sm:$0xff] %v197
                %v199 = vld [vmem:[%s173 + $0xc0] sm:$0xff]
                %200 = vst [vmem:[%s174 + $0x60] sm:$0xff] %v199
                %v201 = vld [vmem:[%s173 + $0xc8] sm:$0xff]
                %202 = vst [vmem:[%s174 + $0x68] sm:$0xff] %v201
                %v203 = vld [vmem:[%s173 + $0xe0] sm:$0xff]
                %204 = vst [vmem:[%s174 + $0x70] sm:$0xff] %v203
                %v205 = vld [vmem:[%s173 + $0xe8] sm:$0xff]
                %206 = vst [vmem:[%s174 + $0x78] sm:$0xff] %v205
                %v207 = vld [vmem:[%s173 + $0x100] sm:$0xff]
                %208 = vst [vmem:[%s174 + $0x80] sm:$0xff] %v207
                %v209 = vld [vmem:[%s173 + $0x108] sm:$0xff]
                %210 = vst [vmem:[%s174 + $0x88] sm:$0xff] %v209
                %v211 = vld [vmem:[%s173 + $0x120] sm:$0xff]
                %212 = vst [vmem:[%s174 + $0x90] sm:$0xff] %v211
                %v213 = vld [vmem:[%s173 + $0x128] sm:$0xff]
                %214 = vst [vmem:[%s174 + $0x98] sm:$0xff] %v213
                %v215 = vld [vmem:[%s173 + $0x140] sm:$0xff]
                %216 = vst [vmem:[%s174 + $0xa0] sm:$0xff] %v215
                %v217 = vld [vmem:[%s173 + $0x148] sm:$0xff]
                %218 = vst [vmem:[%s174 + $0xa8] sm:$0xff] %v217
                %v219 = vld [vmem:[%s173 + $0x160] sm:$0xff]
                %220 = vst [vmem:[%s174 + $0xb0] sm:$0xff] %v219
                %v221 = vld [vmem:[%s173 + $0x168] sm:$0xff]
                %222 = vst [vmem:[%s174 + $0xb8] sm:$0xff] %v221
                %v223 = vld [vmem:[%s173 + $0x180] sm:$0xff]
                %224 = vst [vmem:[%s174 + $0xc0] sm:$0xff] %v223
                %v225 = vld [vmem:[%s173 + $0x188] sm:$0xff]
                %226 = vst [vmem:[%s174 + $0xc8] sm:$0xff] %v225
                %v227 = vld [vmem:[%s173 + $0x1a0] sm:$0xff]
                %228 = vst [vmem:[%s174 + $0xd0] sm:$0xff] %v227
                %v229 = vld [vmem:[%s173 + $0x1a8] sm:$0xff]
                %230 = vst [vmem:[%s174 + $0xd8] sm:$0xff] %v229
                %v231 = vld [vmem:[%s173 + $0x1c0] sm:$0xff]
                %232 = vst [vmem:[%s174 + $0xe0] sm:$0xff] %v231
                %v233 = vld [vmem:[%s173 + $0x1c8] sm:$0xff]
                %234 = vst [vmem:[%s174 + $0xe8] sm:$0xff] %v233
                %v235 = vld [vmem:[%s173 + $0x1e0] sm:$0xff]
                %236 = vst [vmem:[%s174 + $0xf0] sm:$0xff] %v235
                %v237 = vld [vmem:[%s173 + $0x1e8] sm:$0xff]
                %238 = vst [vmem:[%s174 + $0xf8] sm:$0xff] %v237
              $region37: #{decoder_forward.5} parent=31 // loop_footer
                %s172 = sadd.s32 1, %s168
              $region38: #{decoder_forward.5} parent=31 // loop_footer_branch
                %167 = sbr.rel target = $region34
              $region39: #{decoder_forward.5} parent=31 // loop_exit
                _
            $region32: #{decoder_forward.5} parent=27 // pred_fallthru
              _
            // Predicated region
            $region40: #{decoder_forward.5} parent=27 // pred_check
              _
            $region41: #{decoder_forward.5} parent=27 // pred_check_branch
              %240 = sbr.rel target = $region43
            $region42: #{decoder_forward.5} parent=27 // pred_region
              _
            $region43: #{decoder_forward.5} parent=27 // pred_fallthru
              _
          $region28: #{decoder_forward.5} parent=23 // pred_fallthru
            _
          %241 = vnop
        $region24: #{decoder_forward.5} parent=19 // pred_fallthru
          _
        // Predicated region
        $region44: #{decoder_forward.5} parent=19 // pred_check
          %p242 = pneg %p93
        $region45: #{decoder_forward.5} parent=19 // pred_check_branch
          %244 = sbr.rel (%p242) target = $region47
        $region46: #{decoder_forward.5} parent=19 // pred_region
          %s245 = smul.u32 4, %s17
          %p246 = scmp.lt.s32.totalorder %s245, 7
          %s247 = scalar_select %p246, %s245, 7
          %s248 = scalar_lea.vmem %s2, %s247
          %s249 = smul.u32 4, %s17
        $region47: #{decoder_forward.5} parent=19 // pred_fallthru
          _
      $region20: #{decoder_forward.5} parent=5 // pred_fallthru
        _
      %p250 = scmp.le.s32.totalorder 1, %s9
      %p251 = scmp.lt.s32.totalorder %s9, 3
      %p252 = pnand %p250, %p251
      %p253 = pneg %p252
      // Predicated region
      $region48: #{decoder_forward.5} parent=5 // pred_check
        _
      $region49: #{decoder_forward.5} parent=5 // pred_check_branch
        %255 = sbr.rel (%p252) target = $region51
      $region50: #{decoder_forward.5} parent=5 // pred_region
        %s256 = ssub.s32 %s9, 1
        %s257 = sand.u32 %s60, 1
        %s258 = sand.u32 %s60, 1
        %s259 = smul.addr %s258, 256
        %s260 = scalar_lea.vmem [#allocation2], %s259
        // Predicated region
        $region52: #{decoder_forward.5} parent=50 // pred_check
          %p261 = pneg %p73
        $region53: #{decoder_forward.5} parent=50 // pred_check_branch
          %263 = sbr.rel (%p261) target = $region55
        $region54: #{decoder_forward.5} parent=50 // pred_region
          _
        $region55: #{decoder_forward.5} parent=50 // pred_fallthru
          _
        %p264 = scmp.lt.s32.totalorder %s18, 0
        %s265 = scalar_select %p264, %s18, 0
        %s266 = smul.addr %s265, 4
        %s267 = scalar_lea.vmem %s0, %s266
        %p268 = pneg %p47
        %p269 = pneg %p44
        %s270 = sand.u32 %s60, 1
        %s271 = sand.u32 %s60, 1
        %s272 = smul.addr %s271, 256
        %s273 = scalar_lea.vmem [#allocation2], %s272
        %p274 = pneg %p73
        %p275 = pneg %p70
        %s276 = smul.u32 4, %s19
        %p277 = scmp.lt.s32.totalorder %s276, 7
        %s278 = scalar_select %p277, %s276, 7
        %s279 = scalar_lea.vmem %s2, %s278
        %p280 = pneg %p99
        %p281 = pneg %p96
        %p282 = pneg %p127
        %p283 = pneg %p124
        %s284 = smul.u32 4, %s19
        %p285 = scmp.lt.s32.totalorder %s18, 0
        %s286 = scalar_select %p285, %s18, 0
        %p287 = scmp.lt.s32.totalorder %s284, 7
        %s288 = scalar_select %p287, %s284, 7
        %s289 = smul.addr %s286, 8
        %s290 = sadd.s32 %s288, %s289
        %s291 = smul.addr %s290, 4
        %s292 = scalar_lea.vmem %s3, %s291
        %p293 = scmp.lt.s32.totalorder %s18, 0
        %s294 = scalar_select %p293, %s18, 0
        %s295 = smul.addr %s294, 4
        %s296 = scalar_lea.vmem %s0, %s295
        %s297 = smul.u32 4, %s19
        %s298 = smul.u32 4, %s19
        %p299 = scmp.lt.s32.totalorder %s298, 7
        %s300 = scalar_select %p299, %s298, 7
        %s301 = scalar_lea.vmem %s2, %s300
        %s302 = smul.u32 4, %s19
        %s303 = smul.u32 4, %s19
        %p304 = scmp.lt.s32.totalorder %s18, 0
        %s305 = scalar_select %p304, %s18, 0
        %p306 = scmp.lt.s32.totalorder %s303, 7
        %s307 = scalar_select %p306, %s303, 7
        %s308 = smul.addr %s305, 8
        %s309 = sadd.s32 %s307, %s308
        %s310 = smul.addr %s309, 4
        %s311 = scalar_lea.vmem %s3, %s310
        %s312 = smul.u32 4, %s19
        %v314 = vld [vmem:[%s296] sm:$0xf]
        %v315 = vld [vmem:[%s260] sm:$0xff]
        %v316 = vld [vmem:[%s260 + $0x8] sm:$0xff]
        %v317 = vld [vmem:[%s260 + $0x10] sm:$0xff]
        %v318 = vld [vmem:[%s260 + $0x18] sm:$0xff]
        %v319 = vld [vmem:[%s260 + $0x20] sm:$0xff]
        %v320 = vld [vmem:[%s260 + $0x28] sm:$0xff]
        %v321 = vld [vmem:[%s260 + $0x30] sm:$0xff]
        %v322 = vld [vmem:[%s260 + $0x38] sm:$0xff]
        %v323 = vld [vmem:[%s260 + $0x40] sm:$0xff]
        %v324 = vld [vmem:[%s260 + $0x48] sm:$0xff]
        %v325 = vld [vmem:[%s260 + $0x50] sm:$0xff]
        %v326 = vld [vmem:[%s260 + $0x58] sm:$0xff]
        %v327 = vld [vmem:[%s260 + $0x60] sm:$0xff]
        %v328 = vld [vmem:[%s260 + $0x68] sm:$0xff]
        %v329 = vld [vmem:[%s260 + $0x70] sm:$0xff]
        %v330 = vld [vmem:[%s260 + $0x78] sm:$0xff]
        %v331 = vld [vmem:[%s260 + $0x80] sm:$0xff]
        %v332 = vld [vmem:[%s260 + $0x88] sm:$0xff]
        %v333 = vld [vmem:[%s260 + $0x90] sm:$0xff]
        %v334 = vld [vmem:[%s260 + $0x98] sm:$0xff]
        %v335 = vld [vmem:[%s260 + $0xa0] sm:$0xff]
        %v336 = vld [vmem:[%s260 + $0xa8] sm:$0xff]
        %v337 = vld [vmem:[%s260 + $0xb0] sm:$0xff]
        %v338 = vld [vmem:[%s260 + $0xb8] sm:$0xff]
        %v339 = vld [vmem:[%s260 + $0xc0] sm:$0xff]
        %v340 = vld [vmem:[%s260 + $0xc8] sm:$0xff]
        %v341 = vld [vmem:[%s260 + $0xd0] sm:$0xff]
        %v342 = vld [vmem:[%s260 + $0xd8] sm:$0xff]
        %v343 = vld [vmem:[%s260 + $0xe0] sm:$0xff]
        %v344 = vld [vmem:[%s260 + $0xe8] sm:$0xff]
        %v345 = vld [vmem:[%s260 + $0xf0] sm:$0xff]
        %v346 = vld [vmem:[%s260 + $0xf8] sm:$0xff]
        %v347 = vld [vmem:[%s301] sm:$0xf]
        %v349 = vlaneseq
        %v350 = vshrl.u32 %v349, 7
        %v351 = vsub.s32 0, %v350
        %v352 = vrot.slane %v347, %v351
        %v353 = vlaneseq
        %v354 = vshrl.u32 %v353, 7
        %v355 = vsub.s32 1, %v354
        %v356 = vrot.slane %v347, %v355
        %v357 = vlaneseq
        %v358 = vshrl.u32 %v357, 7
        %v359 = vsub.s32 2, %v358
        %v360 = vrot.slane %v347, %v359
        %v361 = vlaneseq
        %v362 = vshrl.u32 %v361, 7
        %v363 = vsub.s32 3, %v362
        %v364 = vrot.slane %v347, %v363
        %v401 = vunpack.c.l.b16 %v315
        %v402 = vunpack.c.h.b16 %v315
        %v403 = vunpack.c.l.b16 %v316
        %v404 = vunpack.c.h.b16 %v316
        %v405 = vunpack.c.l.b16 %v317
        %v406 = vunpack.c.h.b16 %v317
        %v407 = vunpack.c.l.b16 %v318
        %v408 = vunpack.c.h.b16 %v318
        %v409 = vunpack.c.l.b16 %v319
        %v410 = vunpack.c.h.b16 %v319
        %v411 = vunpack.c.l.b16 %v320
        %v412 = vunpack.c.h.b16 %v320
        %v413 = vunpack.c.l.b16 %v321
        %v414 = vunpack.c.h.b16 %v321
        %v415 = vunpack.c.l.b16 %v322
        %v416 = vunpack.c.h.b16 %v322
        %v417 = vunpack.c.l.b16 %v323
        %v418 = vunpack.c.h.b16 %v323
        %v419 = vunpack.c.l.b16 %v324
        %v420 = vunpack.c.h.b16 %v324
        %v421 = vunpack.c.l.b16 %v325
        %v422 = vunpack.c.h.b16 %v325
        %v423 = vunpack.c.l.b16 %v326
        %v424 = vunpack.c.h.b16 %v326
        %v425 = vunpack.c.l.b16 %v327
        %v426 = vunpack.c.h.b16 %v327
        %v427 = vunpack.c.l.b16 %v328
        %v428 = vunpack.c.h.b16 %v328
        %v429 = vunpack.c.l.b16 %v329
        %v430 = vunpack.c.h.b16 %v329
        %v431 = vunpack.c.l.b16 %v330
        %v432 = vunpack.c.h.b16 %v330
        %v433 = vunpack.c.l.b16 %v331
        %v434 = vunpack.c.h.b16 %v331
        %v435 = vunpack.c.l.b16 %v332
        %v436 = vunpack.c.h.b16 %v332
        %v437 = vunpack.c.l.b16 %v333
        %v438 = vunpack.c.h.b16 %v333
        %v439 = vunpack.c.l.b16 %v334
        %v440 = vunpack.c.h.b16 %v334
        %v441 = vunpack.c.l.b16 %v335
        %v442 = vunpack.c.h.b16 %v335
        %v443 = vunpack.c.l.b16 %v336
        %v444 = vunpack.c.h.b16 %v336
        %v445 = vunpack.c.l.b16 %v337
        %v446 = vunpack.c.h.b16 %v337
        %v447 = vunpack.c.l.b16 %v338
        %v448 = vunpack.c.h.b16 %v338
        %v449 = vunpack.c.l.b16 %v339
        %v450 = vunpack.c.h.b16 %v339
        %v451 = vunpack.c.l.b16 %v340
        %v452 = vunpack.c.h.b16 %v340
        %v453 = vunpack.c.l.b16 %v341
        %v454 = vunpack.c.h.b16 %v341
        %v455 = vunpack.c.l.b16 %v342
        %v456 = vunpack.c.h.b16 %v342
        %v457 = vunpack.c.l.b16 %v343
        %v458 = vunpack.c.h.b16 %v343
        %v459 = vunpack.c.l.b16 %v344
        %v460 = vunpack.c.h.b16 %v344
        %v461 = vunpack.c.l.b16 %v345
        %v462 = vunpack.c.h.b16 %v345
        %v463 = vunpack.c.l.b16 %v346
        %v464 = vunpack.c.h.b16 %v346
        %v465 = vpack.c.b16 %v405, %v401
        %v466 = vpack.c.b16 %v406, %v402
        %v467 = vpack.c.b16 %v407, %v403
        %v468 = vpack.c.b16 %v408, %v404
        %v469 = vpack.c.b16 %v413, %v409
        %v470 = vpack.c.b16 %v414, %v410
        %v471 = vpack.c.b16 %v415, %v411
        %v472 = vpack.c.b16 %v416, %v412
        %v473 = vpack.c.b16 %v421, %v417
        %v474 = vpack.c.b16 %v422, %v418
        %v475 = vpack.c.b16 %v423, %v419
        %v476 = vpack.c.b16 %v424, %v420
        %v477 = vpack.c.b16 %v429, %v425
        %v478 = vpack.c.b16 %v430, %v426
        %v479 = vpack.c.b16 %v431, %v427
        %v480 = vpack.c.b16 %v432, %v428
        %v481 = vpack.c.b16 %v437, %v433
        %v482 = vpack.c.b16 %v438, %v434
        %v483 = vpack.c.b16 %v439, %v435
        %v484 = vpack.c.b16 %v440, %v436
        %v485 = vpack.c.b16 %v445, %v441
        %v486 = vpack.c.b16 %v446, %v442
        %v487 = vpack.c.b16 %v447, %v443
        %v488 = vpack.c.b16 %v448, %v444
        %v489 = vpack.c.b16 %v453, %v449
        %v490 = vpack.c.b16 %v454, %v450
        %v491 = vpack.c.b16 %v455, %v451
        %v492 = vpack.c.b16 %v456, %v452
        %v493 = vpack.c.b16 %v461, %v457
        %v494 = vpack.c.b16 %v462, %v458
        %v495 = vpack.c.b16 %v463, %v459
        %v496 = vpack.c.b16 %v464, %v460
        %529 = vmatprep.subr.bf16.mxu0 %v494
        %530 = vmatpush1.bf16.msra.mxu0 %v493
        %531 = vmatprep.subr.bf16.mxu0 %v490
        %532 = vmatpush1.bf16.msra.mxu0 %v489
        %533 = vmatprep.subr.bf16.mxu0 %v486
        %534 = vmatpush1.bf16.msra.mxu0 %v485
        %535 = vmatprep.subr.bf16.mxu0 %v482
        %536 = vmatpush1.bf16.msra.mxu0 %v481
        %537 = vmatprep.subr.bf16.mxu0 %v478
        %538 = vmatpush1.bf16.msra.mxu0 %v477
        %539 = vmatprep.subr.bf16.mxu0 %v474
        %540 = vmatpush1.bf16.msra.mxu0 %v473
        %541 = vmatprep.subr.bf16.mxu0 %v470
        %542 = vmatpush1.bf16.msra.mxu0 %v469
        %543 = vmatprep.subr.bf16.mxu0 %v466
        %544 = vmatpush1.bf16.msra.mxu0 %v465
        %545 = vmatprep.subr.bf16.mxu0 0
        %546 = vmatpush2.bf16.msra.mxu0 0
        %547 = vmatprep.subr.bf16.mxu0 0
        %548 = vmatpush2.bf16.msra.mxu0 0
        %549 = vmatprep.subr.bf16.mxu0 0
        %550 = vmatpush2.bf16.msra.mxu0 0
        %551 = vmatprep.subr.bf16.mxu0 0
        %552 = vmatpush2.bf16.msra.mxu0 0
        %553 = vmatprep.subr.bf16.mxu0 0
        %554 = vmatpush2.bf16.msra.mxu0 0
        %555 = vmatprep.subr.bf16.mxu0 0
        %556 = vmatpush2.bf16.msra.mxu0 0
        %557 = vmatprep.subr.bf16.mxu0 0
        %558 = vmatpush2.bf16.msra.mxu0 0
        %559 = vmatprep.subr.bf16.mxu0 0
        %560 = vmatpush2.bf16.msra.mxu0 0
        %561 = vmatprep.mubr.bf16.mxu0 0
        %562 = vmatmul.mubr.bf16.gmra.mxu0 %v314
        %v563 = vpop.f32.mrf.mxu0
        %v564 = vadd.f32 %v352, %v563
        %v565 = vpop.f32.mrf.mxu0
        %v566 = vadd.f32 %v356, %v565
        %v567 = vpop.f32.mrf.mxu0
        %v568 = vpop.f32.mrf.mxu0
        %569 = vdwg.mxu0
        %570 = vmatprep.subr.bf16.mxu0 %v496
        %571 = vmatpush1.bf16.msra.mxu0 %v495
        %572 = vmatprep.subr.bf16.mxu0 %v492
        %573 = vmatpush1.bf16.msra.mxu0 %v491
        %574 = vmatprep.subr.bf16.mxu0 %v488
        %575 = vmatpush1.bf16.msra.mxu0 %v487
        %576 = vmatprep.subr.bf16.mxu0 %v484
        %577 = vmatpush1.bf16.msra.mxu0 %v483
        %578 = vmatprep.subr.bf16.mxu0 %v480
        %579 = vmatpush1.bf16.msra.mxu0 %v479
        %580 = vmatprep.subr.bf16.mxu0 %v476
        %581 = vmatpush1.bf16.msra.mxu0 %v475
        %582 = vmatprep.subr.bf16.mxu0 %v472
        %583 = vmatpush1.bf16.msra.mxu0 %v471
        %584 = vmatprep.subr.bf16.mxu0 %v468
        %585 = vmatpush1.bf16.msra.mxu0 %v467
        %586 = vmatprep.subr.bf16.mxu0 0
        %587 = vmatpush2.bf16.msra.mxu0 0
        %588 = vmatprep.subr.bf16.mxu0 0
        %589 = vmatpush2.bf16.msra.mxu0 0
        %590 = vmatprep.subr.bf16.mxu0 0
        %591 = vmatpush2.bf16.msra.mxu0 0
        %592 = vmatprep.subr.bf16.mxu0 0
        %593 = vmatpush2.bf16.msra.mxu0 0
        %594 = vmatprep.subr.bf16.mxu0 0
        %595 = vmatpush2.bf16.msra.mxu0 0
        %596 = vmatprep.subr.bf16.mxu0 0
        %597 = vmatpush2.bf16.msra.mxu0 0
        %598 = vmatprep.subr.bf16.mxu0 0
        %599 = vmatpush2.bf16.msra.mxu0 0
        %600 = vmatprep.subr.bf16.mxu0 0
        %601 = vmatpush2.bf16.msra.mxu0 0
        %602 = vmatprep.mubr.bf16.mxu0 0
        %603 = vmatmul.mubr.bf16.gmra.mxu0 %v314
        %v604 = vpop.f32.mrf.mxu0
        %v605 = vadd.f32 %v360, %v604
        %v606 = vpop.f32.mrf.mxu0
        %v607 = vadd.f32 %v364, %v606
        %v608 = vpop.f32.mrf.mxu0
        %v609 = vpop.f32.mrf.mxu0
        %610 = vdwg.mxu0
        %v611 = vmax.f32 %v564, 0.0
        %v612 = vmax.f32 %v566, 0.0
        %v613 = vmax.f32 %v605, 0.0
        %v614 = vmax.f32 %v607, 0.0
        %v615 = vpack.c.bf16 %v611, %v611
        %v616 = vpack.c.bf16 %v612, %v612
        %v617 = vpack.c.bf16 %v613, %v613
        %v618 = vpack.c.bf16 %v614, %v614
        %v623 = vunpack.c.l.b16 %v615
        %v624 = vunpack.c.l.b16 %v616
        %v625 = vunpack.c.l.b16 %v617
        %v626 = vunpack.c.l.b16 %v618
        %v627 = vpack.c.b16 %v624, %v623
        %v628 = vpack.c.b16 %v626, %v625
        %631 = vst [vmem:[%s311] sm:$0xff] %v627
        %632 = vst [vmem:[%s311 + $0x8] sm:$0xff] %v628
        %s633 = smul.u32 4, %s19
        %p634 = scmp.lt.s32.totalorder %s18, 0
        %s635 = scalar_select %p634, %s18, 0
        %p636 = scmp.lt.s32.totalorder %s633, 7
        %s637 = scalar_select %p636, %s633, 7
        %s638 = smul.addr %s635, 8
        %s639 = sadd.s32 %s637, %s638
        %s640 = smul.addr %s639, 4
        %s641 = scalar_lea.vmem %s3, %s640
        // Predicated region
        $region56: #{decoder_forward.5} parent=50 // pred_check
          %p642 = pneg %p124
        $region57: #{decoder_forward.5} parent=50 // pred_check_branch
          %644 = sbr.rel (%p642) target = $region59
        $region58: #{decoder_forward.5} parent=50 // pred_region
          %s645 = smul.u32 4, %s19
        $region59: #{decoder_forward.5} parent=50 // pred_fallthru
          _
      $region51: #{decoder_forward.5} parent=5 // pred_fallthru
        _
      %p646 = scmp.le.s32.totalorder 2, %s9
      // Predicated region
      $region60: #{decoder_forward.5} parent=5 // pred_check
        %p647 = pneg %p646
      $region61: #{decoder_forward.5} parent=5 // pred_check_branch
        %649 = sbr.rel (%p647) target = $region63
      $region62: #{decoder_forward.5} parent=5 // pred_region
        %s650 = ssub.s32 %s9, 2
        // Predicated region
        $region64: #{decoder_forward.5} parent=62 // pred_check
          %p651 = pneg %p130
        $region65: #{decoder_forward.5} parent=62 // pred_check_branch
          %653 = sbr.rel (%p651) target = $region67
        $region66: #{decoder_forward.5} parent=62 // pred_region
          %s654 = smul.u32 4, %s21
          %p655 = scmp.lt.s32.totalorder %s20, 0
          %s656 = scalar_select %p655, %s20, 0
          %p657 = scmp.lt.s32.totalorder %s654, 7
          %s658 = scalar_select %p657, %s654, 7
          %s659 = smul.addr %s656, 8
          %s660 = sadd.s32 %s658, %s659
          %s661 = smul.addr %s660, 4
          %s662 = scalar_lea.vmem %s3, %s661
        $region67: #{decoder_forward.5} parent=62 // pred_fallthru
          _
      $region63: #{decoder_forward.5} parent=5 // pred_fallthru
        _
    $region6: #{decoder_forward.5} parent=1 // loop_footer
      %s13 = sadd.s32 1, %s9
    $region7: #{decoder_forward.5} parent=1 // loop_footer_branch
      %8 = sbr.rel target = $region3
    $region8: #{decoder_forward.5} parent=1 // loop_exit
      _

// kernel: tile.39
$region0: #{tile.39}
  %s0 = inlined_call_operand.vmem [shape: f32[4,32], index: 0, kind: input, shape index: {}]
  %s1 = inlined_call_operand.vmem [shape: f32[1,128], index: 1, kind: output, shape index: {}]
  $region1: #{tile.39} parent=0
    #allocation0 [shape = 'u8[4096]{0}', space=vmem, size = 0x1000, scoped, tag = 'scoped mem for output reshape']
    #allocation1 [shape = 'u8[4096]{0}', space=vmem, size = 0x1000, scoped, tag = 'scoped mem for input reshape']
    %s3 = sshll.u32 1, 4
    %s4 = ssub.s32 %s3, 1
    %v5 = vld [vmem:[%s0] sm:%s4]
    %6 = vst [vmem:[#allocation1] sm:%s4] %v5
    %v7 = vld [vmem:[#allocation1] sm:$0x1]
    %vm8 = vcmask 261120
    %9 = vst.msk [vmem:[#allocation0] sm:$0x1] %vm8, %v7
    %s10 = scalar_lea.vmem [#allocation1], 3
    %v11 = vld [vmem:[%s10] sm:$0x1]
    %12 = vrot.lane.b32.xlu0 %v11, 96
    %v13 = vpop.permute.xlu0 %12
    %vm14 = vcmask 1048320
    %15 = vst.msk [vmem:[#allocation0] sm:$0x1] %vm14, %v13
    %s16 = scalar_lea.vmem [#allocation1], 2
    %v17 = vld [vmem:[%s16] sm:$0x1]
    %18 = vrot.lane.b32.xlu0 %v17, 64
    %v19 = vpop.permute.xlu0 %18
    %vm20 = vcmask 785920
    %21 = vst.msk [vmem:[#allocation0] sm:$0x1] %vm20, %v19
    %s22 = scalar_lea.vmem [#allocation1], 1
    %v23 = vld [vmem:[%s22] sm:$0x1]
    %24 = vrot.lane.b32.xlu0 %v23, 32
    %v25 = vpop.permute.xlu0 %24
    %vm26 = vcmask 523520
    %27 = vst.msk [vmem:[#allocation0] sm:$0x1] %vm26, %v25
    %s29 = sshll.u32 1, 1
    %s30 = ssub.s32 %s29, 1
    %v32 = vld [vmem:[#allocation0] sm:%s30]
    %s33 = sshll.u32 1, 1
    %s34 = ssub.s32 %s33, 1
    %35 = vst [vmem:[%s1] sm:%s34] %v32

// kernel: decoder_forward.6
$region0: #{decoder_forward.6}
  #allocation0 [shape = 'u32[]', space=smem, size = 0x4, offset = 0x4, fixed_abs, tag = 'smem constant byte address 0x4 - core index']
  #allocation1 [shape = 'u32[144,128]{1,0:T(1,128)}', space=vmem, size = 0x12000, scoped, tag = 'internal scratch']
  %s0 = inlined_call_operand.vmem [shape: bf16[56,256], index: 0, kind: input, shape index: {}]
  %s1 = inlined_call_operand.vmem [shape: bf16[256,128], index: 1, kind: input, shape index: {}]
  %s2 = inlined_call_operand.vmem [shape: f32[1,128], index: 2, kind: input, shape index: {}]
  %s3 = inlined_call_operand.vmem [shape: bf16[56,128], index: 3, kind: output, shape index: {}]
  %s4 = sld [smem:[#allocation0]]
  $region22: #{decoder_forward.6} parent=0
    _
  %s6 = ssub.s32 1, %s4
  %s7 = scalar_select 0, %s6, %s4
  // Predicated region
  $region2: #{decoder_forward.6} parent=0 // pred_check
    _
  $region3: #{decoder_forward.6} parent=0 // pred_check_branch
    %9 = sbr.rel (0) target = $region5
  $region4: #{decoder_forward.6} parent=0 // pred_region
    _
  $region5: #{decoder_forward.6} parent=0 // pred_fallthru
    _
  // Predicated region
  $region6: #{decoder_forward.6} parent=0 // pred_check
    _
  $region7: #{decoder_forward.6} parent=0 // pred_check_branch
    %11 = sbr.rel (0) target = $region9
  $region8: #{decoder_forward.6} parent=0 // pred_region
    _
  $region9: #{decoder_forward.6} parent=0 // pred_fallthru
    _
  // Predicated region
  $region10: #{decoder_forward.6} parent=0 // pred_check
    _
  $region11: #{decoder_forward.6} parent=0 // pred_check_branch
    %13 = sbr.rel (0) target = $region13
  $region12: #{decoder_forward.6} parent=0 // pred_region
    _
  $region13: #{decoder_forward.6} parent=0 // pred_fallthru
    _
  %v15 = vld [vmem:[%s0] sm:$0xff]
  %v16 = vld [vmem:[%s0 + $0x8] sm:$0xff]
  %v17 = vld [vmem:[%s0 + $0x10] sm:$0xff]
  %v18 = vld [vmem:[%s0 + $0x18] sm:$0xff]
  %v19 = vld [vmem:[%s0 + $0x20] sm:$0xff]
  %v20 = vld [vmem:[%s0 + $0x28] sm:$0xff]
  %v21 = vld [vmem:[%s0 + $0x30] sm:$0xff]
  %v22 = vld [vmem:[%s1] sm:$0xf]
  %v23 = vld [vmem:[%s1 + $0x4] sm:$0xf]
  %v24 = vld [vmem:[%s1 + $0x8] sm:$0xf]
  %v25 = vld [vmem:[%s1 + $0xc] sm:$0xf]
  %v26 = vld [vmem:[%s1 + $0x10] sm:$0xf]
  %v27 = vld [vmem:[%s1 + $0x14] sm:$0xf]
  %v28 = vld [vmem:[%s1 + $0x18] sm:$0xf]
  %v29 = vld [vmem:[%s1 + $0x1c] sm:$0xf]
  %v30 = vld [vmem:[%s1 + $0x20] sm:$0xf]
  %v31 = vld [vmem:[%s1 + $0x24] sm:$0xf]
  %v32 = vld [vmem:[%s1 + $0x28] sm:$0xf]
  %v33 = vld [vmem:[%s1 + $0x2c] sm:$0xf]
  %v34 = vld [vmem:[%s1 + $0x30] sm:$0xf]
  %v35 = vld [vmem:[%s1 + $0x34] sm:$0xf]
  %v36 = vld [vmem:[%s1 + $0x38] sm:$0xf]
  %v37 = vld [vmem:[%s1 + $0x3c] sm:$0xf]
  %v38 = vld [vmem:[%s1 + $0x40] sm:$0xf]
  %v39 = vld [vmem:[%s1 + $0x44] sm:$0xf]
  %v40 = vld [vmem:[%s1 + $0x48] sm:$0xf]
  %v41 = vld [vmem:[%s1 + $0x4c] sm:$0xf]
  %v42 = vld [vmem:[%s1 + $0x50] sm:$0xf]
  %v43 = vld [vmem:[%s1 + $0x54] sm:$0xf]
  %v44 = vld [vmem:[%s1 + $0x58] sm:$0xf]
  %v45 = vld [vmem:[%s1 + $0x5c] sm:$0xf]
  %v46 = vld [vmem:[%s1 + $0x60] sm:$0xf]
  %v47 = vld [vmem:[%s1 + $0x64] sm:$0xf]
  %v48 = vld [vmem:[%s1 + $0x68] sm:$0xf]
  %v49 = vld [vmem:[%s1 + $0x6c] sm:$0xf]
  %v50 = vld [vmem:[%s1 + $0x70] sm:$0xf]
  %v51 = vld [vmem:[%s1 + $0x74] sm:$0xf]
  %v52 = vld [vmem:[%s1 + $0x78] sm:$0xf]
  %v53 = vld [vmem:[%s1 + $0x7c] sm:$0xf]
  %v54 = vld [vmem:[%s2] sm:$0x1]
  %v56 = vlaneseq
  %v57 = vshrl.u32 %v56, 7
  %v58 = vsub.s32 0, %v57
  %v59 = vrot.slane %v54, %v58
  %v68 = vunpack.c.l.b16 %v15
  %v69 = vunpack.c.h.b16 %v15
  %v70 = vunpack.c.l.b16 %v16
  %v71 = vunpack.c.h.b16 %v16
  %v72 = vunpack.c.l.b16 %v17
  %v73 = vunpack.c.h.b16 %v17
  %v74 = vunpack.c.l.b16 %v18
  %v75 = vunpack.c.h.b16 %v18
  %v76 = vunpack.c.l.b16 %v19
  %v77 = vunpack.c.h.b16 %v19
  %v78 = vunpack.c.l.b16 %v20
  %v79 = vunpack.c.h.b16 %v20
  %v80 = vunpack.c.l.b16 %v21
  %v81 = vunpack.c.h.b16 %v21
  %v82 = vpack.c.b16 %v70, %v68
  %v83 = vpack.c.b16 %v71, %v69
  %v84 = vpack.c.b16 %v74, %v72
  %v85 = vpack.c.b16 %v75, %v73
  %v86 = vpack.c.b16 %v78, %v76
  %v87 = vpack.c.b16 %v79, %v77
  %v88 = vpack.c.b16 %v80, %v80
  %v89 = vpack.c.b16 %v81, %v81
  %v130 = vunpack.c.l.b16 %v22
  %v131 = vunpack.c.l.b16 %v23
  %v132 = vunpack.c.l.b16 %v24
  %v133 = vunpack.c.l.b16 %v25
  %v134 = vunpack.c.l.b16 %v26
  %v135 = vunpack.c.l.b16 %v27
  %v136 = vunpack.c.l.b16 %v28
  %v137 = vunpack.c.l.b16 %v29
  %v138 = vunpack.c.l.b16 %v30
  %v139 = vunpack.c.l.b16 %v31
  %v140 = vunpack.c.l.b16 %v32
  %v141 = vunpack.c.l.b16 %v33
  %v142 = vunpack.c.l.b16 %v34
  %v143 = vunpack.c.l.b16 %v35
  %v144 = vunpack.c.l.b16 %v36
  %v145 = vunpack.c.l.b16 %v37
  %v146 = vunpack.c.l.b16 %v38
  %v147 = vunpack.c.l.b16 %v39
  %v148 = vunpack.c.l.b16 %v40
  %v149 = vunpack.c.l.b16 %v41
  %v150 = vunpack.c.l.b16 %v42
  %v151 = vunpack.c.l.b16 %v43
  %v152 = vunpack.c.l.b16 %v44
  %v153 = vunpack.c.l.b16 %v45
  %v154 = vunpack.c.l.b16 %v46
  %v155 = vunpack.c.l.b16 %v47
  %v156 = vunpack.c.l.b16 %v48
  %v157 = vunpack.c.l.b16 %v49
  %v158 = vunpack.c.l.b16 %v50
  %v159 = vunpack.c.l.b16 %v51
  %v160 = vunpack.c.l.b16 %v52
  %v161 = vunpack.c.l.b16 %v53
  %v162 = vpack.c.b16 %v131, %v130
  %v163 = vpack.c.b16 %v133, %v132
  %v164 = vpack.c.b16 %v135, %v134
  %v165 = vpack.c.b16 %v137, %v136
  %v166 = vpack.c.b16 %v139, %v138
  %v167 = vpack.c.b16 %v141, %v140
  %v168 = vpack.c.b16 %v143, %v142
  %v169 = vpack.c.b16 %v145, %v144
  %v170 = vpack.c.b16 %v147, %v146
  %v171 = vpack.c.b16 %v149, %v148
  %v172 = vpack.c.b16 %v151, %v150
  %v173 = vpack.c.b16 %v153, %v152
  %v174 = vpack.c.b16 %v155, %v154
  %v175 = vpack.c.b16 %v157, %v156
  %v176 = vpack.c.b16 %v159, %v158
  %v177 = vpack.c.b16 %v161, %v160
  %194 = vmatprep.subr.bf16.mxu0 0
  %195 = vmatpush1.bf16.msra.mxu0 %v169
  %196 = vmatprep.subr.bf16.mxu0 0
  %197 = vmatpush1.bf16.msra.mxu0 %v168
  %198 = vmatprep.subr.bf16.mxu0 0
  %199 = vmatpush1.bf16.msra.mxu0 %v167
  %200 = vmatprep.subr.bf16.mxu0 0
  %201 = vmatpush1.bf16.msra.mxu0 %v166
  %202 = vmatprep.subr.bf16.mxu0 0
  %203 = vmatpush1.bf16.msra.mxu0 %v165
  %204 = vmatprep.subr.bf16.mxu0 0
  %205 = vmatpush1.bf16.msra.mxu0 %v164
  %206 = vmatprep.subr.bf16.mxu0 0
  %207 = vmatpush1.bf16.msra.mxu0 %v163
  %208 = vmatprep.subr.bf16.mxu0 0
  %209 = vmatpush1.bf16.msra.mxu0 %v162
  %210 = vmatprep.subr.bf16.mxu0 0
  %211 = vmatpush2.bf16.msra.mxu0 %v177
  %212 = vmatprep.subr.bf16.mxu0 0
  %213 = vmatpush2.bf16.msra.mxu0 %v176
  %214 = vmatprep.subr.bf16.mxu0 0
  %215 = vmatpush2.bf16.msra.mxu0 %v175
  %216 = vmatprep.subr.bf16.mxu0 0
  %217 = vmatpush2.bf16.msra.mxu0 %v174
  %218 = vmatprep.subr.bf16.mxu0 0
  %219 = vmatpush2.bf16.msra.mxu0 %v173
  %220 = vmatprep.subr.bf16.mxu0 0
  %221 = vmatpush2.bf16.msra.mxu0 %v172
  %222 = vmatprep.subr.bf16.mxu0 0
  %223 = vmatpush2.bf16.msra.mxu0 %v171
  %224 = vmatprep.subr.bf16.mxu0 0
  %225 = vmatpush2.bf16.msra.mxu0 %v170
  %226 = vmatprep.mubr.bf16.mxu0 %v83
  %227 = vmatmul.mubr.bf16.gmra.mxu0 %v82
  %v228 = vpop.f32.mrf.mxu0
  %v229 = vadd.f32 %v59, %v228
  %v230 = vpop.f32.mrf.mxu0
  %v231 = vpop.f32.mrf.mxu0
  %v232 = vadd.f32 %v59, %v231
  %v233 = vpop.f32.mrf.mxu0
  %234 = vmatprep.mubr.bf16.mxu0 %v85
  %235 = vmatmul.mubr.bf16.gmra.mxu0 %v84
  %v236 = vpop.f32.mrf.mxu0
  %v237 = vadd.f32 %v59, %v236
  %v238 = vpop.f32.mrf.mxu0
  %v239 = vpop.f32.mrf.mxu0
  %v240 = vadd.f32 %v59, %v239
  %v241 = vpop.f32.mrf.mxu0
  %242 = vmatprep.mubr.bf16.mxu0 %v87
  %243 = vmatmul.mubr.bf16.gmra.mxu0 %v86
  %v244 = vpop.f32.mrf.mxu0
  %v245 = vadd.f32 %v59, %v244
  %v246 = vpop.f32.mrf.mxu0
  %v247 = vpop.f32.mrf.mxu0
  %v248 = vadd.f32 %v59, %v247
  %v249 = vpop.f32.mrf.mxu0
  %250 = vmatprep.mubr.bf16.mxu0 %v89
  %251 = vmatmul.mubr.bf16.gmra.mxu0 %v88
  %v252 = vpop.f32.mrf.mxu0
  %v253 = vadd.f32 %v59, %v252
  %v254 = vpop.f32.mrf.mxu0
  %v255 = vpop.f32.mrf.mxu0
  %v256 = vpop.f32.mrf.mxu0
  %257 = vdwg.mxu0
  %v258 = vmax.f32 %v229, 0.0
  %v259 = vmax.f32 %v232, 0.0
  %v260 = vmax.f32 %v237, 0.0
  %v261 = vmax.f32 %v240, 0.0
  %v262 = vmax.f32 %v245, 0.0
  %v263 = vmax.f32 %v248, 0.0
  %v264 = vmax.f32 %v253, 0.0
  %v265 = vpack.c.bf16 %v259, %v258
  %v266 = vpack.c.bf16 %v261, %v260
  %v267 = vpack.c.bf16 %v263, %v262
  %v268 = vpack.c.bf16 %v264, %v264
  %v273 = vunpack.c.l.b16 %v265
  %v274 = vunpack.c.h.b16 %v265
  %v275 = vunpack.c.l.b16 %v266
  %v276 = vunpack.c.h.b16 %v266
  %v277 = vunpack.c.l.b16 %v267
  %v278 = vunpack.c.h.b16 %v267
  %v279 = vunpack.c.l.b16 %v268
  %v280 = vpack.c.b16 %v273, %v273
  %v281 = vpack.c.b16 %v274, %v274
  %v282 = vpack.c.b16 %v275, %v275
  %v283 = vpack.c.b16 %v276, %v276
  %v284 = vpack.c.b16 %v277, %v277
  %v285 = vpack.c.b16 %v278, %v278
  %v286 = vpack.c.b16 %v279, %v279
  %294 = vst [vmem:[%s3] sm:$0xf] %v280
  %295 = vst [vmem:[%s3 + $0x4] sm:$0xf] %v281
  %296 = vst [vmem:[%s3 + $0x8] sm:$0xf] %v282
  %297 = vst [vmem:[%s3 + $0xc] sm:$0xf] %v283
  %298 = vst [vmem:[%s3 + $0x10] sm:$0xf] %v284
  %299 = vst [vmem:[%s3 + $0x14] sm:$0xf] %v285
  %300 = vst [vmem:[%s3 + $0x18] sm:$0xf] %v286
  // Predicated region
  $region14: #{decoder_forward.6} parent=0 // pred_check
    _
  $region15: #{decoder_forward.6} parent=0 // pred_check_branch
    %302 = sbr.rel (0) target = $region17
  $region16: #{decoder_forward.6} parent=0 // pred_region
    _
  $region17: #{decoder_forward.6} parent=0 // pred_fallthru
    _
  // Predicated region
  $region18: #{decoder_forward.6} parent=0 // pred_check
    _
  $region19: #{decoder_forward.6} parent=0 // pred_check_branch
    %304 = sbr.rel (0) target = $region21
  $region20: #{decoder_forward.6} parent=0 // pred_region
    _
  $region21: #{decoder_forward.6} parent=0 // pred_fallthru
    _

// kernel: tile.43
$region0: #{tile.43}
  #allocation0 [shape = 's32[1]{0}', space=sflag, size = 0x4, scoped, tag = 'scoped memory for tile.43']
  %s0 = inlined_call_operand.vmem [shape: f32[16], index: 0, kind: input, shape index: {}]
  %s1 = inlined_call_operand.vmem [shape: f32[4,16], index: 1, kind: output, shape index: {}]
  // Predicated region
  $region2: #{tile.43} parent=0 // pred_check
    _
  $region3: #{tile.43} parent=0 // pred_check_branch
    %3 = sbr.rel (0) target = $region5
  $region4: #{tile.43} parent=0 // pred_region
    _
  $region5: #{tile.43} parent=0 // pred_fallthru
    _
  %v4 = vld [vmem:[%s0] ss:$0 sm:$0xff]
  %5 = vst [vmem:[%s1] sm:$0xf] %v4

// kernel: mul.17
$region0: #{mul.17}
  %s0 = inlined_call_operand.vmem [shape: f32[4,16], index: 0, kind: input, shape index: {}]
  %s1 = inlined_call_operand.vmem [shape: f32[64], index: 1, kind: output, shape index: {}]
  $region1: #{mul.17} parent=0
    #allocation0 [shape = 'u8[4096]{0}', space=vmem, size = 0x1000, scoped, tag = 'scoped mem for output reshape']
    #allocation1 [shape = 'u8[4096]{0}', space=vmem, size = 0x1000, scoped, tag = 'scoped mem for input reshape']
    %s3 = sshll.u32 1, 4
    %s4 = ssub.s32 %s3, 1
    %v5 = vld [vmem:[%s0] sm:%s4]
    %6 = vst [vmem:[#allocation1] sm:%s4] %v5
    %v7 = vld [vmem:[#allocation1] sm:$0x1]
    %vm8 = vcmask 130048
    %9 = vst.msk [vmem:[#allocation0] sm:$0x1] %vm8, %v7
    %s10 = scalar_lea.vmem [#allocation1], 3
    %v11 = vld [vmem:[%s10] sm:$0x1]
    %12 = vrot.lane.b32.xlu0 %v11, 48
    %v13 = vpop.permute.xlu0 %12
    %vm14 = vcmask 523648
    %15 = vst.msk [vmem:[#allocation0] sm:$0x1] %vm14, %v13
    %s16 = scalar_lea.vmem [#allocation1], 2
    %v17 = vld [vmem:[%s16] sm:$0x1]
    %18 = vrot.lane.b32.xlu0 %v17, 32
    %v19 = vpop.permute.xlu0 %18
    %vm20 = vcmask 392448
    %21 = vst.msk [vmem:[#allocation0] sm:$0x1] %vm20, %v19
    %s22 = scalar_lea.vmem [#allocation1], 1
    %v23 = vld [vmem:[%s22] sm:$0x1]
    %24 = vrot.lane.b32.xlu0 %v23, 16
    %v25 = vpop.permute.xlu0 %24
    %vm26 = vcmask 261248
    %27 = vst.msk [vmem:[#allocation0] sm:$0x1] %vm26, %v25
    %s29 = sshll.u32 1, 1
    %s30 = ssub.s32 %s29, 1
    %v32 = vld [vmem:[#allocation0] sm:%s30]
    %s33 = sshll.u32 1, 1
    %s34 = ssub.s32 %s33, 1
    %35 = vst [vmem:[%s1] sm:%s34] %v32

// kernel: tile.49
$region0: #{tile.49}
  %s0 = inlined_call_operand.vmem [shape: f32[4,16], index: 0, kind: input, shape index: {}]
  %s1 = inlined_call_operand.vmem [shape: f32[1,64], index: 1, kind: output, shape index: {}]
  $region1: #{tile.49} parent=0
    #allocation0 [shape = 'u8[4096]{0}', space=vmem, size = 0x1000, scoped, tag = 'scoped mem for output reshape']
    #allocation1 [shape = 'u8[4096]{0}', space=vmem, size = 0x1000, scoped, tag = 'scoped mem for input reshape']
    %s3 = sshll.u32 1, 4
    %s4 = ssub.s32 %s3, 1
    %v5 = vld [vmem:[%s0] sm:%s4]
    %6 = vst [vmem:[#allocation1] sm:%s4] %v5
    %v7 = vld [vmem:[#allocation1] sm:$0x1]
    %vm8 = vcmask 130048
    %9 = vst.msk [vmem:[#allocation0] sm:$0x1] %vm8, %v7
    %s10 = scalar_lea.vmem [#allocation1], 3
    %v11 = vld [vmem:[%s10] sm:$0x1]
    %12 = vrot.lane.b32.xlu0 %v11, 48
    %v13 = vpop.permute.xlu0 %12
    %vm14 = vcmask 523648
    %15 = vst.msk [vmem:[#allocation0] sm:$0x1] %vm14, %v13
    %s16 = scalar_lea.vmem [#allocation1], 2
    %v17 = vld [vmem:[%s16] sm:$0x1]
    %18 = vrot.lane.b32.xlu0 %v17, 32
    %v19 = vpop.permute.xlu0 %18
    %vm20 = vcmask 392448
    %21 = vst.msk [vmem:[#allocation0] sm:$0x1] %vm20, %v19
    %s22 = scalar_lea.vmem [#allocation1], 1
    %v23 = vld [vmem:[%s22] sm:$0x1]
    %24 = vrot.lane.b32.xlu0 %v23, 16
    %v25 = vpop.permute.xlu0 %24
    %vm26 = vcmask 261248
    %27 = vst.msk [vmem:[#allocation0] sm:$0x1] %vm26, %v25
    %s29 = sshll.u32 1, 1
    %s30 = ssub.s32 %s29, 1
    %v32 = vld [vmem:[#allocation0] sm:%s30]
    %s33 = sshll.u32 1, 1
    %s34 = ssub.s32 %s33, 1
    %35 = vst [vmem:[%s1] sm:%s34] %v32

// kernel: decoder_forward.7
$region0: #{decoder_forward.7}
  #allocation0 [shape = 'u32[]', space=smem, size = 0x4, offset = 0x4, fixed_abs, tag = 'smem constant byte address 0x4 - core index']
  #allocation1 [shape = 'u32[144,128]{1,0:T(1,128)}', space=vmem, size = 0x12000, scoped, tag = 'internal scratch']
  %s0 = inlined_call_operand.vmem [shape: bf16[168,128], index: 0, kind: input, shape index: {}]
  %s1 = inlined_call_operand.vmem [shape: bf16[128,128], index: 1, kind: input, shape index: {}]
  %s2 = inlined_call_operand.vmem [shape: f32[1,128], index: 2, kind: input, shape index: {}]
  %s3 = inlined_call_operand.vmem [shape: bf16[168,128], index: 3, kind: output, shape index: {}]
  %s4 = sld [smem:[#allocation0]]
  $region22: #{decoder_forward.7} parent=0
    _
  %s6 = ssub.s32 1, %s4
  %s7 = scalar_select 0, %s6, %s4
  // Predicated region
  $region2: #{decoder_forward.7} parent=0 // pred_check
    _
  $region3: #{decoder_forward.7} parent=0 // pred_check_branch
    %9 = sbr.rel (0) target = $region5
  $region4: #{decoder_forward.7} parent=0 // pred_region
    _
  $region5: #{decoder_forward.7} parent=0 // pred_fallthru
    _
  // Predicated region
  $region6: #{decoder_forward.7} parent=0 // pred_check
    _
  $region7: #{decoder_forward.7} parent=0 // pred_check_branch
    %11 = sbr.rel (0) target = $region9
  $region8: #{decoder_forward.7} parent=0 // pred_region
    _
  $region9: #{decoder_forward.7} parent=0 // pred_fallthru
    _
  // Predicated region
  $region10: #{decoder_forward.7} parent=0 // pred_check
    _
  $region11: #{decoder_forward.7} parent=0 // pred_check_branch
    %13 = sbr.rel (0) target = $region13
  $region12: #{decoder_forward.7} parent=0 // pred_region
    _
  $region13: #{decoder_forward.7} parent=0 // pred_fallthru
    _
  %v15 = vld [vmem:[%s0] sm:$0xf]
  %v16 = vld [vmem:[%s0 + $0x4] sm:$0xf]
  %v17 = vld [vmem:[%s0 + $0x8] sm:$0xf]
  %v18 = vld [vmem:[%s0 + $0xc] sm:$0xf]
  %v19 = vld [vmem:[%s0 + $0x10] sm:$0xf]
  %v20 = vld [vmem:[%s0 + $0x14] sm:$0xf]
  %v21 = vld [vmem:[%s0 + $0x18] sm:$0xf]
  %v22 = vld [vmem:[%s0 + $0x1c] sm:$0xf]
  %v23 = vld [vmem:[%s0 + $0x20] sm:$0xf]
  %v24 = vld [vmem:[%s0 + $0x24] sm:$0xf]
  %v25 = vld [vmem:[%s0 + $0x28] sm:$0xf]
  %v26 = vld [vmem:[%s0 + $0x2c] sm:$0xf]
  %v27 = vld [vmem:[%s0 + $0x30] sm:$0xf]
  %v28 = vld [vmem:[%s0 + $0x34] sm:$0xf]
  %v29 = vld [vmem:[%s0 + $0x38] sm:$0xf]
  %v30 = vld [vmem:[%s0 + $0x3c] sm:$0xf]
  %v31 = vld [vmem:[%s0 + $0x40] sm:$0xf]
  %v32 = vld [vmem:[%s0 + $0x44] sm:$0xf]
  %v33 = vld [vmem:[%s0 + $0x48] sm:$0xf]
  %v34 = vld [vmem:[%s0 + $0x4c] sm:$0xf]
  %v35 = vld [vmem:[%s0 + $0x50] sm:$0xf]
  %v36 = vld [vmem:[%s1] sm:$0xf]
  %v37 = vld [vmem:[%s1 + $0x4] sm:$0xf]
  %v38 = vld [vmem:[%s1 + $0x8] sm:$0xf]
  %v39 = vld [vmem:[%s1 + $0xc] sm:$0xf]
  %v40 = vld [vmem:[%s1 + $0x10] sm:$0xf]
  %v41 = vld [vmem:[%s1 + $0x14] sm:$0xf]
  %v42 = vld [vmem:[%s1 + $0x18] sm:$0xf]
  %v43 = vld [vmem:[%s1 + $0x1c] sm:$0xf]
  %v44 = vld [vmem:[%s1 + $0x20] sm:$0xf]
  %v45 = vld [vmem:[%s1 + $0x24] sm:$0xf]
  %v46 = vld [vmem:[%s1 + $0x28] sm:$0xf]
  %v47 = vld [vmem:[%s1 + $0x2c] sm:$0xf]
  %v48 = vld [vmem:[%s1 + $0x30] sm:$0xf]
  %v49 = vld [vmem:[%s1 + $0x34] sm:$0xf]
  %v50 = vld [vmem:[%s1 + $0x38] sm:$0xf]
  %v51 = vld [vmem:[%s1 + $0x3c] sm:$0xf]
  %v52 = vld [vmem:[%s2] sm:$0x1]
  %v54 = vlaneseq
  %v55 = vshrl.u32 %v54, 7
  %v56 = vsub.s32 0, %v55
  %v57 = vrot.slane %v52, %v56
  %v80 = vunpack.c.l.b16 %v15
  %v81 = vunpack.c.l.b16 %v16
  %v82 = vunpack.c.l.b16 %v17
  %v83 = vunpack.c.l.b16 %v18
  %v84 = vunpack.c.l.b16 %v19
  %v85 = vunpack.c.l.b16 %v20
  %v86 = vunpack.c.l.b16 %v21
  %v87 = vunpack.c.l.b16 %v22
  %v88 = vunpack.c.l.b16 %v23
  %v89 = vunpack.c.l.b16 %v24
  %v90 = vunpack.c.l.b16 %v25
  %v91 = vunpack.c.l.b16 %v26
  %v92 = vunpack.c.l.b16 %v27
  %v93 = vunpack.c.l.b16 %v28
  %v94 = vunpack.c.l.b16 %v29
  %v95 = vunpack.c.l.b16 %v30
  %v96 = vunpack.c.l.b16 %v31
  %v97 = vunpack.c.l.b16 %v32
  %v98 = vunpack.c.l.b16 %v33
  %v99 = vunpack.c.l.b16 %v34
  %v100 = vunpack.c.l.b16 %v35
  %v101 = vpack.c.b16 %v81, %v80
  %v102 = vpack.c.b16 %v83, %v82
  %v103 = vpack.c.b16 %v85, %v84
  %v104 = vpack.c.b16 %v87, %v86
  %v105 = vpack.c.b16 %v89, %v88
  %v106 = vpack.c.b16 %v91, %v90
  %v107 = vpack.c.b16 %v93, %v92
  %v108 = vpack.c.b16 %v95, %v94
  %v109 = vpack.c.b16 %v97, %v96
  %v110 = vpack.c.b16 %v99, %v98
  %v111 = vpack.c.b16 %v100, %v100
  %v139 = vunpack.c.l.b16 %v36
  %v140 = vunpack.c.l.b16 %v37
  %v141 = vunpack.c.l.b16 %v38
  %v142 = vunpack.c.l.b16 %v39
  %v143 = vunpack.c.l.b16 %v40
  %v144 = vunpack.c.l.b16 %v41
  %v145 = vunpack.c.l.b16 %v42
  %v146 = vunpack.c.l.b16 %v43
  %v147 = vunpack.c.l.b16 %v44
  %v148 = vunpack.c.l.b16 %v45
  %v149 = vunpack.c.l.b16 %v46
  %v150 = vunpack.c.l.b16 %v47
  %v151 = vunpack.c.l.b16 %v48
  %v152 = vunpack.c.l.b16 %v49
  %v153 = vunpack.c.l.b16 %v50
  %v154 = vunpack.c.l.b16 %v51
  %v155 = vpack.c.b16 %v140, %v139
  %v156 = vpack.c.b16 %v142, %v141
  %v157 = vpack.c.b16 %v144, %v143
  %v158 = vpack.c.b16 %v146, %v145
  %v159 = vpack.c.b16 %v148, %v147
  %v160 = vpack.c.b16 %v150, %v149
  %v161 = vpack.c.b16 %v152, %v151
  %v162 = vpack.c.b16 %v154, %v153
  %171 = vmatprep.subr.bf16.mxu0 0
  %172 = vmatpush1.bf16.msra.mxu0 %v162
  %173 = vmatprep.subr.bf16.mxu0 0
  %174 = vmatpush1.bf16.msra.mxu0 %v161
  %175 = vmatprep.subr.bf16.mxu0 0
  %176 = vmatpush1.bf16.msra.mxu0 %v160
  %177 = vmatprep.subr.bf16.mxu0 0
  %178 = vmatpush1.bf16.msra.mxu0 %v159
  %179 = vmatprep.subr.bf16.mxu0 0
  %180 = vmatpush1.bf16.msra.mxu0 %v158
  %181 = vmatprep.subr.bf16.mxu0 0
  %182 = vmatpush1.bf16.msra.mxu0 %v157
  %183 = vmatprep.subr.bf16.mxu0 0
  %184 = vmatpush1.bf16.msra.mxu0 %v156
  %185 = vmatprep.subr.bf16.mxu0 0
  %186 = vmatpush1.bf16.msra.mxu0 %v155
  %187 = vmatprep.subr.bf16.mxu0 0
  %188 = vmatpush2.bf16.msra.mxu0 0
  %189 = vmatprep.subr.bf16.mxu0 0
  %190 = vmatpush2.bf16.msra.mxu0 0
  %191 = vmatprep.subr.bf16.mxu0 0
  %192 = vmatpush2.bf16.msra.mxu0 0
  %193 = vmatprep.subr.bf16.mxu0 0
  %194 = vmatpush2.bf16.msra.mxu0 0
  %195 = vmatprep.subr.bf16.mxu0 0
  %196 = vmatpush2.bf16.msra.mxu0 0
  %197 = vmatprep.subr.bf16.mxu0 0
  %198 = vmatpush2.bf16.msra.mxu0 0
  %199 = vmatprep.subr.bf16.mxu0 0
  %200 = vmatpush2.bf16.msra.mxu0 0
  %201 = vmatprep.subr.bf16.mxu0 0
  %202 = vmatpush2.bf16.msra.mxu0 0
  %203 = vmatprep.mubr.bf16.mxu0 0
  %204 = vmatmul.mubr.bf16.gmra.mxu0 %v101
  %v205 = vpop.f32.mrf.mxu0
  %v206 = vadd.f32 %v57, %v205
  %v207 = vpop.f32.mrf.mxu0
  %v208 = vpop.f32.mrf.mxu0
  %v209 = vadd.f32 %v57, %v208
  %v210 = vpop.f32.mrf.mxu0
  %211 = vmatprep.mubr.bf16.mxu0 0
  %212 = vmatmul.mubr.bf16.gmra.mxu0 %v102
  %v213 = vpop.f32.mrf.mxu0
  %v214 = vadd.f32 %v57, %v213
  %v215 = vpop.f32.mrf.mxu0
  %v216 = vpop.f32.mrf.mxu0
  %v217 = vadd.f32 %v57, %v216
  %v218 = vpop.f32.mrf.mxu0
  %219 = vmatprep.mubr.bf16.mxu0 0
  %220 = vmatmul.mubr.bf16.gmra.mxu0 %v103
  %v221 = vpop.f32.mrf.mxu0
  %v222 = vadd.f32 %v57, %v221
  %v223 = vpop.f32.mrf.mxu0
  %v224 = vpop.f32.mrf.mxu0
  %v225 = vadd.f32 %v57, %v224
  %v226 = vpop.f32.mrf.mxu0
  %227 = vmatprep.mubr.bf16.mxu0 0
  %228 = vmatmul.mubr.bf16.gmra.mxu0 %v104
  %v229 = vpop.f32.mrf.mxu0
  %v230 = vadd.f32 %v57, %v229
  %v231 = vpop.f32.mrf.mxu0
  %v232 = vpop.f32.mrf.mxu0
  %v233 = vadd.f32 %v57, %v232
  %v234 = vpop.f32.mrf.mxu0
  %235 = vmatprep.mubr.bf16.mxu0 0
  %236 = vmatmul.mubr.bf16.gmra.mxu0 %v105
  %v237 = vpop.f32.mrf.mxu0
  %v238 = vadd.f32 %v57, %v237
  %v239 = vpop.f32.mrf.mxu0
  %v240 = vpop.f32.mrf.mxu0
  %v241 = vadd.f32 %v57, %v240
  %v242 = vpop.f32.mrf.mxu0
  %243 = vmatprep.mubr.bf16.mxu0 0
  %244 = vmatmul.mubr.bf16.gmra.mxu0 %v106
  %v245 = vpop.f32.mrf.mxu0
  %v246 = vadd.f32 %v57, %v245
  %v247 = vpop.f32.mrf.mxu0
  %v248 = vpop.f32.mrf.mxu0
  %v249 = vadd.f32 %v57, %v248
  %v250 = vpop.f32.mrf.mxu0
  %251 = vmatprep.mubr.bf16.mxu0 0
  %252 = vmatmul.mubr.bf16.gmra.mxu0 %v107
  %v253 = vpop.f32.mrf.mxu0
  %v254 = vadd.f32 %v57, %v253
  %v255 = vpop.f32.mrf.mxu0
  %v256 = vpop.f32.mrf.mxu0
  %v257 = vadd.f32 %v57, %v256
  %v258 = vpop.f32.mrf.mxu0
  %259 = vmatprep.mubr.bf16.mxu0 0
  %260 = vmatmul.mubr.bf16.gmra.mxu0 %v108
  %v261 = vpop.f32.mrf.mxu0
  %v262 = vadd.f32 %v57, %v261
  %v263 = vpop.f32.mrf.mxu0
  %v264 = vpop.f32.mrf.mxu0
  %v265 = vadd.f32 %v57, %v264
  %v266 = vpop.f32.mrf.mxu0
  %267 = vmatprep.mubr.bf16.mxu0 0
  %268 = vmatmul.mubr.bf16.gmra.mxu0 %v109
  %v269 = vpop.f32.mrf.mxu0
  %v270 = vadd.f32 %v57, %v269
  %v271 = vpop.f32.mrf.mxu0
  %v272 = vpop.f32.mrf.mxu0
  %v273 = vadd.f32 %v57, %v272
  %v274 = vpop.f32.mrf.mxu0
  %275 = vmatprep.mubr.bf16.mxu0 0
  %276 = vmatmul.mubr.bf16.gmra.mxu0 %v110
  %v277 = vpop.f32.mrf.mxu0
  %v278 = vadd.f32 %v57, %v277
  %v279 = vpop.f32.mrf.mxu0
  %v280 = vpop.f32.mrf.mxu0
  %v281 = vadd.f32 %v57, %v280
  %v282 = vpop.f32.mrf.mxu0
  %283 = vmatprep.mubr.bf16.mxu0 0
  %284 = vmatmul.mubr.bf16.gmra.mxu0 %v111
  %v285 = vpop.f32.mrf.mxu0
  %v286 = vadd.f32 %v57, %v285
  %v287 = vpop.f32.mrf.mxu0
  %v288 = vpop.f32.mrf.mxu0
  %v289 = vpop.f32.mrf.mxu0
  %290 = vdwg.mxu0
  %v291 = vmax.f32 %v206, 0.0
  %v292 = vmax.f32 %v209, 0.0
  %v293 = vmax.f32 %v214, 0.0
  %v294 = vmax.f32 %v217, 0.0
  %v295 = vmax.f32 %v222, 0.0
  %v296 = vmax.f32 %v225, 0.0
  %v297 = vmax.f32 %v230, 0.0
  %v298 = vmax.f32 %v233, 0.0
  %v299 = vmax.f32 %v238, 0.0
  %v300 = vmax.f32 %v241, 0.0
  %v301 = vmax.f32 %v246, 0.0
  %v302 = vmax.f32 %v249, 0.0
  %v303 = vmax.f32 %v254, 0.0
  %v304 = vmax.f32 %v257, 0.0
  %v305 = vmax.f32 %v262, 0.0
  %v306 = vmax.f32 %v265, 0.0
  %v307 = vmax.f32 %v270, 0.0
  %v308 = vmax.f32 %v273, 0.0
  %v309 = vmax.f32 %v278, 0.0
  %v310 = vmax.f32 %v281, 0.0
  %v311 = vmax.f32 %v286, 0.0
  %v312 = vpack.c.bf16 %v292, %v291
  %v313 = vpack.c.bf16 %v294, %v293
  %v314 = vpack.c.bf16 %v296, %v295
  %v315 = vpack.c.bf16 %v298, %v297
  %v316 = vpack.c.bf16 %v300, %v299
  %v317 = vpack.c.bf16 %v302, %v301
  %v318 = vpack.c.bf16 %v304, %v303
  %v319 = vpack.c.bf16 %v306, %v305
  %v320 = vpack.c.bf16 %v308, %v307
  %v321 = vpack.c.bf16 %v310, %v309
  %v322 = vpack.c.bf16 %v311, %v311
  %v334 = vunpack.c.l.b16 %v312
  %v335 = vunpack.c.h.b16 %v312
  %v336 = vunpack.c.l.b16 %v313
  %v337 = vunpack.c.h.b16 %v313
  %v338 = vunpack.c.l.b16 %v314
  %v339 = vunpack.c.h.b16 %v314
  %v340 = vunpack.c.l.b16 %v315
  %v341 = vunpack.c.h.b16 %v315
  %v342 = vunpack.c.l.b16 %v316
  %v343 = vunpack.c.h.b16 %v316
  %v344 = vunpack.c.l.b16 %v317
  %v345 = vunpack.c.h.b16 %v317
  %v346 = vunpack.c.l.b16 %v318
  %v347 = vunpack.c.h.b16 %v318
  %v348 = vunpack.c.l.b16 %v319
  %v349 = vunpack.c.h.b16 %v319
  %v350 = vunpack.c.l.b16 %v320
  %v351 = vunpack.c.h.b16 %v320
  %v352 = vunpack.c.l.b16 %v321
  %v353 = vunpack.c.h.b16 %v321
  %v354 = vunpack.c.l.b16 %v322
  %v355 = vpack.c.b16 %v334, %v334
  %v356 = vpack.c.b16 %v335, %v335
  %v357 = vpack.c.b16 %v336, %v336
  %v358 = vpack.c.b16 %v337, %v337
  %v359 = vpack.c.b16 %v338, %v338
  %v360 = vpack.c.b16 %v339, %v339
  %v361 = vpack.c.b16 %v340, %v340
  %v362 = vpack.c.b16 %v341, %v341
  %v363 = vpack.c.b16 %v342, %v342
  %v364 = vpack.c.b16 %v343, %v343
  %v365 = vpack.c.b16 %v344, %v344
  %v366 = vpack.c.b16 %v345, %v345
  %v367 = vpack.c.b16 %v346, %v346
  %v368 = vpack.c.b16 %v347, %v347
  %v369 = vpack.c.b16 %v348, %v348
  %v370 = vpack.c.b16 %v349, %v349
  %v371 = vpack.c.b16 %v350, %v350
  %v372 = vpack.c.b16 %v351, %v351
  %v373 = vpack.c.b16 %v352, %v352
  %v374 = vpack.c.b16 %v353, %v353
  %v375 = vpack.c.b16 %v354, %v354
  %397 = vst [vmem:[%s3] sm:$0xf] %v355
  %398 = vst [vmem:[%s3 + $0x4] sm:$0xf] %v356
  %399 = vst [vmem:[%s3 + $0x8] sm:$0xf] %v357
  %400 = vst [vmem:[%s3 + $0xc] sm:$0xf] %v358
  %401 = vst [vmem:[%s3 + $0x10] sm:$0xf] %v359
  %402 = vst [vmem:[%s3 + $0x14] sm:$0xf] %v360
  %403 = vst [vmem:[%s3 + $0x18] sm:$0xf] %v361
  %404 = vst [vmem:[%s3 + $0x1c] sm:$0xf] %v362
  %405 = vst [vmem:[%s3 + $0x20] sm:$0xf] %v363
  %406 = vst [vmem:[%s3 + $0x24] sm:$0xf] %v364
  %407 = vst [vmem:[%s3 + $0x28] sm:$0xf] %v365
  %408 = vst [vmem:[%s3 + $0x2c] sm:$0xf] %v366
  %409 = vst [vmem:[%s3 + $0x30] sm:$0xf] %v367
  %410 = vst [vmem:[%s3 + $0x34] sm:$0xf] %v368
  %411 = vst [vmem:[%s3 + $0x38] sm:$0xf] %v369
  %412 = vst [vmem:[%s3 + $0x3c] sm:$0xf] %v370
  %413 = vst [vmem:[%s3 + $0x40] sm:$0xf] %v371
  %414 = vst [vmem:[%s3 + $0x44] sm:$0xf] %v372
  %415 = vst [vmem:[%s3 + $0x48] sm:$0xf] %v373
  %416 = vst [vmem:[%s3 + $0x4c] sm:$0xf] %v374
  %417 = vst [vmem:[%s3 + $0x50] sm:$0xf] %v375
  // Predicated region
  $region14: #{decoder_forward.7} parent=0 // pred_check
    _
  $region15: #{decoder_forward.7} parent=0 // pred_check_branch
    %419 = sbr.rel (0) target = $region17
  $region16: #{decoder_forward.7} parent=0 // pred_region
    _
  $region17: #{decoder_forward.7} parent=0 // pred_fallthru
    _
  // Predicated region
  $region18: #{decoder_forward.7} parent=0 // pred_check
    _
  $region19: #{decoder_forward.7} parent=0 // pred_check_branch
    %421 = sbr.rel (0) target = $region21
  $region20: #{decoder_forward.7} parent=0 // pred_region
    _
  $region21: #{decoder_forward.7} parent=0 // pred_fallthru
    _

// kernel: tile.53
$region0: #{tile.53}
  #allocation0 [shape = 's32[1]{0}', space=sflag, size = 0x4, scoped, tag = 'scoped memory for tile.53']
  %s0 = inlined_call_operand.vmem [shape: f32[8], index: 0, kind: input, shape index: {}]
  %s1 = inlined_call_operand.vmem [shape: f32[4,8], index: 1, kind: output, shape index: {}]
  // Predicated region
  $region2: #{tile.53} parent=0 // pred_check
    _
  $region3: #{tile.53} parent=0 // pred_check_branch
    %3 = sbr.rel (0) target = $region5
  $region4: #{tile.53} parent=0 // pred_region
    _
  $region5: #{tile.53} parent=0 // pred_fallthru
    _
  %v4 = vld [vmem:[%s0] ss:$0 sm:$0xff]
  %5 = vst [vmem:[%s1] sm:$0xf] %v4

// kernel: mul.21
$region0: #{mul.21}
  %s0 = inlined_call_operand.vmem [shape: f32[4,8], index: 0, kind: input, shape index: {}]
  %s1 = inlined_call_operand.vmem [shape: f32[32], index: 1, kind: output, shape index: {}]
  $region1: #{mul.21} parent=0
    #allocation0 [shape = 'u8[4096]{0}', space=vmem, size = 0x1000, scoped, tag = 'scoped mem for output reshape']
    #allocation1 [shape = 'u8[4096]{0}', space=vmem, size = 0x1000, scoped, tag = 'scoped mem for input reshape']
    %s3 = sshll.u32 1, 4
    %s4 = ssub.s32 %s3, 1
    %v5 = vld [vmem:[%s0] sm:%s4]
    %6 = vst [vmem:[#allocation1] sm:%s4] %v5
    %v7 = vld [vmem:[#allocation1] sm:$0x1]
    %vm8 = vcmask 64512
    %9 = vst.msk [vmem:[#allocation0] sm:$0x1] %vm8, %v7
    %s10 = scalar_lea.vmem [#allocation1], 3
    %v11 = vld [vmem:[%s10] sm:$0x1]
    %12 = vrot.lane.b32.xlu0 %v11, 24
    %v13 = vpop.permute.xlu0 %12
    %vm14 = vcmask 261312
    %15 = vst.msk [vmem:[#allocation0] sm:$0x1] %vm14, %v13
    %s16 = scalar_lea.vmem [#allocation1], 2
    %v17 = vld [vmem:[%s16] sm:$0x1]
    %18 = vrot.lane.b32.xlu0 %v17, 16
    %v19 = vpop.permute.xlu0 %18
    %vm20 = vcmask 195712
    %21 = vst.msk [vmem:[#allocation0] sm:$0x1] %vm20, %v19
    %s22 = scalar_lea.vmem [#allocation1], 1
    %v23 = vld [vmem:[%s22] sm:$0x1]
    %24 = vrot.lane.b32.xlu0 %v23, 8
    %v25 = vpop.permute.xlu0 %24
    %vm26 = vcmask 130112
    %27 = vst.msk [vmem:[#allocation0] sm:$0x1] %vm26, %v25
    %s29 = sshll.u32 1, 1
    %s30 = ssub.s32 %s29, 1
    %v32 = vld [vmem:[#allocation0] sm:%s30]
    %s33 = sshll.u32 1, 1
    %s34 = ssub.s32 %s33, 1
    %35 = vst [vmem:[%s1] sm:%s34] %v32

// kernel: tile.59
$region0: #{tile.59}
  %s0 = inlined_call_operand.vmem [shape: f32[4,8], index: 0, kind: input, shape index: {}]
  %s1 = inlined_call_operand.vmem [shape: f32[1,32], index: 1, kind: output, shape index: {}]
  $region1: #{tile.59} parent=0
    #allocation0 [shape = 'u8[4096]{0}', space=vmem, size = 0x1000, scoped, tag = 'scoped mem for output reshape']
    #allocation1 [shape = 'u8[4096]{0}', space=vmem, size = 0x1000, scoped, tag = 'scoped mem for input reshape']
    %s3 = sshll.u32 1, 4
    %s4 = ssub.s32 %s3, 1
    %v5 = vld [vmem:[%s0] sm:%s4]
    %6 = vst [vmem:[#allocation1] sm:%s4] %v5
    %v7 = vld [vmem:[#allocation1] sm:$0x1]
    %vm8 = vcmask 64512
    %9 = vst.msk [vmem:[#allocation0] sm:$0x1] %vm8, %v7
    %s10 = scalar_lea.vmem [#allocation1], 3
    %v11 = vld [vmem:[%s10] sm:$0x1]
    %12 = vrot.lane.b32.xlu0 %v11, 24
    %v13 = vpop.permute.xlu0 %12
    %vm14 = vcmask 261312
    %15 = vst.msk [vmem:[#allocation0] sm:$0x1] %vm14, %v13
    %s16 = scalar_lea.vmem [#allocation1], 2
    %v17 = vld [vmem:[%s16] sm:$0x1]
    %18 = vrot.lane.b32.xlu0 %v17, 16
    %v19 = vpop.permute.xlu0 %18
    %vm20 = vcmask 195712
    %21 = vst.msk [vmem:[#allocation0] sm:$0x1] %vm20, %v19
    %s22 = scalar_lea.vmem [#allocation1], 1
    %v23 = vld [vmem:[%s22] sm:$0x1]
    %24 = vrot.lane.b32.xlu0 %v23, 8
    %v25 = vpop.permute.xlu0 %24
    %vm26 = vcmask 130112
    %27 = vst.msk [vmem:[#allocation0] sm:$0x1] %vm26, %v25
    %s29 = sshll.u32 1, 1
    %s30 = ssub.s32 %s29, 1
    %v32 = vld [vmem:[#allocation0] sm:%s30]
    %s33 = sshll.u32 1, 1
    %s34 = ssub.s32 %s33, 1
    %35 = vst [vmem:[%s1] sm:%s34] %v32

// kernel: decoder_forward.8
$region0: #{decoder_forward.8}
  #allocation0 [shape = 'u32[]', space=smem, size = 0x4, offset = 0x4, fixed_abs, tag = 'smem constant byte address 0x4 - core index']
  #allocation1 [shape = 'u32[144,128]{1,0:T(1,128)}', space=vmem, size = 0x12000, scoped, tag = 'internal scratch']
  %s0 = inlined_call_operand.vmem [shape: bf16[584,64], index: 0, kind: input, shape index: {}]
  %s1 = inlined_call_operand.vmem [shape: bf16[64,128], index: 1, kind: input, shape index: {}]
  %s2 = inlined_call_operand.vmem [shape: f32[1,128], index: 2, kind: input, shape index: {}]
  %s3 = inlined_call_operand.vmem [shape: bf16[584,128], index: 3, kind: output, shape index: {}]
  %s4 = sld [smem:[#allocation0]]
  $region22: #{decoder_forward.8} parent=0
    _
  %s6 = ssub.s32 1, %s4
  %s7 = scalar_select 0, %s6, %s4
  // Predicated region
  $region2: #{decoder_forward.8} parent=0 // pred_check
    _
  $region3: #{decoder_forward.8} parent=0 // pred_check_branch
    %9 = sbr.rel (0) target = $region5
  $region4: #{decoder_forward.8} parent=0 // pred_region
    _
  $region5: #{decoder_forward.8} parent=0 // pred_fallthru
    _
  // Predicated region
  $region6: #{decoder_forward.8} parent=0 // pred_check
    _
  $region7: #{decoder_forward.8} parent=0 // pred_check_branch
    %11 = sbr.rel (0) target = $region9
  $region8: #{decoder_forward.8} parent=0 // pred_region
    _
  $region9: #{decoder_forward.8} parent=0 // pred_fallthru
    _
  // Predicated region
  $region10: #{decoder_forward.8} parent=0 // pred_check
    _
  $region11: #{decoder_forward.8} parent=0 // pred_check_branch
    %13 = sbr.rel (0) target = $region13
  $region12: #{decoder_forward.8} parent=0 // pred_region
    _
  $region13: #{decoder_forward.8} parent=0 // pred_fallthru
    _
  %v15 = vld [vmem:[%s0] sm:$0xf]
  %v16 = vld [vmem:[%s0 + $0x4] sm:$0xf]
  %v17 = vld [vmem:[%s0 + $0x8] sm:$0xf]
  %v18 = vld [vmem:[%s0 + $0xc] sm:$0xf]
  %v19 = vld [vmem:[%s0 + $0x10] sm:$0xf]
  %v20 = vld [vmem:[%s0 + $0x14] sm:$0xf]
  %v21 = vld [vmem:[%s0 + $0x18] sm:$0xf]
  %v22 = vld [vmem:[%s0 + $0x1c] sm:$0xf]
  %v23 = vld [vmem:[%s0 + $0x20] sm:$0xf]
  %v24 = vld [vmem:[%s0 + $0x24] sm:$0xf]
  %v25 = vld [vmem:[%s0 + $0x28] sm:$0xf]
  %v26 = vld [vmem:[%s0 + $0x2c] sm:$0xf]
  %v27 = vld [vmem:[%s0 + $0x30] sm:$0xf]
  %v28 = vld [vmem:[%s0 + $0x34] sm:$0xf]
  %v29 = vld [vmem:[%s0 + $0x38] sm:$0xf]
  %v30 = vld [vmem:[%s0 + $0x3c] sm:$0xf]
  %v31 = vld [vmem:[%s0 + $0x40] sm:$0xf]
  %v32 = vld [vmem:[%s0 + $0x44] sm:$0xf]
  %v33 = vld [vmem:[%s0 + $0x48] sm:$0xf]
  %v34 = vld [vmem:[%s0 + $0x4c] sm:$0xf]
  %v35 = vld [vmem:[%s0 + $0x50] sm:$0xf]
  %v36 = vld [vmem:[%s0 + $0x54] sm:$0xf]
  %v37 = vld [vmem:[%s0 + $0x58] sm:$0xf]
  %v38 = vld [vmem:[%s0 + $0x5c] sm:$0xf]
  %v39 = vld [vmem:[%s0 + $0x60] sm:$0xf]
  %v40 = vld [vmem:[%s0 + $0x64] sm:$0xf]
  %v41 = vld [vmem:[%s0 + $0x68] sm:$0xf]
  %v42 = vld [vmem:[%s0 + $0x6c] sm:$0xf]
  %v43 = vld [vmem:[%s0 + $0x70] sm:$0xf]
  %v44 = vld [vmem:[%s0 + $0x74] sm:$0xf]
  %v45 = vld [vmem:[%s0 + $0x78] sm:$0xf]
  %v46 = vld [vmem:[%s0 + $0x7c] sm:$0xf]
  %v47 = vld [vmem:[%s0 + $0x80] sm:$0xf]
  %v48 = vld [vmem:[%s0 + $0x84] sm:$0xf]
  %v49 = vld [vmem:[%s0 + $0x88] sm:$0xf]
  %v50 = vld [vmem:[%s0 + $0x8c] sm:$0xf]
  %v51 = vld [vmem:[%s0 + $0x90] sm:$0xf]
  %v52 = vld [vmem:[%s0 + $0x94] sm:$0xf]
  %v53 = vld [vmem:[%s0 + $0x98] sm:$0xf]
  %v54 = vld [vmem:[%s0 + $0x9c] sm:$0xf]
  %v55 = vld [vmem:[%s0 + $0xa0] sm:$0xf]
  %v56 = vld [vmem:[%s0 + $0xa4] sm:$0xf]
  %v57 = vld [vmem:[%s0 + $0xa8] sm:$0xf]
  %v58 = vld [vmem:[%s0 + $0xac] sm:$0xf]
  %v59 = vld [vmem:[%s0 + $0xb0] sm:$0xf]
  %v60 = vld [vmem:[%s0 + $0xb4] sm:$0xf]
  %v61 = vld [vmem:[%s0 + $0xb8] sm:$0xf]
  %v62 = vld [vmem:[%s0 + $0xbc] sm:$0xf]
  %v63 = vld [vmem:[%s0 + $0xc0] sm:$0xf]
  %v64 = vld [vmem:[%s0 + $0xc4] sm:$0xf]
  %v65 = vld [vmem:[%s0 + $0xc8] sm:$0xf]
  %v66 = vld [vmem:[%s0 + $0xcc] sm:$0xf]
  %v67 = vld [vmem:[%s0 + $0xd0] sm:$0xf]
  %v68 = vld [vmem:[%s0 + $0xd4] sm:$0xf]
  %v69 = vld [vmem:[%s0 + $0xd8] sm:$0xf]
  %v70 = vld [vmem:[%s0 + $0xdc] sm:$0xf]
  %v71 = vld [vmem:[%s0 + $0xe0] sm:$0xf]
  %v72 = vld [vmem:[%s0 + $0xe4] sm:$0xf]
  %v73 = vld [vmem:[%s0 + $0xe8] sm:$0xf]
  %v74 = vld [vmem:[%s0 + $0xec] sm:$0xf]
  %v75 = vld [vmem:[%s0 + $0xf0] sm:$0xf]
  %v76 = vld [vmem:[%s0 + $0xf4] sm:$0xf]
  %v77 = vld [vmem:[%s0 + $0xf8] sm:$0xf]
  %v78 = vld [vmem:[%s0 + $0xfc] sm:$0xf]
  %v79 = vld [vmem:[%s0 + $0x100] sm:$0xf]
  %v80 = vld [vmem:[%s0 + $0x104] sm:$0xf]
  %v81 = vld [vmem:[%s0 + $0x108] sm:$0xf]
  %v82 = vld [vmem:[%s0 + $0x10c] sm:$0xf]
  %v83 = vld [vmem:[%s0 + $0x110] sm:$0xf]
  %v84 = vld [vmem:[%s0 + $0x114] sm:$0xf]
  %v85 = vld [vmem:[%s0 + $0x118] sm:$0xf]
  %v86 = vld [vmem:[%s0 + $0x11c] sm:$0xf]
  %v87 = vld [vmem:[%s0 + $0x120] sm:$0xf]
  %v88 = vld [vmem:[%s1] sm:$0xf]
  %v89 = vld [vmem:[%s1 + $0x4] sm:$0xf]
  %v90 = vld [vmem:[%s1 + $0x8] sm:$0xf]
  %v91 = vld [vmem:[%s1 + $0xc] sm:$0xf]
  %v92 = vld [vmem:[%s1 + $0x10] sm:$0xf]
  %v93 = vld [vmem:[%s1 + $0x14] sm:$0xf]
  %v94 = vld [vmem:[%s1 + $0x18] sm:$0xf]
  %v95 = vld [vmem:[%s1 + $0x1c] sm:$0xf]
  %v96 = vld [vmem:[%s2] sm:$0x1]
  %v98 = vlaneseq
  %v99 = vshrl.u32 %v98, 7
  %v100 = vsub.s32 0, %v99
  %v101 = vrot.slane %v96, %v100
  %v176 = vunpack.c.l.b16 %v15
  %v177 = vunpack.c.l.b16 %v16
  %v178 = vunpack.c.l.b16 %v17
  %v179 = vunpack.c.l.b16 %v18
  %v180 = vunpack.c.l.b16 %v19
  %v181 = vunpack.c.l.b16 %v20
  %v182 = vunpack.c.l.b16 %v21
  %v183 = vunpack.c.l.b16 %v22
  %v184 = vunpack.c.l.b16 %v23
  %v185 = vunpack.c.l.b16 %v24
  %v186 = vunpack.c.l.b16 %v25
  %v187 = vunpack.c.l.b16 %v26
  %v188 = vunpack.c.l.b16 %v27
  %v189 = vunpack.c.l.b16 %v28
  %v190 = vunpack.c.l.b16 %v29
  %v191 = vunpack.c.l.b16 %v30
  %v192 = vunpack.c.l.b16 %v31
  %v193 = vunpack.c.l.b16 %v32
  %v194 = vunpack.c.l.b16 %v33
  %v195 = vunpack.c.l.b16 %v34
  %v196 = vunpack.c.l.b16 %v35
  %v197 = vunpack.c.l.b16 %v36
  %v198 = vunpack.c.l.b16 %v37
  %v199 = vunpack.c.l.b16 %v38
  %v200 = vunpack.c.l.b16 %v39
  %v201 = vunpack.c.l.b16 %v40
  %v202 = vunpack.c.l.b16 %v41
  %v203 = vunpack.c.l.b16 %v42
  %v204 = vunpack.c.l.b16 %v43
  %v205 = vunpack.c.l.b16 %v44
  %v206 = vunpack.c.l.b16 %v45
  %v207 = vunpack.c.l.b16 %v46
  %v208 = vunpack.c.l.b16 %v47
  %v209 = vunpack.c.l.b16 %v48
  %v210 = vunpack.c.l.b16 %v49
  %v211 = vunpack.c.l.b16 %v50
  %v212 = vunpack.c.l.b16 %v51
  %v213 = vunpack.c.l.b16 %v52
  %v214 = vunpack.c.l.b16 %v53
  %v215 = vunpack.c.l.b16 %v54
  %v216 = vunpack.c.l.b16 %v55
  %v217 = vunpack.c.l.b16 %v56
  %v218 = vunpack.c.l.b16 %v57
  %v219 = vunpack.c.l.b16 %v58
  %v220 = vunpack.c.l.b16 %v59
  %v221 = vunpack.c.l.b16 %v60
  %v222 = vunpack.c.l.b16 %v61
  %v223 = vunpack.c.l.b16 %v62
  %v224 = vunpack.c.l.b16 %v63
  %v225 = vunpack.c.l.b16 %v64
  %v226 = vunpack.c.l.b16 %v65
  %v227 = vunpack.c.l.b16 %v66
  %v228 = vunpack.c.l.b16 %v67
  %v229 = vunpack.c.l.b16 %v68
  %v230 = vunpack.c.l.b16 %v69
  %v231 = vunpack.c.l.b16 %v70
  %v232 = vunpack.c.l.b16 %v71
  %v233 = vunpack.c.l.b16 %v72
  %v234 = vunpack.c.l.b16 %v73
  %v235 = vunpack.c.l.b16 %v74
  %v236 = vunpack.c.l.b16 %v75
  %v237 = vunpack.c.l.b16 %v76
  %v238 = vunpack.c.l.b16 %v77
  %v239 = vunpack.c.l.b16 %v78
  %v240 = vunpack.c.l.b16 %v79
  %v241 = vunpack.c.l.b16 %v80
  %v242 = vunpack.c.l.b16 %v81
  %v243 = vunpack.c.l.b16 %v82
  %v244 = vunpack.c.l.b16 %v83
  %v245 = vunpack.c.l.b16 %v84
  %v246 = vunpack.c.l.b16 %v85
  %v247 = vunpack.c.l.b16 %v86
  %v248 = vunpack.c.l.b16 %v87
  %v249 = vpack.c.b16 %v177, %v176
  %v250 = vpack.c.b16 %v179, %v178
  %v251 = vpack.c.b16 %v181, %v180
  %v252 = vpack.c.b16 %v183, %v182
  %v253 = vpack.c.b16 %v185, %v184
  %v254 = vpack.c.b16 %v187, %v186
  %v255 = vpack.c.b16 %v189, %v188
  %v256 = vpack.c.b16 %v191, %v190
  %v257 = vpack.c.b16 %v193, %v192
  %v258 = vpack.c.b16 %v195, %v194
  %v259 = vpack.c.b16 %v197, %v196
  %v260 = vpack.c.b16 %v199, %v198
  %v261 = vpack.c.b16 %v201, %v200
  %v262 = vpack.c.b16 %v203, %v202
  %v263 = vpack.c.b16 %v205, %v204
  %v264 = vpack.c.b16 %v207, %v206
  %v265 = vpack.c.b16 %v209, %v208
  %v266 = vpack.c.b16 %v211, %v210
  %v267 = vpack.c.b16 %v213, %v212
  %v268 = vpack.c.b16 %v215, %v214
  %v269 = vpack.c.b16 %v217, %v216
  %v270 = vpack.c.b16 %v219, %v218
  %v271 = vpack.c.b16 %v221, %v220
  %v272 = vpack.c.b16 %v223, %v222
  %v273 = vpack.c.b16 %v225, %v224
  %v274 = vpack.c.b16 %v227, %v226
  %v275 = vpack.c.b16 %v229, %v228
  %v276 = vpack.c.b16 %v231, %v230
  %v277 = vpack.c.b16 %v233, %v232
  %v278 = vpack.c.b16 %v235, %v234
  %v279 = vpack.c.b16 %v237, %v236
  %v280 = vpack.c.b16 %v239, %v238
  %v281 = vpack.c.b16 %v241, %v240
  %v282 = vpack.c.b16 %v243, %v242
  %v283 = vpack.c.b16 %v245, %v244
  %v284 = vpack.c.b16 %v247, %v246
  %v285 = vpack.c.b16 %v248, %v248
  %v294 = vunpack.c.l.b16 %v88
  %v295 = vunpack.c.l.b16 %v89
  %v296 = vunpack.c.l.b16 %v90
  %v297 = vunpack.c.l.b16 %v91
  %v298 = vunpack.c.l.b16 %v92
  %v299 = vunpack.c.l.b16 %v93
  %v300 = vunpack.c.l.b16 %v94
  %v301 = vunpack.c.l.b16 %v95
  %v302 = vpack.c.b16 %v295, %v294
  %v303 = vpack.c.b16 %v297, %v296
  %v304 = vpack.c.b16 %v299, %v298
  %v305 = vpack.c.b16 %v301, %v300
  %vm310 = vcmask 523264
  %v312 = vsel %vm310, %v249, 0
  %v315 = vsel %vm310, %v250, 0
  %v318 = vsel %vm310, %v251, 0
  %v321 = vsel %vm310, %v252, 0
  %v324 = vsel %vm310, %v253, 0
  %v327 = vsel %vm310, %v254, 0
  %v330 = vsel %vm310, %v255, 0
  %v333 = vsel %vm310, %v256, 0
  %v336 = vsel %vm310, %v257, 0
  %v339 = vsel %vm310, %v258, 0
  %v342 = vsel %vm310, %v259, 0
  %v345 = vsel %vm310, %v260, 0
  %v348 = vsel %vm310, %v261, 0
  %v351 = vsel %vm310, %v262, 0
  %v354 = vsel %vm310, %v263, 0
  %v357 = vsel %vm310, %v264, 0
  %v360 = vsel %vm310, %v265, 0
  %v363 = vsel %vm310, %v266, 0
  %v366 = vsel %vm310, %v267, 0
  %v369 = vsel %vm310, %v268, 0
  %v372 = vsel %vm310, %v269, 0
  %v375 = vsel %vm310, %v270, 0
  %v378 = vsel %vm310, %v271, 0
  %v381 = vsel %vm310, %v272, 0
  %v384 = vsel %vm310, %v273, 0
  %v387 = vsel %vm310, %v274, 0
  %v390 = vsel %vm310, %v275, 0
  %v393 = vsel %vm310, %v276, 0
  %v396 = vsel %vm310, %v277, 0
  %v399 = vsel %vm310, %v278, 0
  %v402 = vsel %vm310, %v279, 0
  %v405 = vsel %vm310, %v280, 0
  %v408 = vsel %vm310, %v281, 0
  %v411 = vsel %vm310, %v282, 0
  %v414 = vsel %vm310, %v283, 0
  %v417 = vsel %vm310, %v284, 0
  %v420 = vsel %vm310, %v285, 0
  %422 = vmatprep.subr.bf16.mxu0 0
  %423 = vmatpush1.bf16.msra.mxu0 0
  %424 = vmatprep.subr.bf16.mxu0 0
  %425 = vmatpush1.bf16.msra.mxu0 0
  %426 = vmatprep.subr.bf16.mxu0 0
  %427 = vmatpush1.bf16.msra.mxu0 0
  %428 = vmatprep.subr.bf16.mxu0 0
  %429 = vmatpush1.bf16.msra.mxu0 0
  %430 = vmatprep.subr.bf16.mxu0 0
  %431 = vmatpush1.bf16.msra.mxu0 %v305
  %432 = vmatprep.subr.bf16.mxu0 0
  %433 = vmatpush1.bf16.msra.mxu0 %v304
  %434 = vmatprep.subr.bf16.mxu0 0
  %435 = vmatpush1.bf16.msra.mxu0 %v303
  %436 = vmatprep.subr.bf16.mxu0 0
  %437 = vmatpush1.bf16.msra.mxu0 %v302
  %438 = vmatprep.subr.bf16.mxu0 0
  %439 = vmatpush2.bf16.msra.mxu0 0
  %440 = vmatprep.subr.bf16.mxu0 0
  %441 = vmatpush2.bf16.msra.mxu0 0
  %442 = vmatprep.subr.bf16.mxu0 0
  %443 = vmatpush2.bf16.msra.mxu0 0
  %444 = vmatprep.subr.bf16.mxu0 0
  %445 = vmatpush2.bf16.msra.mxu0 0
  %446 = vmatprep.subr.bf16.mxu0 0
  %447 = vmatpush2.bf16.msra.mxu0 0
  %448 = vmatprep.subr.bf16.mxu0 0
  %449 = vmatpush2.bf16.msra.mxu0 0
  %450 = vmatprep.subr.bf16.mxu0 0
  %451 = vmatpush2.bf16.msra.mxu0 0
  %452 = vmatprep.subr.bf16.mxu0 0
  %453 = vmatpush2.bf16.msra.mxu0 0
  %454 = vmatprep.mubr.bf16.mxu0 0
  %455 = vmatmul.mubr.bf16.gmra.mxu0 %v312
  %v456 = vpop.f32.mrf.mxu0
  %v457 = vadd.f32 %v101, %v456
  %v458 = vpop.f32.mrf.mxu0
  %v459 = vpop.f32.mrf.mxu0
  %v460 = vadd.f32 %v101, %v459
  %v461 = vpop.f32.mrf.mxu0
  %462 = vmatprep.mubr.bf16.mxu0 0
  %463 = vmatmul.mubr.bf16.gmra.mxu0 %v315
  %v464 = vpop.f32.mrf.mxu0
  %v465 = vadd.f32 %v101, %v464
  %v466 = vpop.f32.mrf.mxu0
  %v467 = vpop.f32.mrf.mxu0
  %v468 = vadd.f32 %v101, %v467
  %v469 = vpop.f32.mrf.mxu0
  %470 = vmatprep.mubr.bf16.mxu0 0
  %471 = vmatmul.mubr.bf16.gmra.mxu0 %v318
  %v472 = vpop.f32.mrf.mxu0
  %v473 = vadd.f32 %v101, %v472
  %v474 = vpop.f32.mrf.mxu0
  %v475 = vpop.f32.mrf.mxu0
  %v476 = vadd.f32 %v101, %v475
  %v477 = vpop.f32.mrf.mxu0
  %478 = vmatprep.mubr.bf16.mxu0 0
  %479 = vmatmul.mubr.bf16.gmra.mxu0 %v321
  %v480 = vpop.f32.mrf.mxu0
  %v481 = vadd.f32 %v101, %v480
  %v482 = vpop.f32.mrf.mxu0
  %v483 = vpop.f32.mrf.mxu0
  %v484 = vadd.f32 %v101, %v483
  %v485 = vpop.f32.mrf.mxu0
  %486 = vmatprep.mubr.bf16.mxu0 0
  %487 = vmatmul.mubr.bf16.gmra.mxu0 %v324
  %v488 = vpop.f32.mrf.mxu0
  %v489 = vadd.f32 %v101, %v488
  %v490 = vpop.f32.mrf.mxu0
  %v491 = vpop.f32.mrf.mxu0
  %v492 = vadd.f32 %v101, %v491
  %v493 = vpop.f32.mrf.mxu0
  %494 = vmatprep.mubr.bf16.mxu0 0
  %495 = vmatmul.mubr.bf16.gmra.mxu0 %v327
  %v496 = vpop.f32.mrf.mxu0
  %v497 = vadd.f32 %v101, %v496
  %v498 = vpop.f32.mrf.mxu0
  %v499 = vpop.f32.mrf.mxu0
  %v500 = vadd.f32 %v101, %v499
  %v501 = vpop.f32.mrf.mxu0
  %502 = vmatprep.mubr.bf16.mxu0 0
  %503 = vmatmul.mubr.bf16.gmra.mxu0 %v330
  %v504 = vpop.f32.mrf.mxu0
  %v505 = vadd.f32 %v101, %v504
  %v506 = vpop.f32.mrf.mxu0
  %v507 = vpop.f32.mrf.mxu0
  %v508 = vadd.f32 %v101, %v507
  %v509 = vpop.f32.mrf.mxu0
  %510 = vmatprep.mubr.bf16.mxu0 0
  %511 = vmatmul.mubr.bf16.gmra.mxu0 %v333
  %v512 = vpop.f32.mrf.mxu0
  %v513 = vadd.f32 %v101, %v512
  %v514 = vpop.f32.mrf.mxu0
  %v515 = vpop.f32.mrf.mxu0
  %v516 = vadd.f32 %v101, %v515
  %v517 = vpop.f32.mrf.mxu0
  %518 = vmatprep.mubr.bf16.mxu0 0
  %519 = vmatmul.mubr.bf16.gmra.mxu0 %v336
  %v520 = vpop.f32.mrf.mxu0
  %v521 = vadd.f32 %v101, %v520
  %v522 = vpop.f32.mrf.mxu0
  %v523 = vpop.f32.mrf.mxu0
  %v524 = vadd.f32 %v101, %v523
  %v525 = vpop.f32.mrf.mxu0
  %526 = vmatprep.mubr.bf16.mxu0 0
  %527 = vmatmul.mubr.bf16.gmra.mxu0 %v339
  %v528 = vpop.f32.mrf.mxu0
  %v529 = vadd.f32 %v101, %v528
  %v530 = vpop.f32.mrf.mxu0
  %v531 = vpop.f32.mrf.mxu0
  %v532 = vadd.f32 %v101, %v531
  %v533 = vpop.f32.mrf.mxu0
  %534 = vmatprep.mubr.bf16.mxu0 0
  %535 = vmatmul.mubr.bf16.gmra.mxu0 %v342
  %v536 = vpop.f32.mrf.mxu0
  %v537 = vadd.f32 %v101, %v536
  %v538 = vpop.f32.mrf.mxu0
  %v539 = vpop.f32.mrf.mxu0
  %v540 = vadd.f32 %v101, %v539
  %v541 = vpop.f32.mrf.mxu0
  %542 = vmatprep.mubr.bf16.mxu0 0
  %543 = vmatmul.mubr.bf16.gmra.mxu0 %v345
  %v544 = vpop.f32.mrf.mxu0
  %v545 = vadd.f32 %v101, %v544
  %v546 = vpop.f32.mrf.mxu0
  %v547 = vpop.f32.mrf.mxu0
  %v548 = vadd.f32 %v101, %v547
  %v549 = vpop.f32.mrf.mxu0
  %550 = vmatprep.mubr.bf16.mxu0 0
  %551 = vmatmul.mubr.bf16.gmra.mxu0 %v348
  %v552 = vpop.f32.mrf.mxu0
  %v553 = vadd.f32 %v101, %v552
  %v554 = vpop.f32.mrf.mxu0
  %v555 = vpop.f32.mrf.mxu0
  %v556 = vadd.f32 %v101, %v555
  %v557 = vpop.f32.mrf.mxu0
  %558 = vmatprep.mubr.bf16.mxu0 0
  %559 = vmatmul.mubr.bf16.gmra.mxu0 %v351
  %v560 = vpop.f32.mrf.mxu0
  %v561 = vadd.f32 %v101, %v560
  %v562 = vpop.f32.mrf.mxu0
  %v563 = vpop.f32.mrf.mxu0
  %v564 = vadd.f32 %v101, %v563
  %v565 = vpop.f32.mrf.mxu0
  %566 = vmatprep.mubr.bf16.mxu0 0
  %567 = vmatmul.mubr.bf16.gmra.mxu0 %v354
  %v568 = vpop.f32.mrf.mxu0
  %v569 = vadd.f32 %v101, %v568
  %v570 = vpop.f32.mrf.mxu0
  %v571 = vpop.f32.mrf.mxu0
  %v572 = vadd.f32 %v101, %v571
  %v573 = vpop.f32.mrf.mxu0
  %574 = vmatprep.mubr.bf16.mxu0 0
  %575 = vmatmul.mubr.bf16.gmra.mxu0 %v357
  %v576 = vpop.f32.mrf.mxu0
  %v577 = vadd.f32 %v101, %v576
  %v578 = vpop.f32.mrf.mxu0
  %v579 = vpop.f32.mrf.mxu0
  %v580 = vadd.f32 %v101, %v579
  %v581 = vpop.f32.mrf.mxu0
  %582 = vmatprep.mubr.bf16.mxu0 0
  %583 = vmatmul.mubr.bf16.gmra.mxu0 %v360
  %v584 = vpop.f32.mrf.mxu0
  %v585 = vadd.f32 %v101, %v584
  %v586 = vpop.f32.mrf.mxu0
  %v587 = vpop.f32.mrf.mxu0
  %v588 = vadd.f32 %v101, %v587
  %v589 = vpop.f32.mrf.mxu0
  %590 = vmatprep.mubr.bf16.mxu0 0
  %591 = vmatmul.mubr.bf16.gmra.mxu0 %v363
  %v592 = vpop.f32.mrf.mxu0
  %v593 = vadd.f32 %v101, %v592
  %v594 = vpop.f32.mrf.mxu0
  %v595 = vpop.f32.mrf.mxu0
  %v596 = vadd.f32 %v101, %v595
  %v597 = vpop.f32.mrf.mxu0
  %598 = vmatprep.mubr.bf16.mxu0 0
  %599 = vmatmul.mubr.bf16.gmra.mxu0 %v366
  %v600 = vpop.f32.mrf.mxu0
  %v601 = vadd.f32 %v101, %v600
  %v602 = vpop.f32.mrf.mxu0
  %v603 = vpop.f32.mrf.mxu0
  %v604 = vadd.f32 %v101, %v603
  %v605 = vpop.f32.mrf.mxu0
  %606 = vmatprep.mubr.bf16.mxu0 0
  %607 = vmatmul.mubr.bf16.gmra.mxu0 %v369
  %v608 = vpop.f32.mrf.mxu0
  %v609 = vadd.f32 %v101, %v608
  %v610 = vpop.f32.mrf.mxu0
  %v611 = vpop.f32.mrf.mxu0
  %v612 = vadd.f32 %v101, %v611
  %v613 = vpop.f32.mrf.mxu0
  %614 = vmatprep.mubr.bf16.mxu0 0
  %615 = vmatmul.mubr.bf16.gmra.mxu0 %v372
  %v616 = vpop.f32.mrf.mxu0
  %v617 = vadd.f32 %v101, %v616
  %v618 = vpop.f32.mrf.mxu0
  %v619 = vpop.f32.mrf.mxu0
  %v620 = vadd.f32 %v101, %v619
  %v621 = vpop.f32.mrf.mxu0
  %622 = vmatprep.mubr.bf16.mxu0 0
  %623 = vmatmul.mubr.bf16.gmra.mxu0 %v375
  %v624 = vpop.f32.mrf.mxu0
  %v625 = vadd.f32 %v101, %v624
  %v626 = vpop.f32.mrf.mxu0
  %v627 = vpop.f32.mrf.mxu0
  %v628 = vadd.f32 %v101, %v627
  %v629 = vpop.f32.mrf.mxu0
  %630 = vmatprep.mubr.bf16.mxu0 0
  %631 = vmatmul.mubr.bf16.gmra.mxu0 %v378
  %v632 = vpop.f32.mrf.mxu0
  %v633 = vadd.f32 %v101, %v632
  %v634 = vpop.f32.mrf.mxu0
  %v635 = vpop.f32.mrf.mxu0
  %v636 = vadd.f32 %v101, %v635
  %v637 = vpop.f32.mrf.mxu0
  %638 = vmatprep.mubr.bf16.mxu0 0
  %639 = vmatmul.mubr.bf16.gmra.mxu0 %v381
  %v640 = vpop.f32.mrf.mxu0
  %v641 = vadd.f32 %v101, %v640
  %v642 = vpop.f32.mrf.mxu0
  %v643 = vpop.f32.mrf.mxu0
  %v644 = vadd.f32 %v101, %v643
  %v645 = vpop.f32.mrf.mxu0
  %646 = vmatprep.mubr.bf16.mxu0 0
  %647 = vmatmul.mubr.bf16.gmra.mxu0 %v384
  %v648 = vpop.f32.mrf.mxu0
  %v649 = vadd.f32 %v101, %v648
  %v650 = vpop.f32.mrf.mxu0
  %v651 = vpop.f32.mrf.mxu0
  %v652 = vadd.f32 %v101, %v651
  %v653 = vpop.f32.mrf.mxu0
  %654 = vmatprep.mubr.bf16.mxu0 0
  %655 = vmatmul.mubr.bf16.gmra.mxu0 %v387
  %v656 = vpop.f32.mrf.mxu0
  %v657 = vadd.f32 %v101, %v656
  %v658 = vpop.f32.mrf.mxu0
  %v659 = vpop.f32.mrf.mxu0
  %v660 = vadd.f32 %v101, %v659
  %v661 = vpop.f32.mrf.mxu0
  %662 = vmatprep.mubr.bf16.mxu0 0
  %663 = vmatmul.mubr.bf16.gmra.mxu0 %v390
  %v664 = vpop.f32.mrf.mxu0
  %v665 = vadd.f32 %v101, %v664
  %v666 = vpop.f32.mrf.mxu0
  %v667 = vpop.f32.mrf.mxu0
  %v668 = vadd.f32 %v101, %v667
  %v669 = vpop.f32.mrf.mxu0
  %670 = vmatprep.mubr.bf16.mxu0 0
  %671 = vmatmul.mubr.bf16.gmra.mxu0 %v393
  %v672 = vpop.f32.mrf.mxu0
  %v673 = vadd.f32 %v101, %v672
  %v674 = vpop.f32.mrf.mxu0
  %v675 = vpop.f32.mrf.mxu0
  %v676 = vadd.f32 %v101, %v675
  %v677 = vpop.f32.mrf.mxu0
  %678 = vmatprep.mubr.bf16.mxu0 0
  %679 = vmatmul.mubr.bf16.gmra.mxu0 %v396
  %v680 = vpop.f32.mrf.mxu0
  %v681 = vadd.f32 %v101, %v680
  %v682 = vpop.f32.mrf.mxu0
  %v683 = vpop.f32.mrf.mxu0
  %v684 = vadd.f32 %v101, %v683
  %v685 = vpop.f32.mrf.mxu0
  %686 = vmatprep.mubr.bf16.mxu0 0
  %687 = vmatmul.mubr.bf16.gmra.mxu0 %v399
  %v688 = vpop.f32.mrf.mxu0
  %v689 = vadd.f32 %v101, %v688
  %v690 = vpop.f32.mrf.mxu0
  %v691 = vpop.f32.mrf.mxu0
  %v692 = vadd.f32 %v101, %v691
  %v693 = vpop.f32.mrf.mxu0
  %694 = vmatprep.mubr.bf16.mxu0 0
  %695 = vmatmul.mubr.bf16.gmra.mxu0 %v402
  %v696 = vpop.f32.mrf.mxu0
  %v697 = vadd.f32 %v101, %v696
  %v698 = vpop.f32.mrf.mxu0
  %v699 = vpop.f32.mrf.mxu0
  %v700 = vadd.f32 %v101, %v699
  %v701 = vpop.f32.mrf.mxu0
  %702 = vmatprep.mubr.bf16.mxu0 0
  %703 = vmatmul.mubr.bf16.gmra.mxu0 %v405
  %v704 = vpop.f32.mrf.mxu0
  %v705 = vadd.f32 %v101, %v704
  %v706 = vpop.f32.mrf.mxu0
  %v707 = vpop.f32.mrf.mxu0
  %v708 = vadd.f32 %v101, %v707
  %v709 = vpop.f32.mrf.mxu0
  %710 = vmatprep.mubr.bf16.mxu0 0
  %711 = vmatmul.mubr.bf16.gmra.mxu0 %v408
  %v712 = vpop.f32.mrf.mxu0
  %v713 = vadd.f32 %v101, %v712
  %v714 = vpop.f32.mrf.mxu0
  %v715 = vpop.f32.mrf.mxu0
  %v716 = vadd.f32 %v101, %v715
  %v717 = vpop.f32.mrf.mxu0
  %718 = vmatprep.mubr.bf16.mxu0 0
  %719 = vmatmul.mubr.bf16.gmra.mxu0 %v411
  %v720 = vpop.f32.mrf.mxu0
  %v721 = vadd.f32 %v101, %v720
  %v722 = vpop.f32.mrf.mxu0
  %v723 = vpop.f32.mrf.mxu0
  %v724 = vadd.f32 %v101, %v723
  %v725 = vpop.f32.mrf.mxu0
  %726 = vmatprep.mubr.bf16.mxu0 0
  %727 = vmatmul.mubr.bf16.gmra.mxu0 %v414
  %v728 = vpop.f32.mrf.mxu0
  %v729 = vadd.f32 %v101, %v728
  %v730 = vpop.f32.mrf.mxu0
  %v731 = vpop.f32.mrf.mxu0
  %v732 = vadd.f32 %v101, %v731
  %v733 = vpop.f32.mrf.mxu0
  %734 = vmatprep.mubr.bf16.mxu0 0
  %735 = vmatmul.mubr.bf16.gmra.mxu0 %v417
  %v736 = vpop.f32.mrf.mxu0
  %v737 = vadd.f32 %v101, %v736
  %v738 = vpop.f32.mrf.mxu0
  %v739 = vpop.f32.mrf.mxu0
  %v740 = vadd.f32 %v101, %v739
  %v741 = vpop.f32.mrf.mxu0
  %742 = vmatprep.mubr.bf16.mxu0 0
  %743 = vmatmul.mubr.bf16.gmra.mxu0 %v420
  %v744 = vpop.f32.mrf.mxu0
  %v745 = vadd.f32 %v101, %v744
  %v746 = vpop.f32.mrf.mxu0
  %v747 = vpop.f32.mrf.mxu0
  %v748 = vpop.f32.mrf.mxu0
  %749 = vdwg.mxu0
  %v750 = vmax.f32 %v457, 0.0
  %v751 = vmax.f32 %v460, 0.0
  %v752 = vmax.f32 %v465, 0.0
  %v753 = vmax.f32 %v468, 0.0
  %v754 = vmax.f32 %v473, 0.0
  %v755 = vmax.f32 %v476, 0.0
  %v756 = vmax.f32 %v481, 0.0
  %v757 = vmax.f32 %v484, 0.0
  %v758 = vmax.f32 %v489, 0.0
  %v759 = vmax.f32 %v492, 0.0
  %v760 = vmax.f32 %v497, 0.0
  %v761 = vmax.f32 %v500, 0.0
  %v762 = vmax.f32 %v505, 0.0
  %v763 = vmax.f32 %v508, 0.0
  %v764 = vmax.f32 %v513, 0.0
  %v765 = vmax.f32 %v516, 0.0
  %v766 = vmax.f32 %v521, 0.0
  %v767 = vmax.f32 %v524, 0.0
  %v768 = vmax.f32 %v529, 0.0
  %v769 = vmax.f32 %v532, 0.0
  %v770 = vmax.f32 %v537, 0.0
  %v771 = vmax.f32 %v540, 0.0
  %v772 = vmax.f32 %v545, 0.0
  %v773 = vmax.f32 %v548, 0.0
  %v774 = vmax.f32 %v553, 0.0
  %v775 = vmax.f32 %v556, 0.0
  %v776 = vmax.f32 %v561, 0.0
  %v777 = vmax.f32 %v564, 0.0
  %v778 = vmax.f32 %v569, 0.0
  %v779 = vmax.f32 %v572, 0.0
  %v780 = vmax.f32 %v577, 0.0
  %v781 = vmax.f32 %v580, 0.0
  %v782 = vmax.f32 %v585, 0.0
  %v783 = vmax.f32 %v588, 0.0
  %v784 = vmax.f32 %v593, 0.0
  %v785 = vmax.f32 %v596, 0.0
  %v786 = vmax.f32 %v601, 0.0
  %v787 = vmax.f32 %v604, 0.0
  %v788 = vmax.f32 %v609, 0.0
  %v789 = vmax.f32 %v612, 0.0
  %v790 = vmax.f32 %v617, 0.0
  %v791 = vmax.f32 %v620, 0.0
  %v792 = vmax.f32 %v625, 0.0
  %v793 = vmax.f32 %v628, 0.0
  %v794 = vmax.f32 %v633, 0.0
  %v795 = vmax.f32 %v636, 0.0
  %v796 = vmax.f32 %v641, 0.0
  %v797 = vmax.f32 %v644, 0.0
  %v798 = vmax.f32 %v649, 0.0
  %v799 = vmax.f32 %v652, 0.0
  %v800 = vmax.f32 %v657, 0.0
  %v801 = vmax.f32 %v660, 0.0
  %v802 = vmax.f32 %v665, 0.0
  %v803 = vmax.f32 %v668, 0.0
  %v804 = vmax.f32 %v673, 0.0
  %v805 = vmax.f32 %v676, 0.0
  %v806 = vmax.f32 %v681, 0.0
  %v807 = vmax.f32 %v684, 0.0
  %v808 = vmax.f32 %v689, 0.0
  %v809 = vmax.f32 %v692, 0.0
  %v810 = vmax.f32 %v697, 0.0
  %v811 = vmax.f32 %v700, 0.0
  %v812 = vmax.f32 %v705, 0.0
  %v813 = vmax.f32 %v708, 0.0
  %v814 = vmax.f32 %v713, 0.0
  %v815 = vmax.f32 %v716, 0.0
  %v816 = vmax.f32 %v721, 0.0
  %v817 = vmax.f32 %v724, 0.0
  %v818 = vmax.f32 %v729, 0.0
  %v819 = vmax.f32 %v732, 0.0
  %v820 = vmax.f32 %v737, 0.0
  %v821 = vmax.f32 %v740, 0.0
  %v822 = vmax.f32 %v745, 0.0
  %v823 = vpack.c.bf16 %v751, %v750
  %v824 = vpack.c.bf16 %v753, %v752
  %v825 = vpack.c.bf16 %v755, %v754
  %v826 = vpack.c.bf16 %v757, %v756
  %v827 = vpack.c.bf16 %v759, %v758
  %v828 = vpack.c.bf16 %v761, %v760
  %v829 = vpack.c.bf16 %v763, %v762
  %v830 = vpack.c.bf16 %v765, %v764
  %v831 = vpack.c.bf16 %v767, %v766
  %v832 = vpack.c.bf16 %v769, %v768
  %v833 = vpack.c.bf16 %v771, %v770
  %v834 = vpack.c.bf16 %v773, %v772
  %v835 = vpack.c.bf16 %v775, %v774
  %v836 = vpack.c.bf16 %v777, %v776
  %v837 = vpack.c.bf16 %v779, %v778
  %v838 = vpack.c.bf16 %v781, %v780
  %v839 = vpack.c.bf16 %v783, %v782
  %v840 = vpack.c.bf16 %v785, %v784
  %v841 = vpack.c.bf16 %v787, %v786
  %v842 = vpack.c.bf16 %v789, %v788
  %v843 = vpack.c.bf16 %v791, %v790
  %v844 = vpack.c.bf16 %v793, %v792
  %v845 = vpack.c.bf16 %v795, %v794
  %v846 = vpack.c.bf16 %v797, %v796
  %v847 = vpack.c.bf16 %v799, %v798
  %v848 = vpack.c.bf16 %v801, %v800
  %v849 = vpack.c.bf16 %v803, %v802
  %v850 = vpack.c.bf16 %v805, %v804
  %v851 = vpack.c.bf16 %v807, %v806
  %v852 = vpack.c.bf16 %v809, %v808
  %v853 = vpack.c.bf16 %v811, %v810
  %v854 = vpack.c.bf16 %v813, %v812
  %v855 = vpack.c.bf16 %v815, %v814
  %v856 = vpack.c.bf16 %v817, %v816
  %v857 = vpack.c.bf16 %v819, %v818
  %v858 = vpack.c.bf16 %v821, %v820
  %v859 = vpack.c.bf16 %v822, %v822
  %v897 = vunpack.c.l.b16 %v823
  %v898 = vunpack.c.h.b16 %v823
  %v899 = vunpack.c.l.b16 %v824
  %v900 = vunpack.c.h.b16 %v824
  %v901 = vunpack.c.l.b16 %v825
  %v902 = vunpack.c.h.b16 %v825
  %v903 = vunpack.c.l.b16 %v826
  %v904 = vunpack.c.h.b16 %v826
  %v905 = vunpack.c.l.b16 %v827
  %v906 = vunpack.c.h.b16 %v827
  %v907 = vunpack.c.l.b16 %v828
  %v908 = vunpack.c.h.b16 %v828
  %v909 = vunpack.c.l.b16 %v829
  %v910 = vunpack.c.h.b16 %v829
  %v911 = vunpack.c.l.b16 %v830
  %v912 = vunpack.c.h.b16 %v830
  %v913 = vunpack.c.l.b16 %v831
  %v914 = vunpack.c.h.b16 %v831
  %v915 = vunpack.c.l.b16 %v832
  %v916 = vunpack.c.h.b16 %v832
  %v917 = vunpack.c.l.b16 %v833
  %v918 = vunpack.c.h.b16 %v833
  %v919 = vunpack.c.l.b16 %v834
  %v920 = vunpack.c.h.b16 %v834
  %v921 = vunpack.c.l.b16 %v835
  %v922 = vunpack.c.h.b16 %v835
  %v923 = vunpack.c.l.b16 %v836
  %v924 = vunpack.c.h.b16 %v836
  %v925 = vunpack.c.l.b16 %v837
  %v926 = vunpack.c.h.b16 %v837
  %v927 = vunpack.c.l.b16 %v838
  %v928 = vunpack.c.h.b16 %v838
  %v929 = vunpack.c.l.b16 %v839
  %v930 = vunpack.c.h.b16 %v839
  %v931 = vunpack.c.l.b16 %v840
  %v932 = vunpack.c.h.b16 %v840
  %v933 = vunpack.c.l.b16 %v841
  %v934 = vunpack.c.h.b16 %v841
  %v935 = vunpack.c.l.b16 %v842
  %v936 = vunpack.c.h.b16 %v842
  %v937 = vunpack.c.l.b16 %v843
  %v938 = vunpack.c.h.b16 %v843
  %v939 = vunpack.c.l.b16 %v844
  %v940 = vunpack.c.h.b16 %v844
  %v941 = vunpack.c.l.b16 %v845
  %v942 = vunpack.c.h.b16 %v845
  %v943 = vunpack.c.l.b16 %v846
  %v944 = vunpack.c.h.b16 %v846
  %v945 = vunpack.c.l.b16 %v847
  %v946 = vunpack.c.h.b16 %v847
  %v947 = vunpack.c.l.b16 %v848
  %v948 = vunpack.c.h.b16 %v848
  %v949 = vunpack.c.l.b16 %v849
  %v950 = vunpack.c.h.b16 %v849
  %v951 = vunpack.c.l.b16 %v850
  %v952 = vunpack.c.h.b16 %v850
  %v953 = vunpack.c.l.b16 %v851
  %v954 = vunpack.c.h.b16 %v851
  %v955 = vunpack.c.l.b16 %v852
  %v956 = vunpack.c.h.b16 %v852
  %v957 = vunpack.c.l.b16 %v853
  %v958 = vunpack.c.h.b16 %v853
  %v959 = vunpack.c.l.b16 %v854
  %v960 = vunpack.c.h.b16 %v854
  %v961 = vunpack.c.l.b16 %v855
  %v962 = vunpack.c.h.b16 %v855
  %v963 = vunpack.c.l.b16 %v856
  %v964 = vunpack.c.h.b16 %v856
  %v965 = vunpack.c.l.b16 %v857
  %v966 = vunpack.c.h.b16 %v857
  %v967 = vunpack.c.l.b16 %v858
  %v968 = vunpack.c.h.b16 %v858
  %v969 = vunpack.c.l.b16 %v859
  %v970 = vpack.c.b16 %v897, %v897
  %v971 = vpack.c.b16 %v898, %v898
  %v972 = vpack.c.b16 %v899, %v899
  %v973 = vpack.c.b16 %v900, %v900
  %v974 = vpack.c.b16 %v901, %v901
  %v975 = vpack.c.b16 %v902, %v902
  %v976 = vpack.c.b16 %v903, %v903
  %v977 = vpack.c.b16 %v904, %v904
  %v978 = vpack.c.b16 %v905, %v905
  %v979 = vpack.c.b16 %v906, %v906
  %v980 = vpack.c.b16 %v907, %v907
  %v981 = vpack.c.b16 %v908, %v908
  %v982 = vpack.c.b16 %v909, %v909
  %v983 = vpack.c.b16 %v910, %v910
  %v984 = vpack.c.b16 %v911, %v911
  %v985 = vpack.c.b16 %v912, %v912
  %v986 = vpack.c.b16 %v913, %v913
  %v987 = vpack.c.b16 %v914, %v914
  %v988 = vpack.c.b16 %v915, %v915
  %v989 = vpack.c.b16 %v916, %v916
  %v990 = vpack.c.b16 %v917, %v917
  %v991 = vpack.c.b16 %v918, %v918
  %v992 = vpack.c.b16 %v919, %v919
  %v993 = vpack.c.b16 %v920, %v920
  %v994 = vpack.c.b16 %v921, %v921
  %v995 = vpack.c.b16 %v922, %v922
  %v996 = vpack.c.b16 %v923, %v923
  %v997 = vpack.c.b16 %v924, %v924
  %v998 = vpack.c.b16 %v925, %v925
  %v999 = vpack.c.b16 %v926, %v926
  %v1000 = vpack.c.b16 %v927, %v927
  %v1001 = vpack.c.b16 %v928, %v928
  %v1002 = vpack.c.b16 %v929, %v929
  %v1003 = vpack.c.b16 %v930, %v930
  %v1004 = vpack.c.b16 %v931, %v931
  %v1005 = vpack.c.b16 %v932, %v932
  %v1006 = vpack.c.b16 %v933, %v933
  %v1007 = vpack.c.b16 %v934, %v934
  %v1008 = vpack.c.b16 %v935, %v935
  %v1009 = vpack.c.b16 %v936, %v936
  %v1010 = vpack.c.b16 %v937, %v937
  %v1011 = vpack.c.b16 %v938, %v938
  %v1012 = vpack.c.b16 %v939, %v939
  %v1013 = vpack.c.b16 %v940, %v940
  %v1014 = vpack.c.b16 %v941, %v941
  %v1015 = vpack.c.b16 %v942, %v942
  %v1016 = vpack.c.b16 %v943, %v943
  %v1017 = vpack.c.b16 %v944, %v944
  %v1018 = vpack.c.b16 %v945, %v945
  %v1019 = vpack.c.b16 %v946, %v946
  %v1020 = vpack.c.b16 %v947, %v947
  %v1021 = vpack.c.b16 %v948, %v948
  %v1022 = vpack.c.b16 %v949, %v949
  %v1023 = vpack.c.b16 %v950, %v950
  %v1024 = vpack.c.b16 %v951, %v951
  %v1025 = vpack.c.b16 %v952, %v952
  %v1026 = vpack.c.b16 %v953, %v953
  %v1027 = vpack.c.b16 %v954, %v954
  %v1028 = vpack.c.b16 %v955, %v955
  %v1029 = vpack.c.b16 %v956, %v956
  %v1030 = vpack.c.b16 %v957, %v957
  %v1031 = vpack.c.b16 %v958, %v958
  %v1032 = vpack.c.b16 %v959, %v959
  %v1033 = vpack.c.b16 %v960, %v960
  %v1034 = vpack.c.b16 %v961, %v961
  %v1035 = vpack.c.b16 %v962, %v962
  %v1036 = vpack.c.b16 %v963, %v963
  %v1037 = vpack.c.b16 %v964, %v964
  %v1038 = vpack.c.b16 %v965, %v965
  %v1039 = vpack.c.b16 %v966, %v966
  %v1040 = vpack.c.b16 %v967, %v967
  %v1041 = vpack.c.b16 %v968, %v968
  %v1042 = vpack.c.b16 %v969, %v969
  %1116 = vst [vmem:[%s3] sm:$0xf] %v970
  %1117 = vst [vmem:[%s3 + $0x4] sm:$0xf] %v971
  %1118 = vst [vmem:[%s3 + $0x8] sm:$0xf] %v972
  %1119 = vst [vmem:[%s3 + $0xc] sm:$0xf] %v973
  %1120 = vst [vmem:[%s3 + $0x10] sm:$0xf] %v974
  %1121 = vst [vmem:[%s3 + $0x14] sm:$0xf] %v975
  %1122 = vst [vmem:[%s3 + $0x18] sm:$0xf] %v976
  %1123 = vst [vmem:[%s3 + $0x1c] sm:$0xf] %v977
  %1124 = vst [vmem:[%s3 + $0x20] sm:$0xf] %v978
  %1125 = vst [vmem:[%s3 + $0x24] sm:$0xf] %v979
  %1126 = vst [vmem:[%s3 + $0x28] sm:$0xf] %v980
  %1127 = vst [vmem:[%s3 + $0x2c] sm:$0xf] %v981
  %1128 = vst [vmem:[%s3 + $0x30] sm:$0xf] %v982
  %1129 = vst [vmem:[%s3 + $0x34] sm:$0xf] %v983
  %1130 = vst [vmem:[%s3 + $0x38] sm:$0xf] %v984
  %1131 = vst [vmem:[%s3 + $0x3c] sm:$0xf] %v985
  %1132 = vst [vmem:[%s3 + $0x40] sm:$0xf] %v986
  %1133 = vst [vmem:[%s3 + $0x44] sm:$0xf] %v987
  %1134 = vst [vmem:[%s3 + $0x48] sm:$0xf] %v988
  %1135 = vst [vmem:[%s3 + $0x4c] sm:$0xf] %v989
  %1136 = vst [vmem:[%s3 + $0x50] sm:$0xf] %v990
  %1137 = vst [vmem:[%s3 + $0x54] sm:$0xf] %v991
  %1138 = vst [vmem:[%s3 + $0x58] sm:$0xf] %v992
  %1139 = vst [vmem:[%s3 + $0x5c] sm:$0xf] %v993
  %1140 = vst [vmem:[%s3 + $0x60] sm:$0xf] %v994
  %1141 = vst [vmem:[%s3 + $0x64] sm:$0xf] %v995
  %1142 = vst [vmem:[%s3 + $0x68] sm:$0xf] %v996
  %1143 = vst [vmem:[%s3 + $0x6c] sm:$0xf] %v997
  %1144 = vst [vmem:[%s3 + $0x70] sm:$0xf] %v998
  %1145 = vst [vmem:[%s3 + $0x74] sm:$0xf] %v999
  %1146 = vst [vmem:[%s3 + $0x78] sm:$0xf] %v1000
  %1147 = vst [vmem:[%s3 + $0x7c] sm:$0xf] %v1001
  %1148 = vst [vmem:[%s3 + $0x80] sm:$0xf] %v1002
  %1149 = vst [vmem:[%s3 + $0x84] sm:$0xf] %v1003
  %1150 = vst [vmem:[%s3 + $0x88] sm:$0xf] %v1004
  %1151 = vst [vmem:[%s3 + $0x8c] sm:$0xf] %v1005
  %1152 = vst [vmem:[%s3 + $0x90] sm:$0xf] %v1006
  %1153 = vst [vmem:[%s3 + $0x94] sm:$0xf] %v1007
  %1154 = vst [vmem:[%s3 + $0x98] sm:$0xf] %v1008
  %1155 = vst [vmem:[%s3 + $0x9c] sm:$0xf] %v1009
  %1156 = vst [vmem:[%s3 + $0xa0] sm:$0xf] %v1010
  %1157 = vst [vmem:[%s3 + $0xa4] sm:$0xf] %v1011
  %1158 = vst [vmem:[%s3 + $0xa8] sm:$0xf] %v1012
  %1159 = vst [vmem:[%s3 + $0xac] sm:$0xf] %v1013
  %1160 = vst [vmem:[%s3 + $0xb0] sm:$0xf] %v1014
  %1161 = vst [vmem:[%s3 + $0xb4] sm:$0xf] %v1015
  %1162 = vst [vmem:[%s3 + $0xb8] sm:$0xf] %v1016
  %1163 = vst [vmem:[%s3 + $0xbc] sm:$0xf] %v1017
  %1164 = vst [vmem:[%s3 + $0xc0] sm:$0xf] %v1018
  %1165 = vst [vmem:[%s3 + $0xc4] sm:$0xf] %v1019
  %1166 = vst [vmem:[%s3 + $0xc8] sm:$0xf] %v1020
  %1167 = vst [vmem:[%s3 + $0xcc] sm:$0xf] %v1021
  %1168 = vst [vmem:[%s3 + $0xd0] sm:$0xf] %v1022
  %1169 = vst [vmem:[%s3 + $0xd4] sm:$0xf] %v1023
  %1170 = vst [vmem:[%s3 + $0xd8] sm:$0xf] %v1024
  %1171 = vst [vmem:[%s3 + $0xdc] sm:$0xf] %v1025
  %1172 = vst [vmem:[%s3 + $0xe0] sm:$0xf] %v1026
  %1173 = vst [vmem:[%s3 + $0xe4] sm:$0xf] %v1027
  %1174 = vst [vmem:[%s3 + $0xe8] sm:$0xf] %v1028
  %1175 = vst [vmem:[%s3 + $0xec] sm:$0xf] %v1029
  %1176 = vst [vmem:[%s3 + $0xf0] sm:$0xf] %v1030
  %1177 = vst [vmem:[%s3 + $0xf4] sm:$0xf] %v1031
  %1178 = vst [vmem:[%s3 + $0xf8] sm:$0xf] %v1032
  %1179 = vst [vmem:[%s3 + $0xfc] sm:$0xf] %v1033
  %1180 = vst [vmem:[%s3 + $0x100] sm:$0xf] %v1034
  %1181 = vst [vmem:[%s3 + $0x104] sm:$0xf] %v1035
  %1182 = vst [vmem:[%s3 + $0x108] sm:$0xf] %v1036
  %1183 = vst [vmem:[%s3 + $0x10c] sm:$0xf] %v1037
  %1184 = vst [vmem:[%s3 + $0x110] sm:$0xf] %v1038
  %1185 = vst [vmem:[%s3 + $0x114] sm:$0xf] %v1039
  %1186 = vst [vmem:[%s3 + $0x118] sm:$0xf] %v1040
  %1187 = vst [vmem:[%s3 + $0x11c] sm:$0xf] %v1041
  %1188 = vst [vmem:[%s3 + $0x120] sm:$0xf] %v1042
  // Predicated region
  $region14: #{decoder_forward.8} parent=0 // pred_check
    _
  $region15: #{decoder_forward.8} parent=0 // pred_check_branch
    %1190 = sbr.rel (0) target = $region17
  $region16: #{decoder_forward.8} parent=0 // pred_region
    _
  $region17: #{decoder_forward.8} parent=0 // pred_fallthru
    _
  // Predicated region
  $region18: #{decoder_forward.8} parent=0 // pred_check
    _
  $region19: #{decoder_forward.8} parent=0 // pred_check_branch
    %1192 = sbr.rel (0) target = $region21
  $region20: #{decoder_forward.8} parent=0 // pred_region
    _
  $region21: #{decoder_forward.8} parent=0 // pred_fallthru
    _

// kernel: decoder_forward.9
$region0: #{decoder_forward.9}
  #allocation0 [shape = 'u32[]', space=smem, size = 0x4, offset = 0x4, fixed_abs, tag = 'smem constant byte address 0x4 - core index']
  #allocation1 [shape = 'u32[144,128]{1,0:T(1,128)}', space=vmem, size = 0x12000, scoped, tag = 'internal scratch']
  %s0 = inlined_call_operand.vmem [shape: bf16[2048,72], index: 0, kind: input, shape index: {}]
  %s1 = inlined_call_operand.vmem [shape: bf16[72,128], index: 1, kind: input, shape index: {}]
  %s2 = inlined_call_operand.vmem [shape: f32[1,128], index: 2, kind: input, shape index: {}]
  %s3 = inlined_call_operand.vmem [shape: f32[2048,128], index: 3, kind: output, shape index: {}]
  %s4 = sld [smem:[#allocation0]]
  $region22: #{decoder_forward.9} parent=0
    _
  %s6 = ssub.s32 1, %s4
  %s7 = scalar_select 0, %s6, %s4
  // Predicated region
  $region2: #{decoder_forward.9} parent=0 // pred_check
    _
  $region3: #{decoder_forward.9} parent=0 // pred_check_branch
    %9 = sbr.rel (0) target = $region5
  $region4: #{decoder_forward.9} parent=0 // pred_region
    _
  $region5: #{decoder_forward.9} parent=0 // pred_fallthru
    _
  // Predicated region
  $region6: #{decoder_forward.9} parent=0 // pred_check
    _
  $region7: #{decoder_forward.9} parent=0 // pred_check_branch
    %11 = sbr.rel (0) target = $region9
  $region8: #{decoder_forward.9} parent=0 // pred_region
    _
  $region9: #{decoder_forward.9} parent=0 // pred_fallthru
    _
  // Predicated region
  $region10: #{decoder_forward.9} parent=0 // pred_check
    _
  $region11: #{decoder_forward.9} parent=0 // pred_check_branch
    %13 = sbr.rel (0) target = $region13
  $region12: #{decoder_forward.9} parent=0 // pred_region
    _
  $region13: #{decoder_forward.9} parent=0 // pred_fallthru
    _
  %v15 = vld [vmem:[%s0] sm:$0xf]
  %v16 = vld [vmem:[%s0 + $0x4] sm:$0xf]
  %v17 = vld [vmem:[%s0 + $0x8] sm:$0xf]
  %v18 = vld [vmem:[%s0 + $0xc] sm:$0xf]
  %v19 = vld [vmem:[%s0 + $0x10] sm:$0xf]
  %v20 = vld [vmem:[%s0 + $0x14] sm:$0xf]
  %v21 = vld [vmem:[%s0 + $0x18] sm:$0xf]
  %v22 = vld [vmem:[%s0 + $0x1c] sm:$0xf]
  %v23 = vld [vmem:[%s0 + $0x20] sm:$0xf]
  %v24 = vld [vmem:[%s0 + $0x24] sm:$0xf]
  %v25 = vld [vmem:[%s0 + $0x28] sm:$0xf]
  %v26 = vld [vmem:[%s0 + $0x2c] sm:$0xf]
  %v27 = vld [vmem:[%s0 + $0x30] sm:$0xf]
  %v28 = vld [vmem:[%s0 + $0x34] sm:$0xf]
  %v29 = vld [vmem:[%s0 + $0x38] sm:$0xf]
  %v30 = vld [vmem:[%s0 + $0x3c] sm:$0xf]
  %v31 = vld [vmem:[%s0 + $0x40] sm:$0xf]
  %v32 = vld [vmem:[%s0 + $0x44] sm:$0xf]
  %v33 = vld [vmem:[%s0 + $0x48] sm:$0xf]
  %v34 = vld [vmem:[%s0 + $0x4c] sm:$0xf]
  %v35 = vld [vmem:[%s0 + $0x50] sm:$0xf]
  %v36 = vld [vmem:[%s0 + $0x54] sm:$0xf]
  %v37 = vld [vmem:[%s0 + $0x58] sm:$0xf]
  %v38 = vld [vmem:[%s0 + $0x5c] sm:$0xf]
  %v39 = vld [vmem:[%s0 + $0x60] sm:$0xf]
  %v40 = vld [vmem:[%s0 + $0x64] sm:$0xf]
  %v41 = vld [vmem:[%s0 + $0x68] sm:$0xf]
  %v42 = vld [vmem:[%s0 + $0x6c] sm:$0xf]
  %v43 = vld [vmem:[%s0 + $0x70] sm:$0xf]
  %v44 = vld [vmem:[%s0 + $0x74] sm:$0xf]
  %v45 = vld [vmem:[%s0 + $0x78] sm:$0xf]
  %v46 = vld [vmem:[%s0 + $0x7c] sm:$0xf]
  %v47 = vld [vmem:[%s0 + $0x80] sm:$0xf]
  %v48 = vld [vmem:[%s0 + $0x84] sm:$0xf]
  %v49 = vld [vmem:[%s0 + $0x88] sm:$0xf]
  %v50 = vld [vmem:[%s0 + $0x8c] sm:$0xf]
  %v51 = vld [vmem:[%s0 + $0x90] sm:$0xf]
  %v52 = vld [vmem:[%s0 + $0x94] sm:$0xf]
  %v53 = vld [vmem:[%s0 + $0x98] sm:$0xf]
  %v54 = vld [vmem:[%s0 + $0x9c] sm:$0xf]
  %v55 = vld [vmem:[%s0 + $0xa0] sm:$0xf]
  %v56 = vld [vmem:[%s0 + $0xa4] sm:$0xf]
  %v57 = vld [vmem:[%s0 + $0xa8] sm:$0xf]
  %v58 = vld [vmem:[%s0 + $0xac] sm:$0xf]
  %v59 = vld [vmem:[%s0 + $0xb0] sm:$0xf]
  %v60 = vld [vmem:[%s0 + $0xb4] sm:$0xf]
  %v61 = vld [vmem:[%s0 + $0xb8] sm:$0xf]
  %v62 = vld [vmem:[%s0 + $0xbc] sm:$0xf]
  %v63 = vld [vmem:[%s0 + $0xc0] sm:$0xf]
  %v64 = vld [vmem:[%s0 + $0xc4] sm:$0xf]
  %v65 = vld [vmem:[%s0 + $0xc8] sm:$0xf]
  %v66 = vld [vmem:[%s0 + $0xcc] sm:$0xf]
  %v67 = vld [vmem:[%s0 + $0xd0] sm:$0xf]
  %v68 = vld [vmem:[%s0 + $0xd4] sm:$0xf]
  %v69 = vld [vmem:[%s0 + $0xd8] sm:$0xf]
  %v70 = vld [vmem:[%s0 + $0xdc] sm:$0xf]
  %v71 = vld [vmem:[%s0 + $0xe0] sm:$0xf]
  %v72 = vld [vmem:[%s0 + $0xe4] sm:$0xf]
  %v73 = vld [vmem:[%s0 + $0xe8] sm:$0xf]
  %v74 = vld [vmem:[%s0 + $0xec] sm:$0xf]
  %v75 = vld [vmem:[%s0 + $0xf0] sm:$0xf]
  %v76 = vld [vmem:[%s0 + $0xf4] sm:$0xf]
  %v77 = vld [vmem:[%s0 + $0xf8] sm:$0xf]
  %v78 = vld [vmem:[%s0 + $0xfc] sm:$0xf]
  %v79 = vld [vmem:[%s0 + $0x100] sm:$0xf]
  %v80 = vld [vmem:[%s0 + $0x104] sm:$0xf]
  %v81 = vld [vmem:[%s0 + $0x108] sm:$0xf]
  %v82 = vld [vmem:[%s0 + $0x10c] sm:$0xf]
  %v83 = vld [vmem:[%s0 + $0x110] sm:$0xf]
  %v84 = vld [vmem:[%s0 + $0x114] sm:$0xf]
  %v85 = vld [vmem:[%s0 + $0x118] sm:$0xf]
  %v86 = vld [vmem:[%s0 + $0x11c] sm:$0xf]
  %v87 = vld [vmem:[%s0 + $0x120] sm:$0xf]
  %v88 = vld [vmem:[%s0 + $0x124] sm:$0xf]
  %v89 = vld [vmem:[%s0 + $0x128] sm:$0xf]
  %v90 = vld [vmem:[%s0 + $0x12c] sm:$0xf]
  %v91 = vld [vmem:[%s0 + $0x130] sm:$0xf]
  %v92 = vld [vmem:[%s0 + $0x134] sm:$0xf]
  %v93 = vld [vmem:[%s0 + $0x138] sm:$0xf]
  %v94 = vld [vmem:[%s0 + $0x13c] sm:$0xf]
  %v95 = vld [vmem:[%s0 + $0x140] sm:$0xf]
  %v96 = vld [vmem:[%s0 + $0x144] sm:$0xf]
  %v97 = vld [vmem:[%s0 + $0x148] sm:$0xf]
  %v98 = vld [vmem:[%s0 + $0x14c] sm:$0xf]
  %v99 = vld [vmem:[%s0 + $0x150] sm:$0xf]
  %v100 = vld [vmem:[%s0 + $0x154] sm:$0xf]
  %v101 = vld [vmem:[%s0 + $0x158] sm:$0xf]
  %v102 = vld [vmem:[%s0 + $0x15c] sm:$0xf]
  %v103 = vld [vmem:[%s0 + $0x160] sm:$0xf]
  %v104 = vld [vmem:[%s0 + $0x164] sm:$0xf]
  %v105 = vld [vmem:[%s0 + $0x168] sm:$0xf]
  %v106 = vld [vmem:[%s0 + $0x16c] sm:$0xf]
  %v107 = vld [vmem:[%s0 + $0x170] sm:$0xf]
  %v108 = vld [vmem:[%s0 + $0x174] sm:$0xf]
  %v109 = vld [vmem:[%s0 + $0x178] sm:$0xf]
  %v110 = vld [vmem:[%s0 + $0x17c] sm:$0xf]
  %v111 = vld [vmem:[%s0 + $0x180] sm:$0xf]
  %v112 = vld [vmem:[%s0 + $0x184] sm:$0xf]
  %v113 = vld [vmem:[%s0 + $0x188] sm:$0xf]
  %v114 = vld [vmem:[%s0 + $0x18c] sm:$0xf]
  %v115 = vld [vmem:[%s0 + $0x190] sm:$0xf]
  %v116 = vld [vmem:[%s0 + $0x194] sm:$0xf]
  %v117 = vld [vmem:[%s0 + $0x198] sm:$0xf]
  %v118 = vld [vmem:[%s0 + $0x19c] sm:$0xf]
  %v119 = vld [vmem:[%s0 + $0x1a0] sm:$0xf]
  %v120 = vld [vmem:[%s0 + $0x1a4] sm:$0xf]
  %v121 = vld [vmem:[%s0 + $0x1a8] sm:$0xf]
  %v122 = vld [vmem:[%s0 + $0x1ac] sm:$0xf]
  %v123 = vld [vmem:[%s0 + $0x1b0] sm:$0xf]
  %v124 = vld [vmem:[%s0 + $0x1b4] sm:$0xf]
  %v125 = vld [vmem:[%s0 + $0x1b8] sm:$0xf]
  %v126 = vld [vmem:[%s0 + $0x1bc] sm:$0xf]
  %v127 = vld [vmem:[%s0 + $0x1c0] sm:$0xf]
  %v128 = vld [vmem:[%s0 + $0x1c4] sm:$0xf]
  %v129 = vld [vmem:[%s0 + $0x1c8] sm:$0xf]
  %v130 = vld [vmem:[%s0 + $0x1cc] sm:$0xf]
  %v131 = vld [vmem:[%s0 + $0x1d0] sm:$0xf]
  %v132 = vld [vmem:[%s0 + $0x1d4] sm:$0xf]
  %v133 = vld [vmem:[%s0 + $0x1d8] sm:$0xf]
  %v134 = vld [vmem:[%s0 + $0x1dc] sm:$0xf]
  %v135 = vld [vmem:[%s0 + $0x1e0] sm:$0xf]
  %v136 = vld [vmem:[%s0 + $0x1e4] sm:$0xf]
  %v137 = vld [vmem:[%s0 + $0x1e8] sm:$0xf]
  %v138 = vld [vmem:[%s0 + $0x1ec] sm:$0xf]
  %v139 = vld [vmem:[%s0 + $0x1f0] sm:$0xf]
  %v140 = vld [vmem:[%s0 + $0x1f4] sm:$0xf]
  %v141 = vld [vmem:[%s0 + $0x1f8] sm:$0xf]
  %v142 = vld [vmem:[%s0 + $0x1fc] sm:$0xf]
  %v143 = vld [vmem:[%s0 + $0x200] sm:$0xf]
  %v144 = vld [vmem:[%s0 + $0x204] sm:$0xf]
  %v145 = vld [vmem:[%s0 + $0x208] sm:$0xf]
  %v146 = vld [vmem:[%s0 + $0x20c] sm:$0xf]
  %v147 = vld [vmem:[%s0 + $0x210] sm:$0xf]
  %v148 = vld [vmem:[%s0 + $0x214] sm:$0xf]
  %v149 = vld [vmem:[%s0 + $0x218] sm:$0xf]
  %v150 = vld [vmem:[%s0 + $0x21c] sm:$0xf]
  %v151 = vld [vmem:[%s0 + $0x220] sm:$0xf]
  %v152 = vld [vmem:[%s0 + $0x224] sm:$0xf]
  %v153 = vld [vmem:[%s0 + $0x228] sm:$0xf]
  %v154 = vld [vmem:[%s0 + $0x22c] sm:$0xf]
  %v155 = vld [vmem:[%s0 + $0x230] sm:$0xf]
  %v156 = vld [vmem:[%s0 + $0x234] sm:$0xf]
  %v157 = vld [vmem:[%s0 + $0x238] sm:$0xf]
  %v158 = vld [vmem:[%s0 + $0x23c] sm:$0xf]
  %v159 = vld [vmem:[%s0 + $0x240] sm:$0xf]
  %v160 = vld [vmem:[%s0 + $0x244] sm:$0xf]
  %v161 = vld [vmem:[%s0 + $0x248] sm:$0xf]
  %v162 = vld [vmem:[%s0 + $0x24c] sm:$0xf]
  %v163 = vld [vmem:[%s0 + $0x250] sm:$0xf]
  %v164 = vld [vmem:[%s0 + $0x254] sm:$0xf]
  %v165 = vld [vmem:[%s0 + $0x258] sm:$0xf]
  %v166 = vld [vmem:[%s0 + $0x25c] sm:$0xf]
  %v167 = vld [vmem:[%s0 + $0x260] sm:$0xf]
  %v168 = vld [vmem:[%s0 + $0x264] sm:$0xf]
  %v169 = vld [vmem:[%s0 + $0x268] sm:$0xf]
  %v170 = vld [vmem:[%s0 + $0x26c] sm:$0xf]
  %v171 = vld [vmem:[%s0 + $0x270] sm:$0xf]
  %v172 = vld [vmem:[%s0 + $0x274] sm:$0xf]
  %v173 = vld [vmem:[%s0 + $0x278] sm:$0xf]
  %v174 = vld [vmem:[%s0 + $0x27c] sm:$0xf]
  %v175 = vld [vmem:[%s0 + $0x280] sm:$0xf]
  %v176 = vld [vmem:[%s0 + $0x284] sm:$0xf]
  %v177 = vld [vmem:[%s0 + $0x288] sm:$0xf]
  %v178 = vld [vmem:[%s0 + $0x28c] sm:$0xf]
  %v179 = vld [vmem:[%s0 + $0x290] sm:$0xf]
  %v180 = vld [vmem:[%s0 + $0x294] sm:$0xf]
  %v181 = vld [vmem:[%s0 + $0x298] sm:$0xf]
  %v182 = vld [vmem:[%s0 + $0x29c] sm:$0xf]
  %v183 = vld [vmem:[%s0 + $0x2a0] sm:$0xf]
  %v184 = vld [vmem:[%s0 + $0x2a4] sm:$0xf]
  %v185 = vld [vmem:[%s0 + $0x2a8] sm:$0xf]
  %v186 = vld [vmem:[%s0 + $0x2ac] sm:$0xf]
  %v187 = vld [vmem:[%s0 + $0x2b0] sm:$0xf]
  %v188 = vld [vmem:[%s0 + $0x2b4] sm:$0xf]
  %v189 = vld [vmem:[%s0 + $0x2b8] sm:$0xf]
  %v190 = vld [vmem:[%s0 + $0x2bc] sm:$0xf]
  %v191 = vld [vmem:[%s0 + $0x2c0] sm:$0xf]
  %v192 = vld [vmem:[%s0 + $0x2c4] sm:$0xf]
  %v193 = vld [vmem:[%s0 + $0x2c8] sm:$0xf]
  %v194 = vld [vmem:[%s0 + $0x2cc] sm:$0xf]
  %v195 = vld [vmem:[%s0 + $0x2d0] sm:$0xf]
  %v196 = vld [vmem:[%s0 + $0x2d4] sm:$0xf]
  %v197 = vld [vmem:[%s0 + $0x2d8] sm:$0xf]
  %v198 = vld [vmem:[%s0 + $0x2dc] sm:$0xf]
  %v199 = vld [vmem:[%s0 + $0x2e0] sm:$0xf]
  %v200 = vld [vmem:[%s0 + $0x2e4] sm:$0xf]
  %v201 = vld [vmem:[%s0 + $0x2e8] sm:$0xf]
  %v202 = vld [vmem:[%s0 + $0x2ec] sm:$0xf]
  %v203 = vld [vmem:[%s0 + $0x2f0] sm:$0xf]
  %v204 = vld [vmem:[%s0 + $0x2f4] sm:$0xf]
  %v205 = vld [vmem:[%s0 + $0x2f8] sm:$0xf]
  %v206 = vld [vmem:[%s0 + $0x2fc] sm:$0xf]
  %v207 = vld [vmem:[%s0 + $0x300] sm:$0xf]
  %v208 = vld [vmem:[%s0 + $0x304] sm:$0xf]
  %v209 = vld [vmem:[%s0 + $0x308] sm:$0xf]
  %v210 = vld [vmem:[%s0 + $0x30c] sm:$0xf]
  %v211 = vld [vmem:[%s0 + $0x310] sm:$0xf]
  %v212 = vld [vmem:[%s0 + $0x314] sm:$0xf]
  %v213 = vld [vmem:[%s0 + $0x318] sm:$0xf]
  %v214 = vld [vmem:[%s0 + $0x31c] sm:$0xf]
  %v215 = vld [vmem:[%s0 + $0x320] sm:$0xf]
  %v216 = vld [vmem:[%s0 + $0x324] sm:$0xf]
  %v217 = vld [vmem:[%s0 + $0x328] sm:$0xf]
  %v218 = vld [vmem:[%s0 + $0x32c] sm:$0xf]
  %v219 = vld [vmem:[%s0 + $0x330] sm:$0xf]
  %v220 = vld [vmem:[%s0 + $0x334] sm:$0xf]
  %v221 = vld [vmem:[%s0 + $0x338] sm:$0xf]
  %v222 = vld [vmem:[%s0 + $0x33c] sm:$0xf]
  %v223 = vld [vmem:[%s0 + $0x340] sm:$0xf]
  %v224 = vld [vmem:[%s0 + $0x344] sm:$0xf]
  %v225 = vld [vmem:[%s0 + $0x348] sm:$0xf]
  %v226 = vld [vmem:[%s0 + $0x34c] sm:$0xf]
  %v227 = vld [vmem:[%s0 + $0x350] sm:$0xf]
  %v228 = vld [vmem:[%s0 + $0x354] sm:$0xf]
  %v229 = vld [vmem:[%s0 + $0x358] sm:$0xf]
  %v230 = vld [vmem:[%s0 + $0x35c] sm:$0xf]
  %v231 = vld [vmem:[%s0 + $0x360] sm:$0xf]
  %v232 = vld [vmem:[%s0 + $0x364] sm:$0xf]
  %v233 = vld [vmem:[%s0 + $0x368] sm:$0xf]
  %v234 = vld [vmem:[%s0 + $0x36c] sm:$0xf]
  %v235 = vld [vmem:[%s0 + $0x370] sm:$0xf]
  %v236 = vld [vmem:[%s0 + $0x374] sm:$0xf]
  %v237 = vld [vmem:[%s0 + $0x378] sm:$0xf]
  %v238 = vld [vmem:[%s0 + $0x37c] sm:$0xf]
  %v239 = vld [vmem:[%s0 + $0x380] sm:$0xf]
  %v240 = vld [vmem:[%s0 + $0x384] sm:$0xf]
  %v241 = vld [vmem:[%s0 + $0x388] sm:$0xf]
  %v242 = vld [vmem:[%s0 + $0x38c] sm:$0xf]
  %v243 = vld [vmem:[%s0 + $0x390] sm:$0xf]
  %v244 = vld [vmem:[%s0 + $0x394] sm:$0xf]
  %v245 = vld [vmem:[%s0 + $0x398] sm:$0xf]
  %v246 = vld [vmem:[%s0 + $0x39c] sm:$0xf]
  %v247 = vld [vmem:[%s0 + $0x3a0] sm:$0xf]
  %v248 = vld [vmem:[%s0 + $0x3a4] sm:$0xf]
  %v249 = vld [vmem:[%s0 + $0x3a8] sm:$0xf]
  %v250 = vld [vmem:[%s0 + $0x3ac] sm:$0xf]
  %v251 = vld [vmem:[%s0 + $0x3b0] sm:$0xf]
  %v252 = vld [vmem:[%s0 + $0x3b4] sm:$0xf]
  %v253 = vld [vmem:[%s0 + $0x3b8] sm:$0xf]
  %v254 = vld [vmem:[%s0 + $0x3bc] sm:$0xf]
  %v255 = vld [vmem:[%s0 + $0x3c0] sm:$0xf]
  %v256 = vld [vmem:[%s0 + $0x3c4] sm:$0xf]
  %v257 = vld [vmem:[%s0 + $0x3c8] sm:$0xf]
  %v258 = vld [vmem:[%s0 + $0x3cc] sm:$0xf]
  %v259 = vld [vmem:[%s0 + $0x3d0] sm:$0xf]
  %v260 = vld [vmem:[%s0 + $0x3d4] sm:$0xf]
  %v261 = vld [vmem:[%s0 + $0x3d8] sm:$0xf]
  %v262 = vld [vmem:[%s0 + $0x3dc] sm:$0xf]
  %v263 = vld [vmem:[%s0 + $0x3e0] sm:$0xf]
  %v264 = vld [vmem:[%s0 + $0x3e4] sm:$0xf]
  %v265 = vld [vmem:[%s0 + $0x3e8] sm:$0xf]
  %v266 = vld [vmem:[%s0 + $0x3ec] sm:$0xf]
  %v267 = vld [vmem:[%s0 + $0x3f0] sm:$0xf]
  %v268 = vld [vmem:[%s0 + $0x3f4] sm:$0xf]
  %v269 = vld [vmem:[%s0 + $0x3f8] sm:$0xf]
  %v270 = vld [vmem:[%s0 + $0x3fc] sm:$0xf]
  %v271 = vld [vmem:[%s1] sm:$0xf]
  %v272 = vld [vmem:[%s1 + $0x4] sm:$0xf]
  %v273 = vld [vmem:[%s1 + $0x8] sm:$0xf]
  %v274 = vld [vmem:[%s1 + $0xc] sm:$0xf]
  %v275 = vld [vmem:[%s1 + $0x10] sm:$0xf]
  %v276 = vld [vmem:[%s1 + $0x14] sm:$0xf]
  %v277 = vld [vmem:[%s1 + $0x18] sm:$0xf]
  %v278 = vld [vmem:[%s1 + $0x1c] sm:$0xf]
  %v279 = vld [vmem:[%s1 + $0x20] sm:$0xf]
  %v280 = vld [vmem:[%s2] sm:$0x1]
  %v282 = vlaneseq
  %v283 = vshrl.u32 %v282, 7
  %v284 = vsub.s32 0, %v283
  %v285 = vrot.slane %v280, %v284
  %v543 = vunpack.c.l.b16 %v15
  %v544 = vunpack.c.l.b16 %v16
  %v545 = vunpack.c.l.b16 %v17
  %v546 = vunpack.c.l.b16 %v18
  %v547 = vunpack.c.l.b16 %v19
  %v548 = vunpack.c.l.b16 %v20
  %v549 = vunpack.c.l.b16 %v21
  %v550 = vunpack.c.l.b16 %v22
  %v551 = vunpack.c.l.b16 %v23
  %v552 = vunpack.c.l.b16 %v24
  %v553 = vunpack.c.l.b16 %v25
  %v554 = vunpack.c.l.b16 %v26
  %v555 = vunpack.c.l.b16 %v27
  %v556 = vunpack.c.l.b16 %v28
  %v557 = vunpack.c.l.b16 %v29
  %v558 = vunpack.c.l.b16 %v30
  %v559 = vunpack.c.l.b16 %v31
  %v560 = vunpack.c.l.b16 %v32
  %v561 = vunpack.c.l.b16 %v33
  %v562 = vunpack.c.l.b16 %v34
  %v563 = vunpack.c.l.b16 %v35
  %v564 = vunpack.c.l.b16 %v36
  %v565 = vunpack.c.l.b16 %v37
  %v566 = vunpack.c.l.b16 %v38
  %v567 = vunpack.c.l.b16 %v39
  %v568 = vunpack.c.l.b16 %v40
  %v569 = vunpack.c.l.b16 %v41
  %v570 = vunpack.c.l.b16 %v42
  %v571 = vunpack.c.l.b16 %v43
  %v572 = vunpack.c.l.b16 %v44
  %v573 = vunpack.c.l.b16 %v45
  %v574 = vunpack.c.l.b16 %v46
  %v575 = vunpack.c.l.b16 %v47
  %v576 = vunpack.c.l.b16 %v48
  %v577 = vunpack.c.l.b16 %v49
  %v578 = vunpack.c.l.b16 %v50
  %v579 = vunpack.c.l.b16 %v51
  %v580 = vunpack.c.l.b16 %v52
  %v581 = vunpack.c.l.b16 %v53
  %v582 = vunpack.c.l.b16 %v54
  %v583 = vunpack.c.l.b16 %v55
  %v584 = vunpack.c.l.b16 %v56
  %v585 = vunpack.c.l.b16 %v57
  %v586 = vunpack.c.l.b16 %v58
  %v587 = vunpack.c.l.b16 %v59
  %v588 = vunpack.c.l.b16 %v60
  %v589 = vunpack.c.l.b16 %v61
  %v590 = vunpack.c.l.b16 %v62
  %v591 = vunpack.c.l.b16 %v63
  %v592 = vunpack.c.l.b16 %v64
  %v593 = vunpack.c.l.b16 %v65
  %v594 = vunpack.c.l.b16 %v66
  %v595 = vunpack.c.l.b16 %v67
  %v596 = vunpack.c.l.b16 %v68
  %v597 = vunpack.c.l.b16 %v69
  %v598 = vunpack.c.l.b16 %v70
  %v599 = vunpack.c.l.b16 %v71
  %v600 = vunpack.c.l.b16 %v72
  %v601 = vunpack.c.l.b16 %v73
  %v602 = vunpack.c.l.b16 %v74
  %v603 = vunpack.c.l.b16 %v75
  %v604 = vunpack.c.l.b16 %v76
  %v605 = vunpack.c.l.b16 %v77
  %v606 = vunpack.c.l.b16 %v78
  %v607 = vunpack.c.l.b16 %v79
  %v608 = vunpack.c.l.b16 %v80
  %v609 = vunpack.c.l.b16 %v81
  %v610 = vunpack.c.l.b16 %v82
  %v611 = vunpack.c.l.b16 %v83
  %v612 = vunpack.c.l.b16 %v84
  %v613 = vunpack.c.l.b16 %v85
  %v614 = vunpack.c.l.b16 %v86
  %v615 = vunpack.c.l.b16 %v87
  %v616 = vunpack.c.l.b16 %v88
  %v617 = vunpack.c.l.b16 %v89
  %v618 = vunpack.c.l.b16 %v90
  %v619 = vunpack.c.l.b16 %v91
  %v620 = vunpack.c.l.b16 %v92
  %v621 = vunpack.c.l.b16 %v93
  %v622 = vunpack.c.l.b16 %v94
  %v623 = vunpack.c.l.b16 %v95
  %v624 = vunpack.c.l.b16 %v96
  %v625 = vunpack.c.l.b16 %v97
  %v626 = vunpack.c.l.b16 %v98
  %v627 = vunpack.c.l.b16 %v99
  %v628 = vunpack.c.l.b16 %v100
  %v629 = vunpack.c.l.b16 %v101
  %v630 = vunpack.c.l.b16 %v102
  %v631 = vunpack.c.l.b16 %v103
  %v632 = vunpack.c.l.b16 %v104
  %v633 = vunpack.c.l.b16 %v105
  %v634 = vunpack.c.l.b16 %v106
  %v635 = vunpack.c.l.b16 %v107
  %v636 = vunpack.c.l.b16 %v108
  %v637 = vunpack.c.l.b16 %v109
  %v638 = vunpack.c.l.b16 %v110
  %v639 = vunpack.c.l.b16 %v111
  %v640 = vunpack.c.l.b16 %v112
  %v641 = vunpack.c.l.b16 %v113
  %v642 = vunpack.c.l.b16 %v114
  %v643 = vunpack.c.l.b16 %v115
  %v644 = vunpack.c.l.b16 %v116
  %v645 = vunpack.c.l.b16 %v117
  %v646 = vunpack.c.l.b16 %v118
  %v647 = vunpack.c.l.b16 %v119
  %v648 = vunpack.c.l.b16 %v120
  %v649 = vunpack.c.l.b16 %v121
  %v650 = vunpack.c.l.b16 %v122
  %v651 = vunpack.c.l.b16 %v123
  %v652 = vunpack.c.l.b16 %v124
  %v653 = vunpack.c.l.b16 %v125
  %v654 = vunpack.c.l.b16 %v126
  %v655 = vunpack.c.l.b16 %v127
  %v656 = vunpack.c.l.b16 %v128
  %v657 = vunpack.c.l.b16 %v129
  %v658 = vunpack.c.l.b16 %v130
  %v659 = vunpack.c.l.b16 %v131
  %v660 = vunpack.c.l.b16 %v132
  %v661 = vunpack.c.l.b16 %v133
  %v662 = vunpack.c.l.b16 %v134
  %v663 = vunpack.c.l.b16 %v135
  %v664 = vunpack.c.l.b16 %v136
  %v665 = vunpack.c.l.b16 %v137
  %v666 = vunpack.c.l.b16 %v138
  %v667 = vunpack.c.l.b16 %v139
  %v668 = vunpack.c.l.b16 %v140
  %v669 = vunpack.c.l.b16 %v141
  %v670 = vunpack.c.l.b16 %v142
  %v671 = vunpack.c.l.b16 %v143
  %v672 = vunpack.c.l.b16 %v144
  %v673 = vunpack.c.l.b16 %v145
  %v674 = vunpack.c.l.b16 %v146
  %v675 = vunpack.c.l.b16 %v147
  %v676 = vunpack.c.l.b16 %v148
  %v677 = vunpack.c.l.b16 %v149
  %v678 = vunpack.c.l.b16 %v150
  %v679 = vunpack.c.l.b16 %v151
  %v680 = vunpack.c.l.b16 %v152
  %v681 = vunpack.c.l.b16 %v153
  %v682 = vunpack.c.l.b16 %v154
  %v683 = vunpack.c.l.b16 %v155
  %v684 = vunpack.c.l.b16 %v156
  %v685 = vunpack.c.l.b16 %v157
  %v686 = vunpack.c.l.b16 %v158
  %v687 = vunpack.c.l.b16 %v159
  %v688 = vunpack.c.l.b16 %v160
  %v689 = vunpack.c.l.b16 %v161
  %v690 = vunpack.c.l.b16 %v162
  %v691 = vunpack.c.l.b16 %v163
  %v692 = vunpack.c.l.b16 %v164
  %v693 = vunpack.c.l.b16 %v165
  %v694 = vunpack.c.l.b16 %v166
  %v695 = vunpack.c.l.b16 %v167
  %v696 = vunpack.c.l.b16 %v168
  %v697 = vunpack.c.l.b16 %v169
  %v698 = vunpack.c.l.b16 %v170
  %v699 = vunpack.c.l.b16 %v171
  %v700 = vunpack.c.l.b16 %v172
  %v701 = vunpack.c.l.b16 %v173
  %v702 = vunpack.c.l.b16 %v174
  %v703 = vunpack.c.l.b16 %v175
  %v704 = vunpack.c.l.b16 %v176
  %v705 = vunpack.c.l.b16 %v177
  %v706 = vunpack.c.l.b16 %v178
  %v707 = vunpack.c.l.b16 %v179
  %v708 = vunpack.c.l.b16 %v180
  %v709 = vunpack.c.l.b16 %v181
  %v710 = vunpack.c.l.b16 %v182
  %v711 = vunpack.c.l.b16 %v183
  %v712 = vunpack.c.l.b16 %v184
  %v713 = vunpack.c.l.b16 %v185
  %v714 = vunpack.c.l.b16 %v186
  %v715 = vunpack.c.l.b16 %v187
  %v716 = vunpack.c.l.b16 %v188
  %v717 = vunpack.c.l.b16 %v189
  %v718 = vunpack.c.l.b16 %v190
  %v719 = vunpack.c.l.b16 %v191
  %v720 = vunpack.c.l.b16 %v192
  %v721 = vunpack.c.l.b16 %v193
  %v722 = vunpack.c.l.b16 %v194
  %v723 = vunpack.c.l.b16 %v195
  %v724 = vunpack.c.l.b16 %v196
  %v725 = vunpack.c.l.b16 %v197
  %v726 = vunpack.c.l.b16 %v198
  %v727 = vunpack.c.l.b16 %v199
  %v728 = vunpack.c.l.b16 %v200
  %v729 = vunpack.c.l.b16 %v201
  %v730 = vunpack.c.l.b16 %v202
  %v731 = vunpack.c.l.b16 %v203
  %v732 = vunpack.c.l.b16 %v204
  %v733 = vunpack.c.l.b16 %v205
  %v734 = vunpack.c.l.b16 %v206
  %v735 = vunpack.c.l.b16 %v207
  %v736 = vunpack.c.l.b16 %v208
  %v737 = vunpack.c.l.b16 %v209
  %v738 = vunpack.c.l.b16 %v210
  %v739 = vunpack.c.l.b16 %v211
  %v740 = vunpack.c.l.b16 %v212
  %v741 = vunpack.c.l.b16 %v213
  %v742 = vunpack.c.l.b16 %v214
  %v743 = vunpack.c.l.b16 %v215
  %v744 = vunpack.c.l.b16 %v216
  %v745 = vunpack.c.l.b16 %v217
  %v746 = vunpack.c.l.b16 %v218
  %v747 = vunpack.c.l.b16 %v219
  %v748 = vunpack.c.l.b16 %v220
  %v749 = vunpack.c.l.b16 %v221
  %v750 = vunpack.c.l.b16 %v222
  %v751 = vunpack.c.l.b16 %v223
  %v752 = vunpack.c.l.b16 %v224
  %v753 = vunpack.c.l.b16 %v225
  %v754 = vunpack.c.l.b16 %v226
  %v755 = vunpack.c.l.b16 %v227
  %v756 = vunpack.c.l.b16 %v228
  %v757 = vunpack.c.l.b16 %v229
  %v758 = vunpack.c.l.b16 %v230
  %v759 = vunpack.c.l.b16 %v231
  %v760 = vunpack.c.l.b16 %v232
  %v761 = vunpack.c.l.b16 %v233
  %v762 = vunpack.c.l.b16 %v234
  %v763 = vunpack.c.l.b16 %v235
  %v764 = vunpack.c.l.b16 %v236
  %v765 = vunpack.c.l.b16 %v237
  %v766 = vunpack.c.l.b16 %v238
  %v767 = vunpack.c.l.b16 %v239
  %v768 = vunpack.c.l.b16 %v240
  %v769 = vunpack.c.l.b16 %v241
  %v770 = vunpack.c.l.b16 %v242
  %v771 = vunpack.c.l.b16 %v243
  %v772 = vunpack.c.l.b16 %v244
  %v773 = vunpack.c.l.b16 %v245
  %v774 = vunpack.c.l.b16 %v246
  %v775 = vunpack.c.l.b16 %v247
  %v776 = vunpack.c.l.b16 %v248
  %v777 = vunpack.c.l.b16 %v249
  %v778 = vunpack.c.l.b16 %v250
  %v779 = vunpack.c.l.b16 %v251
  %v780 = vunpack.c.l.b16 %v252
  %v781 = vunpack.c.l.b16 %v253
  %v782 = vunpack.c.l.b16 %v254
  %v783 = vunpack.c.l.b16 %v255
  %v784 = vunpack.c.l.b16 %v256
  %v785 = vunpack.c.l.b16 %v257
  %v786 = vunpack.c.l.b16 %v258
  %v787 = vunpack.c.l.b16 %v259
  %v788 = vunpack.c.l.b16 %v260
  %v789 = vunpack.c.l.b16 %v261
  %v790 = vunpack.c.l.b16 %v262
  %v791 = vunpack.c.l.b16 %v263
  %v792 = vunpack.c.l.b16 %v264
  %v793 = vunpack.c.l.b16 %v265
  %v794 = vunpack.c.l.b16 %v266
  %v795 = vunpack.c.l.b16 %v267
  %v796 = vunpack.c.l.b16 %v268
  %v797 = vunpack.c.l.b16 %v269
  %v798 = vunpack.c.l.b16 %v270
  %v799 = vpack.c.b16 %v544, %v543
  %v800 = vpack.c.b16 %v546, %v545
  %v801 = vpack.c.b16 %v548, %v547
  %v802 = vpack.c.b16 %v550, %v549
  %v803 = vpack.c.b16 %v552, %v551
  %v804 = vpack.c.b16 %v554, %v553
  %v805 = vpack.c.b16 %v556, %v555
  %v806 = vpack.c.b16 %v558, %v557
  %v807 = vpack.c.b16 %v560, %v559
  %v808 = vpack.c.b16 %v562, %v561
  %v809 = vpack.c.b16 %v564, %v563
  %v810 = vpack.c.b16 %v566, %v565
  %v811 = vpack.c.b16 %v568, %v567
  %v812 = vpack.c.b16 %v570, %v569
  %v813 = vpack.c.b16 %v572, %v571
  %v814 = vpack.c.b16 %v574, %v573
  %v815 = vpack.c.b16 %v576, %v575
  %v816 = vpack.c.b16 %v578, %v577
  %v817 = vpack.c.b16 %v580, %v579
  %v818 = vpack.c.b16 %v582, %v581
  %v819 = vpack.c.b16 %v584, %v583
  %v820 = vpack.c.b16 %v586, %v585
  %v821 = vpack.c.b16 %v588, %v587
  %v822 = vpack.c.b16 %v590, %v589
  %v823 = vpack.c.b16 %v592, %v591
  %v824 = vpack.c.b16 %v594, %v593
  %v825 = vpack.c.b16 %v596, %v595
  %v826 = vpack.c.b16 %v598, %v597
  %v827 = vpack.c.b16 %v600, %v599
  %v828 = vpack.c.b16 %v602, %v601
  %v829 = vpack.c.b16 %v604, %v603
  %v830 = vpack.c.b16 %v606, %v605
  %v831 = vpack.c.b16 %v608, %v607
  %v832 = vpack.c.b16 %v610, %v609
  %v833 = vpack.c.b16 %v612, %v611
  %v834 = vpack.c.b16 %v614, %v613
  %v835 = vpack.c.b16 %v616, %v615
  %v836 = vpack.c.b16 %v618, %v617
  %v837 = vpack.c.b16 %v620, %v619
  %v838 = vpack.c.b16 %v622, %v621
  %v839 = vpack.c.b16 %v624, %v623
  %v840 = vpack.c.b16 %v626, %v625
  %v841 = vpack.c.b16 %v628, %v627
  %v842 = vpack.c.b16 %v630, %v629
  %v843 = vpack.c.b16 %v632, %v631
  %v844 = vpack.c.b16 %v634, %v633
  %v845 = vpack.c.b16 %v636, %v635
  %v846 = vpack.c.b16 %v638, %v637
  %v847 = vpack.c.b16 %v640, %v639
  %v848 = vpack.c.b16 %v642, %v641
  %v849 = vpack.c.b16 %v644, %v643
  %v850 = vpack.c.b16 %v646, %v645
  %v851 = vpack.c.b16 %v648, %v647
  %v852 = vpack.c.b16 %v650, %v649
  %v853 = vpack.c.b16 %v652, %v651
  %v854 = vpack.c.b16 %v654, %v653
  %v855 = vpack.c.b16 %v656, %v655
  %v856 = vpack.c.b16 %v658, %v657
  %v857 = vpack.c.b16 %v660, %v659
  %v858 = vpack.c.b16 %v662, %v661
  %v859 = vpack.c.b16 %v664, %v663
  %v860 = vpack.c.b16 %v666, %v665
  %v861 = vpack.c.b16 %v668, %v667
  %v862 = vpack.c.b16 %v670, %v669
  %v863 = vpack.c.b16 %v672, %v671
  %v864 = vpack.c.b16 %v674, %v673
  %v865 = vpack.c.b16 %v676, %v675
  %v866 = vpack.c.b16 %v678, %v677
  %v867 = vpack.c.b16 %v680, %v679
  %v868 = vpack.c.b16 %v682, %v681
  %v869 = vpack.c.b16 %v684, %v683
  %v870 = vpack.c.b16 %v686, %v685
  %v871 = vpack.c.b16 %v688, %v687
  %v872 = vpack.c.b16 %v690, %v689
  %v873 = vpack.c.b16 %v692, %v691
  %v874 = vpack.c.b16 %v694, %v693
  %v875 = vpack.c.b16 %v696, %v695
  %v876 = vpack.c.b16 %v698, %v697
  %v877 = vpack.c.b16 %v700, %v699
  %v878 = vpack.c.b16 %v702, %v701
  %v879 = vpack.c.b16 %v704, %v703
  %v880 = vpack.c.b16 %v706, %v705
  %v881 = vpack.c.b16 %v708, %v707
  %v882 = vpack.c.b16 %v710, %v709
  %v883 = vpack.c.b16 %v712, %v711
  %v884 = vpack.c.b16 %v714, %v713
  %v885 = vpack.c.b16 %v716, %v715
  %v886 = vpack.c.b16 %v718, %v717
  %v887 = vpack.c.b16 %v720, %v719
  %v888 = vpack.c.b16 %v722, %v721
  %v889 = vpack.c.b16 %v724, %v723
  %v890 = vpack.c.b16 %v726, %v725
  %v891 = vpack.c.b16 %v728, %v727
  %v892 = vpack.c.b16 %v730, %v729
  %v893 = vpack.c.b16 %v732, %v731
  %v894 = vpack.c.b16 %v734, %v733
  %v895 = vpack.c.b16 %v736, %v735
  %v896 = vpack.c.b16 %v738, %v737
  %v897 = vpack.c.b16 %v740, %v739
  %v898 = vpack.c.b16 %v742, %v741
  %v899 = vpack.c.b16 %v744, %v743
  %v900 = vpack.c.b16 %v746, %v745
  %v901 = vpack.c.b16 %v748, %v747
  %v902 = vpack.c.b16 %v750, %v749
  %v903 = vpack.c.b16 %v752, %v751
  %v904 = vpack.c.b16 %v754, %v753
  %v905 = vpack.c.b16 %v756, %v755
  %v906 = vpack.c.b16 %v758, %v757
  %v907 = vpack.c.b16 %v760, %v759
  %v908 = vpack.c.b16 %v762, %v761
  %v909 = vpack.c.b16 %v764, %v763
  %v910 = vpack.c.b16 %v766, %v765
  %v911 = vpack.c.b16 %v768, %v767
  %v912 = vpack.c.b16 %v770, %v769
  %v913 = vpack.c.b16 %v772, %v771
  %v914 = vpack.c.b16 %v774, %v773
  %v915 = vpack.c.b16 %v776, %v775
  %v916 = vpack.c.b16 %v778, %v777
  %v917 = vpack.c.b16 %v780, %v779
  %v918 = vpack.c.b16 %v782, %v781
  %v919 = vpack.c.b16 %v784, %v783
  %v920 = vpack.c.b16 %v786, %v785
  %v921 = vpack.c.b16 %v788, %v787
  %v922 = vpack.c.b16 %v790, %v789
  %v923 = vpack.c.b16 %v792, %v791
  %v924 = vpack.c.b16 %v794, %v793
  %v925 = vpack.c.b16 %v796, %v795
  %v926 = vpack.c.b16 %v798, %v797
  %v936 = vunpack.c.l.b16 %v271
  %v937 = vunpack.c.l.b16 %v272
  %v938 = vunpack.c.l.b16 %v273
  %v939 = vunpack.c.l.b16 %v274
  %v940 = vunpack.c.l.b16 %v275
  %v941 = vunpack.c.l.b16 %v276
  %v942 = vunpack.c.l.b16 %v277
  %v943 = vunpack.c.l.b16 %v278
  %v944 = vunpack.c.l.b16 %v279
  %v945 = vpack.c.b16 %v937, %v936
  %v946 = vpack.c.b16 %v939, %v938
  %v947 = vpack.c.b16 %v941, %v940
  %v948 = vpack.c.b16 %v943, %v942
  %v949 = vpack.c.b16 %v944, %v944
  %vm954 = vcmask 588800
  %v956 = vsel %vm954, %v799, 0
  %v959 = vsel %vm954, %v800, 0
  %v962 = vsel %vm954, %v801, 0
  %v965 = vsel %vm954, %v802, 0
  %v968 = vsel %vm954, %v803, 0
  %v971 = vsel %vm954, %v804, 0
  %v974 = vsel %vm954, %v805, 0
  %v977 = vsel %vm954, %v806, 0
  %v980 = vsel %vm954, %v807, 0
  %v983 = vsel %vm954, %v808, 0
  %v986 = vsel %vm954, %v809, 0
  %v989 = vsel %vm954, %v810, 0
  %v992 = vsel %vm954, %v811, 0
  %v995 = vsel %vm954, %v812, 0
  %v998 = vsel %vm954, %v813, 0
  %v1001 = vsel %vm954, %v814, 0
  %v1004 = vsel %vm954, %v815, 0
  %v1007 = vsel %vm954, %v816, 0
  %v1010 = vsel %vm954, %v817, 0
  %v1013 = vsel %vm954, %v818, 0
  %v1016 = vsel %vm954, %v819, 0
  %v1019 = vsel %vm954, %v820, 0
  %v1022 = vsel %vm954, %v821, 0
  %v1025 = vsel %vm954, %v822, 0
  %v1028 = vsel %vm954, %v823, 0
  %v1031 = vsel %vm954, %v824, 0
  %v1034 = vsel %vm954, %v825, 0
  %v1037 = vsel %vm954, %v826, 0
  %v1040 = vsel %vm954, %v827, 0
  %v1043 = vsel %vm954, %v828, 0
  %v1046 = vsel %vm954, %v829, 0
  %v1049 = vsel %vm954, %v830, 0
  %v1052 = vsel %vm954, %v831, 0
  %v1055 = vsel %vm954, %v832, 0
  %v1058 = vsel %vm954, %v833, 0
  %v1061 = vsel %vm954, %v834, 0
  %v1064 = vsel %vm954, %v835, 0
  %v1067 = vsel %vm954, %v836, 0
  %v1070 = vsel %vm954, %v837, 0
  %v1073 = vsel %vm954, %v838, 0
  %v1076 = vsel %vm954, %v839, 0
  %v1079 = vsel %vm954, %v840, 0
  %v1082 = vsel %vm954, %v841, 0
  %v1085 = vsel %vm954, %v842, 0
  %v1088 = vsel %vm954, %v843, 0
  %v1091 = vsel %vm954, %v844, 0
  %v1094 = vsel %vm954, %v845, 0
  %v1097 = vsel %vm954, %v846, 0
  %v1100 = vsel %vm954, %v847, 0
  %v1103 = vsel %vm954, %v848, 0
  %v1106 = vsel %vm954, %v849, 0
  %v1109 = vsel %vm954, %v850, 0
  %v1112 = vsel %vm954, %v851, 0
  %v1115 = vsel %vm954, %v852, 0
  %v1118 = vsel %vm954, %v853, 0
  %v1121 = vsel %vm954, %v854, 0
  %v1124 = vsel %vm954, %v855, 0
  %v1127 = vsel %vm954, %v856, 0
  %v1130 = vsel %vm954, %v857, 0
  %v1133 = vsel %vm954, %v858, 0
  %v1136 = vsel %vm954, %v859, 0
  %v1139 = vsel %vm954, %v860, 0
  %v1142 = vsel %vm954, %v861, 0
  %v1145 = vsel %vm954, %v862, 0
  %v1148 = vsel %vm954, %v863, 0
  %v1151 = vsel %vm954, %v864, 0
  %v1154 = vsel %vm954, %v865, 0
  %v1157 = vsel %vm954, %v866, 0
  %v1160 = vsel %vm954, %v867, 0
  %v1163 = vsel %vm954, %v868, 0
  %v1166 = vsel %vm954, %v869, 0
  %v1169 = vsel %vm954, %v870, 0
  %v1172 = vsel %vm954, %v871, 0
  %v1175 = vsel %vm954, %v872, 0
  %v1178 = vsel %vm954, %v873, 0
  %v1181 = vsel %vm954, %v874, 0
  %v1184 = vsel %vm954, %v875, 0
  %v1187 = vsel %vm954, %v876, 0
  %v1190 = vsel %vm954, %v877, 0
  %v1193 = vsel %vm954, %v878, 0
  %v1196 = vsel %vm954, %v879, 0
  %v1199 = vsel %vm954, %v880, 0
  %v1202 = vsel %vm954, %v881, 0
  %v1205 = vsel %vm954, %v882, 0
  %v1208 = vsel %vm954, %v883, 0
  %v1211 = vsel %vm954, %v884, 0
  %v1214 = vsel %vm954, %v885, 0
  %v1217 = vsel %vm954, %v886, 0
  %v1220 = vsel %vm954, %v887, 0
  %v1223 = vsel %vm954, %v888, 0
  %v1226 = vsel %vm954, %v889, 0
  %v1229 = vsel %vm954, %v890, 0
  %v1232 = vsel %vm954, %v891, 0
  %v1235 = vsel %vm954, %v892, 0
  %v1238 = vsel %vm954, %v893, 0
  %v1241 = vsel %vm954, %v894, 0
  %v1244 = vsel %vm954, %v895, 0
  %v1247 = vsel %vm954, %v896, 0
  %v1250 = vsel %vm954, %v897, 0
  %v1253 = vsel %vm954, %v898, 0
  %v1256 = vsel %vm954, %v899, 0
  %v1259 = vsel %vm954, %v900, 0
  %v1262 = vsel %vm954, %v901, 0
  %v1265 = vsel %vm954, %v902, 0
  %v1268 = vsel %vm954, %v903, 0
  %v1271 = vsel %vm954, %v904, 0
  %v1274 = vsel %vm954, %v905, 0
  %v1277 = vsel %vm954, %v906, 0
  %v1280 = vsel %vm954, %v907, 0
  %v1283 = vsel %vm954, %v908, 0
  %v1286 = vsel %vm954, %v909, 0
  %v1289 = vsel %vm954, %v910, 0
  %v1292 = vsel %vm954, %v911, 0
  %v1295 = vsel %vm954, %v912, 0
  %v1298 = vsel %vm954, %v913, 0
  %v1301 = vsel %vm954, %v914, 0
  %v1304 = vsel %vm954, %v915, 0
  %v1307 = vsel %vm954, %v916, 0
  %v1310 = vsel %vm954, %v917, 0
  %v1313 = vsel %vm954, %v918, 0
  %v1316 = vsel %vm954, %v919, 0
  %v1319 = vsel %vm954, %v920, 0
  %v1322 = vsel %vm954, %v921, 0
  %v1325 = vsel %vm954, %v922, 0
  %v1328 = vsel %vm954, %v923, 0
  %v1331 = vsel %vm954, %v924, 0
  %v1334 = vsel %vm954, %v925, 0
  %v1337 = vsel %vm954, %v926, 0
  %vm1339 = vcmask 1043456
  %v1341 = vsel %vm1339, %v949, 0
  %1343 = vmatprep.subr.bf16.mxu0 0
  %1344 = vmatpush1.bf16.msra.mxu0 0
  %1345 = vmatprep.subr.bf16.mxu0 0
  %1346 = vmatpush1.bf16.msra.mxu0 0
  %1347 = vmatprep.subr.bf16.mxu0 0
  %1348 = vmatpush1.bf16.msra.mxu0 0
  %1349 = vmatprep.subr.bf16.mxu0 0
  %1350 = vmatpush1.bf16.msra.mxu0 %v1341
  %1351 = vmatprep.subr.bf16.mxu0 0
  %1352 = vmatpush1.bf16.msra.mxu0 %v948
  %1353 = vmatprep.subr.bf16.mxu0 0
  %1354 = vmatpush1.bf16.msra.mxu0 %v947
  %1355 = vmatprep.subr.bf16.mxu0 0
  %1356 = vmatpush1.bf16.msra.mxu0 %v946
  %1357 = vmatprep.subr.bf16.mxu0 0
  %1358 = vmatpush1.bf16.msra.mxu0 %v945
  %1359 = vmatprep.subr.bf16.mxu0 0
  %1360 = vmatpush2.bf16.msra.mxu0 0
  %1361 = vmatprep.subr.bf16.mxu0 0
  %1362 = vmatpush2.bf16.msra.mxu0 0
  %1363 = vmatprep.subr.bf16.mxu0 0
  %1364 = vmatpush2.bf16.msra.mxu0 0
  %1365 = vmatprep.subr.bf16.mxu0 0
  %1366 = vmatpush2.bf16.msra.mxu0 0
  %1367 = vmatprep.subr.bf16.mxu0 0
  %1368 = vmatpush2.bf16.msra.mxu0 0
  %1369 = vmatprep.subr.bf16.mxu0 0
  %1370 = vmatpush2.bf16.msra.mxu0 0
  %1371 = vmatprep.subr.bf16.mxu0 0
  %1372 = vmatpush2.bf16.msra.mxu0 0
  %1373 = vmatprep.subr.bf16.mxu0 0
  %1374 = vmatpush2.bf16.msra.mxu0 0
  %1375 = vmatprep.mubr.bf16.mxu0 0
  %1376 = vmatmul.mubr.bf16.gmra.mxu0 %v956
  %v1377 = vpop.f32.mrf.mxu0
  %v1378 = vadd.f32 %v285, %v1377
  %v1379 = vpop.f32.mrf.mxu0
  %v1380 = vpop.f32.mrf.mxu0
  %v1381 = vadd.f32 %v285, %v1380
  %v1382 = vpop.f32.mrf.mxu0
  %1383 = vmatprep.mubr.bf16.mxu0 0
  %1384 = vmatmul.mubr.bf16.gmra.mxu0 %v959
  %v1385 = vpop.f32.mrf.mxu0
  %v1386 = vadd.f32 %v285, %v1385
  %v1387 = vpop.f32.mrf.mxu0
  %v1388 = vpop.f32.mrf.mxu0
  %v1389 = vadd.f32 %v285, %v1388
  %v1390 = vpop.f32.mrf.mxu0
  %1391 = vmatprep.mubr.bf16.mxu0 0
  %1392 = vmatmul.mubr.bf16.gmra.mxu0 %v962
  %v1393 = vpop.f32.mrf.mxu0
  %v1394 = vadd.f32 %v285, %v1393
  %v1395 = vpop.f32.mrf.mxu0
  %v1396 = vpop.f32.mrf.mxu0
  %v1397 = vadd.f32 %v285, %v1396
  %v1398 = vpop.f32.mrf.mxu0
  %1399 = vmatprep.mubr.bf16.mxu0 0
  %1400 = vmatmul.mubr.bf16.gmra.mxu0 %v965
  %v1401 = vpop.f32.mrf.mxu0
  %v1402 = vadd.f32 %v285, %v1401
  %v1403 = vpop.f32.mrf.mxu0
  %v1404 = vpop.f32.mrf.mxu0
  %v1405 = vadd.f32 %v285, %v1404
  %v1406 = vpop.f32.mrf.mxu0
  %1407 = vmatprep.mubr.bf16.mxu0 0
  %1408 = vmatmul.mubr.bf16.gmra.mxu0 %v968
  %v1409 = vpop.f32.mrf.mxu0
  %v1410 = vadd.f32 %v285, %v1409
  %v1411 = vpop.f32.mrf.mxu0
  %v1412 = vpop.f32.mrf.mxu0
  %v1413 = vadd.f32 %v285, %v1412
  %v1414 = vpop.f32.mrf.mxu0
  %1415 = vmatprep.mubr.bf16.mxu0 0
  %1416 = vmatmul.mubr.bf16.gmra.mxu0 %v971
  %v1417 = vpop.f32.mrf.mxu0
  %v1418 = vadd.f32 %v285, %v1417
  %v1419 = vpop.f32.mrf.mxu0
  %v1420 = vpop.f32.mrf.mxu0
  %v1421 = vadd.f32 %v285, %v1420
  %v1422 = vpop.f32.mrf.mxu0
  %1423 = vmatprep.mubr.bf16.mxu0 0
  %1424 = vmatmul.mubr.bf16.gmra.mxu0 %v974
  %v1425 = vpop.f32.mrf.mxu0
  %v1426 = vadd.f32 %v285, %v1425
  %v1427 = vpop.f32.mrf.mxu0
  %v1428 = vpop.f32.mrf.mxu0
  %v1429 = vadd.f32 %v285, %v1428
  %v1430 = vpop.f32.mrf.mxu0
  %1431 = vmatprep.mubr.bf16.mxu0 0
  %1432 = vmatmul.mubr.bf16.gmra.mxu0 %v977
  %v1433 = vpop.f32.mrf.mxu0
  %v1434 = vadd.f32 %v285, %v1433
  %v1435 = vpop.f32.mrf.mxu0
  %v1436 = vpop.f32.mrf.mxu0
  %v1437 = vadd.f32 %v285, %v1436
  %v1438 = vpop.f32.mrf.mxu0
  %1439 = vmatprep.mubr.bf16.mxu0 0
  %1440 = vmatmul.mubr.bf16.gmra.mxu0 %v980
  %v1441 = vpop.f32.mrf.mxu0
  %v1442 = vadd.f32 %v285, %v1441
  %v1443 = vpop.f32.mrf.mxu0
  %v1444 = vpop.f32.mrf.mxu0
  %v1445 = vadd.f32 %v285, %v1444
  %v1446 = vpop.f32.mrf.mxu0
  %1447 = vmatprep.mubr.bf16.mxu0 0
  %1448 = vmatmul.mubr.bf16.gmra.mxu0 %v983
  %v1449 = vpop.f32.mrf.mxu0
  %v1450 = vadd.f32 %v285, %v1449
  %v1451 = vpop.f32.mrf.mxu0
  %v1452 = vpop.f32.mrf.mxu0
  %v1453 = vadd.f32 %v285, %v1452
  %v1454 = vpop.f32.mrf.mxu0
  %1455 = vmatprep.mubr.bf16.mxu0 0
  %1456 = vmatmul.mubr.bf16.gmra.mxu0 %v986
  %v1457 = vpop.f32.mrf.mxu0
  %v1458 = vadd.f32 %v285, %v1457
  %v1459 = vpop.f32.mrf.mxu0
  %v1460 = vpop.f32.mrf.mxu0
  %v1461 = vadd.f32 %v285, %v1460
  %v1462 = vpop.f32.mrf.mxu0
  %1463 = vmatprep.mubr.bf16.mxu0 0
  %1464 = vmatmul.mubr.bf16.gmra.mxu0 %v989
  %v1465 = vpop.f32.mrf.mxu0
  %v1466 = vadd.f32 %v285, %v1465
  %v1467 = vpop.f32.mrf.mxu0
  %v1468 = vpop.f32.mrf.mxu0
  %v1469 = vadd.f32 %v285, %v1468
  %v1470 = vpop.f32.mrf.mxu0
  %1471 = vmatprep.mubr.bf16.mxu0 0
  %1472 = vmatmul.mubr.bf16.gmra.mxu0 %v992
  %v1473 = vpop.f32.mrf.mxu0
  %v1474 = vadd.f32 %v285, %v1473
  %v1475 = vpop.f32.mrf.mxu0
  %v1476 = vpop.f32.mrf.mxu0
  %v1477 = vadd.f32 %v285, %v1476
  %v1478 = vpop.f32.mrf.mxu0
  %1479 = vmatprep.mubr.bf16.mxu0 0
  %1480 = vmatmul.mubr.bf16.gmra.mxu0 %v995
  %v1481 = vpop.f32.mrf.mxu0
  %v1482 = vadd.f32 %v285, %v1481
  %v1483 = vpop.f32.mrf.mxu0
  %v1484 = vpop.f32.mrf.mxu0
  %v1485 = vadd.f32 %v285, %v1484
  %v1486 = vpop.f32.mrf.mxu0
  %1487 = vmatprep.mubr.bf16.mxu0 0
  %1488 = vmatmul.mubr.bf16.gmra.mxu0 %v998
  %v1489 = vpop.f32.mrf.mxu0
  %v1490 = vadd.f32 %v285, %v1489
  %v1491 = vpop.f32.mrf.mxu0
  %v1492 = vpop.f32.mrf.mxu0
  %v1493 = vadd.f32 %v285, %v1492
  %v1494 = vpop.f32.mrf.mxu0
  %1495 = vmatprep.mubr.bf16.mxu0 0
  %1496 = vmatmul.mubr.bf16.gmra.mxu0 %v1001
  %v1497 = vpop.f32.mrf.mxu0
  %v1498 = vadd.f32 %v285, %v1497
  %v1499 = vpop.f32.mrf.mxu0
  %v1500 = vpop.f32.mrf.mxu0
  %v1501 = vadd.f32 %v285, %v1500
  %v1502 = vpop.f32.mrf.mxu0
  %1503 = vmatprep.mubr.bf16.mxu0 0
  %1504 = vmatmul.mubr.bf16.gmra.mxu0 %v1004
  %v1505 = vpop.f32.mrf.mxu0
  %v1506 = vadd.f32 %v285, %v1505
  %v1507 = vpop.f32.mrf.mxu0
  %v1508 = vpop.f32.mrf.mxu0
  %v1509 = vadd.f32 %v285, %v1508
  %v1510 = vpop.f32.mrf.mxu0
  %1511 = vmatprep.mubr.bf16.mxu0 0
  %1512 = vmatmul.mubr.bf16.gmra.mxu0 %v1007
  %v1513 = vpop.f32.mrf.mxu0
  %v1514 = vadd.f32 %v285, %v1513
  %v1515 = vpop.f32.mrf.mxu0
  %v1516 = vpop.f32.mrf.mxu0
  %v1517 = vadd.f32 %v285, %v1516
  %v1518 = vpop.f32.mrf.mxu0
  %1519 = vmatprep.mubr.bf16.mxu0 0
  %1520 = vmatmul.mubr.bf16.gmra.mxu0 %v1010
  %v1521 = vpop.f32.mrf.mxu0
  %v1522 = vadd.f32 %v285, %v1521
  %v1523 = vpop.f32.mrf.mxu0
  %v1524 = vpop.f32.mrf.mxu0
  %v1525 = vadd.f32 %v285, %v1524
  %v1526 = vpop.f32.mrf.mxu0
  %1527 = vmatprep.mubr.bf16.mxu0 0
  %1528 = vmatmul.mubr.bf16.gmra.mxu0 %v1013
  %v1529 = vpop.f32.mrf.mxu0
  %v1530 = vadd.f32 %v285, %v1529
  %v1531 = vpop.f32.mrf.mxu0
  %v1532 = vpop.f32.mrf.mxu0
  %v1533 = vadd.f32 %v285, %v1532
  %v1534 = vpop.f32.mrf.mxu0
  %1535 = vmatprep.mubr.bf16.mxu0 0
  %1536 = vmatmul.mubr.bf16.gmra.mxu0 %v1016
  %v1537 = vpop.f32.mrf.mxu0
  %v1538 = vadd.f32 %v285, %v1537
  %v1539 = vpop.f32.mrf.mxu0
  %v1540 = vpop.f32.mrf.mxu0
  %v1541 = vadd.f32 %v285, %v1540
  %v1542 = vpop.f32.mrf.mxu0
  %1543 = vmatprep.mubr.bf16.mxu0 0
  %1544 = vmatmul.mubr.bf16.gmra.mxu0 %v1019
  %v1545 = vpop.f32.mrf.mxu0
  %v1546 = vadd.f32 %v285, %v1545
  %v1547 = vpop.f32.mrf.mxu0
  %v1548 = vpop.f32.mrf.mxu0
  %v1549 = vadd.f32 %v285, %v1548
  %v1550 = vpop.f32.mrf.mxu0
  %1551 = vmatprep.mubr.bf16.mxu0 0
  %1552 = vmatmul.mubr.bf16.gmra.mxu0 %v1022
  %v1553 = vpop.f32.mrf.mxu0
  %v1554 = vadd.f32 %v285, %v1553
  %v1555 = vpop.f32.mrf.mxu0
  %v1556 = vpop.f32.mrf.mxu0
  %v1557 = vadd.f32 %v285, %v1556
  %v1558 = vpop.f32.mrf.mxu0
  %1559 = vmatprep.mubr.bf16.mxu0 0
  %1560 = vmatmul.mubr.bf16.gmra.mxu0 %v1025
  %v1561 = vpop.f32.mrf.mxu0
  %v1562 = vadd.f32 %v285, %v1561
  %v1563 = vpop.f32.mrf.mxu0
  %v1564 = vpop.f32.mrf.mxu0
  %v1565 = vadd.f32 %v285, %v1564
  %v1566 = vpop.f32.mrf.mxu0
  %1567 = vmatprep.mubr.bf16.mxu0 0
  %1568 = vmatmul.mubr.bf16.gmra.mxu0 %v1028
  %v1569 = vpop.f32.mrf.mxu0
  %v1570 = vadd.f32 %v285, %v1569
  %v1571 = vpop.f32.mrf.mxu0
  %v1572 = vpop.f32.mrf.mxu0
  %v1573 = vadd.f32 %v285, %v1572
  %v1574 = vpop.f32.mrf.mxu0
  %1575 = vmatprep.mubr.bf16.mxu0 0
  %1576 = vmatmul.mubr.bf16.gmra.mxu0 %v1031
  %v1577 = vpop.f32.mrf.mxu0
  %v1578 = vadd.f32 %v285, %v1577
  %v1579 = vpop.f32.mrf.mxu0
  %v1580 = vpop.f32.mrf.mxu0
  %v1581 = vadd.f32 %v285, %v1580
  %v1582 = vpop.f32.mrf.mxu0
  %1583 = vmatprep.mubr.bf16.mxu0 0
  %1584 = vmatmul.mubr.bf16.gmra.mxu0 %v1034
  %v1585 = vpop.f32.mrf.mxu0
  %v1586 = vadd.f32 %v285, %v1585
  %v1587 = vpop.f32.mrf.mxu0
  %v1588 = vpop.f32.mrf.mxu0
  %v1589 = vadd.f32 %v285, %v1588
  %v1590 = vpop.f32.mrf.mxu0
  %1591 = vmatprep.mubr.bf16.mxu0 0
  %1592 = vmatmul.mubr.bf16.gmra.mxu0 %v1037
  %v1593 = vpop.f32.mrf.mxu0
  %v1594 = vadd.f32 %v285, %v1593
  %v1595 = vpop.f32.mrf.mxu0
  %v1596 = vpop.f32.mrf.mxu0
  %v1597 = vadd.f32 %v285, %v1596
  %v1598 = vpop.f32.mrf.mxu0
  %1599 = vmatprep.mubr.bf16.mxu0 0
  %1600 = vmatmul.mubr.bf16.gmra.mxu0 %v1040
  %v1601 = vpop.f32.mrf.mxu0
  %v1602 = vadd.f32 %v285, %v1601
  %v1603 = vpop.f32.mrf.mxu0
  %v1604 = vpop.f32.mrf.mxu0
  %v1605 = vadd.f32 %v285, %v1604
  %v1606 = vpop.f32.mrf.mxu0
  %1607 = vmatprep.mubr.bf16.mxu0 0
  %1608 = vmatmul.mubr.bf16.gmra.mxu0 %v1043
  %v1609 = vpop.f32.mrf.mxu0
  %v1610 = vadd.f32 %v285, %v1609
  %v1611 = vpop.f32.mrf.mxu0
  %v1612 = vpop.f32.mrf.mxu0
  %v1613 = vadd.f32 %v285, %v1612
  %v1614 = vpop.f32.mrf.mxu0
  %1615 = vmatprep.mubr.bf16.mxu0 0
  %1616 = vmatmul.mubr.bf16.gmra.mxu0 %v1046
  %v1617 = vpop.f32.mrf.mxu0
  %v1618 = vadd.f32 %v285, %v1617
  %v1619 = vpop.f32.mrf.mxu0
  %v1620 = vpop.f32.mrf.mxu0
  %v1621 = vadd.f32 %v285, %v1620
  %v1622 = vpop.f32.mrf.mxu0
  %1623 = vmatprep.mubr.bf16.mxu0 0
  %1624 = vmatmul.mubr.bf16.gmra.mxu0 %v1049
  %v1625 = vpop.f32.mrf.mxu0
  %v1626 = vadd.f32 %v285, %v1625
  %v1627 = vpop.f32.mrf.mxu0
  %v1628 = vpop.f32.mrf.mxu0
  %v1629 = vadd.f32 %v285, %v1628
  %v1630 = vpop.f32.mrf.mxu0
  %1631 = vmatprep.mubr.bf16.mxu0 0
  %1632 = vmatmul.mubr.bf16.gmra.mxu0 %v1052
  %v1633 = vpop.f32.mrf.mxu0
  %v1634 = vadd.f32 %v285, %v1633
  %v1635 = vpop.f32.mrf.mxu0
  %v1636 = vpop.f32.mrf.mxu0
  %v1637 = vadd.f32 %v285, %v1636
  %v1638 = vpop.f32.mrf.mxu0
  %1639 = vmatprep.mubr.bf16.mxu0 0
  %1640 = vmatmul.mubr.bf16.gmra.mxu0 %v1055
  %v1641 = vpop.f32.mrf.mxu0
  %v1642 = vadd.f32 %v285, %v1641
  %v1643 = vpop.f32.mrf.mxu0
  %v1644 = vpop.f32.mrf.mxu0
  %v1645 = vadd.f32 %v285, %v1644
  %v1646 = vpop.f32.mrf.mxu0
  %1647 = vmatprep.mubr.bf16.mxu0 0
  %1648 = vmatmul.mubr.bf16.gmra.mxu0 %v1058
  %v1649 = vpop.f32.mrf.mxu0
  %v1650 = vadd.f32 %v285, %v1649
  %v1651 = vpop.f32.mrf.mxu0
  %v1652 = vpop.f32.mrf.mxu0
  %v1653 = vadd.f32 %v285, %v1652
  %v1654 = vpop.f32.mrf.mxu0
  %1655 = vmatprep.mubr.bf16.mxu0 0
  %1656 = vmatmul.mubr.bf16.gmra.mxu0 %v1061
  %v1657 = vpop.f32.mrf.mxu0
  %v1658 = vadd.f32 %v285, %v1657
  %v1659 = vpop.f32.mrf.mxu0
  %v1660 = vpop.f32.mrf.mxu0
  %v1661 = vadd.f32 %v285, %v1660
  %v1662 = vpop.f32.mrf.mxu0
  %1663 = vmatprep.mubr.bf16.mxu0 0
  %1664 = vmatmul.mubr.bf16.gmra.mxu0 %v1064
  %v1665 = vpop.f32.mrf.mxu0
  %v1666 = vadd.f32 %v285, %v1665
  %v1667 = vpop.f32.mrf.mxu0
  %v1668 = vpop.f32.mrf.mxu0
  %v1669 = vadd.f32 %v285, %v1668
  %v1670 = vpop.f32.mrf.mxu0
  %1671 = vmatprep.mubr.bf16.mxu0 0
  %1672 = vmatmul.mubr.bf16.gmra.mxu0 %v1067
  %v1673 = vpop.f32.mrf.mxu0
  %v1674 = vadd.f32 %v285, %v1673
  %v1675 = vpop.f32.mrf.mxu0
  %v1676 = vpop.f32.mrf.mxu0
  %v1677 = vadd.f32 %v285, %v1676
  %v1678 = vpop.f32.mrf.mxu0
  %1679 = vmatprep.mubr.bf16.mxu0 0
  %1680 = vmatmul.mubr.bf16.gmra.mxu0 %v1070
  %v1681 = vpop.f32.mrf.mxu0
  %v1682 = vadd.f32 %v285, %v1681
  %v1683 = vpop.f32.mrf.mxu0
  %v1684 = vpop.f32.mrf.mxu0
  %v1685 = vadd.f32 %v285, %v1684
  %v1686 = vpop.f32.mrf.mxu0
  %1687 = vmatprep.mubr.bf16.mxu0 0
  %1688 = vmatmul.mubr.bf16.gmra.mxu0 %v1073
  %v1689 = vpop.f32.mrf.mxu0
  %v1690 = vadd.f32 %v285, %v1689
  %v1691 = vpop.f32.mrf.mxu0
  %v1692 = vpop.f32.mrf.mxu0
  %v1693 = vadd.f32 %v285, %v1692
  %v1694 = vpop.f32.mrf.mxu0
  %1695 = vmatprep.mubr.bf16.mxu0 0
  %1696 = vmatmul.mubr.bf16.gmra.mxu0 %v1076
  %v1697 = vpop.f32.mrf.mxu0
  %v1698 = vadd.f32 %v285, %v1697
  %v1699 = vpop.f32.mrf.mxu0
  %v1700 = vpop.f32.mrf.mxu0
  %v1701 = vadd.f32 %v285, %v1700
  %v1702 = vpop.f32.mrf.mxu0
  %1703 = vmatprep.mubr.bf16.mxu0 0
  %1704 = vmatmul.mubr.bf16.gmra.mxu0 %v1079
  %v1705 = vpop.f32.mrf.mxu0
  %v1706 = vadd.f32 %v285, %v1705
  %v1707 = vpop.f32.mrf.mxu0
  %v1708 = vpop.f32.mrf.mxu0
  %v1709 = vadd.f32 %v285, %v1708
  %v1710 = vpop.f32.mrf.mxu0
  %1711 = vmatprep.mubr.bf16.mxu0 0
  %1712 = vmatmul.mubr.bf16.gmra.mxu0 %v1082
  %v1713 = vpop.f32.mrf.mxu0
  %v1714 = vadd.f32 %v285, %v1713
  %v1715 = vpop.f32.mrf.mxu0
  %v1716 = vpop.f32.mrf.mxu0
  %v1717 = vadd.f32 %v285, %v1716
  %v1718 = vpop.f32.mrf.mxu0
  %1719 = vmatprep.mubr.bf16.mxu0 0
  %1720 = vmatmul.mubr.bf16.gmra.mxu0 %v1085
  %v1721 = vpop.f32.mrf.mxu0
  %v1722 = vadd.f32 %v285, %v1721
  %v1723 = vpop.f32.mrf.mxu0
  %v1724 = vpop.f32.mrf.mxu0
  %v1725 = vadd.f32 %v285, %v1724
  %v1726 = vpop.f32.mrf.mxu0
  %1727 = vmatprep.mubr.bf16.mxu0 0
  %1728 = vmatmul.mubr.bf16.gmra.mxu0 %v1088
  %v1729 = vpop.f32.mrf.mxu0
  %v1730 = vadd.f32 %v285, %v1729
  %v1731 = vpop.f32.mrf.mxu0
  %v1732 = vpop.f32.mrf.mxu0
  %v1733 = vadd.f32 %v285, %v1732
  %v1734 = vpop.f32.mrf.mxu0
  %1735 = vmatprep.mubr.bf16.mxu0 0
  %1736 = vmatmul.mubr.bf16.gmra.mxu0 %v1091
  %v1737 = vpop.f32.mrf.mxu0
  %v1738 = vadd.f32 %v285, %v1737
  %v1739 = vpop.f32.mrf.mxu0
  %v1740 = vpop.f32.mrf.mxu0
  %v1741 = vadd.f32 %v285, %v1740
  %v1742 = vpop.f32.mrf.mxu0
  %1743 = vmatprep.mubr.bf16.mxu0 0
  %1744 = vmatmul.mubr.bf16.gmra.mxu0 %v1094
  %v1745 = vpop.f32.mrf.mxu0
  %v1746 = vadd.f32 %v285, %v1745
  %v1747 = vpop.f32.mrf.mxu0
  %v1748 = vpop.f32.mrf.mxu0
  %v1749 = vadd.f32 %v285, %v1748
  %v1750 = vpop.f32.mrf.mxu0
  %1751 = vmatprep.mubr.bf16.mxu0 0
  %1752 = vmatmul.mubr.bf16.gmra.mxu0 %v1097
  %v1753 = vpop.f32.mrf.mxu0
  %v1754 = vadd.f32 %v285, %v1753
  %v1755 = vpop.f32.mrf.mxu0
  %v1756 = vpop.f32.mrf.mxu0
  %v1757 = vadd.f32 %v285, %v1756
  %v1758 = vpop.f32.mrf.mxu0
  %1759 = vmatprep.mubr.bf16.mxu0 0
  %1760 = vmatmul.mubr.bf16.gmra.mxu0 %v1100
  %v1761 = vpop.f32.mrf.mxu0
  %v1762 = vadd.f32 %v285, %v1761
  %v1763 = vpop.f32.mrf.mxu0
  %v1764 = vpop.f32.mrf.mxu0
  %v1765 = vadd.f32 %v285, %v1764
  %v1766 = vpop.f32.mrf.mxu0
  %1767 = vmatprep.mubr.bf16.mxu0 0
  %1768 = vmatmul.mubr.bf16.gmra.mxu0 %v1103
  %v1769 = vpop.f32.mrf.mxu0
  %v1770 = vadd.f32 %v285, %v1769
  %v1771 = vpop.f32.mrf.mxu0
  %v1772 = vpop.f32.mrf.mxu0
  %v1773 = vadd.f32 %v285, %v1772
  %v1774 = vpop.f32.mrf.mxu0
  %1775 = vmatprep.mubr.bf16.mxu0 0
  %1776 = vmatmul.mubr.bf16.gmra.mxu0 %v1106
  %v1777 = vpop.f32.mrf.mxu0
  %v1778 = vadd.f32 %v285, %v1777
  %v1779 = vpop.f32.mrf.mxu0
  %v1780 = vpop.f32.mrf.mxu0
  %v1781 = vadd.f32 %v285, %v1780
  %v1782 = vpop.f32.mrf.mxu0
  %1783 = vmatprep.mubr.bf16.mxu0 0
  %1784 = vmatmul.mubr.bf16.gmra.mxu0 %v1109
  %v1785 = vpop.f32.mrf.mxu0
  %v1786 = vadd.f32 %v285, %v1785
  %v1787 = vpop.f32.mrf.mxu0
  %v1788 = vpop.f32.mrf.mxu0
  %v1789 = vadd.f32 %v285, %v1788
  %v1790 = vpop.f32.mrf.mxu0
  %1791 = vmatprep.mubr.bf16.mxu0 0
  %1792 = vmatmul.mubr.bf16.gmra.mxu0 %v1112
  %v1793 = vpop.f32.mrf.mxu0
  %v1794 = vadd.f32 %v285, %v1793
  %v1795 = vpop.f32.mrf.mxu0
  %v1796 = vpop.f32.mrf.mxu0
  %v1797 = vadd.f32 %v285, %v1796
  %v1798 = vpop.f32.mrf.mxu0
  %1799 = vmatprep.mubr.bf16.mxu0 0
  %1800 = vmatmul.mubr.bf16.gmra.mxu0 %v1115
  %v1801 = vpop.f32.mrf.mxu0
  %v1802 = vadd.f32 %v285, %v1801
  %v1803 = vpop.f32.mrf.mxu0
  %v1804 = vpop.f32.mrf.mxu0
  %v1805 = vadd.f32 %v285, %v1804
  %v1806 = vpop.f32.mrf.mxu0
  %1807 = vmatprep.mubr.bf16.mxu0 0
  %1808 = vmatmul.mubr.bf16.gmra.mxu0 %v1118
  %v1809 = vpop.f32.mrf.mxu0
  %v1810 = vadd.f32 %v285, %v1809
  %v1811 = vpop.f32.mrf.mxu0
  %v1812 = vpop.f32.mrf.mxu0
  %v1813 = vadd.f32 %v285, %v1812
  %v1814 = vpop.f32.mrf.mxu0
  %1815 = vmatprep.mubr.bf16.mxu0 0
  %1816 = vmatmul.mubr.bf16.gmra.mxu0 %v1121
  %v1817 = vpop.f32.mrf.mxu0
  %v1818 = vadd.f32 %v285, %v1817
  %v1819 = vpop.f32.mrf.mxu0
  %v1820 = vpop.f32.mrf.mxu0
  %v1821 = vadd.f32 %v285, %v1820
  %v1822 = vpop.f32.mrf.mxu0
  %1823 = vmatprep.mubr.bf16.mxu0 0
  %1824 = vmatmul.mubr.bf16.gmra.mxu0 %v1124
  %v1825 = vpop.f32.mrf.mxu0
  %v1826 = vadd.f32 %v285, %v1825
  %v1827 = vpop.f32.mrf.mxu0
  %v1828 = vpop.f32.mrf.mxu0
  %v1829 = vadd.f32 %v285, %v1828
  %v1830 = vpop.f32.mrf.mxu0
  %1831 = vmatprep.mubr.bf16.mxu0 0
  %1832 = vmatmul.mubr.bf16.gmra.mxu0 %v1127
  %v1833 = vpop.f32.mrf.mxu0
  %v1834 = vadd.f32 %v285, %v1833
  %v1835 = vpop.f32.mrf.mxu0
  %v1836 = vpop.f32.mrf.mxu0
  %v1837 = vadd.f32 %v285, %v1836
  %v1838 = vpop.f32.mrf.mxu0
  %1839 = vmatprep.mubr.bf16.mxu0 0
  %1840 = vmatmul.mubr.bf16.gmra.mxu0 %v1130
  %v1841 = vpop.f32.mrf.mxu0
  %v1842 = vadd.f32 %v285, %v1841
  %v1843 = vpop.f32.mrf.mxu0
  %v1844 = vpop.f32.mrf.mxu0
  %v1845 = vadd.f32 %v285, %v1844
  %v1846 = vpop.f32.mrf.mxu0
  %1847 = vmatprep.mubr.bf16.mxu0 0
  %1848 = vmatmul.mubr.bf16.gmra.mxu0 %v1133
  %v1849 = vpop.f32.mrf.mxu0
  %v1850 = vadd.f32 %v285, %v1849
  %v1851 = vpop.f32.mrf.mxu0
  %v1852 = vpop.f32.mrf.mxu0
  %v1853 = vadd.f32 %v285, %v1852
  %v1854 = vpop.f32.mrf.mxu0
  %1855 = vmatprep.mubr.bf16.mxu0 0
  %1856 = vmatmul.mubr.bf16.gmra.mxu0 %v1136
  %v1857 = vpop.f32.mrf.mxu0
  %v1858 = vadd.f32 %v285, %v1857
  %v1859 = vpop.f32.mrf.mxu0
  %v1860 = vpop.f32.mrf.mxu0
  %v1861 = vadd.f32 %v285, %v1860
  %v1862 = vpop.f32.mrf.mxu0
  %1863 = vmatprep.mubr.bf16.mxu0 0
  %1864 = vmatmul.mubr.bf16.gmra.mxu0 %v1139
  %v1865 = vpop.f32.mrf.mxu0
  %v1866 = vadd.f32 %v285, %v1865
  %v1867 = vpop.f32.mrf.mxu0
  %v1868 = vpop.f32.mrf.mxu0
  %v1869 = vadd.f32 %v285, %v1868
  %v1870 = vpop.f32.mrf.mxu0
  %1871 = vmatprep.mubr.bf16.mxu0 0
  %1872 = vmatmul.mubr.bf16.gmra.mxu0 %v1142
  %v1873 = vpop.f32.mrf.mxu0
  %v1874 = vadd.f32 %v285, %v1873
  %v1875 = vpop.f32.mrf.mxu0
  %v1876 = vpop.f32.mrf.mxu0
  %v1877 = vadd.f32 %v285, %v1876
  %v1878 = vpop.f32.mrf.mxu0
  %1879 = vmatprep.mubr.bf16.mxu0 0
  %1880 = vmatmul.mubr.bf16.gmra.mxu0 %v1145
  %v1881 = vpop.f32.mrf.mxu0
  %v1882 = vadd.f32 %v285, %v1881
  %v1883 = vpop.f32.mrf.mxu0
  %v1884 = vpop.f32.mrf.mxu0
  %v1885 = vadd.f32 %v285, %v1884
  %v1886 = vpop.f32.mrf.mxu0
  %1887 = vmatprep.mubr.bf16.mxu0 0
  %1888 = vmatmul.mubr.bf16.gmra.mxu0 %v1148
  %v1889 = vpop.f32.mrf.mxu0
  %v1890 = vadd.f32 %v285, %v1889
  %v1891 = vpop.f32.mrf.mxu0
  %v1892 = vpop.f32.mrf.mxu0
  %v1893 = vadd.f32 %v285, %v1892
  %v1894 = vpop.f32.mrf.mxu0
  %1895 = vmatprep.mubr.bf16.mxu0 0
  %1896 = vmatmul.mubr.bf16.gmra.mxu0 %v1151
  %v1897 = vpop.f32.mrf.mxu0
  %v1898 = vadd.f32 %v285, %v1897
  %v1899 = vpop.f32.mrf.mxu0
  %v1900 = vpop.f32.mrf.mxu0
  %v1901 = vadd.f32 %v285, %v1900
  %v1902 = vpop.f32.mrf.mxu0
  %1903 = vmatprep.mubr.bf16.mxu0 0
  %1904 = vmatmul.mubr.bf16.gmra.mxu0 %v1154
  %v1905 = vpop.f32.mrf.mxu0
  %v1906 = vadd.f32 %v285, %v1905
  %v1907 = vpop.f32.mrf.mxu0
  %v1908 = vpop.f32.mrf.mxu0
  %v1909 = vadd.f32 %v285, %v1908
  %v1910 = vpop.f32.mrf.mxu0
  %1911 = vmatprep.mubr.bf16.mxu0 0
  %1912 = vmatmul.mubr.bf16.gmra.mxu0 %v1157
  %v1913 = vpop.f32.mrf.mxu0
  %v1914 = vadd.f32 %v285, %v1913
  %v1915 = vpop.f32.mrf.mxu0
  %v1916 = vpop.f32.mrf.mxu0
  %v1917 = vadd.f32 %v285, %v1916
  %v1918 = vpop.f32.mrf.mxu0
  %1919 = vmatprep.mubr.bf16.mxu0 0
  %1920 = vmatmul.mubr.bf16.gmra.mxu0 %v1160
  %v1921 = vpop.f32.mrf.mxu0
  %v1922 = vadd.f32 %v285, %v1921
  %v1923 = vpop.f32.mrf.mxu0
  %v1924 = vpop.f32.mrf.mxu0
  %v1925 = vadd.f32 %v285, %v1924
  %v1926 = vpop.f32.mrf.mxu0
  %1927 = vmatprep.mubr.bf16.mxu0 0
  %1928 = vmatmul.mubr.bf16.gmra.mxu0 %v1163
  %v1929 = vpop.f32.mrf.mxu0
  %v1930 = vadd.f32 %v285, %v1929
  %v1931 = vpop.f32.mrf.mxu0
  %v1932 = vpop.f32.mrf.mxu0
  %v1933 = vadd.f32 %v285, %v1932
  %v1934 = vpop.f32.mrf.mxu0
  %1935 = vmatprep.mubr.bf16.mxu0 0
  %1936 = vmatmul.mubr.bf16.gmra.mxu0 %v1166
  %v1937 = vpop.f32.mrf.mxu0
  %v1938 = vadd.f32 %v285, %v1937
  %v1939 = vpop.f32.mrf.mxu0
  %v1940 = vpop.f32.mrf.mxu0
  %v1941 = vadd.f32 %v285, %v1940
  %v1942 = vpop.f32.mrf.mxu0
  %1943 = vmatprep.mubr.bf16.mxu0 0
  %1944 = vmatmul.mubr.bf16.gmra.mxu0 %v1169
  %v1945 = vpop.f32.mrf.mxu0
  %v1946 = vadd.f32 %v285, %v1945
  %v1947 = vpop.f32.mrf.mxu0
  %v1948 = vpop.f32.mrf.mxu0
  %v1949 = vadd.f32 %v285, %v1948
  %v1950 = vpop.f32.mrf.mxu0
  %1951 = vmatprep.mubr.bf16.mxu0 0
  %1952 = vmatmul.mubr.bf16.gmra.mxu0 %v1172
  %v1953 = vpop.f32.mrf.mxu0
  %v1954 = vadd.f32 %v285, %v1953
  %v1955 = vpop.f32.mrf.mxu0
  %v1956 = vpop.f32.mrf.mxu0
  %v1957 = vadd.f32 %v285, %v1956
  %v1958 = vpop.f32.mrf.mxu0
  %1959 = vmatprep.mubr.bf16.mxu0 0
  %1960 = vmatmul.mubr.bf16.gmra.mxu0 %v1175
  %v1961 = vpop.f32.mrf.mxu0
  %v1962 = vadd.f32 %v285, %v1961
  %v1963 = vpop.f32.mrf.mxu0
  %v1964 = vpop.f32.mrf.mxu0
  %v1965 = vadd.f32 %v285, %v1964
  %v1966 = vpop.f32.mrf.mxu0
  %1967 = vmatprep.mubr.bf16.mxu0 0
  %1968 = vmatmul.mubr.bf16.gmra.mxu0 %v1178
  %v1969 = vpop.f32.mrf.mxu0
  %v1970 = vadd.f32 %v285, %v1969
  %v1971 = vpop.f32.mrf.mxu0
  %v1972 = vpop.f32.mrf.mxu0
  %v1973 = vadd.f32 %v285, %v1972
  %v1974 = vpop.f32.mrf.mxu0
  %1975 = vmatprep.mubr.bf16.mxu0 0
  %1976 = vmatmul.mubr.bf16.gmra.mxu0 %v1181
  %v1977 = vpop.f32.mrf.mxu0
  %v1978 = vadd.f32 %v285, %v1977
  %v1979 = vpop.f32.mrf.mxu0
  %v1980 = vpop.f32.mrf.mxu0
  %v1981 = vadd.f32 %v285, %v1980
  %v1982 = vpop.f32.mrf.mxu0
  %1983 = vmatprep.mubr.bf16.mxu0 0
  %1984 = vmatmul.mubr.bf16.gmra.mxu0 %v1184
  %v1985 = vpop.f32.mrf.mxu0
  %v1986 = vadd.f32 %v285, %v1985
  %v1987 = vpop.f32.mrf.mxu0
  %v1988 = vpop.f32.mrf.mxu0
  %v1989 = vadd.f32 %v285, %v1988
  %v1990 = vpop.f32.mrf.mxu0
  %1991 = vmatprep.mubr.bf16.mxu0 0
  %1992 = vmatmul.mubr.bf16.gmra.mxu0 %v1187
  %v1993 = vpop.f32.mrf.mxu0
  %v1994 = vadd.f32 %v285, %v1993
  %v1995 = vpop.f32.mrf.mxu0
  %v1996 = vpop.f32.mrf.mxu0
  %v1997 = vadd.f32 %v285, %v1996
  %v1998 = vpop.f32.mrf.mxu0
  %1999 = vmatprep.mubr.bf16.mxu0 0
  %2000 = vmatmul.mubr.bf16.gmra.mxu0 %v1190
  %v2001 = vpop.f32.mrf.mxu0
  %v2002 = vadd.f32 %v285, %v2001
  %v2003 = vpop.f32.mrf.mxu0
  %v2004 = vpop.f32.mrf.mxu0
  %v2005 = vadd.f32 %v285, %v2004
  %v2006 = vpop.f32.mrf.mxu0
  %2007 = vmatprep.mubr.bf16.mxu0 0
  %2008 = vmatmul.mubr.bf16.gmra.mxu0 %v1193
  %v2009 = vpop.f32.mrf.mxu0
  %v2010 = vadd.f32 %v285, %v2009
  %v2011 = vpop.f32.mrf.mxu0
  %v2012 = vpop.f32.mrf.mxu0
  %v2013 = vadd.f32 %v285, %v2012
  %v2014 = vpop.f32.mrf.mxu0
  %2015 = vmatprep.mubr.bf16.mxu0 0
  %2016 = vmatmul.mubr.bf16.gmra.mxu0 %v1196
  %v2017 = vpop.f32.mrf.mxu0
  %v2018 = vadd.f32 %v285, %v2017
  %v2019 = vpop.f32.mrf.mxu0
  %v2020 = vpop.f32.mrf.mxu0
  %v2021 = vadd.f32 %v285, %v2020
  %v2022 = vpop.f32.mrf.mxu0
  %2023 = vmatprep.mubr.bf16.mxu0 0
  %2024 = vmatmul.mubr.bf16.gmra.mxu0 %v1199
  %v2025 = vpop.f32.mrf.mxu0
  %v2026 = vadd.f32 %v285, %v2025
  %v2027 = vpop.f32.mrf.mxu0
  %v2028 = vpop.f32.mrf.mxu0
  %v2029 = vadd.f32 %v285, %v2028
  %v2030 = vpop.f32.mrf.mxu0
  %2031 = vmatprep.mubr.bf16.mxu0 0
  %2032 = vmatmul.mubr.bf16.gmra.mxu0 %v1202
  %v2033 = vpop.f32.mrf.mxu0
  %v2034 = vadd.f32 %v285, %v2033
  %v2035 = vpop.f32.mrf.mxu0
  %v2036 = vpop.f32.mrf.mxu0
  %v2037 = vadd.f32 %v285, %v2036
  %v2038 = vpop.f32.mrf.mxu0
  %2039 = vmatprep.mubr.bf16.mxu0 0
  %2040 = vmatmul.mubr.bf16.gmra.mxu0 %v1205
  %v2041 = vpop.f32.mrf.mxu0
  %v2042 = vadd.f32 %v285, %v2041
  %v2043 = vpop.f32.mrf.mxu0
  %v2044 = vpop.f32.mrf.mxu0
  %v2045 = vadd.f32 %v285, %v2044
  %v2046 = vpop.f32.mrf.mxu0
  %2047 = vmatprep.mubr.bf16.mxu0 0
  %2048 = vmatmul.mubr.bf16.gmra.mxu0 %v1208
  %v2049 = vpop.f32.mrf.mxu0
  %v2050 = vadd.f32 %v285, %v2049
  %v2051 = vpop.f32.mrf.mxu0
  %v2052 = vpop.f32.mrf.mxu0
  %v2053 = vadd.f32 %v285, %v2052
  %v2054 = vpop.f32.mrf.mxu0
  %2055 = vmatprep.mubr.bf16.mxu0 0
  %2056 = vmatmul.mubr.bf16.gmra.mxu0 %v1211
  %v2057 = vpop.f32.mrf.mxu0
  %v2058 = vadd.f32 %v285, %v2057
  %v2059 = vpop.f32.mrf.mxu0
  %v2060 = vpop.f32.mrf.mxu0
  %v2061 = vadd.f32 %v285, %v2060
  %v2062 = vpop.f32.mrf.mxu0
  %2063 = vmatprep.mubr.bf16.mxu0 0
  %2064 = vmatmul.mubr.bf16.gmra.mxu0 %v1214
  %v2065 = vpop.f32.mrf.mxu0
  %v2066 = vadd.f32 %v285, %v2065
  %v2067 = vpop.f32.mrf.mxu0
  %v2068 = vpop.f32.mrf.mxu0
  %v2069 = vadd.f32 %v285, %v2068
  %v2070 = vpop.f32.mrf.mxu0
  %2071 = vmatprep.mubr.bf16.mxu0 0
  %2072 = vmatmul.mubr.bf16.gmra.mxu0 %v1217
  %v2073 = vpop.f32.mrf.mxu0
  %v2074 = vadd.f32 %v285, %v2073
  %v2075 = vpop.f32.mrf.mxu0
  %v2076 = vpop.f32.mrf.mxu0
  %v2077 = vadd.f32 %v285, %v2076
  %v2078 = vpop.f32.mrf.mxu0
  %2079 = vmatprep.mubr.bf16.mxu0 0
  %2080 = vmatmul.mubr.bf16.gmra.mxu0 %v1220
  %v2081 = vpop.f32.mrf.mxu0
  %v2082 = vadd.f32 %v285, %v2081
  %v2083 = vpop.f32.mrf.mxu0
  %v2084 = vpop.f32.mrf.mxu0
  %v2085 = vadd.f32 %v285, %v2084
  %v2086 = vpop.f32.mrf.mxu0
  %2087 = vmatprep.mubr.bf16.mxu0 0
  %2088 = vmatmul.mubr.bf16.gmra.mxu0 %v1223
  %v2089 = vpop.f32.mrf.mxu0
  %v2090 = vadd.f32 %v285, %v2089
  %v2091 = vpop.f32.mrf.mxu0
  %v2092 = vpop.f32.mrf.mxu0
  %v2093 = vadd.f32 %v285, %v2092
  %v2094 = vpop.f32.mrf.mxu0
  %2095 = vmatprep.mubr.bf16.mxu0 0
  %2096 = vmatmul.mubr.bf16.gmra.mxu0 %v1226
  %v2097 = vpop.f32.mrf.mxu0
  %v2098 = vadd.f32 %v285, %v2097
  %v2099 = vpop.f32.mrf.mxu0
  %v2100 = vpop.f32.mrf.mxu0
  %v2101 = vadd.f32 %v285, %v2100
  %v2102 = vpop.f32.mrf.mxu0
  %2103 = vmatprep.mubr.bf16.mxu0 0
  %2104 = vmatmul.mubr.bf16.gmra.mxu0 %v1229
  %v2105 = vpop.f32.mrf.mxu0
  %v2106 = vadd.f32 %v285, %v2105
  %v2107 = vpop.f32.mrf.mxu0
  %v2108 = vpop.f32.mrf.mxu0
  %v2109 = vadd.f32 %v285, %v2108
  %v2110 = vpop.f32.mrf.mxu0
  %2111 = vmatprep.mubr.bf16.mxu0 0
  %2112 = vmatmul.mubr.bf16.gmra.mxu0 %v1232
  %v2113 = vpop.f32.mrf.mxu0
  %v2114 = vadd.f32 %v285, %v2113
  %v2115 = vpop.f32.mrf.mxu0
  %v2116 = vpop.f32.mrf.mxu0
  %v2117 = vadd.f32 %v285, %v2116
  %v2118 = vpop.f32.mrf.mxu0
  %2119 = vmatprep.mubr.bf16.mxu0 0
  %2120 = vmatmul.mubr.bf16.gmra.mxu0 %v1235
  %v2121 = vpop.f32.mrf.mxu0
  %v2122 = vadd.f32 %v285, %v2121
  %v2123 = vpop.f32.mrf.mxu0
  %v2124 = vpop.f32.mrf.mxu0
  %v2125 = vadd.f32 %v285, %v2124
  %v2126 = vpop.f32.mrf.mxu0
  %2127 = vmatprep.mubr.bf16.mxu0 0
  %2128 = vmatmul.mubr.bf16.gmra.mxu0 %v1238
  %v2129 = vpop.f32.mrf.mxu0
  %v2130 = vadd.f32 %v285, %v2129
  %v2131 = vpop.f32.mrf.mxu0
  %v2132 = vpop.f32.mrf.mxu0
  %v2133 = vadd.f32 %v285, %v2132
  %v2134 = vpop.f32.mrf.mxu0
  %2135 = vmatprep.mubr.bf16.mxu0 0
  %2136 = vmatmul.mubr.bf16.gmra.mxu0 %v1241
  %v2137 = vpop.f32.mrf.mxu0
  %v2138 = vadd.f32 %v285, %v2137
  %v2139 = vpop.f32.mrf.mxu0
  %v2140 = vpop.f32.mrf.mxu0
  %v2141 = vadd.f32 %v285, %v2140
  %v2142 = vpop.f32.mrf.mxu0
  %2143 = vmatprep.mubr.bf16.mxu0 0
  %2144 = vmatmul.mubr.bf16.gmra.mxu0 %v1244
  %v2145 = vpop.f32.mrf.mxu0
  %v2146 = vadd.f32 %v285, %v2145
  %v2147 = vpop.f32.mrf.mxu0
  %v2148 = vpop.f32.mrf.mxu0
  %v2149 = vadd.f32 %v285, %v2148
  %v2150 = vpop.f32.mrf.mxu0
  %2151 = vmatprep.mubr.bf16.mxu0 0
  %2152 = vmatmul.mubr.bf16.gmra.mxu0 %v1247
  %v2153 = vpop.f32.mrf.mxu0
  %v2154 = vadd.f32 %v285, %v2153
  %v2155 = vpop.f32.mrf.mxu0
  %v2156 = vpop.f32.mrf.mxu0
  %v2157 = vadd.f32 %v285, %v2156
  %v2158 = vpop.f32.mrf.mxu0
  %2159 = vmatprep.mubr.bf16.mxu0 0
  %2160 = vmatmul.mubr.bf16.gmra.mxu0 %v1250
  %v2161 = vpop.f32.mrf.mxu0
  %v2162 = vadd.f32 %v285, %v2161
  %v2163 = vpop.f32.mrf.mxu0
  %v2164 = vpop.f32.mrf.mxu0
  %v2165 = vadd.f32 %v285, %v2164
  %v2166 = vpop.f32.mrf.mxu0
  %2167 = vmatprep.mubr.bf16.mxu0 0
  %2168 = vmatmul.mubr.bf16.gmra.mxu0 %v1253
  %v2169 = vpop.f32.mrf.mxu0
  %v2170 = vadd.f32 %v285, %v2169
  %v2171 = vpop.f32.mrf.mxu0
  %v2172 = vpop.f32.mrf.mxu0
  %v2173 = vadd.f32 %v285, %v2172
  %v2174 = vpop.f32.mrf.mxu0
  %2175 = vmatprep.mubr.bf16.mxu0 0
  %2176 = vmatmul.mubr.bf16.gmra.mxu0 %v1256
  %v2177 = vpop.f32.mrf.mxu0
  %v2178 = vadd.f32 %v285, %v2177
  %v2179 = vpop.f32.mrf.mxu0
  %v2180 = vpop.f32.mrf.mxu0
  %v2181 = vadd.f32 %v285, %v2180
  %v2182 = vpop.f32.mrf.mxu0
  %2183 = vmatprep.mubr.bf16.mxu0 0
  %2184 = vmatmul.mubr.bf16.gmra.mxu0 %v1259
  %v2185 = vpop.f32.mrf.mxu0
  %v2186 = vadd.f32 %v285, %v2185
  %v2187 = vpop.f32.mrf.mxu0
  %v2188 = vpop.f32.mrf.mxu0
  %v2189 = vadd.f32 %v285, %v2188
  %v2190 = vpop.f32.mrf.mxu0
  %2191 = vmatprep.mubr.bf16.mxu0 0
  %2192 = vmatmul.mubr.bf16.gmra.mxu0 %v1262
  %v2193 = vpop.f32.mrf.mxu0
  %v2194 = vadd.f32 %v285, %v2193
  %v2195 = vpop.f32.mrf.mxu0
  %v2196 = vpop.f32.mrf.mxu0
  %v2197 = vadd.f32 %v285, %v2196
  %v2198 = vpop.f32.mrf.mxu0
  %2199 = vmatprep.mubr.bf16.mxu0 0
  %2200 = vmatmul.mubr.bf16.gmra.mxu0 %v1265
  %v2201 = vpop.f32.mrf.mxu0
  %v2202 = vadd.f32 %v285, %v2201
  %v2203 = vpop.f32.mrf.mxu0
  %v2204 = vpop.f32.mrf.mxu0
  %v2205 = vadd.f32 %v285, %v2204
  %v2206 = vpop.f32.mrf.mxu0
  %2207 = vmatprep.mubr.bf16.mxu0 0
  %2208 = vmatmul.mubr.bf16.gmra.mxu0 %v1268
  %v2209 = vpop.f32.mrf.mxu0
  %v2210 = vadd.f32 %v285, %v2209
  %v2211 = vpop.f32.mrf.mxu0
  %v2212 = vpop.f32.mrf.mxu0
  %v2213 = vadd.f32 %v285, %v2212
  %v2214 = vpop.f32.mrf.mxu0
  %2215 = vmatprep.mubr.bf16.mxu0 0
  %2216 = vmatmul.mubr.bf16.gmra.mxu0 %v1271
  %v2217 = vpop.f32.mrf.mxu0
  %v2218 = vadd.f32 %v285, %v2217
  %v2219 = vpop.f32.mrf.mxu0
  %v2220 = vpop.f32.mrf.mxu0
  %v2221 = vadd.f32 %v285, %v2220
  %v2222 = vpop.f32.mrf.mxu0
  %2223 = vmatprep.mubr.bf16.mxu0 0
  %2224 = vmatmul.mubr.bf16.gmra.mxu0 %v1274
  %v2225 = vpop.f32.mrf.mxu0
  %v2226 = vadd.f32 %v285, %v2225
  %v2227 = vpop.f32.mrf.mxu0
  %v2228 = vpop.f32.mrf.mxu0
  %v2229 = vadd.f32 %v285, %v2228
  %v2230 = vpop.f32.mrf.mxu0
  %2231 = vmatprep.mubr.bf16.mxu0 0
  %2232 = vmatmul.mubr.bf16.gmra.mxu0 %v1277
  %v2233 = vpop.f32.mrf.mxu0
  %v2234 = vadd.f32 %v285, %v2233
  %v2235 = vpop.f32.mrf.mxu0
  %v2236 = vpop.f32.mrf.mxu0
  %v2237 = vadd.f32 %v285, %v2236
  %v2238 = vpop.f32.mrf.mxu0
  %2239 = vmatprep.mubr.bf16.mxu0 0
  %2240 = vmatmul.mubr.bf16.gmra.mxu0 %v1280
  %v2241 = vpop.f32.mrf.mxu0
  %v2242 = vadd.f32 %v285, %v2241
  %v2243 = vpop.f32.mrf.mxu0
  %v2244 = vpop.f32.mrf.mxu0
  %v2245 = vadd.f32 %v285, %v2244
  %v2246 = vpop.f32.mrf.mxu0
  %2247 = vmatprep.mubr.bf16.mxu0 0
  %2248 = vmatmul.mubr.bf16.gmra.mxu0 %v1283
  %v2249 = vpop.f32.mrf.mxu0
  %v2250 = vadd.f32 %v285, %v2249
  %v2251 = vpop.f32.mrf.mxu0
  %v2252 = vpop.f32.mrf.mxu0
  %v2253 = vadd.f32 %v285, %v2252
  %v2254 = vpop.f32.mrf.mxu0
  %2255 = vmatprep.mubr.bf16.mxu0 0
  %2256 = vmatmul.mubr.bf16.gmra.mxu0 %v1286
  %v2257 = vpop.f32.mrf.mxu0
  %v2258 = vadd.f32 %v285, %v2257
  %v2259 = vpop.f32.mrf.mxu0
  %v2260 = vpop.f32.mrf.mxu0
  %v2261 = vadd.f32 %v285, %v2260
  %v2262 = vpop.f32.mrf.mxu0
  %2263 = vmatprep.mubr.bf16.mxu0 0
  %2264 = vmatmul.mubr.bf16.gmra.mxu0 %v1289
  %v2265 = vpop.f32.mrf.mxu0
  %v2266 = vadd.f32 %v285, %v2265
  %v2267 = vpop.f32.mrf.mxu0
  %v2268 = vpop.f32.mrf.mxu0
  %v2269 = vadd.f32 %v285, %v2268
  %v2270 = vpop.f32.mrf.mxu0
  %2271 = vmatprep.mubr.bf16.mxu0 0
  %2272 = vmatmul.mubr.bf16.gmra.mxu0 %v1292
  %v2273 = vpop.f32.mrf.mxu0
  %v2274 = vadd.f32 %v285, %v2273
  %v2275 = vpop.f32.mrf.mxu0
  %v2276 = vpop.f32.mrf.mxu0
  %v2277 = vadd.f32 %v285, %v2276
  %v2278 = vpop.f32.mrf.mxu0
  %2279 = vmatprep.mubr.bf16.mxu0 0
  %2280 = vmatmul.mubr.bf16.gmra.mxu0 %v1295
  %v2281 = vpop.f32.mrf.mxu0
  %v2282 = vadd.f32 %v285, %v2281
  %v2283 = vpop.f32.mrf.mxu0
  %v2284 = vpop.f32.mrf.mxu0
  %v2285 = vadd.f32 %v285, %v2284
  %v2286 = vpop.f32.mrf.mxu0
  %2287 = vmatprep.mubr.bf16.mxu0 0
  %2288 = vmatmul.mubr.bf16.gmra.mxu0 %v1298
  %v2289 = vpop.f32.mrf.mxu0
  %v2290 = vadd.f32 %v285, %v2289
  %v2291 = vpop.f32.mrf.mxu0
  %v2292 = vpop.f32.mrf.mxu0
  %v2293 = vadd.f32 %v285, %v2292
  %v2294 = vpop.f32.mrf.mxu0
  %2295 = vmatprep.mubr.bf16.mxu0 0
  %2296 = vmatmul.mubr.bf16.gmra.mxu0 %v1301
  %v2297 = vpop.f32.mrf.mxu0
  %v2298 = vadd.f32 %v285, %v2297
  %v2299 = vpop.f32.mrf.mxu0
  %v2300 = vpop.f32.mrf.mxu0
  %v2301 = vadd.f32 %v285, %v2300
  %v2302 = vpop.f32.mrf.mxu0
  %2303 = vmatprep.mubr.bf16.mxu0 0
  %2304 = vmatmul.mubr.bf16.gmra.mxu0 %v1304
  %v2305 = vpop.f32.mrf.mxu0
  %v2306 = vadd.f32 %v285, %v2305
  %v2307 = vpop.f32.mrf.mxu0
  %v2308 = vpop.f32.mrf.mxu0
  %v2309 = vadd.f32 %v285, %v2308
  %v2310 = vpop.f32.mrf.mxu0
  %2311 = vmatprep.mubr.bf16.mxu0 0
  %2312 = vmatmul.mubr.bf16.gmra.mxu0 %v1307
  %v2313 = vpop.f32.mrf.mxu0
  %v2314 = vadd.f32 %v285, %v2313
  %v2315 = vpop.f32.mrf.mxu0
  %v2316 = vpop.f32.mrf.mxu0
  %v2317 = vadd.f32 %v285, %v2316
  %v2318 = vpop.f32.mrf.mxu0
  %2319 = vmatprep.mubr.bf16.mxu0 0
  %2320 = vmatmul.mubr.bf16.gmra.mxu0 %v1310
  %v2321 = vpop.f32.mrf.mxu0
  %v2322 = vadd.f32 %v285, %v2321
  %v2323 = vpop.f32.mrf.mxu0
  %v2324 = vpop.f32.mrf.mxu0
  %v2325 = vadd.f32 %v285, %v2324
  %v2326 = vpop.f32.mrf.mxu0
  %2327 = vmatprep.mubr.bf16.mxu0 0
  %2328 = vmatmul.mubr.bf16.gmra.mxu0 %v1313
  %v2329 = vpop.f32.mrf.mxu0
  %v2330 = vadd.f32 %v285, %v2329
  %v2331 = vpop.f32.mrf.mxu0
  %v2332 = vpop.f32.mrf.mxu0
  %v2333 = vadd.f32 %v285, %v2332
  %v2334 = vpop.f32.mrf.mxu0
  %2335 = vmatprep.mubr.bf16.mxu0 0
  %2336 = vmatmul.mubr.bf16.gmra.mxu0 %v1316
  %v2337 = vpop.f32.mrf.mxu0
  %v2338 = vadd.f32 %v285, %v2337
  %v2339 = vpop.f32.mrf.mxu0
  %v2340 = vpop.f32.mrf.mxu0
  %v2341 = vadd.f32 %v285, %v2340
  %v2342 = vpop.f32.mrf.mxu0
  %2343 = vmatprep.mubr.bf16.mxu0 0
  %2344 = vmatmul.mubr.bf16.gmra.mxu0 %v1319
  %v2345 = vpop.f32.mrf.mxu0
  %v2346 = vadd.f32 %v285, %v2345
  %v2347 = vpop.f32.mrf.mxu0
  %v2348 = vpop.f32.mrf.mxu0
  %v2349 = vadd.f32 %v285, %v2348
  %v2350 = vpop.f32.mrf.mxu0
  %2351 = vmatprep.mubr.bf16.mxu0 0
  %2352 = vmatmul.mubr.bf16.gmra.mxu0 %v1322
  %v2353 = vpop.f32.mrf.mxu0
  %v2354 = vadd.f32 %v285, %v2353
  %v2355 = vpop.f32.mrf.mxu0
  %v2356 = vpop.f32.mrf.mxu0
  %v2357 = vadd.f32 %v285, %v2356
  %v2358 = vpop.f32.mrf.mxu0
  %2359 = vmatprep.mubr.bf16.mxu0 0
  %2360 = vmatmul.mubr.bf16.gmra.mxu0 %v1325
  %v2361 = vpop.f32.mrf.mxu0
  %v2362 = vadd.f32 %v285, %v2361
  %v2363 = vpop.f32.mrf.mxu0
  %v2364 = vpop.f32.mrf.mxu0
  %v2365 = vadd.f32 %v285, %v2364
  %v2366 = vpop.f32.mrf.mxu0
  %2367 = vmatprep.mubr.bf16.mxu0 0
  %2368 = vmatmul.mubr.bf16.gmra.mxu0 %v1328
  %v2369 = vpop.f32.mrf.mxu0
  %v2370 = vadd.f32 %v285, %v2369
  %v2371 = vpop.f32.mrf.mxu0
  %v2372 = vpop.f32.mrf.mxu0
  %v2373 = vadd.f32 %v285, %v2372
  %v2374 = vpop.f32.mrf.mxu0
  %2375 = vmatprep.mubr.bf16.mxu0 0
  %2376 = vmatmul.mubr.bf16.gmra.mxu0 %v1331
  %v2377 = vpop.f32.mrf.mxu0
  %v2378 = vadd.f32 %v285, %v2377
  %v2379 = vpop.f32.mrf.mxu0
  %v2380 = vpop.f32.mrf.mxu0
  %v2381 = vadd.f32 %v285, %v2380
  %v2382 = vpop.f32.mrf.mxu0
  %2383 = vmatprep.mubr.bf16.mxu0 0
  %2384 = vmatmul.mubr.bf16.gmra.mxu0 %v1334
  %v2385 = vpop.f32.mrf.mxu0
  %v2386 = vadd.f32 %v285, %v2385
  %v2387 = vpop.f32.mrf.mxu0
  %v2388 = vpop.f32.mrf.mxu0
  %v2389 = vadd.f32 %v285, %v2388
  %v2390 = vpop.f32.mrf.mxu0
  %2391 = vmatprep.mubr.bf16.mxu0 0
  %2392 = vmatmul.mubr.bf16.gmra.mxu0 %v1337
  %v2393 = vpop.f32.mrf.mxu0
  %v2394 = vadd.f32 %v285, %v2393
  %v2395 = vpop.f32.mrf.mxu0
  %v2396 = vpop.f32.mrf.mxu0
  %v2397 = vadd.f32 %v285, %v2396
  %v2398 = vpop.f32.mrf.mxu0
  %2399 = vdwg.mxu0
  %v2400 = vxor.u32 %v1378, 2147483648
  %v2401 = vxor.u32 %v1381, 2147483648
  %v2402 = vxor.u32 %v1386, 2147483648
  %v2403 = vxor.u32 %v1389, 2147483648
  %v2404 = vxor.u32 %v1394, 2147483648
  %v2405 = vxor.u32 %v1397, 2147483648
  %v2406 = vxor.u32 %v1402, 2147483648
  %v2407 = vxor.u32 %v1405, 2147483648
  %v2408 = vxor.u32 %v1410, 2147483648
  %v2409 = vxor.u32 %v1413, 2147483648
  %v2410 = vxor.u32 %v1418, 2147483648
  %v2411 = vxor.u32 %v1421, 2147483648
  %v2412 = vxor.u32 %v1426, 2147483648
  %v2413 = vxor.u32 %v1429, 2147483648
  %v2414 = vxor.u32 %v1434, 2147483648
  %v2415 = vxor.u32 %v1437, 2147483648
  %v2416 = vxor.u32 %v1442, 2147483648
  %v2417 = vxor.u32 %v1445, 2147483648
  %v2418 = vxor.u32 %v1450, 2147483648
  %v2419 = vxor.u32 %v1453, 2147483648
  %v2420 = vxor.u32 %v1458, 2147483648
  %v2421 = vxor.u32 %v1461, 2147483648
  %v2422 = vxor.u32 %v1466, 2147483648
  %v2423 = vxor.u32 %v1469, 2147483648
  %v2424 = vxor.u32 %v1474, 2147483648
  %v2425 = vxor.u32 %v1477, 2147483648
  %v2426 = vxor.u32 %v1482, 2147483648
  %v2427 = vxor.u32 %v1485, 2147483648
  %v2428 = vxor.u32 %v1490, 2147483648
  %v2429 = vxor.u32 %v1493, 2147483648
  %v2430 = vxor.u32 %v1498, 2147483648
  %v2431 = vxor.u32 %v1501, 2147483648
  %v2432 = vxor.u32 %v1506, 2147483648
  %v2433 = vxor.u32 %v1509, 2147483648
  %v2434 = vxor.u32 %v1514, 2147483648
  %v2435 = vxor.u32 %v1517, 2147483648
  %v2436 = vxor.u32 %v1522, 2147483648
  %v2437 = vxor.u32 %v1525, 2147483648
  %v2438 = vxor.u32 %v1530, 2147483648
  %v2439 = vxor.u32 %v1533, 2147483648
  %v2440 = vxor.u32 %v1538, 2147483648
  %v2441 = vxor.u32 %v1541, 2147483648
  %v2442 = vxor.u32 %v1546, 2147483648
  %v2443 = vxor.u32 %v1549, 2147483648
  %v2444 = vxor.u32 %v1554, 2147483648
  %v2445 = vxor.u32 %v1557, 2147483648
  %v2446 = vxor.u32 %v1562, 2147483648
  %v2447 = vxor.u32 %v1565, 2147483648
  %v2448 = vxor.u32 %v1570, 2147483648
  %v2449 = vxor.u32 %v1573, 2147483648
  %v2450 = vxor.u32 %v1578, 2147483648
  %v2451 = vxor.u32 %v1581, 2147483648
  %v2452 = vxor.u32 %v1586, 2147483648
  %v2453 = vxor.u32 %v1589, 2147483648
  %v2454 = vxor.u32 %v1594, 2147483648
  %v2455 = vxor.u32 %v1597, 2147483648
  %v2456 = vxor.u32 %v1602, 2147483648
  %v2457 = vxor.u32 %v1605, 2147483648
  %v2458 = vxor.u32 %v1610, 2147483648
  %v2459 = vxor.u32 %v1613, 2147483648
  %v2460 = vxor.u32 %v1618, 2147483648
  %v2461 = vxor.u32 %v1621, 2147483648
  %v2462 = vxor.u32 %v1626, 2147483648
  %v2463 = vxor.u32 %v1629, 2147483648
  %v2464 = vxor.u32 %v1634, 2147483648
  %v2465 = vxor.u32 %v1637, 2147483648
  %v2466 = vxor.u32 %v1642, 2147483648
  %v2467 = vxor.u32 %v1645, 2147483648
  %v2468 = vxor.u32 %v1650, 2147483648
  %v2469 = vxor.u32 %v1653, 2147483648
  %v2470 = vxor.u32 %v1658, 2147483648
  %v2471 = vxor.u32 %v1661, 2147483648
  %v2472 = vxor.u32 %v1666, 2147483648
  %v2473 = vxor.u32 %v1669, 2147483648
  %v2474 = vxor.u32 %v1674, 2147483648
  %v2475 = vxor.u32 %v1677, 2147483648
  %v2476 = vxor.u32 %v1682, 2147483648
  %v2477 = vxor.u32 %v1685, 2147483648
  %v2478 = vxor.u32 %v1690, 2147483648
  %v2479 = vxor.u32 %v1693, 2147483648
  %v2480 = vxor.u32 %v1698, 2147483648
  %v2481 = vxor.u32 %v1701, 2147483648
  %v2482 = vxor.u32 %v1706, 2147483648
  %v2483 = vxor.u32 %v1709, 2147483648
  %v2484 = vxor.u32 %v1714, 2147483648
  %v2485 = vxor.u32 %v1717, 2147483648
  %v2486 = vxor.u32 %v1722, 2147483648
  %v2487 = vxor.u32 %v1725, 2147483648
  %v2488 = vxor.u32 %v1730, 2147483648
  %v2489 = vxor.u32 %v1733, 2147483648
  %v2490 = vxor.u32 %v1738, 2147483648
  %v2491 = vxor.u32 %v1741, 2147483648
  %v2492 = vxor.u32 %v1746, 2147483648
  %v2493 = vxor.u32 %v1749, 2147483648
  %v2494 = vxor.u32 %v1754, 2147483648
  %v2495 = vxor.u32 %v1757, 2147483648
  %v2496 = vxor.u32 %v1762, 2147483648
  %v2497 = vxor.u32 %v1765, 2147483648
  %v2498 = vxor.u32 %v1770, 2147483648
  %v2499 = vxor.u32 %v1773, 2147483648
  %v2500 = vxor.u32 %v1778, 2147483648
  %v2501 = vxor.u32 %v1781, 2147483648
  %v2502 = vxor.u32 %v1786, 2147483648
  %v2503 = vxor.u32 %v1789, 2147483648
  %v2504 = vxor.u32 %v1794, 2147483648
  %v2505 = vxor.u32 %v1797, 2147483648
  %v2506 = vxor.u32 %v1802, 2147483648
  %v2507 = vxor.u32 %v1805, 2147483648
  %v2508 = vxor.u32 %v1810, 2147483648
  %v2509 = vxor.u32 %v1813, 2147483648
  %v2510 = vxor.u32 %v1818, 2147483648
  %v2511 = vxor.u32 %v1821, 2147483648
  %v2512 = vxor.u32 %v1826, 2147483648
  %v2513 = vxor.u32 %v1829, 2147483648
  %v2514 = vxor.u32 %v1834, 2147483648
  %v2515 = vxor.u32 %v1837, 2147483648
  %v2516 = vxor.u32 %v1842, 2147483648
  %v2517 = vxor.u32 %v1845, 2147483648
  %v2518 = vxor.u32 %v1850, 2147483648
  %v2519 = vxor.u32 %v1853, 2147483648
  %v2520 = vxor.u32 %v1858, 2147483648
  %v2521 = vxor.u32 %v1861, 2147483648
  %v2522 = vxor.u32 %v1866, 2147483648
  %v2523 = vxor.u32 %v1869, 2147483648
  %v2524 = vxor.u32 %v1874, 2147483648
  %v2525 = vxor.u32 %v1877, 2147483648
  %v2526 = vxor.u32 %v1882, 2147483648
  %v2527 = vxor.u32 %v1885, 2147483648
  %v2528 = vxor.u32 %v1890, 2147483648
  %v2529 = vxor.u32 %v1893, 2147483648
  %v2530 = vxor.u32 %v1898, 2147483648
  %v2531 = vxor.u32 %v1901, 2147483648
  %v2532 = vxor.u32 %v1906, 2147483648
  %v2533 = vxor.u32 %v1909, 2147483648
  %v2534 = vxor.u32 %v1914, 2147483648
  %v2535 = vxor.u32 %v1917, 2147483648
  %v2536 = vxor.u32 %v1922, 2147483648
  %v2537 = vxor.u32 %v1925, 2147483648
  %v2538 = vxor.u32 %v1930, 2147483648
  %v2539 = vxor.u32 %v1933, 2147483648
  %v2540 = vxor.u32 %v1938, 2147483648
  %v2541 = vxor.u32 %v1941, 2147483648
  %v2542 = vxor.u32 %v1946, 2147483648
  %v2543 = vxor.u32 %v1949, 2147483648
  %v2544 = vxor.u32 %v1954, 2147483648
  %v2545 = vxor.u32 %v1957, 2147483648
  %v2546 = vxor.u32 %v1962, 2147483648
  %v2547 = vxor.u32 %v1965, 2147483648
  %v2548 = vxor.u32 %v1970, 2147483648
  %v2549 = vxor.u32 %v1973, 2147483648
  %v2550 = vxor.u32 %v1978, 2147483648
  %v2551 = vxor.u32 %v1981, 2147483648
  %v2552 = vxor.u32 %v1986, 2147483648
  %v2553 = vxor.u32 %v1989, 2147483648
  %v2554 = vxor.u32 %v1994, 2147483648
  %v2555 = vxor.u32 %v1997, 2147483648
  %v2556 = vxor.u32 %v2002, 2147483648
  %v2557 = vxor.u32 %v2005, 2147483648
  %v2558 = vxor.u32 %v2010, 2147483648
  %v2559 = vxor.u32 %v2013, 2147483648
  %v2560 = vxor.u32 %v2018, 2147483648
  %v2561 = vxor.u32 %v2021, 2147483648
  %v2562 = vxor.u32 %v2026, 2147483648
  %v2563 = vxor.u32 %v2029, 2147483648
  %v2564 = vxor.u32 %v2034, 2147483648
  %v2565 = vxor.u32 %v2037, 2147483648
  %v2566 = vxor.u32 %v2042, 2147483648
  %v2567 = vxor.u32 %v2045, 2147483648
  %v2568 = vxor.u32 %v2050, 2147483648
  %v2569 = vxor.u32 %v2053, 2147483648
  %v2570 = vxor.u32 %v2058, 2147483648
  %v2571 = vxor.u32 %v2061, 2147483648
  %v2572 = vxor.u32 %v2066, 2147483648
  %v2573 = vxor.u32 %v2069, 2147483648
  %v2574 = vxor.u32 %v2074, 2147483648
  %v2575 = vxor.u32 %v2077, 2147483648
  %v2576 = vxor.u32 %v2082, 2147483648
  %v2577 = vxor.u32 %v2085, 2147483648
  %v2578 = vxor.u32 %v2090, 2147483648
  %v2579 = vxor.u32 %v2093, 2147483648
  %v2580 = vxor.u32 %v2098, 2147483648
  %v2581 = vxor.u32 %v2101, 2147483648
  %v2582 = vxor.u32 %v2106, 2147483648
  %v2583 = vxor.u32 %v2109, 2147483648
  %v2584 = vxor.u32 %v2114, 2147483648
  %v2585 = vxor.u32 %v2117, 2147483648
  %v2586 = vxor.u32 %v2122, 2147483648
  %v2587 = vxor.u32 %v2125, 2147483648
  %v2588 = vxor.u32 %v2130, 2147483648
  %v2589 = vxor.u32 %v2133, 2147483648
  %v2590 = vxor.u32 %v2138, 2147483648
  %v2591 = vxor.u32 %v2141, 2147483648
  %v2592 = vxor.u32 %v2146, 2147483648
  %v2593 = vxor.u32 %v2149, 2147483648
  %v2594 = vxor.u32 %v2154, 2147483648
  %v2595 = vxor.u32 %v2157, 2147483648
  %v2596 = vxor.u32 %v2162, 2147483648
  %v2597 = vxor.u32 %v2165, 2147483648
  %v2598 = vxor.u32 %v2170, 2147483648
  %v2599 = vxor.u32 %v2173, 2147483648
  %v2600 = vxor.u32 %v2178, 2147483648
  %v2601 = vxor.u32 %v2181, 2147483648
  %v2602 = vxor.u32 %v2186, 2147483648
  %v2603 = vxor.u32 %v2189, 2147483648
  %v2604 = vxor.u32 %v2194, 2147483648
  %v2605 = vxor.u32 %v2197, 2147483648
  %v2606 = vxor.u32 %v2202, 2147483648
  %v2607 = vxor.u32 %v2205, 2147483648
  %v2608 = vxor.u32 %v2210, 2147483648
  %v2609 = vxor.u32 %v2213, 2147483648
  %v2610 = vxor.u32 %v2218, 2147483648
  %v2611 = vxor.u32 %v2221, 2147483648
  %v2612 = vxor.u32 %v2226, 2147483648
  %v2613 = vxor.u32 %v2229, 2147483648
  %v2614 = vxor.u32 %v2234, 2147483648
  %v2615 = vxor.u32 %v2237, 2147483648
  %v2616 = vxor.u32 %v2242, 2147483648
  %v2617 = vxor.u32 %v2245, 2147483648
  %v2618 = vxor.u32 %v2250, 2147483648
  %v2619 = vxor.u32 %v2253, 2147483648
  %v2620 = vxor.u32 %v2258, 2147483648
  %v2621 = vxor.u32 %v2261, 2147483648
  %v2622 = vxor.u32 %v2266, 2147483648
  %v2623 = vxor.u32 %v2269, 2147483648
  %v2624 = vxor.u32 %v2274, 2147483648
  %v2625 = vxor.u32 %v2277, 2147483648
  %v2626 = vxor.u32 %v2282, 2147483648
  %v2627 = vxor.u32 %v2285, 2147483648
  %v2628 = vxor.u32 %v2290, 2147483648
  %v2629 = vxor.u32 %v2293, 2147483648
  %v2630 = vxor.u32 %v2298, 2147483648
  %v2631 = vxor.u32 %v2301, 2147483648
  %v2632 = vxor.u32 %v2306, 2147483648
  %v2633 = vxor.u32 %v2309, 2147483648
  %v2634 = vxor.u32 %v2314, 2147483648
  %v2635 = vxor.u32 %v2317, 2147483648
  %v2636 = vxor.u32 %v2322, 2147483648
  %v2637 = vxor.u32 %v2325, 2147483648
  %v2638 = vxor.u32 %v2330, 2147483648
  %v2639 = vxor.u32 %v2333, 2147483648
  %v2640 = vxor.u32 %v2338, 2147483648
  %v2641 = vxor.u32 %v2341, 2147483648
  %v2642 = vxor.u32 %v2346, 2147483648
  %v2643 = vxor.u32 %v2349, 2147483648
  %v2644 = vxor.u32 %v2354, 2147483648
  %v2645 = vxor.u32 %v2357, 2147483648
  %v2646 = vxor.u32 %v2362, 2147483648
  %v2647 = vxor.u32 %v2365, 2147483648
  %v2648 = vxor.u32 %v2370, 2147483648
  %v2649 = vxor.u32 %v2373, 2147483648
  %v2650 = vxor.u32 %v2378, 2147483648
  %v2651 = vxor.u32 %v2381, 2147483648
  %v2652 = vxor.u32 %v2386, 2147483648
  %v2653 = vxor.u32 %v2389, 2147483648
  %v2654 = vxor.u32 %v2394, 2147483648
  %v2655 = vxor.u32 %v2397, 2147483648
  %v2656 = vmul.f32 %v2400, 1.442695
  %v2657 = vpow.pop %v2656
  %v2658 = vmul.f32 %v2401, 1.442695
  %v2659 = vpow.pop %v2658
  %v2660 = vmul.f32 %v2402, 1.442695
  %v2661 = vpow.pop %v2660
  %v2662 = vmul.f32 %v2403, 1.442695
  %v2663 = vpow.pop %v2662
  %v2664 = vmul.f32 %v2404, 1.442695
  %v2665 = vpow.pop %v2664
  %v2666 = vmul.f32 %v2405, 1.442695
  %v2667 = vpow.pop %v2666
  %v2668 = vmul.f32 %v2406, 1.442695
  %v2669 = vpow.pop %v2668
  %v2670 = vmul.f32 %v2407, 1.442695
  %v2671 = vpow.pop %v2670
  %v2672 = vmul.f32 %v2408, 1.442695
  %v2673 = vpow.pop %v2672
  %v2674 = vmul.f32 %v2409, 1.442695
  %v2675 = vpow.pop %v2674
  %v2676 = vmul.f32 %v2410, 1.442695
  %v2677 = vpow.pop %v2676
  %v2678 = vmul.f32 %v2411, 1.442695
  %v2679 = vpow.pop %v2678
  %v2680 = vmul.f32 %v2412, 1.442695
  %v2681 = vpow.pop %v2680
  %v2682 = vmul.f32 %v2413, 1.442695
  %v2683 = vpow.pop %v2682
  %v2684 = vmul.f32 %v2414, 1.442695
  %v2685 = vpow.pop %v2684
  %v2686 = vmul.f32 %v2415, 1.442695
  %v2687 = vpow.pop %v2686
  %v2688 = vmul.f32 %v2416, 1.442695
  %v2689 = vpow.pop %v2688
  %v2690 = vmul.f32 %v2417, 1.442695
  %v2691 = vpow.pop %v2690
  %v2692 = vmul.f32 %v2418, 1.442695
  %v2693 = vpow.pop %v2692
  %v2694 = vmul.f32 %v2419, 1.442695
  %v2695 = vpow.pop %v2694
  %v2696 = vmul.f32 %v2420, 1.442695
  %v2697 = vpow.pop %v2696
  %v2698 = vmul.f32 %v2421, 1.442695
  %v2699 = vpow.pop %v2698
  %v2700 = vmul.f32 %v2422, 1.442695
  %v2701 = vpow.pop %v2700
  %v2702 = vmul.f32 %v2423, 1.442695
  %v2703 = vpow.pop %v2702
  %v2704 = vmul.f32 %v2424, 1.442695
  %v2705 = vpow.pop %v2704
  %v2706 = vmul.f32 %v2425, 1.442695
  %v2707 = vpow.pop %v2706
  %v2708 = vmul.f32 %v2426, 1.442695
  %v2709 = vpow.pop %v2708
  %v2710 = vmul.f32 %v2427, 1.442695
  %v2711 = vpow.pop %v2710
  %v2712 = vmul.f32 %v2428, 1.442695
  %v2713 = vpow.pop %v2712
  %v2714 = vmul.f32 %v2429, 1.442695
  %v2715 = vpow.pop %v2714
  %v2716 = vmul.f32 %v2430, 1.442695
  %v2717 = vpow.pop %v2716
  %v2718 = vmul.f32 %v2431, 1.442695
  %v2719 = vpow.pop %v2718
  %v2720 = vmul.f32 %v2432, 1.442695
  %v2721 = vpow.pop %v2720
  %v2722 = vmul.f32 %v2433, 1.442695
  %v2723 = vpow.pop %v2722
  %v2724 = vmul.f32 %v2434, 1.442695
  %v2725 = vpow.pop %v2724
  %v2726 = vmul.f32 %v2435, 1.442695
  %v2727 = vpow.pop %v2726
  %v2728 = vmul.f32 %v2436, 1.442695
  %v2729 = vpow.pop %v2728
  %v2730 = vmul.f32 %v2437, 1.442695
  %v2731 = vpow.pop %v2730
  %v2732 = vmul.f32 %v2438, 1.442695
  %v2733 = vpow.pop %v2732
  %v2734 = vmul.f32 %v2439, 1.442695
  %v2735 = vpow.pop %v2734
  %v2736 = vmul.f32 %v2440, 1.442695
  %v2737 = vpow.pop %v2736
  %v2738 = vmul.f32 %v2441, 1.442695
  %v2739 = vpow.pop %v2738
  %v2740 = vmul.f32 %v2442, 1.442695
  %v2741 = vpow.pop %v2740
  %v2742 = vmul.f32 %v2443, 1.442695
  %v2743 = vpow.pop %v2742
  %v2744 = vmul.f32 %v2444, 1.442695
  %v2745 = vpow.pop %v2744
  %v2746 = vmul.f32 %v2445, 1.442695
  %v2747 = vpow.pop %v2746
  %v2748 = vmul.f32 %v2446, 1.442695
  %v2749 = vpow.pop %v2748
  %v2750 = vmul.f32 %v2447, 1.442695
  %v2751 = vpow.pop %v2750
  %v2752 = vmul.f32 %v2448, 1.442695
  %v2753 = vpow.pop %v2752
  %v2754 = vmul.f32 %v2449, 1.442695
  %v2755 = vpow.pop %v2754
  %v2756 = vmul.f32 %v2450, 1.442695
  %v2757 = vpow.pop %v2756
  %v2758 = vmul.f32 %v2451, 1.442695
  %v2759 = vpow.pop %v2758
  %v2760 = vmul.f32 %v2452, 1.442695
  %v2761 = vpow.pop %v2760
  %v2762 = vmul.f32 %v2453, 1.442695
  %v2763 = vpow.pop %v2762
  %v2764 = vmul.f32 %v2454, 1.442695
  %v2765 = vpow.pop %v2764
  %v2766 = vmul.f32 %v2455, 1.442695
  %v2767 = vpow.pop %v2766
  %v2768 = vmul.f32 %v2456, 1.442695
  %v2769 = vpow.pop %v2768
  %v2770 = vmul.f32 %v2457, 1.442695
  %v2771 = vpow.pop %v2770
  %v2772 = vmul.f32 %v2458, 1.442695
  %v2773 = vpow.pop %v2772
  %v2774 = vmul.f32 %v2459, 1.442695
  %v2775 = vpow.pop %v2774
  %v2776 = vmul.f32 %v2460, 1.442695
  %v2777 = vpow.pop %v2776
  %v2778 = vmul.f32 %v2461, 1.442695
  %v2779 = vpow.pop %v2778
  %v2780 = vmul.f32 %v2462, 1.442695
  %v2781 = vpow.pop %v2780
  %v2782 = vmul.f32 %v2463, 1.442695
  %v2783 = vpow.pop %v2782
  %v2784 = vmul.f32 %v2464, 1.442695
  %v2785 = vpow.pop %v2784
  %v2786 = vmul.f32 %v2465, 1.442695
  %v2787 = vpow.pop %v2786
  %v2788 = vmul.f32 %v2466, 1.442695
  %v2789 = vpow.pop %v2788
  %v2790 = vmul.f32 %v2467, 1.442695
  %v2791 = vpow.pop %v2790
  %v2792 = vmul.f32 %v2468, 1.442695
  %v2793 = vpow.pop %v2792
  %v2794 = vmul.f32 %v2469, 1.442695
  %v2795 = vpow.pop %v2794
  %v2796 = vmul.f32 %v2470, 1.442695
  %v2797 = vpow.pop %v2796
  %v2798 = vmul.f32 %v2471, 1.442695
  %v2799 = vpow.pop %v2798
  %v2800 = vmul.f32 %v2472, 1.442695
  %v2801 = vpow.pop %v2800
  %v2802 = vmul.f32 %v2473, 1.442695
  %v2803 = vpow.pop %v2802
  %v2804 = vmul.f32 %v2474, 1.442695
  %v2805 = vpow.pop %v2804
  %v2806 = vmul.f32 %v2475, 1.442695
  %v2807 = vpow.pop %v2806
  %v2808 = vmul.f32 %v2476, 1.442695
  %v2809 = vpow.pop %v2808
  %v2810 = vmul.f32 %v2477, 1.442695
  %v2811 = vpow.pop %v2810
  %v2812 = vmul.f32 %v2478, 1.442695
  %v2813 = vpow.pop %v2812
  %v2814 = vmul.f32 %v2479, 1.442695
  %v2815 = vpow.pop %v2814
  %v2816 = vmul.f32 %v2480, 1.442695
  %v2817 = vpow.pop %v2816
  %v2818 = vmul.f32 %v2481, 1.442695
  %v2819 = vpow.pop %v2818
  %v2820 = vmul.f32 %v2482, 1.442695
  %v2821 = vpow.pop %v2820
  %v2822 = vmul.f32 %v2483, 1.442695
  %v2823 = vpow.pop %v2822
  %v2824 = vmul.f32 %v2484, 1.442695
  %v2825 = vpow.pop %v2824
  %v2826 = vmul.f32 %v2485, 1.442695
  %v2827 = vpow.pop %v2826
  %v2828 = vmul.f32 %v2486, 1.442695
  %v2829 = vpow.pop %v2828
  %v2830 = vmul.f32 %v2487, 1.442695
  %v2831 = vpow.pop %v2830
  %v2832 = vmul.f32 %v2488, 1.442695
  %v2833 = vpow.pop %v2832
  %v2834 = vmul.f32 %v2489, 1.442695
  %v2835 = vpow.pop %v2834
  %v2836 = vmul.f32 %v2490, 1.442695
  %v2837 = vpow.pop %v2836
  %v2838 = vmul.f32 %v2491, 1.442695
  %v2839 = vpow.pop %v2838
  %v2840 = vmul.f32 %v2492, 1.442695
  %v2841 = vpow.pop %v2840
  %v2842 = vmul.f32 %v2493, 1.442695
  %v2843 = vpow.pop %v2842
  %v2844 = vmul.f32 %v2494, 1.442695
  %v2845 = vpow.pop %v2844
  %v2846 = vmul.f32 %v2495, 1.442695
  %v2847 = vpow.pop %v2846
  %v2848 = vmul.f32 %v2496, 1.442695
  %v2849 = vpow.pop %v2848
  %v2850 = vmul.f32 %v2497, 1.442695
  %v2851 = vpow.pop %v2850
  %v2852 = vmul.f32 %v2498, 1.442695
  %v2853 = vpow.pop %v2852
  %v2854 = vmul.f32 %v2499, 1.442695
  %v2855 = vpow.pop %v2854
  %v2856 = vmul.f32 %v2500, 1.442695
  %v2857 = vpow.pop %v2856
  %v2858 = vmul.f32 %v2501, 1.442695
  %v2859 = vpow.pop %v2858
  %v2860 = vmul.f32 %v2502, 1.442695
  %v2861 = vpow.pop %v2860
  %v2862 = vmul.f32 %v2503, 1.442695
  %v2863 = vpow.pop %v2862
  %v2864 = vmul.f32 %v2504, 1.442695
  %v2865 = vpow.pop %v2864
  %v2866 = vmul.f32 %v2505, 1.442695
  %v2867 = vpow.pop %v2866
  %v2868 = vmul.f32 %v2506, 1.442695
  %v2869 = vpow.pop %v2868
  %v2870 = vmul.f32 %v2507, 1.442695
  %v2871 = vpow.pop %v2870
  %v2872 = vmul.f32 %v2508, 1.442695
  %v2873 = vpow.pop %v2872
  %v2874 = vmul.f32 %v2509, 1.442695
  %v2875 = vpow.pop %v2874
  %v2876 = vmul.f32 %v2510, 1.442695
  %v2877 = vpow.pop %v2876
  %v2878 = vmul.f32 %v2511, 1.442695
  %v2879 = vpow.pop %v2878
  %v2880 = vmul.f32 %v2512, 1.442695
  %v2881 = vpow.pop %v2880
  %v2882 = vmul.f32 %v2513, 1.442695
  %v2883 = vpow.pop %v2882
  %v2884 = vmul.f32 %v2514, 1.442695
  %v2885 = vpow.pop %v2884
  %v2886 = vmul.f32 %v2515, 1.442695
  %v2887 = vpow.pop %v2886
  %v2888 = vmul.f32 %v2516, 1.442695
  %v2889 = vpow.pop %v2888
  %v2890 = vmul.f32 %v2517, 1.442695
  %v2891 = vpow.pop %v2890
  %v2892 = vmul.f32 %v2518, 1.442695
  %v2893 = vpow.pop %v2892
  %v2894 = vmul.f32 %v2519, 1.442695
  %v2895 = vpow.pop %v2894
  %v2896 = vmul.f32 %v2520, 1.442695
  %v2897 = vpow.pop %v2896
  %v2898 = vmul.f32 %v2521, 1.442695
  %v2899 = vpow.pop %v2898
  %v2900 = vmul.f32 %v2522, 1.442695
  %v2901 = vpow.pop %v2900
  %v2902 = vmul.f32 %v2523, 1.442695
  %v2903 = vpow.pop %v2902
  %v2904 = vmul.f32 %v2524, 1.442695
  %v2905 = vpow.pop %v2904
  %v2906 = vmul.f32 %v2525, 1.442695
  %v2907 = vpow.pop %v2906
  %v2908 = vmul.f32 %v2526, 1.442695
  %v2909 = vpow.pop %v2908
  %v2910 = vmul.f32 %v2527, 1.442695
  %v2911 = vpow.pop %v2910
  %v2912 = vmul.f32 %v2528, 1.442695
  %v2913 = vpow.pop %v2912
  %v2914 = vmul.f32 %v2529, 1.442695
  %v2915 = vpow.pop %v2914
  %v2916 = vmul.f32 %v2530, 1.442695
  %v2917 = vpow.pop %v2916
  %v2918 = vmul.f32 %v2531, 1.442695
  %v2919 = vpow.pop %v2918
  %v2920 = vmul.f32 %v2532, 1.442695
  %v2921 = vpow.pop %v2920
  %v2922 = vmul.f32 %v2533, 1.442695
  %v2923 = vpow.pop %v2922
  %v2924 = vmul.f32 %v2534, 1.442695
  %v2925 = vpow.pop %v2924
  %v2926 = vmul.f32 %v2535, 1.442695
  %v2927 = vpow.pop %v2926
  %v2928 = vmul.f32 %v2536, 1.442695
  %v2929 = vpow.pop %v2928
  %v2930 = vmul.f32 %v2537, 1.442695
  %v2931 = vpow.pop %v2930
  %v2932 = vmul.f32 %v2538, 1.442695
  %v2933 = vpow.pop %v2932
  %v2934 = vmul.f32 %v2539, 1.442695
  %v2935 = vpow.pop %v2934
  %v2936 = vmul.f32 %v2540, 1.442695
  %v2937 = vpow.pop %v2936
  %v2938 = vmul.f32 %v2541, 1.442695
  %v2939 = vpow.pop %v2938
  %v2940 = vmul.f32 %v2542, 1.442695
  %v2941 = vpow.pop %v2940
  %v2942 = vmul.f32 %v2543, 1.442695
  %v2943 = vpow.pop %v2942
  %v2944 = vmul.f32 %v2544, 1.442695
  %v2945 = vpow.pop %v2944
  %v2946 = vmul.f32 %v2545, 1.442695
  %v2947 = vpow.pop %v2946
  %v2948 = vmul.f32 %v2546, 1.442695
  %v2949 = vpow.pop %v2948
  %v2950 = vmul.f32 %v2547, 1.442695
  %v2951 = vpow.pop %v2950
  %v2952 = vmul.f32 %v2548, 1.442695
  %v2953 = vpow.pop %v2952
  %v2954 = vmul.f32 %v2549, 1.442695
  %v2955 = vpow.pop %v2954
  %v2956 = vmul.f32 %v2550, 1.442695
  %v2957 = vpow.pop %v2956
  %v2958 = vmul.f32 %v2551, 1.442695
  %v2959 = vpow.pop %v2958
  %v2960 = vmul.f32 %v2552, 1.442695
  %v2961 = vpow.pop %v2960
  %v2962 = vmul.f32 %v2553, 1.442695
  %v2963 = vpow.pop %v2962
  %v2964 = vmul.f32 %v2554, 1.442695
  %v2965 = vpow.pop %v2964
  %v2966 = vmul.f32 %v2555, 1.442695
  %v2967 = vpow.pop %v2966
  %v2968 = vmul.f32 %v2556, 1.442695
  %v2969 = vpow.pop %v2968
  %v2970 = vmul.f32 %v2557, 1.442695
  %v2971 = vpow.pop %v2970
  %v2972 = vmul.f32 %v2558, 1.442695
  %v2973 = vpow.pop %v2972
  %v2974 = vmul.f32 %v2559, 1.442695
  %v2975 = vpow.pop %v2974
  %v2976 = vmul.f32 %v2560, 1.442695
  %v2977 = vpow.pop %v2976
  %v2978 = vmul.f32 %v2561, 1.442695
  %v2979 = vpow.pop %v2978
  %v2980 = vmul.f32 %v2562, 1.442695
  %v2981 = vpow.pop %v2980
  %v2982 = vmul.f32 %v2563, 1.442695
  %v2983 = vpow.pop %v2982
  %v2984 = vmul.f32 %v2564, 1.442695
  %v2985 = vpow.pop %v2984
  %v2986 = vmul.f32 %v2565, 1.442695
  %v2987 = vpow.pop %v2986
  %v2988 = vmul.f32 %v2566, 1.442695
  %v2989 = vpow.pop %v2988
  %v2990 = vmul.f32 %v2567, 1.442695
  %v2991 = vpow.pop %v2990
  %v2992 = vmul.f32 %v2568, 1.442695
  %v2993 = vpow.pop %v2992
  %v2994 = vmul.f32 %v2569, 1.442695
  %v2995 = vpow.pop %v2994
  %v2996 = vmul.f32 %v2570, 1.442695
  %v2997 = vpow.pop %v2996
  %v2998 = vmul.f32 %v2571, 1.442695
  %v2999 = vpow.pop %v2998
  %v3000 = vmul.f32 %v2572, 1.442695
  %v3001 = vpow.pop %v3000
  %v3002 = vmul.f32 %v2573, 1.442695
  %v3003 = vpow.pop %v3002
  %v3004 = vmul.f32 %v2574, 1.442695
  %v3005 = vpow.pop %v3004
  %v3006 = vmul.f32 %v2575, 1.442695
  %v3007 = vpow.pop %v3006
  %v3008 = vmul.f32 %v2576, 1.442695
  %v3009 = vpow.pop %v3008
  %v3010 = vmul.f32 %v2577, 1.442695
  %v3011 = vpow.pop %v3010
  %v3012 = vmul.f32 %v2578, 1.442695
  %v3013 = vpow.pop %v3012
  %v3014 = vmul.f32 %v2579, 1.442695
  %v3015 = vpow.pop %v3014
  %v3016 = vmul.f32 %v2580, 1.442695
  %v3017 = vpow.pop %v3016
  %v3018 = vmul.f32 %v2581, 1.442695
  %v3019 = vpow.pop %v3018
  %v3020 = vmul.f32 %v2582, 1.442695
  %v3021 = vpow.pop %v3020
  %v3022 = vmul.f32 %v2583, 1.442695
  %v3023 = vpow.pop %v3022
  %v3024 = vmul.f32 %v2584, 1.442695
  %v3025 = vpow.pop %v3024
  %v3026 = vmul.f32 %v2585, 1.442695
  %v3027 = vpow.pop %v3026
  %v3028 = vmul.f32 %v2586, 1.442695
  %v3029 = vpow.pop %v3028
  %v3030 = vmul.f32 %v2587, 1.442695
  %v3031 = vpow.pop %v3030
  %v3032 = vmul.f32 %v2588, 1.442695
  %v3033 = vpow.pop %v3032
  %v3034 = vmul.f32 %v2589, 1.442695
  %v3035 = vpow.pop %v3034
  %v3036 = vmul.f32 %v2590, 1.442695
  %v3037 = vpow.pop %v3036
  %v3038 = vmul.f32 %v2591, 1.442695
  %v3039 = vpow.pop %v3038
  %v3040 = vmul.f32 %v2592, 1.442695
  %v3041 = vpow.pop %v3040
  %v3042 = vmul.f32 %v2593, 1.442695
  %v3043 = vpow.pop %v3042
  %v3044 = vmul.f32 %v2594, 1.442695
  %v3045 = vpow.pop %v3044
  %v3046 = vmul.f32 %v2595, 1.442695
  %v3047 = vpow.pop %v3046
  %v3048 = vmul.f32 %v2596, 1.442695
  %v3049 = vpow.pop %v3048
  %v3050 = vmul.f32 %v2597, 1.442695
  %v3051 = vpow.pop %v3050
  %v3052 = vmul.f32 %v2598, 1.442695
  %v3053 = vpow.pop %v3052
  %v3054 = vmul.f32 %v2599, 1.442695
  %v3055 = vpow.pop %v3054
  %v3056 = vmul.f32 %v2600, 1.442695
  %v3057 = vpow.pop %v3056
  %v3058 = vmul.f32 %v2601, 1.442695
  %v3059 = vpow.pop %v3058
  %v3060 = vmul.f32 %v2602, 1.442695
  %v3061 = vpow.pop %v3060
  %v3062 = vmul.f32 %v2603, 1.442695
  %v3063 = vpow.pop %v3062
  %v3064 = vmul.f32 %v2604, 1.442695
  %v3065 = vpow.pop %v3064
  %v3066 = vmul.f32 %v2605, 1.442695
  %v3067 = vpow.pop %v3066
  %v3068 = vmul.f32 %v2606, 1.442695
  %v3069 = vpow.pop %v3068
  %v3070 = vmul.f32 %v2607, 1.442695
  %v3071 = vpow.pop %v3070
  %v3072 = vmul.f32 %v2608, 1.442695
  %v3073 = vpow.pop %v3072
  %v3074 = vmul.f32 %v2609, 1.442695
  %v3075 = vpow.pop %v3074
  %v3076 = vmul.f32 %v2610, 1.442695
  %v3077 = vpow.pop %v3076
  %v3078 = vmul.f32 %v2611, 1.442695
  %v3079 = vpow.pop %v3078
  %v3080 = vmul.f32 %v2612, 1.442695
  %v3081 = vpow.pop %v3080
  %v3082 = vmul.f32 %v2613, 1.442695
  %v3083 = vpow.pop %v3082
  %v3084 = vmul.f32 %v2614, 1.442695
  %v3085 = vpow.pop %v3084
  %v3086 = vmul.f32 %v2615, 1.442695
  %v3087 = vpow.pop %v3086
  %v3088 = vmul.f32 %v2616, 1.442695
  %v3089 = vpow.pop %v3088
  %v3090 = vmul.f32 %v2617, 1.442695
  %v3091 = vpow.pop %v3090
  %v3092 = vmul.f32 %v2618, 1.442695
  %v3093 = vpow.pop %v3092
  %v3094 = vmul.f32 %v2619, 1.442695
  %v3095 = vpow.pop %v3094
  %v3096 = vmul.f32 %v2620, 1.442695
  %v3097 = vpow.pop %v3096
  %v3098 = vmul.f32 %v2621, 1.442695
  %v3099 = vpow.pop %v3098
  %v3100 = vmul.f32 %v2622, 1.442695
  %v3101 = vpow.pop %v3100
  %v3102 = vmul.f32 %v2623, 1.442695
  %v3103 = vpow.pop %v3102
  %v3104 = vmul.f32 %v2624, 1.442695
  %v3105 = vpow.pop %v3104
  %v3106 = vmul.f32 %v2625, 1.442695
  %v3107 = vpow.pop %v3106
  %v3108 = vmul.f32 %v2626, 1.442695
  %v3109 = vpow.pop %v3108
  %v3110 = vmul.f32 %v2627, 1.442695
  %v3111 = vpow.pop %v3110
  %v3112 = vmul.f32 %v2628, 1.442695
  %v3113 = vpow.pop %v3112
  %v3114 = vmul.f32 %v2629, 1.442695
  %v3115 = vpow.pop %v3114
  %v3116 = vmul.f32 %v2630, 1.442695
  %v3117 = vpow.pop %v3116
  %v3118 = vmul.f32 %v2631, 1.442695
  %v3119 = vpow.pop %v3118
  %v3120 = vmul.f32 %v2632, 1.442695
  %v3121 = vpow.pop %v3120
  %v3122 = vmul.f32 %v2633, 1.442695
  %v3123 = vpow.pop %v3122
  %v3124 = vmul.f32 %v2634, 1.442695
  %v3125 = vpow.pop %v3124
  %v3126 = vmul.f32 %v2635, 1.442695
  %v3127 = vpow.pop %v3126
  %v3128 = vmul.f32 %v2636, 1.442695
  %v3129 = vpow.pop %v3128
  %v3130 = vmul.f32 %v2637, 1.442695
  %v3131 = vpow.pop %v3130
  %v3132 = vmul.f32 %v2638, 1.442695
  %v3133 = vpow.pop %v3132
  %v3134 = vmul.f32 %v2639, 1.442695
  %v3135 = vpow.pop %v3134
  %v3136 = vmul.f32 %v2640, 1.442695
  %v3137 = vpow.pop %v3136
  %v3138 = vmul.f32 %v2641, 1.442695
  %v3139 = vpow.pop %v3138
  %v3140 = vmul.f32 %v2642, 1.442695
  %v3141 = vpow.pop %v3140
  %v3142 = vmul.f32 %v2643, 1.442695
  %v3143 = vpow.pop %v3142
  %v3144 = vmul.f32 %v2644, 1.442695
  %v3145 = vpow.pop %v3144
  %v3146 = vmul.f32 %v2645, 1.442695
  %v3147 = vpow.pop %v3146
  %v3148 = vmul.f32 %v2646, 1.442695
  %v3149 = vpow.pop %v3148
  %v3150 = vmul.f32 %v2647, 1.442695
  %v3151 = vpow.pop %v3150
  %v3152 = vmul.f32 %v2648, 1.442695
  %v3153 = vpow.pop %v3152
  %v3154 = vmul.f32 %v2649, 1.442695
  %v3155 = vpow.pop %v3154
  %v3156 = vmul.f32 %v2650, 1.442695
  %v3157 = vpow.pop %v3156
  %v3158 = vmul.f32 %v2651, 1.442695
  %v3159 = vpow.pop %v3158
  %v3160 = vmul.f32 %v2652, 1.442695
  %v3161 = vpow.pop %v3160
  %v3162 = vmul.f32 %v2653, 1.442695
  %v3163 = vpow.pop %v3162
  %v3164 = vmul.f32 %v2654, 1.442695
  %v3165 = vpow.pop %v3164
  %v3166 = vmul.f32 %v2655, 1.442695
  %v3167 = vpow.pop %v3166
  %v3168 = vadd.f32 %v2657, 1.0
  %v3169 = vadd.f32 %v2659, 1.0
  %v3170 = vadd.f32 %v2661, 1.0
  %v3171 = vadd.f32 %v2663, 1.0
  %v3172 = vadd.f32 %v2665, 1.0
  %v3173 = vadd.f32 %v2667, 1.0
  %v3174 = vadd.f32 %v2669, 1.0
  %v3175 = vadd.f32 %v2671, 1.0
  %v3176 = vadd.f32 %v2673, 1.0
  %v3177 = vadd.f32 %v2675, 1.0
  %v3178 = vadd.f32 %v2677, 1.0
  %v3179 = vadd.f32 %v2679, 1.0
  %v3180 = vadd.f32 %v2681, 1.0
  %v3181 = vadd.f32 %v2683, 1.0
  %v3182 = vadd.f32 %v2685, 1.0
  %v3183 = vadd.f32 %v2687, 1.0
  %v3184 = vadd.f32 %v2689, 1.0
  %v3185 = vadd.f32 %v2691, 1.0
  %v3186 = vadd.f32 %v2693, 1.0
  %v3187 = vadd.f32 %v2695, 1.0
  %v3188 = vadd.f32 %v2697, 1.0
  %v3189 = vadd.f32 %v2699, 1.0
  %v3190 = vadd.f32 %v2701, 1.0
  %v3191 = vadd.f32 %v2703, 1.0
  %v3192 = vadd.f32 %v2705, 1.0
  %v3193 = vadd.f32 %v2707, 1.0
  %v3194 = vadd.f32 %v2709, 1.0
  %v3195 = vadd.f32 %v2711, 1.0
  %v3196 = vadd.f32 %v2713, 1.0
  %v3197 = vadd.f32 %v2715, 1.0
  %v3198 = vadd.f32 %v2717, 1.0
  %v3199 = vadd.f32 %v2719, 1.0
  %v3200 = vadd.f32 %v2721, 1.0
  %v3201 = vadd.f32 %v2723, 1.0
  %v3202 = vadd.f32 %v2725, 1.0
  %v3203 = vadd.f32 %v2727, 1.0
  %v3204 = vadd.f32 %v2729, 1.0
  %v3205 = vadd.f32 %v2731, 1.0
  %v3206 = vadd.f32 %v2733, 1.0
  %v3207 = vadd.f32 %v2735, 1.0
  %v3208 = vadd.f32 %v2737, 1.0
  %v3209 = vadd.f32 %v2739, 1.0
  %v3210 = vadd.f32 %v2741, 1.0
  %v3211 = vadd.f32 %v2743, 1.0
  %v3212 = vadd.f32 %v2745, 1.0
  %v3213 = vadd.f32 %v2747, 1.0
  %v3214 = vadd.f32 %v2749, 1.0
  %v3215 = vadd.f32 %v2751, 1.0
  %v3216 = vadd.f32 %v2753, 1.0
  %v3217 = vadd.f32 %v2755, 1.0
  %v3218 = vadd.f32 %v2757, 1.0
  %v3219 = vadd.f32 %v2759, 1.0
  %v3220 = vadd.f32 %v2761, 1.0
  %v3221 = vadd.f32 %v2763, 1.0
  %v3222 = vadd.f32 %v2765, 1.0
  %v3223 = vadd.f32 %v2767, 1.0
  %v3224 = vadd.f32 %v2769, 1.0
  %v3225 = vadd.f32 %v2771, 1.0
  %v3226 = vadd.f32 %v2773, 1.0
  %v3227 = vadd.f32 %v2775, 1.0
  %v3228 = vadd.f32 %v2777, 1.0
  %v3229 = vadd.f32 %v2779, 1.0
  %v3230 = vadd.f32 %v2781, 1.0
  %v3231 = vadd.f32 %v2783, 1.0
  %v3232 = vadd.f32 %v2785, 1.0
  %v3233 = vadd.f32 %v2787, 1.0
  %v3234 = vadd.f32 %v2789, 1.0
  %v3235 = vadd.f32 %v2791, 1.0
  %v3236 = vadd.f32 %v2793, 1.0
  %v3237 = vadd.f32 %v2795, 1.0
  %v3238 = vadd.f32 %v2797, 1.0
  %v3239 = vadd.f32 %v2799, 1.0
  %v3240 = vadd.f32 %v2801, 1.0
  %v3241 = vadd.f32 %v2803, 1.0
  %v3242 = vadd.f32 %v2805, 1.0
  %v3243 = vadd.f32 %v2807, 1.0
  %v3244 = vadd.f32 %v2809, 1.0
  %v3245 = vadd.f32 %v2811, 1.0
  %v3246 = vadd.f32 %v2813, 1.0
  %v3247 = vadd.f32 %v2815, 1.0
  %v3248 = vadd.f32 %v2817, 1.0
  %v3249 = vadd.f32 %v2819, 1.0
  %v3250 = vadd.f32 %v2821, 1.0
  %v3251 = vadd.f32 %v2823, 1.0
  %v3252 = vadd.f32 %v2825, 1.0
  %v3253 = vadd.f32 %v2827, 1.0
  %v3254 = vadd.f32 %v2829, 1.0
  %v3255 = vadd.f32 %v2831, 1.0
  %v3256 = vadd.f32 %v2833, 1.0
  %v3257 = vadd.f32 %v2835, 1.0
  %v3258 = vadd.f32 %v2837, 1.0
  %v3259 = vadd.f32 %v2839, 1.0
  %v3260 = vadd.f32 %v2841, 1.0
  %v3261 = vadd.f32 %v2843, 1.0
  %v3262 = vadd.f32 %v2845, 1.0
  %v3263 = vadd.f32 %v2847, 1.0
  %v3264 = vadd.f32 %v2849, 1.0
  %v3265 = vadd.f32 %v2851, 1.0
  %v3266 = vadd.f32 %v2853, 1.0
  %v3267 = vadd.f32 %v2855, 1.0
  %v3268 = vadd.f32 %v2857, 1.0
  %v3269 = vadd.f32 %v2859, 1.0
  %v3270 = vadd.f32 %v2861, 1.0
  %v3271 = vadd.f32 %v2863, 1.0
  %v3272 = vadd.f32 %v2865, 1.0
  %v3273 = vadd.f32 %v2867, 1.0
  %v3274 = vadd.f32 %v2869, 1.0
  %v3275 = vadd.f32 %v2871, 1.0
  %v3276 = vadd.f32 %v2873, 1.0
  %v3277 = vadd.f32 %v2875, 1.0
  %v3278 = vadd.f32 %v2877, 1.0
  %v3279 = vadd.f32 %v2879, 1.0
  %v3280 = vadd.f32 %v2881, 1.0
  %v3281 = vadd.f32 %v2883, 1.0
  %v3282 = vadd.f32 %v2885, 1.0
  %v3283 = vadd.f32 %v2887, 1.0
  %v3284 = vadd.f32 %v2889, 1.0
  %v3285 = vadd.f32 %v2891, 1.0
  %v3286 = vadd.f32 %v2893, 1.0
  %v3287 = vadd.f32 %v2895, 1.0
  %v3288 = vadd.f32 %v2897, 1.0
  %v3289 = vadd.f32 %v2899, 1.0
  %v3290 = vadd.f32 %v2901, 1.0
  %v3291 = vadd.f32 %v2903, 1.0
  %v3292 = vadd.f32 %v2905, 1.0
  %v3293 = vadd.f32 %v2907, 1.0
  %v3294 = vadd.f32 %v2909, 1.0
  %v3295 = vadd.f32 %v2911, 1.0
  %v3296 = vadd.f32 %v2913, 1.0
  %v3297 = vadd.f32 %v2915, 1.0
  %v3298 = vadd.f32 %v2917, 1.0
  %v3299 = vadd.f32 %v2919, 1.0
  %v3300 = vadd.f32 %v2921, 1.0
  %v3301 = vadd.f32 %v2923, 1.0
  %v3302 = vadd.f32 %v2925, 1.0
  %v3303 = vadd.f32 %v2927, 1.0
  %v3304 = vadd.f32 %v2929, 1.0
  %v3305 = vadd.f32 %v2931, 1.0
  %v3306 = vadd.f32 %v2933, 1.0
  %v3307 = vadd.f32 %v2935, 1.0
  %v3308 = vadd.f32 %v2937, 1.0
  %v3309 = vadd.f32 %v2939, 1.0
  %v3310 = vadd.f32 %v2941, 1.0
  %v3311 = vadd.f32 %v2943, 1.0
  %v3312 = vadd.f32 %v2945, 1.0
  %v3313 = vadd.f32 %v2947, 1.0
  %v3314 = vadd.f32 %v2949, 1.0
  %v3315 = vadd.f32 %v2951, 1.0
  %v3316 = vadd.f32 %v2953, 1.0
  %v3317 = vadd.f32 %v2955, 1.0
  %v3318 = vadd.f32 %v2957, 1.0
  %v3319 = vadd.f32 %v2959, 1.0
  %v3320 = vadd.f32 %v2961, 1.0
  %v3321 = vadd.f32 %v2963, 1.0
  %v3322 = vadd.f32 %v2965, 1.0
  %v3323 = vadd.f32 %v2967, 1.0
  %v3324 = vadd.f32 %v2969, 1.0
  %v3325 = vadd.f32 %v2971, 1.0
  %v3326 = vadd.f32 %v2973, 1.0
  %v3327 = vadd.f32 %v2975, 1.0
  %v3328 = vadd.f32 %v2977, 1.0
  %v3329 = vadd.f32 %v2979, 1.0
  %v3330 = vadd.f32 %v2981, 1.0
  %v3331 = vadd.f32 %v2983, 1.0
  %v3332 = vadd.f32 %v2985, 1.0
  %v3333 = vadd.f32 %v2987, 1.0
  %v3334 = vadd.f32 %v2989, 1.0
  %v3335 = vadd.f32 %v2991, 1.0
  %v3336 = vadd.f32 %v2993, 1.0
  %v3337 = vadd.f32 %v2995, 1.0
  %v3338 = vadd.f32 %v2997, 1.0
  %v3339 = vadd.f32 %v2999, 1.0
  %v3340 = vadd.f32 %v3001, 1.0
  %v3341 = vadd.f32 %v3003, 1.0
  %v3342 = vadd.f32 %v3005, 1.0
  %v3343 = vadd.f32 %v3007, 1.0
  %v3344 = vadd.f32 %v3009, 1.0
  %v3345 = vadd.f32 %v3011, 1.0
  %v3346 = vadd.f32 %v3013, 1.0
  %v3347 = vadd.f32 %v3015, 1.0
  %v3348 = vadd.f32 %v3017, 1.0
  %v3349 = vadd.f32 %v3019, 1.0
  %v3350 = vadd.f32 %v3021, 1.0
  %v3351 = vadd.f32 %v3023, 1.0
  %v3352 = vadd.f32 %v3025, 1.0
  %v3353 = vadd.f32 %v3027, 1.0
  %v3354 = vadd.f32 %v3029, 1.0
  %v3355 = vadd.f32 %v3031, 1.0
  %v3356 = vadd.f32 %v3033, 1.0
  %v3357 = vadd.f32 %v3035, 1.0
  %v3358 = vadd.f32 %v3037, 1.0
  %v3359 = vadd.f32 %v3039, 1.0
  %v3360 = vadd.f32 %v3041, 1.0
  %v3361 = vadd.f32 %v3043, 1.0
  %v3362 = vadd.f32 %v3045, 1.0
  %v3363 = vadd.f32 %v3047, 1.0
  %v3364 = vadd.f32 %v3049, 1.0
  %v3365 = vadd.f32 %v3051, 1.0
  %v3366 = vadd.f32 %v3053, 1.0
  %v3367 = vadd.f32 %v3055, 1.0
  %v3368 = vadd.f32 %v3057, 1.0
  %v3369 = vadd.f32 %v3059, 1.0
  %v3370 = vadd.f32 %v3061, 1.0
  %v3371 = vadd.f32 %v3063, 1.0
  %v3372 = vadd.f32 %v3065, 1.0
  %v3373 = vadd.f32 %v3067, 1.0
  %v3374 = vadd.f32 %v3069, 1.0
  %v3375 = vadd.f32 %v3071, 1.0
  %v3376 = vadd.f32 %v3073, 1.0
  %v3377 = vadd.f32 %v3075, 1.0
  %v3378 = vadd.f32 %v3077, 1.0
  %v3379 = vadd.f32 %v3079, 1.0
  %v3380 = vadd.f32 %v3081, 1.0
  %v3381 = vadd.f32 %v3083, 1.0
  %v3382 = vadd.f32 %v3085, 1.0
  %v3383 = vadd.f32 %v3087, 1.0
  %v3384 = vadd.f32 %v3089, 1.0
  %v3385 = vadd.f32 %v3091, 1.0
  %v3386 = vadd.f32 %v3093, 1.0
  %v3387 = vadd.f32 %v3095, 1.0
  %v3388 = vadd.f32 %v3097, 1.0
  %v3389 = vadd.f32 %v3099, 1.0
  %v3390 = vadd.f32 %v3101, 1.0
  %v3391 = vadd.f32 %v3103, 1.0
  %v3392 = vadd.f32 %v3105, 1.0
  %v3393 = vadd.f32 %v3107, 1.0
  %v3394 = vadd.f32 %v3109, 1.0
  %v3395 = vadd.f32 %v3111, 1.0
  %v3396 = vadd.f32 %v3113, 1.0
  %v3397 = vadd.f32 %v3115, 1.0
  %v3398 = vadd.f32 %v3117, 1.0
  %v3399 = vadd.f32 %v3119, 1.0
  %v3400 = vadd.f32 %v3121, 1.0
  %v3401 = vadd.f32 %v3123, 1.0
  %v3402 = vadd.f32 %v3125, 1.0
  %v3403 = vadd.f32 %v3127, 1.0
  %v3404 = vadd.f32 %v3129, 1.0
  %v3405 = vadd.f32 %v3131, 1.0
  %v3406 = vadd.f32 %v3133, 1.0
  %v3407 = vadd.f32 %v3135, 1.0
  %v3408 = vadd.f32 %v3137, 1.0
  %v3409 = vadd.f32 %v3139, 1.0
  %v3410 = vadd.f32 %v3141, 1.0
  %v3411 = vadd.f32 %v3143, 1.0
  %v3412 = vadd.f32 %v3145, 1.0
  %v3413 = vadd.f32 %v3147, 1.0
  %v3414 = vadd.f32 %v3149, 1.0
  %v3415 = vadd.f32 %v3151, 1.0
  %v3416 = vadd.f32 %v3153, 1.0
  %v3417 = vadd.f32 %v3155, 1.0
  %v3418 = vadd.f32 %v3157, 1.0
  %v3419 = vadd.f32 %v3159, 1.0
  %v3420 = vadd.f32 %v3161, 1.0
  %v3421 = vadd.f32 %v3163, 1.0
  %v3422 = vadd.f32 %v3165, 1.0
  %v3423 = vadd.f32 %v3167, 1.0
  %v3424 = vrcp.pop %v3168
  %v3425 = vmul.f32 1.0, %v3424
  %v3426 = vrcp.pop %v3169
  %v3427 = vmul.f32 1.0, %v3426
  %v3428 = vrcp.pop %v3170
  %v3429 = vmul.f32 1.0, %v3428
  %v3430 = vrcp.pop %v3171
  %v3431 = vmul.f32 1.0, %v3430
  %v3432 = vrcp.pop %v3172
  %v3433 = vmul.f32 1.0, %v3432
  %v3434 = vrcp.pop %v3173
  %v3435 = vmul.f32 1.0, %v3434
  %v3436 = vrcp.pop %v3174
  %v3437 = vmul.f32 1.0, %v3436
  %v3438 = vrcp.pop %v3175
  %v3439 = vmul.f32 1.0, %v3438
  %v3440 = vrcp.pop %v3176
  %v3441 = vmul.f32 1.0, %v3440
  %v3442 = vrcp.pop %v3177
  %v3443 = vmul.f32 1.0, %v3442
  %v3444 = vrcp.pop %v3178
  %v3445 = vmul.f32 1.0, %v3444
  %v3446 = vrcp.pop %v3179
  %v3447 = vmul.f32 1.0, %v3446
  %v3448 = vrcp.pop %v3180
  %v3449 = vmul.f32 1.0, %v3448
  %v3450 = vrcp.pop %v3181
  %v3451 = vmul.f32 1.0, %v3450
  %v3452 = vrcp.pop %v3182
  %v3453 = vmul.f32 1.0, %v3452
  %v3454 = vrcp.pop %v3183
  %v3455 = vmul.f32 1.0, %v3454
  %v3456 = vrcp.pop %v3184
  %v3457 = vmul.f32 1.0, %v3456
  %v3458 = vrcp.pop %v3185
  %v3459 = vmul.f32 1.0, %v3458
  %v3460 = vrcp.pop %v3186
  %v3461 = vmul.f32 1.0, %v3460
  %v3462 = vrcp.pop %v3187
  %v3463 = vmul.f32 1.0, %v3462
  %v3464 = vrcp.pop %v3188
  %v3465 = vmul.f32 1.0, %v3464
  %v3466 = vrcp.pop %v3189
  %v3467 = vmul.f32 1.0, %v3466
  %v3468 = vrcp.pop %v3190
  %v3469 = vmul.f32 1.0, %v3468
  %v3470 = vrcp.pop %v3191
  %v3471 = vmul.f32 1.0, %v3470
  %v3472 = vrcp.pop %v3192
  %v3473 = vmul.f32 1.0, %v3472
  %v3474 = vrcp.pop %v3193
  %v3475 = vmul.f32 1.0, %v3474
  %v3476 = vrcp.pop %v3194
  %v3477 = vmul.f32 1.0, %v3476
  %v3478 = vrcp.pop %v3195
  %v3479 = vmul.f32 1.0, %v3478
  %v3480 = vrcp.pop %v3196
  %v3481 = vmul.f32 1.0, %v3480
  %v3482 = vrcp.pop %v3197
  %v3483 = vmul.f32 1.0, %v3482
  %v3484 = vrcp.pop %v3198
  %v3485 = vmul.f32 1.0, %v3484
  %v3486 = vrcp.pop %v3199
  %v3487 = vmul.f32 1.0, %v3486
  %v3488 = vrcp.pop %v3200
  %v3489 = vmul.f32 1.0, %v3488
  %v3490 = vrcp.pop %v3201
  %v3491 = vmul.f32 1.0, %v3490
  %v3492 = vrcp.pop %v3202
  %v3493 = vmul.f32 1.0, %v3492
  %v3494 = vrcp.pop %v3203
  %v3495 = vmul.f32 1.0, %v3494
  %v3496 = vrcp.pop %v3204
  %v3497 = vmul.f32 1.0, %v3496
  %v3498 = vrcp.pop %v3205
  %v3499 = vmul.f32 1.0, %v3498
  %v3500 = vrcp.pop %v3206
  %v3501 = vmul.f32 1.0, %v3500
  %v3502 = vrcp.pop %v3207
  %v3503 = vmul.f32 1.0, %v3502
  %v3504 = vrcp.pop %v3208
  %v3505 = vmul.f32 1.0, %v3504
  %v3506 = vrcp.pop %v3209
  %v3507 = vmul.f32 1.0, %v3506
  %v3508 = vrcp.pop %v3210
  %v3509 = vmul.f32 1.0, %v3508
  %v3510 = vrcp.pop %v3211
  %v3511 = vmul.f32 1.0, %v3510
  %v3512 = vrcp.pop %v3212
  %v3513 = vmul.f32 1.0, %v3512
  %v3514 = vrcp.pop %v3213
  %v3515 = vmul.f32 1.0, %v3514
  %v3516 = vrcp.pop %v3214
  %v3517 = vmul.f32 1.0, %v3516
  %v3518 = vrcp.pop %v3215
  %v3519 = vmul.f32 1.0, %v3518
  %v3520 = vrcp.pop %v3216
  %v3521 = vmul.f32 1.0, %v3520
  %v3522 = vrcp.pop %v3217
  %v3523 = vmul.f32 1.0, %v3522
  %v3524 = vrcp.pop %v3218
  %v3525 = vmul.f32 1.0, %v3524
  %v3526 = vrcp.pop %v3219
  %v3527 = vmul.f32 1.0, %v3526
  %v3528 = vrcp.pop %v3220
  %v3529 = vmul.f32 1.0, %v3528
  %v3530 = vrcp.pop %v3221
  %v3531 = vmul.f32 1.0, %v3530
  %v3532 = vrcp.pop %v3222
  %v3533 = vmul.f32 1.0, %v3532
  %v3534 = vrcp.pop %v3223
  %v3535 = vmul.f32 1.0, %v3534
  %v3536 = vrcp.pop %v3224
  %v3537 = vmul.f32 1.0, %v3536
  %v3538 = vrcp.pop %v3225
  %v3539 = vmul.f32 1.0, %v3538
  %v3540 = vrcp.pop %v3226
  %v3541 = vmul.f32 1.0, %v3540
  %v3542 = vrcp.pop %v3227
  %v3543 = vmul.f32 1.0, %v3542
  %v3544 = vrcp.pop %v3228
  %v3545 = vmul.f32 1.0, %v3544
  %v3546 = vrcp.pop %v3229
  %v3547 = vmul.f32 1.0, %v3546
  %v3548 = vrcp.pop %v3230
  %v3549 = vmul.f32 1.0, %v3548
  %v3550 = vrcp.pop %v3231
  %v3551 = vmul.f32 1.0, %v3550
  %v3552 = vrcp.pop %v3232
  %v3553 = vmul.f32 1.0, %v3552
  %v3554 = vrcp.pop %v3233
  %v3555 = vmul.f32 1.0, %v3554
  %v3556 = vrcp.pop %v3234
  %v3557 = vmul.f32 1.0, %v3556
  %v3558 = vrcp.pop %v3235
  %v3559 = vmul.f32 1.0, %v3558
  %v3560 = vrcp.pop %v3236
  %v3561 = vmul.f32 1.0, %v3560
  %v3562 = vrcp.pop %v3237
  %v3563 = vmul.f32 1.0, %v3562
  %v3564 = vrcp.pop %v3238
  %v3565 = vmul.f32 1.0, %v3564
  %v3566 = vrcp.pop %v3239
  %v3567 = vmul.f32 1.0, %v3566
  %v3568 = vrcp.pop %v3240
  %v3569 = vmul.f32 1.0, %v3568
  %v3570 = vrcp.pop %v3241
  %v3571 = vmul.f32 1.0, %v3570
  %v3572 = vrcp.pop %v3242
  %v3573 = vmul.f32 1.0, %v3572
  %v3574 = vrcp.pop %v3243
  %v3575 = vmul.f32 1.0, %v3574
  %v3576 = vrcp.pop %v3244
  %v3577 = vmul.f32 1.0, %v3576
  %v3578 = vrcp.pop %v3245
  %v3579 = vmul.f32 1.0, %v3578
  %v3580 = vrcp.pop %v3246
  %v3581 = vmul.f32 1.0, %v3580
  %v3582 = vrcp.pop %v3247
  %v3583 = vmul.f32 1.0, %v3582
  %v3584 = vrcp.pop %v3248
  %v3585 = vmul.f32 1.0, %v3584
  %v3586 = vrcp.pop %v3249
  %v3587 = vmul.f32 1.0, %v3586
  %v3588 = vrcp.pop %v3250
  %v3589 = vmul.f32 1.0, %v3588
  %v3590 = vrcp.pop %v3251
  %v3591 = vmul.f32 1.0, %v3590
  %v3592 = vrcp.pop %v3252
  %v3593 = vmul.f32 1.0, %v3592
  %v3594 = vrcp.pop %v3253
  %v3595 = vmul.f32 1.0, %v3594
  %v3596 = vrcp.pop %v3254
  %v3597 = vmul.f32 1.0, %v3596
  %v3598 = vrcp.pop %v3255
  %v3599 = vmul.f32 1.0, %v3598
  %v3600 = vrcp.pop %v3256
  %v3601 = vmul.f32 1.0, %v3600
  %v3602 = vrcp.pop %v3257
  %v3603 = vmul.f32 1.0, %v3602
  %v3604 = vrcp.pop %v3258
  %v3605 = vmul.f32 1.0, %v3604
  %v3606 = vrcp.pop %v3259
  %v3607 = vmul.f32 1.0, %v3606
  %v3608 = vrcp.pop %v3260
  %v3609 = vmul.f32 1.0, %v3608
  %v3610 = vrcp.pop %v3261
  %v3611 = vmul.f32 1.0, %v3610
  %v3612 = vrcp.pop %v3262
  %v3613 = vmul.f32 1.0, %v3612
  %v3614 = vrcp.pop %v3263
  %v3615 = vmul.f32 1.0, %v3614
  %v3616 = vrcp.pop %v3264
  %v3617 = vmul.f32 1.0, %v3616
  %v3618 = vrcp.pop %v3265
  %v3619 = vmul.f32 1.0, %v3618
  %v3620 = vrcp.pop %v3266
  %v3621 = vmul.f32 1.0, %v3620
  %v3622 = vrcp.pop %v3267
  %v3623 = vmul.f32 1.0, %v3622
  %v3624 = vrcp.pop %v3268
  %v3625 = vmul.f32 1.0, %v3624
  %v3626 = vrcp.pop %v3269
  %v3627 = vmul.f32 1.0, %v3626
  %v3628 = vrcp.pop %v3270
  %v3629 = vmul.f32 1.0, %v3628
  %v3630 = vrcp.pop %v3271
  %v3631 = vmul.f32 1.0, %v3630
  %v3632 = vrcp.pop %v3272
  %v3633 = vmul.f32 1.0, %v3632
  %v3634 = vrcp.pop %v3273
  %v3635 = vmul.f32 1.0, %v3634
  %v3636 = vrcp.pop %v3274
  %v3637 = vmul.f32 1.0, %v3636
  %v3638 = vrcp.pop %v3275
  %v3639 = vmul.f32 1.0, %v3638
  %v3640 = vrcp.pop %v3276
  %v3641 = vmul.f32 1.0, %v3640
  %v3642 = vrcp.pop %v3277
  %v3643 = vmul.f32 1.0, %v3642
  %v3644 = vrcp.pop %v3278
  %v3645 = vmul.f32 1.0, %v3644
  %v3646 = vrcp.pop %v3279
  %v3647 = vmul.f32 1.0, %v3646
  %v3648 = vrcp.pop %v3280
  %v3649 = vmul.f32 1.0, %v3648
  %v3650 = vrcp.pop %v3281
  %v3651 = vmul.f32 1.0, %v3650
  %v3652 = vrcp.pop %v3282
  %v3653 = vmul.f32 1.0, %v3652
  %v3654 = vrcp.pop %v3283
  %v3655 = vmul.f32 1.0, %v3654
  %v3656 = vrcp.pop %v3284
  %v3657 = vmul.f32 1.0, %v3656
  %v3658 = vrcp.pop %v3285
  %v3659 = vmul.f32 1.0, %v3658
  %v3660 = vrcp.pop %v3286
  %v3661 = vmul.f32 1.0, %v3660
  %v3662 = vrcp.pop %v3287
  %v3663 = vmul.f32 1.0, %v3662
  %v3664 = vrcp.pop %v3288
  %v3665 = vmul.f32 1.0, %v3664
  %v3666 = vrcp.pop %v3289
  %v3667 = vmul.f32 1.0, %v3666
  %v3668 = vrcp.pop %v3290
  %v3669 = vmul.f32 1.0, %v3668
  %v3670 = vrcp.pop %v3291
  %v3671 = vmul.f32 1.0, %v3670
  %v3672 = vrcp.pop %v3292
  %v3673 = vmul.f32 1.0, %v3672
  %v3674 = vrcp.pop %v3293
  %v3675 = vmul.f32 1.0, %v3674
  %v3676 = vrcp.pop %v3294
  %v3677 = vmul.f32 1.0, %v3676
  %v3678 = vrcp.pop %v3295
  %v3679 = vmul.f32 1.0, %v3678
  %v3680 = vrcp.pop %v3296
  %v3681 = vmul.f32 1.0, %v3680
  %v3682 = vrcp.pop %v3297
  %v3683 = vmul.f32 1.0, %v3682
  %v3684 = vrcp.pop %v3298
  %v3685 = vmul.f32 1.0, %v3684
  %v3686 = vrcp.pop %v3299
  %v3687 = vmul.f32 1.0, %v3686
  %v3688 = vrcp.pop %v3300
  %v3689 = vmul.f32 1.0, %v3688
  %v3690 = vrcp.pop %v3301
  %v3691 = vmul.f32 1.0, %v3690
  %v3692 = vrcp.pop %v3302
  %v3693 = vmul.f32 1.0, %v3692
  %v3694 = vrcp.pop %v3303
  %v3695 = vmul.f32 1.0, %v3694
  %v3696 = vrcp.pop %v3304
  %v3697 = vmul.f32 1.0, %v3696
  %v3698 = vrcp.pop %v3305
  %v3699 = vmul.f32 1.0, %v3698
  %v3700 = vrcp.pop %v3306
  %v3701 = vmul.f32 1.0, %v3700
  %v3702 = vrcp.pop %v3307
  %v3703 = vmul.f32 1.0, %v3702
  %v3704 = vrcp.pop %v3308
  %v3705 = vmul.f32 1.0, %v3704
  %v3706 = vrcp.pop %v3309
  %v3707 = vmul.f32 1.0, %v3706
  %v3708 = vrcp.pop %v3310
  %v3709 = vmul.f32 1.0, %v3708
  %v3710 = vrcp.pop %v3311
  %v3711 = vmul.f32 1.0, %v3710
  %v3712 = vrcp.pop %v3312
  %v3713 = vmul.f32 1.0, %v3712
  %v3714 = vrcp.pop %v3313
  %v3715 = vmul.f32 1.0, %v3714
  %v3716 = vrcp.pop %v3314
  %v3717 = vmul.f32 1.0, %v3716
  %v3718 = vrcp.pop %v3315
  %v3719 = vmul.f32 1.0, %v3718
  %v3720 = vrcp.pop %v3316
  %v3721 = vmul.f32 1.0, %v3720
  %v3722 = vrcp.pop %v3317
  %v3723 = vmul.f32 1.0, %v3722
  %v3724 = vrcp.pop %v3318
  %v3725 = vmul.f32 1.0, %v3724
  %v3726 = vrcp.pop %v3319
  %v3727 = vmul.f32 1.0, %v3726
  %v3728 = vrcp.pop %v3320
  %v3729 = vmul.f32 1.0, %v3728
  %v3730 = vrcp.pop %v3321
  %v3731 = vmul.f32 1.0, %v3730
  %v3732 = vrcp.pop %v3322
  %v3733 = vmul.f32 1.0, %v3732
  %v3734 = vrcp.pop %v3323
  %v3735 = vmul.f32 1.0, %v3734
  %v3736 = vrcp.pop %v3324
  %v3737 = vmul.f32 1.0, %v3736
  %v3738 = vrcp.pop %v3325
  %v3739 = vmul.f32 1.0, %v3738
  %v3740 = vrcp.pop %v3326
  %v3741 = vmul.f32 1.0, %v3740
  %v3742 = vrcp.pop %v3327
  %v3743 = vmul.f32 1.0, %v3742
  %v3744 = vrcp.pop %v3328
  %v3745 = vmul.f32 1.0, %v3744
  %v3746 = vrcp.pop %v3329
  %v3747 = vmul.f32 1.0, %v3746
  %v3748 = vrcp.pop %v3330
  %v3749 = vmul.f32 1.0, %v3748
  %v3750 = vrcp.pop %v3331
  %v3751 = vmul.f32 1.0, %v3750
  %v3752 = vrcp.pop %v3332
  %v3753 = vmul.f32 1.0, %v3752
  %v3754 = vrcp.pop %v3333
  %v3755 = vmul.f32 1.0, %v3754
  %v3756 = vrcp.pop %v3334
  %v3757 = vmul.f32 1.0, %v3756
  %v3758 = vrcp.pop %v3335
  %v3759 = vmul.f32 1.0, %v3758
  %v3760 = vrcp.pop %v3336
  %v3761 = vmul.f32 1.0, %v3760
  %v3762 = vrcp.pop %v3337
  %v3763 = vmul.f32 1.0, %v3762
  %v3764 = vrcp.pop %v3338
  %v3765 = vmul.f32 1.0, %v3764
  %v3766 = vrcp.pop %v3339
  %v3767 = vmul.f32 1.0, %v3766
  %v3768 = vrcp.pop %v3340
  %v3769 = vmul.f32 1.0, %v3768
  %v3770 = vrcp.pop %v3341
  %v3771 = vmul.f32 1.0, %v3770
  %v3772 = vrcp.pop %v3342
  %v3773 = vmul.f32 1.0, %v3772
  %v3774 = vrcp.pop %v3343
  %v3775 = vmul.f32 1.0, %v3774
  %v3776 = vrcp.pop %v3344
  %v3777 = vmul.f32 1.0, %v3776
  %v3778 = vrcp.pop %v3345
  %v3779 = vmul.f32 1.0, %v3778
  %v3780 = vrcp.pop %v3346
  %v3781 = vmul.f32 1.0, %v3780
  %v3782 = vrcp.pop %v3347
  %v3783 = vmul.f32 1.0, %v3782
  %v3784 = vrcp.pop %v3348
  %v3785 = vmul.f32 1.0, %v3784
  %v3786 = vrcp.pop %v3349
  %v3787 = vmul.f32 1.0, %v3786
  %v3788 = vrcp.pop %v3350
  %v3789 = vmul.f32 1.0, %v3788
  %v3790 = vrcp.pop %v3351
  %v3791 = vmul.f32 1.0, %v3790
  %v3792 = vrcp.pop %v3352
  %v3793 = vmul.f32 1.0, %v3792
  %v3794 = vrcp.pop %v3353
  %v3795 = vmul.f32 1.0, %v3794
  %v3796 = vrcp.pop %v3354
  %v3797 = vmul.f32 1.0, %v3796
  %v3798 = vrcp.pop %v3355
  %v3799 = vmul.f32 1.0, %v3798
  %v3800 = vrcp.pop %v3356
  %v3801 = vmul.f32 1.0, %v3800
  %v3802 = vrcp.pop %v3357
  %v3803 = vmul.f32 1.0, %v3802
  %v3804 = vrcp.pop %v3358
  %v3805 = vmul.f32 1.0, %v3804
  %v3806 = vrcp.pop %v3359
  %v3807 = vmul.f32 1.0, %v3806
  %v3808 = vrcp.pop %v3360
  %v3809 = vmul.f32 1.0, %v3808
  %v3810 = vrcp.pop %v3361
  %v3811 = vmul.f32 1.0, %v3810
  %v3812 = vrcp.pop %v3362
  %v3813 = vmul.f32 1.0, %v3812
  %v3814 = vrcp.pop %v3363
  %v3815 = vmul.f32 1.0, %v3814
  %v3816 = vrcp.pop %v3364
  %v3817 = vmul.f32 1.0, %v3816
  %v3818 = vrcp.pop %v3365
  %v3819 = vmul.f32 1.0, %v3818
  %v3820 = vrcp.pop %v3366
  %v3821 = vmul.f32 1.0, %v3820
  %v3822 = vrcp.pop %v3367
  %v3823 = vmul.f32 1.0, %v3822
  %v3824 = vrcp.pop %v3368
  %v3825 = vmul.f32 1.0, %v3824
  %v3826 = vrcp.pop %v3369
  %v3827 = vmul.f32 1.0, %v3826
  %v3828 = vrcp.pop %v3370
  %v3829 = vmul.f32 1.0, %v3828
  %v3830 = vrcp.pop %v3371
  %v3831 = vmul.f32 1.0, %v3830
  %v3832 = vrcp.pop %v3372
  %v3833 = vmul.f32 1.0, %v3832
  %v3834 = vrcp.pop %v3373
  %v3835 = vmul.f32 1.0, %v3834
  %v3836 = vrcp.pop %v3374
  %v3837 = vmul.f32 1.0, %v3836
  %v3838 = vrcp.pop %v3375
  %v3839 = vmul.f32 1.0, %v3838
  %v3840 = vrcp.pop %v3376
  %v3841 = vmul.f32 1.0, %v3840
  %v3842 = vrcp.pop %v3377
  %v3843 = vmul.f32 1.0, %v3842
  %v3844 = vrcp.pop %v3378
  %v3845 = vmul.f32 1.0, %v3844
  %v3846 = vrcp.pop %v3379
  %v3847 = vmul.f32 1.0, %v3846
  %v3848 = vrcp.pop %v3380
  %v3849 = vmul.f32 1.0, %v3848
  %v3850 = vrcp.pop %v3381
  %v3851 = vmul.f32 1.0, %v3850
  %v3852 = vrcp.pop %v3382
  %v3853 = vmul.f32 1.0, %v3852
  %v3854 = vrcp.pop %v3383
  %v3855 = vmul.f32 1.0, %v3854
  %v3856 = vrcp.pop %v3384
  %v3857 = vmul.f32 1.0, %v3856
  %v3858 = vrcp.pop %v3385
  %v3859 = vmul.f32 1.0, %v3858
  %v3860 = vrcp.pop %v3386
  %v3861 = vmul.f32 1.0, %v3860
  %v3862 = vrcp.pop %v3387
  %v3863 = vmul.f32 1.0, %v3862
  %v3864 = vrcp.pop %v3388
  %v3865 = vmul.f32 1.0, %v3864
  %v3866 = vrcp.pop %v3389
  %v3867 = vmul.f32 1.0, %v3866
  %v3868 = vrcp.pop %v3390
  %v3869 = vmul.f32 1.0, %v3868
  %v3870 = vrcp.pop %v3391
  %v3871 = vmul.f32 1.0, %v3870
  %v3872 = vrcp.pop %v3392
  %v3873 = vmul.f32 1.0, %v3872
  %v3874 = vrcp.pop %v3393
  %v3875 = vmul.f32 1.0, %v3874
  %v3876 = vrcp.pop %v3394
  %v3877 = vmul.f32 1.0, %v3876
  %v3878 = vrcp.pop %v3395
  %v3879 = vmul.f32 1.0, %v3878
  %v3880 = vrcp.pop %v3396
  %v3881 = vmul.f32 1.0, %v3880
  %v3882 = vrcp.pop %v3397
  %v3883 = vmul.f32 1.0, %v3882
  %v3884 = vrcp.pop %v3398
  %v3885 = vmul.f32 1.0, %v3884
  %v3886 = vrcp.pop %v3399
  %v3887 = vmul.f32 1.0, %v3886
  %v3888 = vrcp.pop %v3400
  %v3889 = vmul.f32 1.0, %v3888
  %v3890 = vrcp.pop %v3401
  %v3891 = vmul.f32 1.0, %v3890
  %v3892 = vrcp.pop %v3402
  %v3893 = vmul.f32 1.0, %v3892
  %v3894 = vrcp.pop %v3403
  %v3895 = vmul.f32 1.0, %v3894
  %v3896 = vrcp.pop %v3404
  %v3897 = vmul.f32 1.0, %v3896
  %v3898 = vrcp.pop %v3405
  %v3899 = vmul.f32 1.0, %v3898
  %v3900 = vrcp.pop %v3406
  %v3901 = vmul.f32 1.0, %v3900
  %v3902 = vrcp.pop %v3407
  %v3903 = vmul.f32 1.0, %v3902
  %v3904 = vrcp.pop %v3408
  %v3905 = vmul.f32 1.0, %v3904
  %v3906 = vrcp.pop %v3409
  %v3907 = vmul.f32 1.0, %v3906
  %v3908 = vrcp.pop %v3410
  %v3909 = vmul.f32 1.0, %v3908
  %v3910 = vrcp.pop %v3411
  %v3911 = vmul.f32 1.0, %v3910
  %v3912 = vrcp.pop %v3412
  %v3913 = vmul.f32 1.0, %v3912
  %v3914 = vrcp.pop %v3413
  %v3915 = vmul.f32 1.0, %v3914
  %v3916 = vrcp.pop %v3414
  %v3917 = vmul.f32 1.0, %v3916
  %v3918 = vrcp.pop %v3415
  %v3919 = vmul.f32 1.0, %v3918
  %v3920 = vrcp.pop %v3416
  %v3921 = vmul.f32 1.0, %v3920
  %v3922 = vrcp.pop %v3417
  %v3923 = vmul.f32 1.0, %v3922
  %v3924 = vrcp.pop %v3418
  %v3925 = vmul.f32 1.0, %v3924
  %v3926 = vrcp.pop %v3419
  %v3927 = vmul.f32 1.0, %v3926
  %v3928 = vrcp.pop %v3420
  %v3929 = vmul.f32 1.0, %v3928
  %v3930 = vrcp.pop %v3421
  %v3931 = vmul.f32 1.0, %v3930
  %v3932 = vrcp.pop %v3422
  %v3933 = vmul.f32 1.0, %v3932
  %v3934 = vrcp.pop %v3423
  %v3935 = vmul.f32 1.0, %v3934
  %3936 = vst [vmem:[%s3] sm:$0xff] %v3425
  %3937 = vst [vmem:[%s3 + $0x8] sm:$0xff] %v3427
  %3938 = vst [vmem:[%s3 + $0x10] sm:$0xff] %v3429
  %3939 = vst [vmem:[%s3 + $0x18] sm:$0xff] %v3431
  %3940 = vst [vmem:[%s3 + $0x20] sm:$0xff] %v3433
  %3941 = vst [vmem:[%s3 + $0x28] sm:$0xff] %v3435
  %3942 = vst [vmem:[%s3 + $0x30] sm:$0xff] %v3437
  %3943 = vst [vmem:[%s3 + $0x38] sm:$0xff] %v3439
  %3944 = vst [vmem:[%s3 + $0x40] sm:$0xff] %v3441
  %3945 = vst [vmem:[%s3 + $0x48] sm:$0xff] %v3443
  %3946 = vst [vmem:[%s3 + $0x50] sm:$0xff] %v3445
  %3947 = vst [vmem:[%s3 + $0x58] sm:$0xff] %v3447
  %3948 = vst [vmem:[%s3 + $0x60] sm:$0xff] %v3449
  %3949 = vst [vmem:[%s3 + $0x68] sm:$0xff] %v3451
  %3950 = vst [vmem:[%s3 + $0x70] sm:$0xff] %v3453
  %3951 = vst [vmem:[%s3 + $0x78] sm:$0xff] %v3455
  %3952 = vst [vmem:[%s3 + $0x80] sm:$0xff] %v3457
  %3953 = vst [vmem:[%s3 + $0x88] sm:$0xff] %v3459
  %3954 = vst [vmem:[%s3 + $0x90] sm:$0xff] %v3461
  %3955 = vst [vmem:[%s3 + $0x98] sm:$0xff] %v3463
  %3956 = vst [vmem:[%s3 + $0xa0] sm:$0xff] %v3465
  %3957 = vst [vmem:[%s3 + $0xa8] sm:$0xff] %v3467
  %3958 = vst [vmem:[%s3 + $0xb0] sm:$0xff] %v3469
  %3959 = vst [vmem:[%s3 + $0xb8] sm:$0xff] %v3471
  %3960 = vst [vmem:[%s3 + $0xc0] sm:$0xff] %v3473
  %3961 = vst [vmem:[%s3 + $0xc8] sm:$0xff] %v3475
  %3962 = vst [vmem:[%s3 + $0xd0] sm:$0xff] %v3477
  %3963 = vst [vmem:[%s3 + $0xd8] sm:$0xff] %v3479
  %3964 = vst [vmem:[%s3 + $0xe0] sm:$0xff] %v3481
  %3965 = vst [vmem:[%s3 + $0xe8] sm:$0xff] %v3483
  %3966 = vst [vmem:[%s3 + $0xf0] sm:$0xff] %v3485
  %3967 = vst [vmem:[%s3 + $0xf8] sm:$0xff] %v3487
  %3968 = vst [vmem:[%s3 + $0x100] sm:$0xff] %v3489
  %3969 = vst [vmem:[%s3 + $0x108] sm:$0xff] %v3491
  %3970 = vst [vmem:[%s3 + $0x110] sm:$0xff] %v3493
  %3971 = vst [vmem:[%s3 + $0x118] sm:$0xff] %v3495
  %3972 = vst [vmem:[%s3 + $0x120] sm:$0xff] %v3497
  %3973 = vst [vmem:[%s3 + $0x128] sm:$0xff] %v3499
  %3974 = vst [vmem:[%s3 + $0x130] sm:$0xff] %v3501
  %3975 = vst [vmem:[%s3 + $0x138] sm:$0xff] %v3503
  %3976 = vst [vmem:[%s3 + $0x140] sm:$0xff] %v3505
  %3977 = vst [vmem:[%s3 + $0x148] sm:$0xff] %v3507
  %3978 = vst [vmem:[%s3 + $0x150] sm:$0xff] %v3509
  %3979 = vst [vmem:[%s3 + $0x158] sm:$0xff] %v3511
  %3980 = vst [vmem:[%s3 + $0x160] sm:$0xff] %v3513
  %3981 = vst [vmem:[%s3 + $0x168] sm:$0xff] %v3515
  %3982 = vst [vmem:[%s3 + $0x170] sm:$0xff] %v3517
  %3983 = vst [vmem:[%s3 + $0x178] sm:$0xff] %v3519
  %3984 = vst [vmem:[%s3 + $0x180] sm:$0xff] %v3521
  %3985 = vst [vmem:[%s3 + $0x188] sm:$0xff] %v3523
  %3986 = vst [vmem:[%s3 + $0x190] sm:$0xff] %v3525
  %3987 = vst [vmem:[%s3 + $0x198] sm:$0xff] %v3527
  %3988 = vst [vmem:[%s3 + $0x1a0] sm:$0xff] %v3529
  %3989 = vst [vmem:[%s3 + $0x1a8] sm:$0xff] %v3531
  %3990 = vst [vmem:[%s3 + $0x1b0] sm:$0xff] %v3533
  %3991 = vst [vmem:[%s3 + $0x1b8] sm:$0xff] %v3535
  %3992 = vst [vmem:[%s3 + $0x1c0] sm:$0xff] %v3537
  %3993 = vst [vmem:[%s3 + $0x1c8] sm:$0xff] %v3539
  %3994 = vst [vmem:[%s3 + $0x1d0] sm:$0xff] %v3541
  %3995 = vst [vmem:[%s3 + $0x1d8] sm:$0xff] %v3543
  %3996 = vst [vmem:[%s3 + $0x1e0] sm:$0xff] %v3545
  %3997 = vst [vmem:[%s3 + $0x1e8] sm:$0xff] %v3547
  %3998 = vst [vmem:[%s3 + $0x1f0] sm:$0xff] %v3549
  %3999 = vst [vmem:[%s3 + $0x1f8] sm:$0xff] %v3551
  %4000 = vst [vmem:[%s3 + $0x200] sm:$0xff] %v3553
  %4001 = vst [vmem:[%s3 + $0x208] sm:$0xff] %v3555
  %4002 = vst [vmem:[%s3 + $0x210] sm:$0xff] %v3557
  %4003 = vst [vmem:[%s3 + $0x218] sm:$0xff] %v3559
  %4004 = vst [vmem:[%s3 + $0x220] sm:$0xff] %v3561
  %4005 = vst [vmem:[%s3 + $0x228] sm:$0xff] %v3563
  %4006 = vst [vmem:[%s3 + $0x230] sm:$0xff] %v3565
  %4007 = vst [vmem:[%s3 + $0x238] sm:$0xff] %v3567
  %4008 = vst [vmem:[%s3 + $0x240] sm:$0xff] %v3569
  %4009 = vst [vmem:[%s3 + $0x248] sm:$0xff] %v3571
  %4010 = vst [vmem:[%s3 + $0x250] sm:$0xff] %v3573
  %4011 = vst [vmem:[%s3 + $0x258] sm:$0xff] %v3575
  %4012 = vst [vmem:[%s3 + $0x260] sm:$0xff] %v3577
  %4013 = vst [vmem:[%s3 + $0x268] sm:$0xff] %v3579
  %4014 = vst [vmem:[%s3 + $0x270] sm:$0xff] %v3581
  %4015 = vst [vmem:[%s3 + $0x278] sm:$0xff] %v3583
  %4016 = vst [vmem:[%s3 + $0x280] sm:$0xff] %v3585
  %4017 = vst [vmem:[%s3 + $0x288] sm:$0xff] %v3587
  %4018 = vst [vmem:[%s3 + $0x290] sm:$0xff] %v3589
  %4019 = vst [vmem:[%s3 + $0x298] sm:$0xff] %v3591
  %4020 = vst [vmem:[%s3 + $0x2a0] sm:$0xff] %v3593
  %4021 = vst [vmem:[%s3 + $0x2a8] sm:$0xff] %v3595
  %4022 = vst [vmem:[%s3 + $0x2b0] sm:$0xff] %v3597
  %4023 = vst [vmem:[%s3 + $0x2b8] sm:$0xff] %v3599
  %4024 = vst [vmem:[%s3 + $0x2c0] sm:$0xff] %v3601
  %4025 = vst [vmem:[%s3 + $0x2c8] sm:$0xff] %v3603
  %4026 = vst [vmem:[%s3 + $0x2d0] sm:$0xff] %v3605
  %4027 = vst [vmem:[%s3 + $0x2d8] sm:$0xff] %v3607
  %4028 = vst [vmem:[%s3 + $0x2e0] sm:$0xff] %v3609
  %4029 = vst [vmem:[%s3 + $0x2e8] sm:$0xff] %v3611
  %4030 = vst [vmem:[%s3 + $0x2f0] sm:$0xff] %v3613
  %4031 = vst [vmem:[%s3 + $0x2f8] sm:$0xff] %v3615
  %4032 = vst [vmem:[%s3 + $0x300] sm:$0xff] %v3617
  %4033 = vst [vmem:[%s3 + $0x308] sm:$0xff] %v3619
  %4034 = vst [vmem:[%s3 + $0x310] sm:$0xff] %v3621
  %4035 = vst [vmem:[%s3 + $0x318] sm:$0xff] %v3623
  %4036 = vst [vmem:[%s3 + $0x320] sm:$0xff] %v3625
  %4037 = vst [vmem:[%s3 + $0x328] sm:$0xff] %v3627
  %4038 = vst [vmem:[%s3 + $0x330] sm:$0xff] %v3629
  %4039 = vst [vmem:[%s3 + $0x338] sm:$0xff] %v3631
  %4040 = vst [vmem:[%s3 + $0x340] sm:$0xff] %v3633
  %4041 = vst [vmem:[%s3 + $0x348] sm:$0xff] %v3635
  %4042 = vst [vmem:[%s3 + $0x350] sm:$0xff] %v3637
  %4043 = vst [vmem:[%s3 + $0x358] sm:$0xff] %v3639
  %4044 = vst [vmem:[%s3 + $0x360] sm:$0xff] %v3641
  %4045 = vst [vmem:[%s3 + $0x368] sm:$0xff] %v3643
  %4046 = vst [vmem:[%s3 + $0x370] sm:$0xff] %v3645
  %4047 = vst [vmem:[%s3 + $0x378] sm:$0xff] %v3647
  %4048 = vst [vmem:[%s3 + $0x380] sm:$0xff] %v3649
  %4049 = vst [vmem:[%s3 + $0x388] sm:$0xff] %v3651
  %4050 = vst [vmem:[%s3 + $0x390] sm:$0xff] %v3653
  %4051 = vst [vmem:[%s3 + $0x398] sm:$0xff] %v3655
  %4052 = vst [vmem:[%s3 + $0x3a0] sm:$0xff] %v3657
  %4053 = vst [vmem:[%s3 + $0x3a8] sm:$0xff] %v3659
  %4054 = vst [vmem:[%s3 + $0x3b0] sm:$0xff] %v3661
  %4055 = vst [vmem:[%s3 + $0x3b8] sm:$0xff] %v3663
  %4056 = vst [vmem:[%s3 + $0x3c0] sm:$0xff] %v3665
  %4057 = vst [vmem:[%s3 + $0x3c8] sm:$0xff] %v3667
  %4058 = vst [vmem:[%s3 + $0x3d0] sm:$0xff] %v3669
  %4059 = vst [vmem:[%s3 + $0x3d8] sm:$0xff] %v3671
  %4060 = vst [vmem:[%s3 + $0x3e0] sm:$0xff] %v3673
  %4061 = vst [vmem:[%s3 + $0x3e8] sm:$0xff] %v3675
  %4062 = vst [vmem:[%s3 + $0x3f0] sm:$0xff] %v3677
  %4063 = vst [vmem:[%s3 + $0x3f8] sm:$0xff] %v3679
  %4064 = vst [vmem:[%s3 + $0x400] sm:$0xff] %v3681
  %4065 = vst [vmem:[%s3 + $0x408] sm:$0xff] %v3683
  %4066 = vst [vmem:[%s3 + $0x410] sm:$0xff] %v3685
  %4067 = vst [vmem:[%s3 + $0x418] sm:$0xff] %v3687
  %4068 = vst [vmem:[%s3 + $0x420] sm:$0xff] %v3689
  %4069 = vst [vmem:[%s3 + $0x428] sm:$0xff] %v3691
  %4070 = vst [vmem:[%s3 + $0x430] sm:$0xff] %v3693
  %4071 = vst [vmem:[%s3 + $0x438] sm:$0xff] %v3695
  %4072 = vst [vmem:[%s3 + $0x440] sm:$0xff] %v3697
  %4073 = vst [vmem:[%s3 + $0x448] sm:$0xff] %v3699
  %4074 = vst [vmem:[%s3 + $0x450] sm:$0xff] %v3701
  %4075 = vst [vmem:[%s3 + $0x458] sm:$0xff] %v3703
  %4076 = vst [vmem:[%s3 + $0x460] sm:$0xff] %v3705
  %4077 = vst [vmem:[%s3 + $0x468] sm:$0xff] %v3707
  %4078 = vst [vmem:[%s3 + $0x470] sm:$0xff] %v3709
  %4079 = vst [vmem:[%s3 + $0x478] sm:$0xff] %v3711
  %4080 = vst [vmem:[%s3 + $0x480] sm:$0xff] %v3713
  %4081 = vst [vmem:[%s3 + $0x488] sm:$0xff] %v3715
  %4082 = vst [vmem:[%s3 + $0x490] sm:$0xff] %v3717
  %4083 = vst [vmem:[%s3 + $0x498] sm:$0xff] %v3719
  %4084 = vst [vmem:[%s3 + $0x4a0] sm:$0xff] %v3721
  %4085 = vst [vmem:[%s3 + $0x4a8] sm:$0xff] %v3723
  %4086 = vst [vmem:[%s3 + $0x4b0] sm:$0xff] %v3725
  %4087 = vst [vmem:[%s3 + $0x4b8] sm:$0xff] %v3727
  %4088 = vst [vmem:[%s3 + $0x4c0] sm:$0xff] %v3729
  %4089 = vst [vmem:[%s3 + $0x4c8] sm:$0xff] %v3731
  %4090 = vst [vmem:[%s3 + $0x4d0] sm:$0xff] %v3733
  %4091 = vst [vmem:[%s3 + $0x4d8] sm:$0xff] %v3735
  %4092 = vst [vmem:[%s3 + $0x4e0] sm:$0xff] %v3737
  %4093 = vst [vmem:[%s3 + $0x4e8] sm:$0xff] %v3739
  %4094 = vst [vmem:[%s3 + $0x4f0] sm:$0xff] %v3741
  %4095 = vst [vmem:[%s3 + $0x4f8] sm:$0xff] %v3743
  %4096 = vst [vmem:[%s3 + $0x500] sm:$0xff] %v3745
  %4097 = vst [vmem:[%s3 + $0x508] sm:$0xff] %v3747
  %4098 = vst [vmem:[%s3 + $0x510] sm:$0xff] %v3749
  %4099 = vst [vmem:[%s3 + $0x518] sm:$0xff] %v3751
  %4100 = vst [vmem:[%s3 + $0x520] sm:$0xff] %v3753
  %4101 = vst [vmem:[%s3 + $0x528] sm:$0xff] %v3755
  %4102 = vst [vmem:[%s3 + $0x530] sm:$0xff] %v3757
  %4103 = vst [vmem:[%s3 + $0x538] sm:$0xff] %v3759
  %4104 = vst [vmem:[%s3 + $0x540] sm:$0xff] %v3761
  %4105 = vst [vmem:[%s3 + $0x548] sm:$0xff] %v3763
  %4106 = vst [vmem:[%s3 + $0x550] sm:$0xff] %v3765
  %4107 = vst [vmem:[%s3 + $0x558] sm:$0xff] %v3767
  %4108 = vst [vmem:[%s3 + $0x560] sm:$0xff] %v3769
  %4109 = vst [vmem:[%s3 + $0x568] sm:$0xff] %v3771
  %4110 = vst [vmem:[%s3 + $0x570] sm:$0xff] %v3773
  %4111 = vst [vmem:[%s3 + $0x578] sm:$0xff] %v3775
  %4112 = vst [vmem:[%s3 + $0x580] sm:$0xff] %v3777
  %4113 = vst [vmem:[%s3 + $0x588] sm:$0xff] %v3779
  %4114 = vst [vmem:[%s3 + $0x590] sm:$0xff] %v3781
  %4115 = vst [vmem:[%s3 + $0x598] sm:$0xff] %v3783
  %4116 = vst [vmem:[%s3 + $0x5a0] sm:$0xff] %v3785
  %4117 = vst [vmem:[%s3 + $0x5a8] sm:$0xff] %v3787
  %4118 = vst [vmem:[%s3 + $0x5b0] sm:$0xff] %v3789
  %4119 = vst [vmem:[%s3 + $0x5b8] sm:$0xff] %v3791
  %4120 = vst [vmem:[%s3 + $0x5c0] sm:$0xff] %v3793
  %4121 = vst [vmem:[%s3 + $0x5c8] sm:$0xff] %v3795
  %4122 = vst [vmem:[%s3 + $0x5d0] sm:$0xff] %v3797
  %4123 = vst [vmem:[%s3 + $0x5d8] sm:$0xff] %v3799
  %4124 = vst [vmem:[%s3 + $0x5e0] sm:$0xff] %v3801
  %4125 = vst [vmem:[%s3 + $0x5e8] sm:$0xff] %v3803
  %4126 = vst [vmem:[%s3 + $0x5f0] sm:$0xff] %v3805
  %4127 = vst [vmem:[%s3 + $0x5f8] sm:$0xff] %v3807
  %4128 = vst [vmem:[%s3 + $0x600] sm:$0xff] %v3809
  %4129 = vst [vmem:[%s3 + $0x608] sm:$0xff] %v3811
  %4130 = vst [vmem:[%s3 + $0x610] sm:$0xff] %v3813
  %4131 = vst [vmem:[%s3 + $0x618] sm:$0xff] %v3815
  %4132 = vst [vmem:[%s3 + $0x620] sm:$0xff] %v3817
  %4133 = vst [vmem:[%s3 + $0x628] sm:$0xff] %v3819
  %4134 = vst [vmem:[%s3 + $0x630] sm:$0xff] %v3821
  %4135 = vst [vmem:[%s3 + $0x638] sm:$0xff] %v3823
  %4136 = vst [vmem:[%s3 + $0x640] sm:$0xff] %v3825
  %4137 = vst [vmem:[%s3 + $0x648] sm:$0xff] %v3827
  %4138 = vst [vmem:[%s3 + $0x650] sm:$0xff] %v3829
  %4139 = vst [vmem:[%s3 + $0x658] sm:$0xff] %v3831
  %4140 = vst [vmem:[%s3 + $0x660] sm:$0xff] %v3833
  %4141 = vst [vmem:[%s3 + $0x668] sm:$0xff] %v3835
  %4142 = vst [vmem:[%s3 + $0x670] sm:$0xff] %v3837
  %4143 = vst [vmem:[%s3 + $0x678] sm:$0xff] %v3839
  %4144 = vst [vmem:[%s3 + $0x680] sm:$0xff] %v3841
  %4145 = vst [vmem:[%s3 + $0x688] sm:$0xff] %v3843
  %4146 = vst [vmem:[%s3 + $0x690] sm:$0xff] %v3845
  %4147 = vst [vmem:[%s3 + $0x698] sm:$0xff] %v3847
  %4148 = vst [vmem:[%s3 + $0x6a0] sm:$0xff] %v3849
  %4149 = vst [vmem:[%s3 + $0x6a8] sm:$0xff] %v3851
  %4150 = vst [vmem:[%s3 + $0x6b0] sm:$0xff] %v3853
  %4151 = vst [vmem:[%s3 + $0x6b8] sm:$0xff] %v3855
  %4152 = vst [vmem:[%s3 + $0x6c0] sm:$0xff] %v3857
  %4153 = vst [vmem:[%s3 + $0x6c8] sm:$0xff] %v3859
  %4154 = vst [vmem:[%s3 + $0x6d0] sm:$0xff] %v3861
  %4155 = vst [vmem:[%s3 + $0x6d8] sm:$0xff] %v3863
  %4156 = vst [vmem:[%s3 + $0x6e0] sm:$0xff] %v3865
  %4157 = vst [vmem:[%s3 + $0x6e8] sm:$0xff] %v3867
  %4158 = vst [vmem:[%s3 + $0x6f0] sm:$0xff] %v3869
  %4159 = vst [vmem:[%s3 + $0x6f8] sm:$0xff] %v3871
  %4160 = vst [vmem:[%s3 + $0x700] sm:$0xff] %v3873
  %4161 = vst [vmem:[%s3 + $0x708] sm:$0xff] %v3875
  %4162 = vst [vmem:[%s3 + $0x710] sm:$0xff] %v3877
  %4163 = vst [vmem:[%s3 + $0x718] sm:$0xff] %v3879
  %4164 = vst [vmem:[%s3 + $0x720] sm:$0xff] %v3881
  %4165 = vst [vmem:[%s3 + $0x728] sm:$0xff] %v3883
  %4166 = vst [vmem:[%s3 + $0x730] sm:$0xff] %v3885
  %4167 = vst [vmem:[%s3 + $0x738] sm:$0xff] %v3887
  %4168 = vst [vmem:[%s3 + $0x740] sm:$0xff] %v3889
  %4169 = vst [vmem:[%s3 + $0x748] sm:$0xff] %v3891
  %4170 = vst [vmem:[%s3 + $0x750] sm:$0xff] %v3893
  %4171 = vst [vmem:[%s3 + $0x758] sm:$0xff] %v3895
  %4172 = vst [vmem:[%s3 + $0x760] sm:$0xff] %v3897
  %4173 = vst [vmem:[%s3 + $0x768] sm:$0xff] %v3899
  %4174 = vst [vmem:[%s3 + $0x770] sm:$0xff] %v3901
  %4175 = vst [vmem:[%s3 + $0x778] sm:$0xff] %v3903
  %4176 = vst [vmem:[%s3 + $0x780] sm:$0xff] %v3905
  %4177 = vst [vmem:[%s3 + $0x788] sm:$0xff] %v3907
  %4178 = vst [vmem:[%s3 + $0x790] sm:$0xff] %v3909
  %4179 = vst [vmem:[%s3 + $0x798] sm:$0xff] %v3911
  %4180 = vst [vmem:[%s3 + $0x7a0] sm:$0xff] %v3913
  %4181 = vst [vmem:[%s3 + $0x7a8] sm:$0xff] %v3915
  %4182 = vst [vmem:[%s3 + $0x7b0] sm:$0xff] %v3917
  %4183 = vst [vmem:[%s3 + $0x7b8] sm:$0xff] %v3919
  %4184 = vst [vmem:[%s3 + $0x7c0] sm:$0xff] %v3921
  %4185 = vst [vmem:[%s3 + $0x7c8] sm:$0xff] %v3923
  %4186 = vst [vmem:[%s3 + $0x7d0] sm:$0xff] %v3925
  %4187 = vst [vmem:[%s3 + $0x7d8] sm:$0xff] %v3927
  %4188 = vst [vmem:[%s3 + $0x7e0] sm:$0xff] %v3929
  %4189 = vst [vmem:[%s3 + $0x7e8] sm:$0xff] %v3931
  %4190 = vst [vmem:[%s3 + $0x7f0] sm:$0xff] %v3933
  %4191 = vst [vmem:[%s3 + $0x7f8] sm:$0xff] %v3935
  // Predicated region
  $region14: #{decoder_forward.9} parent=0 // pred_check
    _
  $region15: #{decoder_forward.9} parent=0 // pred_check_branch
    %4193 = sbr.rel (0) target = $region17
  $region16: #{decoder_forward.9} parent=0 // pred_region
    _
  $region17: #{decoder_forward.9} parent=0 // pred_fallthru
    _
  // Predicated region
  $region18: #{decoder_forward.9} parent=0 // pred_check
    _
  $region19: #{decoder_forward.9} parent=0 // pred_check_branch
    %4195 = sbr.rel (0) target = $region21
  $region20: #{decoder_forward.9} parent=0 // pred_region
    _
  $region21: #{decoder_forward.9} parent=0 // pred_fallthru
    _

</llo_original>
